<compile_context>
chip_gen: v7x
topology: tpu7x:2x2x1
jax: 0.10.0
libtpu: 0.0.40
codegen_flags: <defaults>
</compile_context>

<pallas_src>
import numpy as np
import jax
import jax.numpy as jnp
from jax.experimental import pallas as pl
from jax.experimental.pallas import tpu as pltpu


H_IN, W_IN = 88, 128
# (Hin, Win, Cin, Hout, Wout, Cout, pad) for the three stride-2 3x3 convs.
CONVS = (
    (88, 128, 1, 44, 64, 8, 1),
    (44, 64, 8, 22, 32, 16, 1),
    (22, 32, 16, 10, 15, 32, 0),
)
FC1_IN, FC1_OUT = 4800, 128


# ----------------------------------------------------------------------------
# Fused encoder kernel (one image per grid step).
# ----------------------------------------------------------------------------
def _encoder_kernel(x_ref,
                    s1_ref, w1_ref, sh1_ref,
                    s2_ref, w2_ref, sh2_ref,
                    s3_ref, w3_ref, sh3_ref,
                    wfc1_ref, bfc1_ref, wfc2_ref, bfc2_ref,
                    o_ref):
    def conv(a, s_ref, w_ref, sh_ref):
        # a: (Hin, Win*Cin) f32.  For each kernel row ky:
        #   T = S_ky @ a            -- selects input rows 2*oy+ky-pad (0 pad)
        #   acc += T @ Wt_ky        -- kx taps / col padding / channel sum
        hout = s_ref.shape[1]
        nout = w_ref.shape[2]
        acc = jnp.zeros((hout, nout), jnp.float32)
        for ky in range(3):
            t = jnp.dot(s_ref[ky], a, preferred_element_type=jnp.float32)
            wk = w_ref[ky].astype(jnp.float32)          # bf16 -> f32
            acc = acc + jnp.dot(t, wk, preferred_element_type=jnp.float32)
        return jnp.maximum(acc + sh_ref[...], 0.0)

    x = x_ref[0]                                        # (88, 128), lane-dense
    a1 = conv(x, s1_ref, w1_ref, sh1_ref)               # (44, 512)
    a2 = conv(a1, s2_ref, w2_ref, sh2_ref)              # (22, 512)  BN folded
    a3 = conv(a2, s3_ref, w3_ref, sh3_ref)              # (10, 480)

    # Linear(4800,128): fc1 rows pre-permuted to the kernel's (h, w, c)
    # flatten order and reshaped to (10, 480, 128); contract row by row.
    h = bfc1_ref[...]                                   # (1, 128)
    for r in range(10):
        h = h + jnp.dot(a3[r:r + 1, :], wfc1_ref[r].astype(jnp.float32),
                        preferred_element_type=jnp.float32)
    h = jnp.maximum(h, 0.0)
    out = jnp.dot(h, wfc2_ref[...], preferred_element_type=jnp.float32)
    o_ref[0] = out + bfc2_ref[...]                      # (1, enc_dim)


def encoder_forward(x_nchw, kp):
    """x_nchw: (B, 1, 88, 128) f32; kp: preprocessed params (prepare_params)."""
    B = x_nchw.shape[0]
    enc_dim = kp["w_fc2"].shape[1]
    x = x_nchw.reshape(B, H_IN, W_IN)                   # drop Cin=1 channel dim

    args = (x,
            kp["s1"], kp["w1"], kp["sh1"],
            kp["s2"], kp["w2"], kp["sh2"],
            kp["s3"], kp["w3"], kp["sh3"],
            kp["w_fc1"], kp["b_fc1"], kp["w_fc2"], kp["b_fc2"])

    def full_spec(arr):
        nd = arr.ndim
        return pl.BlockSpec(tuple(arr.shape), lambda b, _nd=nd: (0,) * _nd)

    in_specs = [pl.BlockSpec((1, H_IN, W_IN), lambda b: (b, 0, 0))]
    in_specs += [full_spec(a) for a in args[1:]]

    out = pl.pallas_call(
        _encoder_kernel,
        out_shape=jax.ShapeDtypeStruct((B, 1, enc_dim), jnp.float32),
        grid=(B,),
        in_specs=in_specs,
        out_specs=pl.BlockSpec((1, 1, enc_dim), lambda b: (b, 0, 0)),
        compiler_params=pltpu.CompilerParams(
            dimension_semantics=("parallel",),
            vmem_limit_bytes=32 * 1024 * 1024),
    )(*args)
    return out.reshape(B, enc_dim)


# ----------------------------------------------------------------------------
# One-time weight preprocessing (outside the jitted forward).
# ----------------------------------------------------------------------------
def _row_select(hout, hin, pad):
    """S[ky, oy, r] = 1  iff  r == 2*oy + ky - pad  (and in range)."""
    ky = np.arange(3)[:, None, None]
    oy = np.arange(hout)[None, :, None]
    r = np.arange(hin)[None, None, :]
    return (r == 2 * oy + ky - pad).astype(np.float32)


def _col_weight(w, win, wout, pad):
    """Fold the 3 kx taps, zero col padding and the channel contraction of a
    stride-2 conv into dense (3, win*cin, wout*cout) matrices (one per ky)."""
    w = np.asarray(w, np.float32)                       # (3, 3, cin, cout)
    cin, cout = w.shape[2], w.shape[3]
    wt = np.zeros((3, win, cin, wout, cout), np.float32)
    for kx in range(3):
        for ox in range(wout):
            wi = 2 * ox + kx - pad
            if 0 <= wi < win:
                wt[:, wi, :, ox, :] = w[:, kx, :, :]
    return wt.reshape(3, win * cin, wout * cout)


def prepare_params(p, eps=1e-5):
    h0, w0, _, h1, w1, _, pad1 = CONVS[0]
    _, _, _, h2, w2, _, pad2 = CONVS[1]
    _, _, _, h3, w3, c3, pad3 = CONVS[2]
    assert c3 * h3 * w3 == FC1_IN

    bn_scale = np.asarray(p["bn_gamma"], np.float32) / np.sqrt(
        np.asarray(p["bn_var"], np.float32) + eps)
    bn_shift = ((np.asarray(p["b2c"], np.float32)
                 - np.asarray(p["bn_mean"], np.float32)) * bn_scale
                + np.asarray(p["bn_beta"], np.float32))

    wt1 = _col_weight(p["w1c"], w0, w1, pad1)
    wt2 = _col_weight(p["w2c"], w1, w2, pad2) * np.tile(bn_scale, w2)[None, None, :]
    wt3 = _col_weight(p["w3c"], w2, w3, pad3)

    # fc1: PyTorch flattens the (c, h, w) tensor; the kernel flattens (h, w, c).
    i = np.arange(FC1_IN)
    oy, rem = i // (w3 * c3), i % (w3 * c3)
    ox, co = rem // c3, rem % c3
    perm = co * (h3 * w3) + oy * w3 + ox
    w_fc1 = np.asarray(p["w_fc1"], np.float32)[perm, :].reshape(h3, w3 * c3, FC1_OUT)

    f32 = lambda a: jnp.asarray(a, jnp.float32)
    bf16 = lambda a: jnp.asarray(a, jnp.bfloat16)
    return {
        "s1": f32(_row_select(h1, h0, pad1)), "w1": bf16(wt1),
        "sh1": f32(np.tile(np.asarray(p["b1c"], np.float32), w1)[None, :]),
        "s2": f32(_row_select(h2, h1, pad2)), "w2": bf16(wt2),
        "sh2": f32(np.tile(bn_shift, w2)[None, :]),
        "s3": f32(_row_select(h3, h2, pad3)), "w3": bf16(wt3),
        "sh3": f32(np.tile(np.asarray(p["b3c"], np.float32), w3)[None, :]),
        "w_fc1": bf16(w_fc1),
        "b_fc1": f32(np.asarray(p["b_fc1"], np.float32)[None, :]),
        "w_fc2": f32(p["w_fc2"]),
        "b_fc2": f32(np.asarray(p["b_fc2"], np.float32)[None, :]),
    }


# ----------------------------------------------------------------------------
# Synthetic parameters (deterministic) and pure-JAX reference.
# ----------------------------------------------------------------------------
def init_params(key, enc_dim):
    ks = jax.random.split(key, 14)
    n = lambda k, s, std: jax.random.normal(k, s, jnp.float32) * std
    return {
        "w1c": n(ks[0], (3, 3, 1, 8), (2.0 / 9) ** 0.5),
        "b1c": n(ks[1], (8,), 0.05),
        "w2c": n(ks[2], (3, 3, 8, 16), (2.0 / 72) ** 0.5),
        "b2c": n(ks[3], (16,), 0.05),
        "w3c": n(ks[4], (3, 3, 16, 32), (2.0 / 144) ** 0.5),
        "b3c": n(ks[5], (32,), 0.05),
        "bn_gamma": 1.0 + n(ks[6], (16,), 0.1),
        "bn_beta": n(ks[7], (16,), 0.1),
        "bn_mean": n(ks[8], (16,), 0.1),
        "bn_var": 1.0 + jnp.abs(n(ks[9], (16,), 0.1)),
        "w_fc1": n(ks[10], (FC1_IN, FC1_OUT), (2.0 / FC1_IN) ** 0.5),
        "b_fc1": n(ks[11], (FC1_OUT,), 0.05),
        "w_fc2": n(ks[12], (FC1_OUT, enc_dim), (2.0 / FC1_OUT) ** 0.5),
        "b_fc2": n(ks[13], (enc_dim,), 0.05),
    }


def encoder_reference(x_nchw, p):
    """Mirrors the PyTorch forward (eval-mode BN), all f32."""
    eps = 1e-5

    def conv(x, w_hwio, b, pad):
        w = jnp.transpose(w_hwio, (3, 2, 0, 1))          # OIHW
        y = jax.lax.conv_general_dilated(
            x, w, (2, 2), [(pad, pad), (pad, pad)],
            dimension_numbers=("NCHW", "OIHW", "NCHW"))
        return y + b.reshape(1, -1, 1, 1)

    x = jax.nn.relu(conv(x_nchw, p["w1c"], p["b1c"], 1))
    x = conv(x, p["w2c"], p["b2c"], 1)
    x = ((x - p["bn_mean"].reshape(1, -1, 1, 1))
         / jnp.sqrt(p["bn_var"].reshape(1, -1, 1, 1) + eps)
         * p["bn_gamma"].reshape(1, -1, 1, 1)
         + p["bn_beta"].reshape(1, -1, 1, 1))
    x = jax.nn.relu(x)
    x = jax.nn.relu(conv(x, p["w3c"], p["b3c"], 0))
    x = x.reshape(x.shape[0], -1)
    h = jax.nn.relu(x @ p["w_fc1"] + p["b_fc1"])
    return h @ p["w_fc2"] + p["b_fc2"]


if __name__ == "__main__":
    key = jax.random.PRNGKey(0)
    k_x, k_p = jax.random.split(key)

    B, enc_dim = 2, 32
    x = jax.random.normal(k_x, (B, 1, H_IN, W_IN), jnp.float32)
    params = init_params(k_p, enc_dim)
    kparams = prepare_params(params)      # one-time weight preprocessing

    fwd = jax.jit(encoder_forward)
    out = jax.block_until_ready(fwd(x, kparams))
    assert out.shape == (B, enc_dim)

    ref = encoder_reference(x, params)
    max_err = float(jnp.max(jnp.abs(out - ref)))
    assert jnp.allclose(out, ref, rtol=2e-2, atol=2e-2), max_err

    print("KERNEL_OK")
</pallas_src>

<mosaic_0001>
module attributes {stable_mosaic.version = 11 : i64} {
  func.func @_encoder_kernel(%arg0: i32, %arg1: memref<1x88x128xf32, #tpu.memory_space<vmem>>, %arg2: memref<3x44x88xf32, #tpu.memory_space<vmem>>, %arg3: memref<3x128x512xbf16, #tpu.memory_space<vmem>>, %arg4: memref<1x512xf32, #tpu.memory_space<vmem>>, %arg5: memref<3x22x44xf32, #tpu.memory_space<vmem>>, %arg6: memref<3x512x512xbf16, #tpu.memory_space<vmem>>, %arg7: memref<1x512xf32, #tpu.memory_space<vmem>>, %arg8: memref<3x10x22xf32, #tpu.memory_space<vmem>>, %arg9: memref<3x512x480xbf16, #tpu.memory_space<vmem>>, %arg10: memref<1x480xf32, #tpu.memory_space<vmem>>, %arg11: memref<10x480x128xbf16, #tpu.memory_space<vmem>>, %arg12: memref<1x128xf32, #tpu.memory_space<vmem>>, %arg13: memref<128x32xf32, #tpu.memory_space<vmem>>, %arg14: memref<1x32xf32, #tpu.memory_space<vmem>>, %arg15: memref<1x1x32xf32, #tpu.memory_space<vmem>>) attributes {dimension_semantics = [#tpu.dimension_semantics<parallel>], iteration_bounds = array<i64: 2>, scalar_prefetch = 0 : i64, scratch_operands = 0 : i64, tpu.core_type = #tpu.core_type<tc>, window_params = [{transform_indices = @transform_0, window_bounds = array<i64: 1, 88, 128>}, {pipeline_mode = #tpu.pipeline_mode<synchronous>, transform_indices = @transform_1, window_bounds = array<i64: 3, 44, 88>}, {pipeline_mode = #tpu.pipeline_mode<synchronous>, transform_indices = @transform_2, window_bounds = array<i64: 3, 128, 512>}, {pipeline_mode = #tpu.pipeline_mode<synchronous>, transform_indices = @transform_3, window_bounds = array<i64: 1, 512>}, {pipeline_mode = #tpu.pipeline_mode<synchronous>, transform_indices = @transform_4, window_bounds = array<i64: 3, 22, 44>}, {pipeline_mode = #tpu.pipeline_mode<synchronous>, transform_indices = @transform_5, window_bounds = array<i64: 3, 512, 512>}, {pipeline_mode = #tpu.pipeline_mode<synchronous>, transform_indices = @transform_6, window_bounds = array<i64: 1, 512>}, {pipeline_mode = #tpu.pipeline_mode<synchronous>, transform_indices = @transform_7, window_bounds = array<i64: 3, 10, 22>}, {pipeline_mode = #tpu.pipeline_mode<synchronous>, transform_indices = @transform_8, window_bounds = array<i64: 3, 512, 480>}, {pipeline_mode = #tpu.pipeline_mode<synchronous>, transform_indices = @transform_9, window_bounds = array<i64: 1, 480>}, {pipeline_mode = #tpu.pipeline_mode<synchronous>, transform_indices = @transform_10, window_bounds = array<i64: 10, 480, 128>}, {pipeline_mode = #tpu.pipeline_mode<synchronous>, transform_indices = @transform_11, window_bounds = array<i64: 1, 128>}, {pipeline_mode = #tpu.pipeline_mode<synchronous>, transform_indices = @transform_12, window_bounds = array<i64: 128, 32>}, {pipeline_mode = #tpu.pipeline_mode<synchronous>, transform_indices = @transform_13, window_bounds = array<i64: 1, 32>}, {transform_indices = @transform_14, window_bounds = array<i64: 1, 1, 32>}]} {
    %c0 = arith.constant 0 : index
    %c0_0 = arith.constant 0 : index
    %c0_1 = arith.constant 0 : index
    %0 = vector.load %arg1[%c0, %c0_0, %c0_1] : memref<1x88x128xf32, #tpu.memory_space<vmem>>, vector<1x88x128xf32>
    %1 = vector.shape_cast %0 : vector<1x88x128xf32> to vector<88x128xf32>
    %cst = arith.constant 0.000000e+00 : f32
    %2 = vector.broadcast %cst : f32 to vector<44x512xf32>
    %c0_2 = arith.constant 0 : index
    %c0_3 = arith.constant 0 : index
    %c0_4 = arith.constant 0 : index
    %3 = vector.load %arg2[%c0_2, %c0_3, %c0_4] : memref<3x44x88xf32, #tpu.memory_space<vmem>>, vector<1x44x88xf32>
    %4 = vector.shape_cast %3 : vector<1x44x88xf32> to vector<44x88xf32>
    %cst_5 = arith.constant dense<0.000000e+00> : vector<44x128xf32>
    %5 = tpu.matmul %4, %1, %cst_5 {dimension_numbers = #tpu.dot_dimension_numbers<[1], [0], [0], [1], [0, 0, 1, 1], [], []>} : vector<44x88xf32>, vector<88x128xf32>, vector<44x128xf32> -> vector<44x128xf32>
    %c0_6 = arith.constant 0 : index
    %c0_7 = arith.constant 0 : index
    %c0_8 = arith.constant 0 : index
    %6 = vector.load %arg3[%c0_6, %c0_7, %c0_8] : memref<3x128x512xbf16, #tpu.memory_space<vmem>>, vector<1x128x512xbf16>
    %7 = vector.shape_cast %6 : vector<1x128x512xbf16> to vector<128x512xbf16>
    %8 = arith.extf %7 : vector<128x512xbf16> to vector<128x512xf32>
    %cst_9 = arith.constant dense<0.000000e+00> : vector<44x512xf32>
    %9 = tpu.matmul %5, %8, %cst_9 {dimension_numbers = #tpu.dot_dimension_numbers<[1], [0], [0], [1], [0, 0, 1, 1], [], []>} : vector<44x128xf32>, vector<128x512xf32>, vector<44x512xf32> -> vector<44x512xf32>
    %10 = arith.addf %2, %9 : vector<44x512xf32>
    %c1 = arith.constant 1 : index
    %c0_10 = arith.constant 0 : index
    %c0_11 = arith.constant 0 : index
    %11 = vector.load %arg2[%c1, %c0_10, %c0_11] : memref<3x44x88xf32, #tpu.memory_space<vmem>>, vector<1x44x88xf32>
    %12 = vector.shape_cast %11 : vector<1x44x88xf32> to vector<44x88xf32>
    %cst_12 = arith.constant dense<0.000000e+00> : vector<44x128xf32>
    %13 = tpu.matmul %12, %1, %cst_12 {dimension_numbers = #tpu.dot_dimension_numbers<[1], [0], [0], [1], [0, 0, 1, 1], [], []>} : vector<44x88xf32>, vector<88x128xf32>, vector<44x128xf32> -> vector<44x128xf32>
    %c1_13 = arith.constant 1 : index
    %c0_14 = arith.constant 0 : index
    %c0_15 = arith.constant 0 : index
    %14 = vector.load %arg3[%c1_13, %c0_14, %c0_15] : memref<3x128x512xbf16, #tpu.memory_space<vmem>>, vector<1x128x512xbf16>
    %15 = vector.shape_cast %14 : vector<1x128x512xbf16> to vector<128x512xbf16>
    %16 = arith.extf %15 : vector<128x512xbf16> to vector<128x512xf32>
    %cst_16 = arith.constant dense<0.000000e+00> : vector<44x512xf32>
    %17 = tpu.matmul %13, %16, %cst_16 {dimension_numbers = #tpu.dot_dimension_numbers<[1], [0], [0], [1], [0, 0, 1, 1], [], []>} : vector<44x128xf32>, vector<128x512xf32>, vector<44x512xf32> -> vector<44x512xf32>
    %18 = arith.addf %10, %17 : vector<44x512xf32>
    %c2 = arith.constant 2 : index
    %c0_17 = arith.constant 0 : index
    %c0_18 = arith.constant 0 : index
    %19 = vector.load %arg2[%c2, %c0_17, %c0_18] : memref<3x44x88xf32, #tpu.memory_space<vmem>>, vector<1x44x88xf32>
    %20 = vector.shape_cast %19 : vector<1x44x88xf32> to vector<44x88xf32>
    %cst_19 = arith.constant dense<0.000000e+00> : vector<44x128xf32>
    %21 = tpu.matmul %20, %1, %cst_19 {dimension_numbers = #tpu.dot_dimension_numbers<[1], [0], [0], [1], [0, 0, 1, 1], [], []>} : vector<44x88xf32>, vector<88x128xf32>, vector<44x128xf32> -> vector<44x128xf32>
    %c2_20 = arith.constant 2 : index
    %c0_21 = arith.constant 0 : index
    %c0_22 = arith.constant 0 : index
    %22 = vector.load %arg3[%c2_20, %c0_21, %c0_22] : memref<3x128x512xbf16, #tpu.memory_space<vmem>>, vector<1x128x512xbf16>
    %23 = vector.shape_cast %22 : vector<1x128x512xbf16> to vector<128x512xbf16>
    %24 = arith.extf %23 : vector<128x512xbf16> to vector<128x512xf32>
    %cst_23 = arith.constant dense<0.000000e+00> : vector<44x512xf32>
    %25 = tpu.matmul %21, %24, %cst_23 {dimension_numbers = #tpu.dot_dimension_numbers<[1], [0], [0], [1], [0, 0, 1, 1], [], []>} : vector<44x128xf32>, vector<128x512xf32>, vector<44x512xf32> -> vector<44x512xf32>
    %26 = arith.addf %18, %25 : vector<44x512xf32>
    %c0_24 = arith.constant 0 : index
    %c0_25 = arith.constant 0 : index
    %27 = vector.load %arg4[%c0_24, %c0_25] : memref<1x512xf32, #tpu.memory_space<vmem>>, vector<1x512xf32>
    %28 = vector.broadcast %27 : vector<1x512xf32> to vector<44x512xf32>
    %29 = arith.addf %26, %28 : vector<44x512xf32>
    %cst_26 = arith.constant 0.000000e+00 : f32
    %30 = vector.broadcast %cst_26 : f32 to vector<44x512xf32>
    %31 = arith.maximumf %29, %30 : vector<44x512xf32>
    %cst_27 = arith.constant 0.000000e+00 : f32
    %32 = vector.broadcast %cst_27 : f32 to vector<22x512xf32>
    %c0_28 = arith.constant 0 : index
    %c0_29 = arith.constant 0 : index
    %c0_30 = arith.constant 0 : index
    %33 = vector.load %arg5[%c0_28, %c0_29, %c0_30] : memref<3x22x44xf32, #tpu.memory_space<vmem>>, vector<1x22x44xf32>
    %34 = vector.shape_cast %33 : vector<1x22x44xf32> to vector<22x44xf32>
    %cst_31 = arith.constant dense<0.000000e+00> : vector<22x512xf32>
    %35 = tpu.matmul %34, %31, %cst_31 {dimension_numbers = #tpu.dot_dimension_numbers<[1], [0], [0], [1], [0, 0, 1, 1], [], []>} : vector<22x44xf32>, vector<44x512xf32>, vector<22x512xf32> -> vector<22x512xf32>
    %c0_32 = arith.constant 0 : index
    %c0_33 = arith.constant 0 : index
    %c0_34 = arith.constant 0 : index
    %36 = vector.load %arg6[%c0_32, %c0_33, %c0_34] : memref<3x512x512xbf16, #tpu.memory_space<vmem>>, vector<1x512x512xbf16>
    %37 = vector.shape_cast %36 : vector<1x512x512xbf16> to vector<512x512xbf16>
    %38 = arith.extf %37 : vector<512x512xbf16> to vector<512x512xf32>
    %cst_35 = arith.constant dense<0.000000e+00> : vector<22x512xf32>
    %39 = tpu.matmul %35, %38, %cst_35 {dimension_numbers = #tpu.dot_dimension_numbers<[1], [0], [0], [1], [0, 0, 1, 1], [], []>} : vector<22x512xf32>, vector<512x512xf32>, vector<22x512xf32> -> vector<22x512xf32>
    %40 = arith.addf %32, %39 : vector<22x512xf32>
    %c1_36 = arith.constant 1 : index
    %c0_37 = arith.constant 0 : index
    %c0_38 = arith.constant 0 : index
    %41 = vector.load %arg5[%c1_36, %c0_37, %c0_38] : memref<3x22x44xf32, #tpu.memory_space<vmem>>, vector<1x22x44xf32>
    %42 = vector.shape_cast %41 : vector<1x22x44xf32> to vector<22x44xf32>
    %cst_39 = arith.constant dense<0.000000e+00> : vector<22x512xf32>
    %43 = tpu.matmul %42, %31, %cst_39 {dimension_numbers = #tpu.dot_dimension_numbers<[1], [0], [0], [1], [0, 0, 1, 1], [], []>} : vector<22x44xf32>, vector<44x512xf32>, vector<22x512xf32> -> vector<22x512xf32>
    %c1_40 = arith.constant 1 : index
    %c0_41 = arith.constant 0 : index
    %c0_42 = arith.constant 0 : index
    %44 = vector.load %arg6[%c1_40, %c0_41, %c0_42] : memref<3x512x512xbf16, #tpu.memory_space<vmem>>, vector<1x512x512xbf16>
    %45 = vector.shape_cast %44 : vector<1x512x512xbf16> to vector<512x512xbf16>
    %46 = arith.extf %45 : vector<512x512xbf16> to vector<512x512xf32>
    %cst_43 = arith.constant dense<0.000000e+00> : vector<22x512xf32>
    %47 = tpu.matmul %43, %46, %cst_43 {dimension_numbers = #tpu.dot_dimension_numbers<[1], [0], [0], [1], [0, 0, 1, 1], [], []>} : vector<22x512xf32>, vector<512x512xf32>, vector<22x512xf32> -> vector<22x512xf32>
    %48 = arith.addf %40, %47 : vector<22x512xf32>
    %c2_44 = arith.constant 2 : index
    %c0_45 = arith.constant 0 : index
    %c0_46 = arith.constant 0 : index
    %49 = vector.load %arg5[%c2_44, %c0_45, %c0_46] : memref<3x22x44xf32, #tpu.memory_space<vmem>>, vector<1x22x44xf32>
    %50 = vector.shape_cast %49 : vector<1x22x44xf32> to vector<22x44xf32>
    %cst_47 = arith.constant dense<0.000000e+00> : vector<22x512xf32>
    %51 = tpu.matmul %50, %31, %cst_47 {dimension_numbers = #tpu.dot_dimension_numbers<[1], [0], [0], [1], [0, 0, 1, 1], [], []>} : vector<22x44xf32>, vector<44x512xf32>, vector<22x512xf32> -> vector<22x512xf32>
    %c2_48 = arith.constant 2 : index
    %c0_49 = arith.constant 0 : index
    %c0_50 = arith.constant 0 : index
    %52 = vector.load %arg6[%c2_48, %c0_49, %c0_50] : memref<3x512x512xbf16, #tpu.memory_space<vmem>>, vector<1x512x512xbf16>
    %53 = vector.shape_cast %52 : vector<1x512x512xbf16> to vector<512x512xbf16>
    %54 = arith.extf %53 : vector<512x512xbf16> to vector<512x512xf32>
    %cst_51 = arith.constant dense<0.000000e+00> : vector<22x512xf32>
    %55 = tpu.matmul %51, %54, %cst_51 {dimension_numbers = #tpu.dot_dimension_numbers<[1], [0], [0], [1], [0, 0, 1, 1], [], []>} : vector<22x512xf32>, vector<512x512xf32>, vector<22x512xf32> -> vector<22x512xf32>
    %56 = arith.addf %48, %55 : vector<22x512xf32>
    %c0_52 = arith.constant 0 : index
    %c0_53 = arith.constant 0 : index
    %57 = vector.load %arg7[%c0_52, %c0_53] : memref<1x512xf32, #tpu.memory_space<vmem>>, vector<1x512xf32>
    %58 = vector.broadcast %57 : vector<1x512xf32> to vector<22x512xf32>
    %59 = arith.addf %56, %58 : vector<22x512xf32>
    %cst_54 = arith.constant 0.000000e+00 : f32
    %60 = vector.broadcast %cst_54 : f32 to vector<22x512xf32>
    %61 = arith.maximumf %59, %60 : vector<22x512xf32>
    %cst_55 = arith.constant 0.000000e+00 : f32
    %62 = vector.broadcast %cst_55 : f32 to vector<10x480xf32>
    %c0_56 = arith.constant 0 : index
    %c0_57 = arith.constant 0 : index
    %c0_58 = arith.constant 0 : index
    %63 = vector.load %arg8[%c0_56, %c0_57, %c0_58] : memref<3x10x22xf32, #tpu.memory_space<vmem>>, vector<1x10x22xf32>
    %64 = vector.shape_cast %63 : vector<1x10x22xf32> to vector<10x22xf32>
    %cst_59 = arith.constant dense<0.000000e+00> : vector<10x512xf32>
    %65 = tpu.matmul %64, %61, %cst_59 {dimension_numbers = #tpu.dot_dimension_numbers<[1], [0], [0], [1], [0, 0, 1, 1], [], []>} : vector<10x22xf32>, vector<22x512xf32>, vector<10x512xf32> -> vector<10x512xf32>
    %c0_60 = arith.constant 0 : index
    %c0_61 = arith.constant 0 : index
    %c0_62 = arith.constant 0 : index
    %66 = vector.load %arg9[%c0_60, %c0_61, %c0_62] : memref<3x512x480xbf16, #tpu.memory_space<vmem>>, vector<1x512x480xbf16>
    %67 = vector.shape_cast %66 : vector<1x512x480xbf16> to vector<512x480xbf16>
    %68 = arith.extf %67 : vector<512x480xbf16> to vector<512x480xf32>
    %cst_63 = arith.constant dense<0.000000e+00> : vector<10x480xf32>
    %69 = tpu.matmul %65, %68, %cst_63 {dimension_numbers = #tpu.dot_dimension_numbers<[1], [0], [0], [1], [0, 0, 1, 1], [], []>} : vector<10x512xf32>, vector<512x480xf32>, vector<10x480xf32> -> vector<10x480xf32>
    %70 = arith.addf %62, %69 : vector<10x480xf32>
    %c1_64 = arith.constant 1 : index
    %c0_65 = arith.constant 0 : index
    %c0_66 = arith.constant 0 : index
    %71 = vector.load %arg8[%c1_64, %c0_65, %c0_66] : memref<3x10x22xf32, #tpu.memory_space<vmem>>, vector<1x10x22xf32>
    %72 = vector.shape_cast %71 : vector<1x10x22xf32> to vector<10x22xf32>
    %cst_67 = arith.constant dense<0.000000e+00> : vector<10x512xf32>
    %73 = tpu.matmul %72, %61, %cst_67 {dimension_numbers = #tpu.dot_dimension_numbers<[1], [0], [0], [1], [0, 0, 1, 1], [], []>} : vector<10x22xf32>, vector<22x512xf32>, vector<10x512xf32> -> vector<10x512xf32>
    %c1_68 = arith.constant 1 : index
    %c0_69 = arith.constant 0 : index
    %c0_70 = arith.constant 0 : index
    %74 = vector.load %arg9[%c1_68, %c0_69, %c0_70] : memref<3x512x480xbf16, #tpu.memory_space<vmem>>, vector<1x512x480xbf16>
    %75 = vector.shape_cast %74 : vector<1x512x480xbf16> to vector<512x480xbf16>
    %76 = arith.extf %75 : vector<512x480xbf16> to vector<512x480xf32>
    %cst_71 = arith.constant dense<0.000000e+00> : vector<10x480xf32>
    %77 = tpu.matmul %73, %76, %cst_71 {dimension_numbers = #tpu.dot_dimension_numbers<[1], [0], [0], [1], [0, 0, 1, 1], [], []>} : vector<10x512xf32>, vector<512x480xf32>, vector<10x480xf32> -> vector<10x480xf32>
    %78 = arith.addf %70, %77 : vector<10x480xf32>
    %c2_72 = arith.constant 2 : index
    %c0_73 = arith.constant 0 : index
    %c0_74 = arith.constant 0 : index
    %79 = vector.load %arg8[%c2_72, %c0_73, %c0_74] : memref<3x10x22xf32, #tpu.memory_space<vmem>>, vector<1x10x22xf32>
    %80 = vector.shape_cast %79 : vector<1x10x22xf32> to vector<10x22xf32>
    %cst_75 = arith.constant dense<0.000000e+00> : vector<10x512xf32>
    %81 = tpu.matmul %80, %61, %cst_75 {dimension_numbers = #tpu.dot_dimension_numbers<[1], [0], [0], [1], [0, 0, 1, 1], [], []>} : vector<10x22xf32>, vector<22x512xf32>, vector<10x512xf32> -> vector<10x512xf32>
    %c2_76 = arith.constant 2 : index
    %c0_77 = arith.constant 0 : index
    %c0_78 = arith.constant 0 : index
    %82 = vector.load %arg9[%c2_76, %c0_77, %c0_78] : memref<3x512x480xbf16, #tpu.memory_space<vmem>>, vector<1x512x480xbf16>
    %83 = vector.shape_cast %82 : vector<1x512x480xbf16> to vector<512x480xbf16>
    %84 = arith.extf %83 : vector<512x480xbf16> to vector<512x480xf32>
    %cst_79 = arith.constant dense<0.000000e+00> : vector<10x480xf32>
    %85 = tpu.matmul %81, %84, %cst_79 {dimension_numbers = #tpu.dot_dimension_numbers<[1], [0], [0], [1], [0, 0, 1, 1], [], []>} : vector<10x512xf32>, vector<512x480xf32>, vector<10x480xf32> -> vector<10x480xf32>
    %86 = arith.addf %78, %85 : vector<10x480xf32>
    %c0_80 = arith.constant 0 : index
    %c0_81 = arith.constant 0 : index
    %87 = vector.load %arg10[%c0_80, %c0_81] : memref<1x480xf32, #tpu.memory_space<vmem>>, vector<1x480xf32>
    %88 = vector.broadcast %87 : vector<1x480xf32> to vector<10x480xf32>
    %89 = arith.addf %86, %88 : vector<10x480xf32>
    %cst_82 = arith.constant 0.000000e+00 : f32
    %90 = vector.broadcast %cst_82 : f32 to vector<10x480xf32>
    %91 = arith.maximumf %89, %90 : vector<10x480xf32>
    %c0_83 = arith.constant 0 : index
    %c0_84 = arith.constant 0 : index
    %92 = vector.load %arg12[%c0_83, %c0_84] : memref<1x128xf32, #tpu.memory_space<vmem>>, vector<1x128xf32>
    %93 = vector.extract_strided_slice %91 {offsets = [0, 0], sizes = [1, 480], strides = [1, 1]} : vector<10x480xf32> to vector<1x480xf32>
    %c0_85 = arith.constant 0 : index
    %c0_86 = arith.constant 0 : index
    %c0_87 = arith.constant 0 : index
    %94 = vector.load %arg11[%c0_85, %c0_86, %c0_87] : memref<10x480x128xbf16, #tpu.memory_space<vmem>>, vector<1x480x128xbf16>
    %95 = vector.shape_cast %94 : vector<1x480x128xbf16> to vector<480x128xbf16>
    %96 = arith.extf %95 : vector<480x128xbf16> to vector<480x128xf32>
    %cst_88 = arith.constant dense<0.000000e+00> : vector<1x128xf32>
    %97 = tpu.matmul %93, %96, %cst_88 {dimension_numbers = #tpu.dot_dimension_numbers<[1], [0], [0], [1], [0, 0, 1, 1], [], []>} : vector<1x480xf32>, vector<480x128xf32>, vector<1x128xf32> -> vector<1x128xf32>
    %98 = arith.addf %92, %97 : vector<1x128xf32>
    %99 = vector.extract_strided_slice %91 {offsets = [1, 0], sizes = [1, 480], strides = [1, 1]} : vector<10x480xf32> to vector<1x480xf32>
    %c1_89 = arith.constant 1 : index
    %c0_90 = arith.constant 0 : index
    %c0_91 = arith.constant 0 : index
    %100 = vector.load %arg11[%c1_89, %c0_90, %c0_91] : memref<10x480x128xbf16, #tpu.memory_space<vmem>>, vector<1x480x128xbf16>
    %101 = vector.shape_cast %100 : vector<1x480x128xbf16> to vector<480x128xbf16>
    %102 = arith.extf %101 : vector<480x128xbf16> to vector<480x128xf32>
    %cst_92 = arith.constant dense<0.000000e+00> : vector<1x128xf32>
    %103 = tpu.matmul %99, %102, %cst_92 {dimension_numbers = #tpu.dot_dimension_numbers<[1], [0], [0], [1], [0, 0, 1, 1], [], []>} : vector<1x480xf32>, vector<480x128xf32>, vector<1x128xf32> -> vector<1x128xf32>
    %104 = arith.addf %98, %103 : vector<1x128xf32>
    %105 = vector.extract_strided_slice %91 {offsets = [2, 0], sizes = [1, 480], strides = [1, 1]} : vector<10x480xf32> to vector<1x480xf32>
    %c2_93 = arith.constant 2 : index
    %c0_94 = arith.constant 0 : index
    %c0_95 = arith.constant 0 : index
    %106 = vector.load %arg11[%c2_93, %c0_94, %c0_95] : memref<10x480x128xbf16, #tpu.memory_space<vmem>>, vector<1x480x128xbf16>
    %107 = vector.shape_cast %106 : vector<1x480x128xbf16> to vector<480x128xbf16>
    %108 = arith.extf %107 : vector<480x128xbf16> to vector<480x128xf32>
    %cst_96 = arith.constant dense<0.000000e+00> : vector<1x128xf32>
    %109 = tpu.matmul %105, %108, %cst_96 {dimension_numbers = #tpu.dot_dimension_numbers<[1], [0], [0], [1], [0, 0, 1, 1], [], []>} : vector<1x480xf32>, vector<480x128xf32>, vector<1x128xf32> -> vector<1x128xf32>
    %110 = arith.addf %104, %109 : vector<1x128xf32>
    %111 = vector.extract_strided_slice %91 {offsets = [3, 0], sizes = [1, 480], strides = [1, 1]} : vector<10x480xf32> to vector<1x480xf32>
    %c3 = arith.constant 3 : index
    %c0_97 = arith.constant 0 : index
    %c0_98 = arith.constant 0 : index
    %112 = vector.load %arg11[%c3, %c0_97, %c0_98] : memref<10x480x128xbf16, #tpu.memory_space<vmem>>, vector<1x480x128xbf16>
    %113 = vector.shape_cast %112 : vector<1x480x128xbf16> to vector<480x128xbf16>
    %114 = arith.extf %113 : vector<480x128xbf16> to vector<480x128xf32>
    %cst_99 = arith.constant dense<0.000000e+00> : vector<1x128xf32>
    %115 = tpu.matmul %111, %114, %cst_99 {dimension_numbers = #tpu.dot_dimension_numbers<[1], [0], [0], [1], [0, 0, 1, 1], [], []>} : vector<1x480xf32>, vector<480x128xf32>, vector<1x128xf32> -> vector<1x128xf32>
    %116 = arith.addf %110, %115 : vector<1x128xf32>
    %117 = vector.extract_strided_slice %91 {offsets = [4, 0], sizes = [1, 480], strides = [1, 1]} : vector<10x480xf32> to vector<1x480xf32>
    %c4 = arith.constant 4 : index
    %c0_100 = arith.constant 0 : index
    %c0_101 = arith.constant 0 : index
    %118 = vector.load %arg11[%c4, %c0_100, %c0_101] : memref<10x480x128xbf16, #tpu.memory_space<vmem>>, vector<1x480x128xbf16>
    %119 = vector.shape_cast %118 : vector<1x480x128xbf16> to vector<480x128xbf16>
    %120 = arith.extf %119 : vector<480x128xbf16> to vector<480x128xf32>
    %cst_102 = arith.constant dense<0.000000e+00> : vector<1x128xf32>
    %121 = tpu.matmul %117, %120, %cst_102 {dimension_numbers = #tpu.dot_dimension_numbers<[1], [0], [0], [1], [0, 0, 1, 1], [], []>} : vector<1x480xf32>, vector<480x128xf32>, vector<1x128xf32> -> vector<1x128xf32>
    %122 = arith.addf %116, %121 : vector<1x128xf32>
    %123 = vector.extract_strided_slice %91 {offsets = [5, 0], sizes = [1, 480], strides = [1, 1]} : vector<10x480xf32> to vector<1x480xf32>
    %c5 = arith.constant 5 : index
    %c0_103 = arith.constant 0 : index
    %c0_104 = arith.constant 0 : index
    %124 = vector.load %arg11[%c5, %c0_103, %c0_104] : memref<10x480x128xbf16, #tpu.memory_space<vmem>>, vector<1x480x128xbf16>
    %125 = vector.shape_cast %124 : vector<1x480x128xbf16> to vector<480x128xbf16>
    %126 = arith.extf %125 : vector<480x128xbf16> to vector<480x128xf32>
    %cst_105 = arith.constant dense<0.000000e+00> : vector<1x128xf32>
    %127 = tpu.matmul %123, %126, %cst_105 {dimension_numbers = #tpu.dot_dimension_numbers<[1], [0], [0], [1], [0, 0, 1, 1], [], []>} : vector<1x480xf32>, vector<480x128xf32>, vector<1x128xf32> -> vector<1x128xf32>
    %128 = arith.addf %122, %127 : vector<1x128xf32>
    %129 = vector.extract_strided_slice %91 {offsets = [6, 0], sizes = [1, 480], strides = [1, 1]} : vector<10x480xf32> to vector<1x480xf32>
    %c6 = arith.constant 6 : index
    %c0_106 = arith.constant 0 : index
    %c0_107 = arith.constant 0 : index
    %130 = vector.load %arg11[%c6, %c0_106, %c0_107] : memref<10x480x128xbf16, #tpu.memory_space<vmem>>, vector<1x480x128xbf16>
    %131 = vector.shape_cast %130 : vector<1x480x128xbf16> to vector<480x128xbf16>
    %132 = arith.extf %131 : vector<480x128xbf16> to vector<480x128xf32>
    %cst_108 = arith.constant dense<0.000000e+00> : vector<1x128xf32>
    %133 = tpu.matmul %129, %132, %cst_108 {dimension_numbers = #tpu.dot_dimension_numbers<[1], [0], [0], [1], [0, 0, 1, 1], [], []>} : vector<1x480xf32>, vector<480x128xf32>, vector<1x128xf32> -> vector<1x128xf32>
    %134 = arith.addf %128, %133 : vector<1x128xf32>
    %135 = vector.extract_strided_slice %91 {offsets = [7, 0], sizes = [1, 480], strides = [1, 1]} : vector<10x480xf32> to vector<1x480xf32>
    %c7 = arith.constant 7 : index
    %c0_109 = arith.constant 0 : index
    %c0_110 = arith.constant 0 : index
    %136 = vector.load %arg11[%c7, %c0_109, %c0_110] : memref<10x480x128xbf16, #tpu.memory_space<vmem>>, vector<1x480x128xbf16>
    %137 = vector.shape_cast %136 : vector<1x480x128xbf16> to vector<480x128xbf16>
    %138 = arith.extf %137 : vector<480x128xbf16> to vector<480x128xf32>
    %cst_111 = arith.constant dense<0.000000e+00> : vector<1x128xf32>
    %139 = tpu.matmul %135, %138, %cst_111 {dimension_numbers = #tpu.dot_dimension_numbers<[1], [0], [0], [1], [0, 0, 1, 1], [], []>} : vector<1x480xf32>, vector<480x128xf32>, vector<1x128xf32> -> vector<1x128xf32>
    %140 = arith.addf %134, %139 : vector<1x128xf32>
    %141 = vector.extract_strided_slice %91 {offsets = [8, 0], sizes = [1, 480], strides = [1, 1]} : vector<10x480xf32> to vector<1x480xf32>
    %c8 = arith.constant 8 : index
    %c0_112 = arith.constant 0 : index
    %c0_113 = arith.constant 0 : index
    %142 = vector.load %arg11[%c8, %c0_112, %c0_113] : memref<10x480x128xbf16, #tpu.memory_space<vmem>>, vector<1x480x128xbf16>
    %143 = vector.shape_cast %142 : vector<1x480x128xbf16> to vector<480x128xbf16>
    %144 = arith.extf %143 : vector<480x128xbf16> to vector<480x128xf32>
    %cst_114 = arith.constant dense<0.000000e+00> : vector<1x128xf32>
    %145 = tpu.matmul %141, %144, %cst_114 {dimension_numbers = #tpu.dot_dimension_numbers<[1], [0], [0], [1], [0, 0, 1, 1], [], []>} : vector<1x480xf32>, vector<480x128xf32>, vector<1x128xf32> -> vector<1x128xf32>
    %146 = arith.addf %140, %145 : vector<1x128xf32>
    %147 = vector.extract_strided_slice %91 {offsets = [9, 0], sizes = [1, 480], strides = [1, 1]} : vector<10x480xf32> to vector<1x480xf32>
    %c9 = arith.constant 9 : index
    %c0_115 = arith.constant 0 : index
    %c0_116 = arith.constant 0 : index
    %148 = vector.load %arg11[%c9, %c0_115, %c0_116] : memref<10x480x128xbf16, #tpu.memory_space<vmem>>, vector<1x480x128xbf16>
    %149 = vector.shape_cast %148 : vector<1x480x128xbf16> to vector<480x128xbf16>
    %150 = arith.extf %149 : vector<480x128xbf16> to vector<480x128xf32>
    %cst_117 = arith.constant dense<0.000000e+00> : vector<1x128xf32>
    %151 = tpu.matmul %147, %150, %cst_117 {dimension_numbers = #tpu.dot_dimension_numbers<[1], [0], [0], [1], [0, 0, 1, 1], [], []>} : vector<1x480xf32>, vector<480x128xf32>, vector<1x128xf32> -> vector<1x128xf32>
    %152 = arith.addf %146, %151 : vector<1x128xf32>
    %cst_118 = arith.constant 0.000000e+00 : f32
    %153 = vector.broadcast %cst_118 : f32 to vector<1x128xf32>
    %154 = arith.maximumf %152, %153 : vector<1x128xf32>
    %c0_119 = arith.constant 0 : index
    %c0_120 = arith.constant 0 : index
    %155 = vector.load %arg13[%c0_119, %c0_120] : memref<128x32xf32, #tpu.memory_space<vmem>>, vector<128x32xf32>
    %cst_121 = arith.constant dense<0.000000e+00> : vector<1x32xf32>
    %156 = tpu.matmul %154, %155, %cst_121 {dimension_numbers = #tpu.dot_dimension_numbers<[1], [0], [0], [1], [0, 0, 1, 1], [], []>} : vector<1x128xf32>, vector<128x32xf32>, vector<1x32xf32> -> vector<1x32xf32>
    %c0_122 = arith.constant 0 : index
    %c0_123 = arith.constant 0 : index
    %157 = vector.load %arg14[%c0_122, %c0_123] : memref<1x32xf32, #tpu.memory_space<vmem>>, vector<1x32xf32>
    %158 = arith.addf %156, %157 : vector<1x32xf32>
    %c0_124 = arith.constant 0 : index
    %c0_125 = arith.constant 0 : index
    %c0_126 = arith.constant 0 : index
    %159 = vector.load %arg15[%c0_124, %c0_125, %c0_126] : memref<1x1x32xf32, #tpu.memory_space<vmem>>, vector<1x1x32xf32>
    %160 = vector.shape_cast %159 : vector<1x1x32xf32> to vector<1x32xf32>
    %161 = vector.shape_cast %158 : vector<1x32xf32> to vector<1x1x32xf32>
    tpu.vector_store %arg15[%c0_124, %c0_125, %c0_126], %161 {strides = array<i32>} : memref<1x1x32xf32, #tpu.memory_space<vmem>>, vector<1x1x32xf32>,
    return
  }
  func.func @transform_0(%arg0: i32) -> (i32, i32, i32) {
    %c0_i32 = arith.constant 0 : i32
    %c0_i32_0 = arith.constant 0 : i32
    %c0_i32_1 = arith.constant 0 : i32
    return %arg0, %c0_i32, %c0_i32_0 : i32, i32, i32
  }
  func.func @transform_1(%arg0: i32) -> (i32, i32, i32) {
    %c0_i32 = arith.constant 0 : i32
    %c0_i32_0 = arith.constant 0 : i32
    %c0_i32_1 = arith.constant 0 : i32
    %c0_i32_2 = arith.constant 0 : i32
    return %c0_i32, %c0_i32_0, %c0_i32_1 : i32, i32, i32
  }
  func.func @transform_2(%arg0: i32) -> (i32, i32, i32) {
    %c0_i32 = arith.constant 0 : i32
    %c0_i32_0 = arith.constant 0 : i32
    %c0_i32_1 = arith.constant 0 : i32
    %c0_i32_2 = arith.constant 0 : i32
    return %c0_i32, %c0_i32_0, %c0_i32_1 : i32, i32, i32
  }
  func.func @transform_3(%arg0: i32) -> (i32, i32) {
    %c0_i32 = arith.constant 0 : i32
    %c0_i32_0 = arith.constant 0 : i32
    %c0_i32_1 = arith.constant 0 : i32
    return %c0_i32, %c0_i32_0 : i32, i32
  }
  func.func @transform_4(%arg0: i32) -> (i32, i32, i32) {
    %c0_i32 = arith.constant 0 : i32
    %c0_i32_0 = arith.constant 0 : i32
    %c0_i32_1 = arith.constant 0 : i32
    %c0_i32_2 = arith.constant 0 : i32
    return %c0_i32, %c0_i32_0, %c0_i32_1 : i32, i32, i32
  }
  func.func @transform_5(%arg0: i32) -> (i32, i32, i32) {
    %c0_i32 = arith.constant 0 : i32
    %c0_i32_0 = arith.constant 0 : i32
    %c0_i32_1 = arith.constant 0 : i32
    %c0_i32_2 = arith.constant 0 : i32
    return %c0_i32, %c0_i32_0, %c0_i32_1 : i32, i32, i32
  }
  func.func @transform_6(%arg0: i32) -> (i32, i32) {
    %c0_i32 = arith.constant 0 : i32
    %c0_i32_0 = arith.constant 0 : i32
    %c0_i32_1 = arith.constant 0 : i32
    return %c0_i32, %c0_i32_0 : i32, i32
  }
  func.func @transform_7(%arg0: i32) -> (i32, i32, i32) {
    %c0_i32 = arith.constant 0 : i32
    %c0_i32_0 = arith.constant 0 : i32
    %c0_i32_1 = arith.constant 0 : i32
    %c0_i32_2 = arith.constant 0 : i32
    return %c0_i32, %c0_i32_0, %c0_i32_1 : i32, i32, i32
  }
  func.func @transform_8(%arg0: i32) -> (i32, i32, i32) {
    %c0_i32 = arith.constant 0 : i32
    %c0_i32_0 = arith.constant 0 : i32
    %c0_i32_1 = arith.constant 0 : i32
    %c0_i32_2 = arith.constant 0 : i32
    return %c0_i32, %c0_i32_0, %c0_i32_1 : i32, i32, i32
  }
  func.func @transform_9(%arg0: i32) -> (i32, i32) {
    %c0_i32 = arith.constant 0 : i32
    %c0_i32_0 = arith.constant 0 : i32
    %c0_i32_1 = arith.constant 0 : i32
    return %c0_i32, %c0_i32_0 : i32, i32
  }
  func.func @transform_10(%arg0: i32) -> (i32, i32, i32) {
    %c0_i32 = arith.constant 0 : i32
    %c0_i32_0 = arith.constant 0 : i32
    %c0_i32_1 = arith.constant 0 : i32
    %c0_i32_2 = arith.constant 0 : i32
    return %c0_i32, %c0_i32_0, %c0_i32_1 : i32, i32, i32
  }
  func.func @transform_11(%arg0: i32) -> (i32, i32) {
    %c0_i32 = arith.constant 0 : i32
    %c0_i32_0 = arith.constant 0 : i32
    %c0_i32_1 = arith.constant 0 : i32
    return %c0_i32, %c0_i32_0 : i32, i32
  }
  func.func @transform_12(%arg0: i32) -> (i32, i32) {
    %c0_i32 = arith.constant 0 : i32
    %c0_i32_0 = arith.constant 0 : i32
    %c0_i32_1 = arith.constant 0 : i32
    return %c0_i32, %c0_i32_0 : i32, i32
  }
  func.func @transform_13(%arg0: i32) -> (i32, i32) {
    %c0_i32 = arith.constant 0 : i32
    %c0_i32_0 = arith.constant 0 : i32
    %c0_i32_1 = arith.constant 0 : i32
    return %c0_i32, %c0_i32_0 : i32, i32
  }
  func.func @transform_14(%arg0: i32) -> (i32, i32, i32) {
    %c0_i32 = arith.constant 0 : i32
    %c0_i32_0 = arith.constant 0 : i32
    %c0_i32_1 = arith.constant 0 : i32
    return %arg0, %c0_i32, %c0_i32_0 : i32, i32, i32
  }
}

</mosaic_0001>

<llo_original>
// kernel: encoder_forward.1
$region0: #{encoder_forward.1}
  #allocation0 [shape = 'u32[]', space=smem, size = 0x4, offset = 0x4, fixed_abs, tag = 'smem constant byte address 0x4 - core index']
  #allocation1 [shape = 'u32[144,128]{1,0:T(1,128)}', space=vmem, size = 0x12000, scoped, tag = 'internal scratch']
  %s0 = inlined_call_operand.vmem [shape: f32[2,88,128], index: 0, kind: input, shape index: {}]
  %s1 = inlined_call_operand.vmem [shape: f32[3,44,88], index: 1, kind: input, shape index: {}]
  %s2 = inlined_call_operand.hbm [shape: bf16[3,128,512], index: 2, kind: input, shape index: {}]
  %s3 = inlined_call_operand.vmem [shape: f32[1,512], index: 3, kind: input, shape index: {}]
  %s4 = inlined_call_operand.vmem [shape: f32[3,22,44], index: 4, kind: input, shape index: {}]
  %s5 = inlined_call_operand.vmem [shape: bf16[3,512,512], index: 5, kind: input, shape index: {}]
  %s6 = inlined_call_operand.vmem [shape: f32[1,512], index: 6, kind: input, shape index: {}]
  %s7 = inlined_call_operand.vmem [shape: f32[3,10,22], index: 7, kind: input, shape index: {}]
  %s8 = inlined_call_operand.vmem [shape: bf16[3,512,480], index: 8, kind: input, shape index: {}]
  %s9 = inlined_call_operand.vmem [shape: f32[1,480], index: 9, kind: input, shape index: {}]
  %s10 = inlined_call_operand.vmem [shape: bf16[10,480,128], index: 10, kind: input, shape index: {}]
  %s11 = inlined_call_operand.vmem [shape: f32[1,128], index: 11, kind: input, shape index: {}]
  %s12 = inlined_call_operand.vmem [shape: f32[128,32], index: 12, kind: input, shape index: {}]
  %s13 = inlined_call_operand.vmem [shape: f32[1,32], index: 13, kind: input, shape index: {}]
  %s14 = inlined_call_operand.hbm [shape: f32[2,1,32], index: 14, kind: output, shape index: {}]
  %s15 = sld [smem:[#allocation0]]
  $region93: #{encoder_forward.1} parent=0
    _
  %s17 = ssub.s32 1, %s15
  %s18 = scalar_select 0, %s17, %s15
  $region1: #{encoder_forward.1} parent=0
    #allocation2 [shape = 'u8[393216]{0}', space=vmem, size = 0x60000, scoped, tag = 'input window, operand 2, single buffered']
    #allocation3 [shape = 's32[2]{0}', space=sflag, size = 0x8, scoped, tag = 'scoped memory for encoder_forward.1']
    #allocation4 [shape = 's32[2]{0}', space=sflag, size = 0x8, scoped, tag = 'scoped memory for encoder_forward.1']
    #allocation5 [shape = 'u8[1024]{0}', space=vmem, size = 0x400, scoped, tag = 'output window, operand 0']
    %19 = vsyncpa [#allocation3], 0
    %20 = vsyncpa [#allocation4], 0
    %s21 = scalar_lea.sflag [#allocation4], 1
    %22 = vsyncpa %s21, 0
    loop: start=0, step=1, limit=4
    $region2: #{encoder_forward.1} parent=1 // loop_pre_header
      _
    $region3: #{encoder_forward.1} parent=1 // loop_header
      %s24 = sphi 0, %s28
      %p25 = scmp.ge.s32.totalorder %s24, 4
      %s34 = sphi 0, %s36
      %s37 = sphi 0, %s34
      %s38 = sphi 0, %s37
      %s54 = sphi 0, %s38
      %s58 = sphi 0, %s58
      %s60 = sphi 0, %s58
      %s61 = sphi 0, %s60
      %s75 = sphi 0, %s61
      %s79 = sphi 0, %s79
      %s81 = sphi 0, %s79
      %s82 = sphi 0, %s81
      %s96 = sphi 0, %s82
      %s100 = sphi 0, %s100
      %s102 = sphi 0, %s100
      %s103 = sphi 0, %s102
      %s117 = sphi 0, %s103
      %s121 = sphi 0, %s121
      %s123 = sphi 0, %s121
      %s124 = sphi 0, %s123
      %s138 = sphi 0, %s124
      %s142 = sphi 0, %s142
      %s144 = sphi 0, %s142
      %s145 = sphi 0, %s144
      %s159 = sphi 0, %s145
      %s163 = sphi 0, %s163
      %s165 = sphi 0, %s163
      %s166 = sphi 0, %s165
      %s180 = sphi 0, %s166
      %s184 = sphi 0, %s184
      %s186 = sphi 0, %s184
      %s187 = sphi 0, %s186
      %s201 = sphi 0, %s187
      %s205 = sphi 0, %s205
      %s207 = sphi 0, %s205
      %s208 = sphi 0, %s207
      %s222 = sphi 0, %s208
      %s226 = sphi 0, %s226
      %s228 = sphi 0, %s226
      %s229 = sphi 0, %s228
      %s243 = sphi 0, %s229
      %s247 = sphi 0, %s247
      %s249 = sphi 0, %s247
      %s250 = sphi 0, %s249
      %s264 = sphi 0, %s250
      %s268 = sphi 0, %s268
      %s270 = sphi 0, %s268
      %s271 = sphi 0, %s270
      %s285 = sphi 0, %s271
      %s289 = sphi 0, %s289
      %s291 = sphi 0, %s289
      %s292 = sphi 0, %s291
      %s306 = sphi 0, %s292
      %s310 = sphi 0, %s310
      %s312 = sphi 0, %s310
      %s313 = sphi 0, %s312
      %s327 = sphi 0, %s313
      %s333 = sphi 0, %s335
      %s336 = sphi 0, %s333
      %s337 = sphi 0, %s336
      %s353 = sphi 0, %s337
    $region4: #{encoder_forward.1} parent=1 // loop_header_branch
      %27 = sbr.rel (%p25) target = $region8
    $region5: #{encoder_forward.1} parent=1 // loop_body
      %s29 = ssub.s32 %s24, 1
      %s30 = ssub.s32 %s24, 2
      %s31 = sadd.s32 %s24, 1
      %s32 = ssub.s32 %s24, %s31
      %p33 = scmp.eq.s32.totalorder %s32, 0
      %s35 = sadd.s32 %s34, 1
      %s36 = scalar_select %p33, %s34, %s35
      %p39 = pneg %p33
      %p40 = scmp.eq.s32.totalorder %s24, 1
      %p41 = por %p39, %p40
      %p42 = scmp.ne.s32.totalorder %s34, %s37
      %p43 = scmp.eq.s32.totalorder %s24, 0
      %p44 = por %p42, %p43
      %p45 = scmp.ne.s32.totalorder %s34, %s37
      %p46 = scmp.eq.s32.totalorder %s29, 1
      %p47 = por %p45, %p46
      %p48 = scmp.ne.s32.totalorder %s37, %s38
      %p49 = scmp.eq.s32.totalorder %s29, 0
      %p50 = por %p48, %p49
      %p51 = scmp.ne.s32.totalorder %s37, %s38
      %p52 = scmp.eq.s32.totalorder %s30, 1
      %p53 = por %p51, %p52
      %p55 = scmp.ne.s32.totalorder %s38, %s54
      %p56 = scmp.eq.s32.totalorder %s30, 0
      %p57 = por %p55, %p56
      %s59 = sadd.s32 %s58, 1
      %p62 = scmp.eq.s32.totalorder %s24, 1
      %p63 = scmp.ne.s32.totalorder %s58, %s60
      %p64 = scmp.eq.s32.totalorder %s24, 0
      %p65 = por %p63, %p64
      %p66 = scmp.ne.s32.totalorder %s58, %s60
      %p67 = scmp.eq.s32.totalorder %s29, 1
      %p68 = por %p66, %p67
      %p69 = scmp.ne.s32.totalorder %s60, %s61
      %p70 = scmp.eq.s32.totalorder %s29, 0
      %p71 = por %p69, %p70
      %p72 = scmp.ne.s32.totalorder %s60, %s61
      %p73 = scmp.eq.s32.totalorder %s30, 1
      %p74 = por %p72, %p73
      %p76 = scmp.ne.s32.totalorder %s61, %s75
      %p77 = scmp.eq.s32.totalorder %s30, 0
      %p78 = por %p76, %p77
      %s80 = sadd.s32 %s79, 1
      %p83 = scmp.eq.s32.totalorder %s24, 1
      %p84 = scmp.ne.s32.totalorder %s79, %s81
      %p85 = scmp.eq.s32.totalorder %s24, 0
      %p86 = por %p84, %p85
      %p87 = scmp.ne.s32.totalorder %s79, %s81
      %p88 = scmp.eq.s32.totalorder %s29, 1
      %p89 = por %p87, %p88
      %p90 = scmp.ne.s32.totalorder %s81, %s82
      %p91 = scmp.eq.s32.totalorder %s29, 0
      %p92 = por %p90, %p91
      %p93 = scmp.ne.s32.totalorder %s81, %s82
      %p94 = scmp.eq.s32.totalorder %s30, 1
      %p95 = por %p93, %p94
      %p97 = scmp.ne.s32.totalorder %s82, %s96
      %p98 = scmp.eq.s32.totalorder %s30, 0
      %p99 = por %p97, %p98
      %s101 = sadd.s32 %s100, 1
      %p104 = scmp.eq.s32.totalorder %s24, 1
      %p105 = scmp.ne.s32.totalorder %s100, %s102
      %p106 = scmp.eq.s32.totalorder %s24, 0
      %p107 = por %p105, %p106
      %p108 = scmp.ne.s32.totalorder %s100, %s102
      %p109 = scmp.eq.s32.totalorder %s29, 1
      %p110 = por %p108, %p109
      %p111 = scmp.ne.s32.totalorder %s102, %s103
      %p112 = scmp.eq.s32.totalorder %s29, 0
      %p113 = por %p111, %p112
      %p114 = scmp.ne.s32.totalorder %s102, %s103
      %p115 = scmp.eq.s32.totalorder %s30, 1
      %p116 = por %p114, %p115
      %p118 = scmp.ne.s32.totalorder %s103, %s117
      %p119 = scmp.eq.s32.totalorder %s30, 0
      %p120 = por %p118, %p119
      %s122 = sadd.s32 %s121, 1
      %p125 = scmp.eq.s32.totalorder %s24, 1
      %p126 = scmp.ne.s32.totalorder %s121, %s123
      %p127 = scmp.eq.s32.totalorder %s24, 0
      %p128 = por %p126, %p127
      %p129 = scmp.ne.s32.totalorder %s121, %s123
      %p130 = scmp.eq.s32.totalorder %s29, 1
      %p131 = por %p129, %p130
      %p132 = scmp.ne.s32.totalorder %s123, %s124
      %p133 = scmp.eq.s32.totalorder %s29, 0
      %p134 = por %p132, %p133
      %p135 = scmp.ne.s32.totalorder %s123, %s124
      %p136 = scmp.eq.s32.totalorder %s30, 1
      %p137 = por %p135, %p136
      %p139 = scmp.ne.s32.totalorder %s124, %s138
      %p140 = scmp.eq.s32.totalorder %s30, 0
      %p141 = por %p139, %p140
      %s143 = sadd.s32 %s142, 1
      %p146 = scmp.eq.s32.totalorder %s24, 1
      %p147 = scmp.ne.s32.totalorder %s142, %s144
      %p148 = scmp.eq.s32.totalorder %s24, 0
      %p149 = por %p147, %p148
      %p150 = scmp.ne.s32.totalorder %s142, %s144
      %p151 = scmp.eq.s32.totalorder %s29, 1
      %p152 = por %p150, %p151
      %p153 = scmp.ne.s32.totalorder %s144, %s145
      %p154 = scmp.eq.s32.totalorder %s29, 0
      %p155 = por %p153, %p154
      %p156 = scmp.ne.s32.totalorder %s144, %s145
      %p157 = scmp.eq.s32.totalorder %s30, 1
      %p158 = por %p156, %p157
      %p160 = scmp.ne.s32.totalorder %s145, %s159
      %p161 = scmp.eq.s32.totalorder %s30, 0
      %p162 = por %p160, %p161
      %s164 = sadd.s32 %s163, 1
      %p167 = scmp.eq.s32.totalorder %s24, 1
      %p168 = scmp.ne.s32.totalorder %s163, %s165
      %p169 = scmp.eq.s32.totalorder %s24, 0
      %p170 = por %p168, %p169
      %p171 = scmp.ne.s32.totalorder %s163, %s165
      %p172 = scmp.eq.s32.totalorder %s29, 1
      %p173 = por %p171, %p172
      %p174 = scmp.ne.s32.totalorder %s165, %s166
      %p175 = scmp.eq.s32.totalorder %s29, 0
      %p176 = por %p174, %p175
      %p177 = scmp.ne.s32.totalorder %s165, %s166
      %p178 = scmp.eq.s32.totalorder %s30, 1
      %p179 = por %p177, %p178
      %p181 = scmp.ne.s32.totalorder %s166, %s180
      %p182 = scmp.eq.s32.totalorder %s30, 0
      %p183 = por %p181, %p182
      %s185 = sadd.s32 %s184, 1
      %p188 = scmp.eq.s32.totalorder %s24, 1
      %p189 = scmp.ne.s32.totalorder %s184, %s186
      %p190 = scmp.eq.s32.totalorder %s24, 0
      %p191 = por %p189, %p190
      %p192 = scmp.ne.s32.totalorder %s184, %s186
      %p193 = scmp.eq.s32.totalorder %s29, 1
      %p194 = por %p192, %p193
      %p195 = scmp.ne.s32.totalorder %s186, %s187
      %p196 = scmp.eq.s32.totalorder %s29, 0
      %p197 = por %p195, %p196
      %p198 = scmp.ne.s32.totalorder %s186, %s187
      %p199 = scmp.eq.s32.totalorder %s30, 1
      %p200 = por %p198, %p199
      %p202 = scmp.ne.s32.totalorder %s187, %s201
      %p203 = scmp.eq.s32.totalorder %s30, 0
      %p204 = por %p202, %p203
      %s206 = sadd.s32 %s205, 1
      %p209 = scmp.eq.s32.totalorder %s24, 1
      %p210 = scmp.ne.s32.totalorder %s205, %s207
      %p211 = scmp.eq.s32.totalorder %s24, 0
      %p212 = por %p210, %p211
      %p213 = scmp.ne.s32.totalorder %s205, %s207
      %p214 = scmp.eq.s32.totalorder %s29, 1
      %p215 = por %p213, %p214
      %p216 = scmp.ne.s32.totalorder %s207, %s208
      %p217 = scmp.eq.s32.totalorder %s29, 0
      %p218 = por %p216, %p217
      %p219 = scmp.ne.s32.totalorder %s207, %s208
      %p220 = scmp.eq.s32.totalorder %s30, 1
      %p221 = por %p219, %p220
      %p223 = scmp.ne.s32.totalorder %s208, %s222
      %p224 = scmp.eq.s32.totalorder %s30, 0
      %p225 = por %p223, %p224
      %s227 = sadd.s32 %s226, 1
      %p230 = scmp.eq.s32.totalorder %s24, 1
      %p231 = scmp.ne.s32.totalorder %s226, %s228
      %p232 = scmp.eq.s32.totalorder %s24, 0
      %p233 = por %p231, %p232
      %p234 = scmp.ne.s32.totalorder %s226, %s228
      %p235 = scmp.eq.s32.totalorder %s29, 1
      %p236 = por %p234, %p235
      %p237 = scmp.ne.s32.totalorder %s228, %s229
      %p238 = scmp.eq.s32.totalorder %s29, 0
      %p239 = por %p237, %p238
      %p240 = scmp.ne.s32.totalorder %s228, %s229
      %p241 = scmp.eq.s32.totalorder %s30, 1
      %p242 = por %p240, %p241
      %p244 = scmp.ne.s32.totalorder %s229, %s243
      %p245 = scmp.eq.s32.totalorder %s30, 0
      %p246 = por %p244, %p245
      %s248 = sadd.s32 %s247, 1
      %p251 = scmp.eq.s32.totalorder %s24, 1
      %p252 = scmp.ne.s32.totalorder %s247, %s249
      %p253 = scmp.eq.s32.totalorder %s24, 0
      %p254 = por %p252, %p253
      %p255 = scmp.ne.s32.totalorder %s247, %s249
      %p256 = scmp.eq.s32.totalorder %s29, 1
      %p257 = por %p255, %p256
      %p258 = scmp.ne.s32.totalorder %s249, %s250
      %p259 = scmp.eq.s32.totalorder %s29, 0
      %p260 = por %p258, %p259
      %p261 = scmp.ne.s32.totalorder %s249, %s250
      %p262 = scmp.eq.s32.totalorder %s30, 1
      %p263 = por %p261, %p262
      %p265 = scmp.ne.s32.totalorder %s250, %s264
      %p266 = scmp.eq.s32.totalorder %s30, 0
      %p267 = por %p265, %p266
      %s269 = sadd.s32 %s268, 1
      %p272 = scmp.eq.s32.totalorder %s24, 1
      %p273 = scmp.ne.s32.totalorder %s268, %s270
      %p274 = scmp.eq.s32.totalorder %s24, 0
      %p275 = por %p273, %p274
      %p276 = scmp.ne.s32.totalorder %s268, %s270
      %p277 = scmp.eq.s32.totalorder %s29, 1
      %p278 = por %p276, %p277
      %p279 = scmp.ne.s32.totalorder %s270, %s271
      %p280 = scmp.eq.s32.totalorder %s29, 0
      %p281 = por %p279, %p280
      %p282 = scmp.ne.s32.totalorder %s270, %s271
      %p283 = scmp.eq.s32.totalorder %s30, 1
      %p284 = por %p282, %p283
      %p286 = scmp.ne.s32.totalorder %s271, %s285
      %p287 = scmp.eq.s32.totalorder %s30, 0
      %p288 = por %p286, %p287
      %s290 = sadd.s32 %s289, 1
      %p293 = scmp.eq.s32.totalorder %s24, 1
      %p294 = scmp.ne.s32.totalorder %s289, %s291
      %p295 = scmp.eq.s32.totalorder %s24, 0
      %p296 = por %p294, %p295
      %p297 = scmp.ne.s32.totalorder %s289, %s291
      %p298 = scmp.eq.s32.totalorder %s29, 1
      %p299 = por %p297, %p298
      %p300 = scmp.ne.s32.totalorder %s291, %s292
      %p301 = scmp.eq.s32.totalorder %s29, 0
      %p302 = por %p300, %p301
      %p303 = scmp.ne.s32.totalorder %s291, %s292
      %p304 = scmp.eq.s32.totalorder %s30, 1
      %p305 = por %p303, %p304
      %p307 = scmp.ne.s32.totalorder %s292, %s306
      %p308 = scmp.eq.s32.totalorder %s30, 0
      %p309 = por %p307, %p308
      %s311 = sadd.s32 %s310, 1
      %p314 = scmp.eq.s32.totalorder %s24, 1
      %p315 = scmp.ne.s32.totalorder %s310, %s312
      %p316 = scmp.eq.s32.totalorder %s24, 0
      %p317 = por %p315, %p316
      %p318 = scmp.ne.s32.totalorder %s310, %s312
      %p319 = scmp.eq.s32.totalorder %s29, 1
      %p320 = por %p318, %p319
      %p321 = scmp.ne.s32.totalorder %s312, %s313
      %p322 = scmp.eq.s32.totalorder %s29, 0
      %p323 = por %p321, %p322
      %p324 = scmp.ne.s32.totalorder %s312, %s313
      %p325 = scmp.eq.s32.totalorder %s30, 1
      %p326 = por %p324, %p325
      %p328 = scmp.ne.s32.totalorder %s313, %s327
      %p329 = scmp.eq.s32.totalorder %s30, 0
      %p330 = por %p328, %p329
      %s331 = ssub.s32 %s24, %s31
      %p332 = scmp.eq.s32.totalorder %s331, 0
      %s334 = sadd.s32 %s333, 1
      %s335 = scalar_select %p332, %s333, %s334
      %p338 = pneg %p332
      %p339 = scmp.eq.s32.totalorder %s24, 1
      %p340 = por %p338, %p339
      %p341 = scmp.ne.s32.totalorder %s333, %s336
      %p342 = scmp.eq.s32.totalorder %s24, 0
      %p343 = por %p341, %p342
      %p344 = scmp.ne.s32.totalorder %s333, %s336
      %p345 = scmp.eq.s32.totalorder %s29, 1
      %p346 = por %p344, %p345
      %p347 = scmp.ne.s32.totalorder %s336, %s337
      %p348 = scmp.eq.s32.totalorder %s29, 0
      %p349 = por %p347, %p348
      %p350 = scmp.ne.s32.totalorder %s336, %s337
      %p351 = scmp.eq.s32.totalorder %s30, 1
      %p352 = por %p350, %p351
      %p354 = scmp.ne.s32.totalorder %s337, %s353
      %p355 = scmp.eq.s32.totalorder %s30, 0
      %p356 = por %p354, %p355
      %p357 = scmp.le.s32.totalorder 1, %s24
      %p358 = scmp.lt.s32.totalorder %s24, 3
      %p359 = pnand %p357, %p358
      %p360 = pneg %p359
      // Predicated region
      $region9: #{encoder_forward.1} parent=5 // pred_check
        _
      $region10: #{encoder_forward.1} parent=5 // pred_check_branch
        %362 = sbr.rel (%p359) target = $region12
      $region11: #{encoder_forward.1} parent=5 // pred_region
        %s363 = ssub.s32 %s24, 1
        // Predicated region
        $region13: #{encoder_forward.1} parent=11 // pred_check
          %p364 = pneg %p71
        $region14: #{encoder_forward.1} parent=11 // pred_check_branch
          %366 = sbr.rel (%p364) target = $region16
        $region15: #{encoder_forward.1} parent=11 // pred_region
          _
        $region16: #{encoder_forward.1} parent=11 // pred_fallthru
          _
        // Predicated region
        $region17: #{encoder_forward.1} parent=11 // pred_check
          %p367 = pneg %p92
        $region18: #{encoder_forward.1} parent=11 // pred_check_branch
          %369 = sbr.rel (%p367) target = $region20
        $region19: #{encoder_forward.1} parent=11 // pred_region
          %s371 = ssub.s32 12288, 12288
          %372 = vsyncadd [#allocation3], %s371
          %s373 = sshll.u32 [#allocation2], 4
          %s374 = int_to_ptr.vmem [resolvable:$true] %s373
          %379 = dma.hbm_to_vmem [thread:$0]  %s2, 12288, %s374, [#allocation3], 256, 256, 16
        $region20: #{encoder_forward.1} parent=11 // pred_fallthru
          _
        // Predicated region
        $region21: #{encoder_forward.1} parent=11 // pred_check
          %p380 = pneg %p113
        $region22: #{encoder_forward.1} parent=11 // pred_check_branch
          %382 = sbr.rel (%p380) target = $region24
        $region23: #{encoder_forward.1} parent=11 // pred_region
          _
        $region24: #{encoder_forward.1} parent=11 // pred_fallthru
          _
        // Predicated region
        $region25: #{encoder_forward.1} parent=11 // pred_check
          %p383 = pneg %p134
        $region26: #{encoder_forward.1} parent=11 // pred_check_branch
          %385 = sbr.rel (%p383) target = $region28
        $region27: #{encoder_forward.1} parent=11 // pred_region
          _
        $region28: #{encoder_forward.1} parent=11 // pred_fallthru
          _
        // Predicated region
        $region29: #{encoder_forward.1} parent=11 // pred_check
          %p386 = pneg %p155
        $region30: #{encoder_forward.1} parent=11 // pred_check_branch
          %388 = sbr.rel (%p386) target = $region32
        $region31: #{encoder_forward.1} parent=11 // pred_region
          _
        $region32: #{encoder_forward.1} parent=11 // pred_fallthru
          _
        // Predicated region
        $region33: #{encoder_forward.1} parent=11 // pred_check
          %p389 = pneg %p176
        $region34: #{encoder_forward.1} parent=11 // pred_check_branch
          %391 = sbr.rel (%p389) target = $region36
        $region35: #{encoder_forward.1} parent=11 // pred_region
          _
        $region36: #{encoder_forward.1} parent=11 // pred_fallthru
          _
        // Predicated region
        $region37: #{encoder_forward.1} parent=11 // pred_check
          %p392 = pneg %p197
        $region38: #{encoder_forward.1} parent=11 // pred_check_branch
          %394 = sbr.rel (%p392) target = $region40
        $region39: #{encoder_forward.1} parent=11 // pred_region
          _
        $region40: #{encoder_forward.1} parent=11 // pred_fallthru
          _
        // Predicated region
        $region41: #{encoder_forward.1} parent=11 // pred_check
          %p395 = pneg %p218
        $region42: #{encoder_forward.1} parent=11 // pred_check_branch
          %397 = sbr.rel (%p395) target = $region44
        $region43: #{encoder_forward.1} parent=11 // pred_region
          _
        $region44: #{encoder_forward.1} parent=11 // pred_fallthru
          _
        // Predicated region
        $region45: #{encoder_forward.1} parent=11 // pred_check
          %p398 = pneg %p239
        $region46: #{encoder_forward.1} parent=11 // pred_check_branch
          %400 = sbr.rel (%p398) target = $region48
        $region47: #{encoder_forward.1} parent=11 // pred_region
          _
        $region48: #{encoder_forward.1} parent=11 // pred_fallthru
          _
        // Predicated region
        $region49: #{encoder_forward.1} parent=11 // pred_check
          %p401 = pneg %p260
        $region50: #{encoder_forward.1} parent=11 // pred_check_branch
          %403 = sbr.rel (%p401) target = $region52
        $region51: #{encoder_forward.1} parent=11 // pred_region
          _
        $region52: #{encoder_forward.1} parent=11 // pred_fallthru
          _
        // Predicated region
        $region53: #{encoder_forward.1} parent=11 // pred_check
          %p404 = pneg %p281
        $region54: #{encoder_forward.1} parent=11 // pred_check_branch
          %406 = sbr.rel (%p404) target = $region56
        $region55: #{encoder_forward.1} parent=11 // pred_region
          _
        $region56: #{encoder_forward.1} parent=11 // pred_fallthru
          _
        // Predicated region
        $region57: #{encoder_forward.1} parent=11 // pred_check
          %p407 = pneg %p302
        $region58: #{encoder_forward.1} parent=11 // pred_check_branch
          %409 = sbr.rel (%p407) target = $region60
        $region59: #{encoder_forward.1} parent=11 // pred_region
          _
        $region60: #{encoder_forward.1} parent=11 // pred_fallthru
          _
        // Predicated region
        $region61: #{encoder_forward.1} parent=11 // pred_check
          %p410 = pneg %p323
        $region62: #{encoder_forward.1} parent=11 // pred_check_branch
          %412 = sbr.rel (%p410) target = $region64
        $region63: #{encoder_forward.1} parent=11 // pred_region
          _
        $region64: #{encoder_forward.1} parent=11 // pred_fallthru
          _
      $region12: #{encoder_forward.1} parent=5 // pred_fallthru
        _
      %p413 = scmp.lt.s32.totalorder %s24, 2
      // Predicated region
      $region65: #{encoder_forward.1} parent=5 // pred_check
        %p414 = pneg %p413
      $region66: #{encoder_forward.1} parent=5 // pred_check_branch
        %416 = sbr.rel (%p414) target = $region68
      $region67: #{encoder_forward.1} parent=5 // pred_region
        // Predicated region
        $region69: #{encoder_forward.1} parent=67 // pred_check
          %p417 = pneg %p44
        $region70: #{encoder_forward.1} parent=67 // pred_check_branch
          %419 = sbr.rel (%p417) target = $region72
        $region71: #{encoder_forward.1} parent=67 // pred_region
          %p420 = scmp.lt.s32.totalorder %s24, 1
          %s421 = scalar_select %p420, %s24, 1
          %s422 = smul.addr %s421, 11
          %s423 = smul.addr %s422, 8
          %s424 = scalar_lea.vmem %s0, %s423
        $region72: #{encoder_forward.1} parent=67 // pred_fallthru
          _
      $region68: #{encoder_forward.1} parent=5 // pred_fallthru
        _
      %p425 = scmp.le.s32.totalorder 1, %s24
      %p426 = scmp.lt.s32.totalorder %s24, 3
      %p427 = pnand %p425, %p426
      %p428 = pneg %p427
      // Predicated region
      $region73: #{encoder_forward.1} parent=5 // pred_check
        _
      $region74: #{encoder_forward.1} parent=5 // pred_check_branch
        %430 = sbr.rel (%p427) target = $region76
      $region75: #{encoder_forward.1} parent=5 // pred_region
        %s431 = ssub.s32 %s24, 1
        // Predicated region
        $region77: #{encoder_forward.1} parent=75 // pred_check
          %p432 = pneg %p92
        $region78: #{encoder_forward.1} parent=75 // pred_check_branch
          %434 = sbr.rel (%p432) target = $region80
        $region79: #{encoder_forward.1} parent=75 // pred_region
          %435 = dma.done [#allocation3], 12288
        $region80: #{encoder_forward.1} parent=75 // pred_fallthru
          _
        %p436 = scmp.lt.s32.totalorder %s29, 1
        %s437 = scalar_select %p436, %s29, 1
        %s438 = smul.addr %s437, 11
        %s439 = smul.addr %s438, 8
        %s440 = scalar_lea.vmem %s0, %s439
        %p441 = pneg %p50
        %p442 = pneg %p47
        %p443 = pneg %p71
        %p444 = pneg %p68
        %p445 = pneg %p92
        %p446 = pneg %p89
        %p447 = pneg %p113
        %p448 = pneg %p110
        %p449 = pneg %p134
        %p450 = pneg %p131
        %p451 = pneg %p155
        %p452 = pneg %p152
        %p453 = pneg %p176
        %p454 = pneg %p173
        %p455 = pneg %p197
        %p456 = pneg %p194
        %p457 = pneg %p218
        %p458 = pneg %p215
        %p459 = pneg %p239
        %p460 = pneg %p236
        %p461 = pneg %p260
        %p462 = pneg %p257
        %p463 = pneg %p281
        %p464 = pneg %p278
        %p465 = pneg %p302
        %p466 = pneg %p299
        %p467 = pneg %p323
        %p468 = pneg %p320
        %p469 = pneg %p349
        %p470 = pneg %p346
        %s471 = sand.u32 %s336, 1
        %s472 = scalar_lea.sflag [#allocation4], %s471
        %s473 = sand.u32 %s336, 1
        %s474 = scalar_lea.vmem [#allocation5], %s473
        %p475 = scmp.lt.s32.totalorder %s29, 1
        %s476 = scalar_select %p475, %s29, 1
        %s477 = smul.addr %s476, 11
        %s478 = smul.addr %s477, 8
        %s479 = scalar_lea.vmem %s0, %s478
        %v480 = vld [vmem:[%s479] sm:$0xff]
        %v481 = vld [vmem:[%s479 + $0x8] sm:$0xff]
        %v482 = vld [vmem:[%s479 + $0x10] sm:$0xff]
        %v483 = vld [vmem:[%s479 + $0x18] sm:$0xff]
        %v484 = vld [vmem:[%s479 + $0x20] sm:$0xff]
        %v485 = vld [vmem:[%s479 + $0x28] sm:$0xff]
        %v486 = vld [vmem:[%s479 + $0x30] sm:$0xff]
        %v487 = vld [vmem:[%s479 + $0x38] sm:$0xff]
        %v488 = vld [vmem:[%s479 + $0x40] sm:$0xff]
        %v489 = vld [vmem:[%s479 + $0x48] sm:$0xff]
        %v490 = vld [vmem:[%s479 + $0x50] sm:$0xff]
        %v491 = vld [vmem:[%s1] sm:$0xff]
        %v492 = vld [vmem:[%s1 + $0x8] sm:$0xff]
        %v493 = vld [vmem:[%s1 + $0x10] sm:$0xff]
        %v494 = vld [vmem:[%s1 + $0x18] sm:$0xff]
        %v495 = vld [vmem:[%s1 + $0x20] sm:$0xff]
        %v496 = vld [vmem:[%s1 + $0x28] sm:$0xf]
        %vm497 = vcmask 719872
        %v499 = vsel %vm497, %v491, 0
        %v502 = vsel %vm497, %v492, 0
        %v505 = vsel %vm497, %v493, 0
        %v508 = vsel %vm497, %v494, 0
        %v511 = vsel %vm497, %v495, 0
        %v514 = vsel %vm497, %v496, 0
        %516 = vmatprep.subr.mxu0 0.0
        %517 = vmatpush1.msra.mxu0 %v480
        %518 = vmatprep.subr.mxu0 0.0
        %519 = vmatpush1.msra.mxu0 %v481
        %520 = vmatprep.subr.mxu0 0.0
        %521 = vmatpush1.msra.mxu0 %v482
        %522 = vmatprep.subr.mxu0 0.0
        %523 = vmatpush1.msra.mxu0 %v483
        %524 = vmatprep.subr.mxu0 0.0
        %525 = vmatpush1.msra.mxu0 %v484
        %526 = vmatprep.subr.mxu0 0.0
        %527 = vmatpush1.msra.mxu0 %v485
        %528 = vmatprep.subr.mxu0 0.0
        %529 = vmatpush1.msra.mxu0 %v486
        %530 = vmatprep.subr.mxu0 0.0
        %531 = vmatpush1.msra.mxu0 %v487
        %532 = vmatprep.subr.mxu0 0.0
        %533 = vmatpush1.msra.mxu0 %v488
        %534 = vmatprep.subr.mxu0 0.0
        %535 = vmatpush1.msra.mxu0 %v489
        %536 = vmatprep.subr.mxu0 0.0
        %537 = vmatpush1.msra.mxu0 %v490
        %538 = vmatprep.subr.mxu0 0.0
        %539 = vmatpush1.msra.mxu0 0.0
        %540 = vmatprep.subr.mxu0 0.0
        %541 = vmatpush1.msra.mxu0 0.0
        %542 = vmatprep.subr.mxu0 0.0
        %543 = vmatpush1.msra.mxu0 0.0
        %544 = vmatprep.subr.mxu0 0.0
        %545 = vmatpush1.msra.mxu0 0.0
        %546 = vmatprep.subr.mxu0 0.0
        %547 = vmatpush1.msra.mxu0 0.0
        %548 = vmatprep.subr.mxu0 0.0
        %549 = vmatpush1.msra.mxu0 0.0
        %550 = vmatprep.subr.mxu0 0.0
        %551 = vmatpush1.msra.mxu0 0.0
        %552 = vmatprep.subr.mxu0 0.0
        %553 = vmatpush1.msra.mxu0 0.0
        %554 = vmatprep.subr.mxu0 0.0
        %555 = vmatpush1.msra.mxu0 0.0
        %556 = vmatprep.subr.mxu0 0.0
        %557 = vmatpush1.msra.mxu0 0.0
        %558 = vmatprep.subr.mxu0 0.0
        %559 = vmatpush1.msra.mxu0 0.0
        %560 = vmatprep.subr.mxu0 0.0
        %561 = vmatpush1.msra.mxu0 0.0
        %562 = vmatprep.subr.mxu0 0.0
        %563 = vmatpush1.msra.mxu0 0.0
        %564 = vmatprep.subr.mxu0 0.0
        %565 = vmatpush1.msra.mxu0 0.0
        %566 = vmatprep.subr.mxu0 0.0
        %567 = vmatpush1.msra.mxu0 0.0
        %568 = vmatprep.subr.mxu0 0.0
        %569 = vmatpush1.msra.mxu0 0.0
        %570 = vmatprep.subr.mxu0 0.0
        %571 = vmatpush1.msra.mxu0 0.0
        %572 = vmatprep.subr.mxu0 0.0
        %573 = vmatpush1.msra.mxu0 0.0
        %574 = vmatprep.subr.mxu0 0.0
        %575 = vmatpush1.msra.mxu0 0.0
        %576 = vmatprep.subr.mxu0 0.0
        %577 = vmatpush1.msra.mxu0 0.0
        %578 = vmatprep.subr.mxu0 0.0
        %579 = vmatpush1.msra.mxu0 0.0
        %580 = vmatprep.mubr.f32.mxu0 0.0
        %581 = vmatmul.mubr.f32.gmra.mrb[0].mxu0 %v499
        %v582 = vpop.f32.mrb[0].mxu0
        %v583 = vadd.f32 0.0, %v582
        %v584 = vpop.f32.mrb[0].mxu0
        %585 = vmatprep.mubr.f32.mxu0 0.0
        %586 = vmatmul.mubr.f32.gmra.mrb[0].mxu0 %v502
        %v587 = vpop.f32.mrb[0].mxu0
        %v588 = vadd.f32 0.0, %v587
        %v589 = vpop.f32.mrb[0].mxu0
        %590 = vmatprep.mubr.f32.mxu0 0.0
        %591 = vmatmul.mubr.f32.gmra.mrb[0].mxu0 %v505
        %v592 = vpop.f32.mrb[0].mxu0
        %v593 = vadd.f32 0.0, %v592
        %v594 = vpop.f32.mrb[0].mxu0
        %595 = vmatprep.mubr.f32.mxu0 0.0
        %596 = vmatmul.mubr.f32.gmra.mrb[0].mxu0 %v508
        %v597 = vpop.f32.mrb[0].mxu0
        %v598 = vadd.f32 0.0, %v597
        %v599 = vpop.f32.mrb[0].mxu0
        %600 = vmatprep.mubr.f32.mxu0 0.0
        %601 = vmatmul.mubr.f32.gmra.mrb[0].mxu0 %v511
        %v602 = vpop.f32.mrb[0].mxu0
        %v603 = vadd.f32 0.0, %v602
        %v604 = vpop.f32.mrb[0].mxu0
        %605 = vmatprep.mubr.f32.mxu0 0.0
        %606 = vmatmul.mubr.f32.gmra.mrb[0].mxu0 %v514
        %v607 = vpop.f32.mrb[0].mxu0
        %v608 = vadd.f32 0.0, %v607
        %v609 = vpop.f32.mrb[0].mxu0
        %610 = vdwg.mxu0
        %v611 = vld [vmem:[#allocation2] sm:$0xff]
        %v612 = vld [vmem:[#allocation2 + $0x8] sm:$0xff]
        %v613 = vld [vmem:[#allocation2 + $0x10] sm:$0xff]
        %v614 = vld [vmem:[#allocation2 + $0x18] sm:$0xff]
        %v615 = vld [vmem:[#allocation2 + $0x20] sm:$0xff]
        %v616 = vld [vmem:[#allocation2 + $0x28] sm:$0xff]
        %v617 = vld [vmem:[#allocation2 + $0x30] sm:$0xff]
        %v618 = vld [vmem:[#allocation2 + $0x38] sm:$0xff]
        %v619 = vld [vmem:[#allocation2 + $0x40] sm:$0xff]
        %v620 = vld [vmem:[#allocation2 + $0x48] sm:$0xff]
        %v621 = vld [vmem:[#allocation2 + $0x50] sm:$0xff]
        %v622 = vld [vmem:[#allocation2 + $0x58] sm:$0xff]
        %v623 = vld [vmem:[#allocation2 + $0x60] sm:$0xff]
        %v624 = vld [vmem:[#allocation2 + $0x68] sm:$0xff]
        %v625 = vld [vmem:[#allocation2 + $0x70] sm:$0xff]
        %v626 = vld [vmem:[#allocation2 + $0x78] sm:$0xff]
        %v627 = vld [vmem:[#allocation2 + $0x80] sm:$0xff]
        %v628 = vld [vmem:[#allocation2 + $0x88] sm:$0xff]
        %v629 = vld [vmem:[#allocation2 + $0x90] sm:$0xff]
        %v630 = vld [vmem:[#allocation2 + $0x98] sm:$0xff]
        %v631 = vld [vmem:[#allocation2 + $0xa0] sm:$0xff]
        %v632 = vld [vmem:[#allocation2 + $0xa8] sm:$0xff]
        %v633 = vld [vmem:[#allocation2 + $0xb0] sm:$0xff]
        %v634 = vld [vmem:[#allocation2 + $0xb8] sm:$0xff]
        %v635 = vld [vmem:[#allocation2 + $0xc0] sm:$0xff]
        %v636 = vld [vmem:[#allocation2 + $0xc8] sm:$0xff]
        %v637 = vld [vmem:[#allocation2 + $0xd0] sm:$0xff]
        %v638 = vld [vmem:[#allocation2 + $0xd8] sm:$0xff]
        %v639 = vld [vmem:[#allocation2 + $0xe0] sm:$0xff]
        %v640 = vld [vmem:[#allocation2 + $0xe8] sm:$0xff]
        %v641 = vld [vmem:[#allocation2 + $0xf0] sm:$0xff]
        %v642 = vld [vmem:[#allocation2 + $0xf8] sm:$0xff]
        %v643 = vunpack.c.l.bf16 %v611
        %v644 = vunpack.c.h.bf16 %v611
        %v645 = vunpack.c.l.bf16 %v612
        %v646 = vunpack.c.h.bf16 %v612
        %v647 = vunpack.c.l.bf16 %v613
        %v648 = vunpack.c.h.bf16 %v613
        %v649 = vunpack.c.l.bf16 %v614
        %v650 = vunpack.c.h.bf16 %v614
        %v651 = vunpack.c.l.bf16 %v615
        %v652 = vunpack.c.h.bf16 %v615
        %v653 = vunpack.c.l.bf16 %v616
        %v654 = vunpack.c.h.bf16 %v616
        %v655 = vunpack.c.l.bf16 %v617
        %v656 = vunpack.c.h.bf16 %v617
        %v657 = vunpack.c.l.bf16 %v618
        %v658 = vunpack.c.h.bf16 %v618
        %v659 = vunpack.c.l.bf16 %v619
        %v660 = vunpack.c.h.bf16 %v619
        %v661 = vunpack.c.l.bf16 %v620
        %v662 = vunpack.c.h.bf16 %v620
        %v663 = vunpack.c.l.bf16 %v621
        %v664 = vunpack.c.h.bf16 %v621
        %v665 = vunpack.c.l.bf16 %v622
        %v666 = vunpack.c.h.bf16 %v622
        %v667 = vunpack.c.l.bf16 %v623
        %v668 = vunpack.c.h.bf16 %v623
        %v669 = vunpack.c.l.bf16 %v624
        %v670 = vunpack.c.h.bf16 %v624
        %v671 = vunpack.c.l.bf16 %v625
        %v672 = vunpack.c.h.bf16 %v625
        %v673 = vunpack.c.l.bf16 %v626
        %v674 = vunpack.c.h.bf16 %v626
        %v675 = vunpack.c.l.bf16 %v627
        %v676 = vunpack.c.h.bf16 %v627
        %v677 = vunpack.c.l.bf16 %v628
        %v678 = vunpack.c.h.bf16 %v628
        %v679 = vunpack.c.l.bf16 %v629
        %v680 = vunpack.c.h.bf16 %v629
        %v681 = vunpack.c.l.bf16 %v630
        %v682 = vunpack.c.h.bf16 %v630
        %v683 = vunpack.c.l.bf16 %v631
        %v684 = vunpack.c.h.bf16 %v631
        %v685 = vunpack.c.l.bf16 %v632
        %v686 = vunpack.c.h.bf16 %v632
        %v687 = vunpack.c.l.bf16 %v633
        %v688 = vunpack.c.h.bf16 %v633
        %v689 = vunpack.c.l.bf16 %v634
        %v690 = vunpack.c.h.bf16 %v634
        %v691 = vunpack.c.l.bf16 %v635
        %v692 = vunpack.c.h.bf16 %v635
        %v693 = vunpack.c.l.bf16 %v636
        %v694 = vunpack.c.h.bf16 %v636
        %v695 = vunpack.c.l.bf16 %v637
        %v696 = vunpack.c.h.bf16 %v637
        %v697 = vunpack.c.l.bf16 %v638
        %v698 = vunpack.c.h.bf16 %v638
        %v699 = vunpack.c.l.bf16 %v639
        %v700 = vunpack.c.h.bf16 %v639
        %v701 = vunpack.c.l.bf16 %v640
        %v702 = vunpack.c.h.bf16 %v640
        %v703 = vunpack.c.l.bf16 %v641
        %v704 = vunpack.c.h.bf16 %v641
        %v705 = vunpack.c.l.bf16 %v642
        %v706 = vunpack.c.h.bf16 %v642
        %s707 = scalar_lea.vmem %s1, 48
        %v708 = vld [vmem:[%s707] sm:$0xff]
        %v709 = vld [vmem:[%s707 + $0x8] sm:$0xff]
        %v710 = vld [vmem:[%s707 + $0x10] sm:$0xff]
        %v711 = vld [vmem:[%s707 + $0x18] sm:$0xff]
        %v712 = vld [vmem:[%s707 + $0x20] sm:$0xff]
        %v713 = vld [vmem:[%s707 + $0x28] sm:$0xf]
        %v715 = vsel %vm497, %v708, 0
        %v718 = vsel %vm497, %v709, 0
        %v721 = vsel %vm497, %v710, 0
        %v724 = vsel %vm497, %v711, 0
        %v727 = vsel %vm497, %v712, 0
        %v730 = vsel %vm497, %v713, 0
        %732 = vmatprep.subr.mxu0 0.0
        %733 = vmatpush1.msra.mxu0 %v480
        %734 = vmatprep.subr.mxu0 0.0
        %735 = vmatpush1.msra.mxu0 %v481
        %736 = vmatprep.subr.mxu0 0.0
        %737 = vmatpush1.msra.mxu0 %v482
        %738 = vmatprep.subr.mxu0 0.0
        %739 = vmatpush1.msra.mxu0 %v483
        %740 = vmatprep.subr.mxu0 0.0
        %741 = vmatpush1.msra.mxu0 %v484
        %742 = vmatprep.subr.mxu0 0.0
        %743 = vmatpush1.msra.mxu0 %v485
        %744 = vmatprep.subr.mxu0 0.0
        %745 = vmatpush1.msra.mxu0 %v486
        %746 = vmatprep.subr.mxu0 0.0
        %747 = vmatpush1.msra.mxu0 %v487
        %748 = vmatprep.subr.mxu0 0.0
        %749 = vmatpush1.msra.mxu0 %v488
        %750 = vmatprep.subr.mxu0 0.0
        %751 = vmatpush1.msra.mxu0 %v489
        %752 = vmatprep.subr.mxu0 0.0
        %753 = vmatpush1.msra.mxu0 %v490
        %754 = vmatprep.subr.mxu0 0.0
        %755 = vmatpush1.msra.mxu0 0.0
        %756 = vmatprep.subr.mxu0 0.0
        %757 = vmatpush1.msra.mxu0 0.0
        %758 = vmatprep.subr.mxu0 0.0
        %759 = vmatpush1.msra.mxu0 0.0
        %760 = vmatprep.subr.mxu0 0.0
        %761 = vmatpush1.msra.mxu0 0.0
        %762 = vmatprep.subr.mxu0 0.0
        %763 = vmatpush1.msra.mxu0 0.0
        %764 = vmatprep.subr.mxu0 0.0
        %765 = vmatpush1.msra.mxu0 0.0
        %766 = vmatprep.subr.mxu0 0.0
        %767 = vmatpush1.msra.mxu0 0.0
        %768 = vmatprep.subr.mxu0 0.0
        %769 = vmatpush1.msra.mxu0 0.0
        %770 = vmatprep.subr.mxu0 0.0
        %771 = vmatpush1.msra.mxu0 0.0
        %772 = vmatprep.subr.mxu0 0.0
        %773 = vmatpush1.msra.mxu0 0.0
        %774 = vmatprep.subr.mxu0 0.0
        %775 = vmatpush1.msra.mxu0 0.0
        %776 = vmatprep.subr.mxu0 0.0
        %777 = vmatpush1.msra.mxu0 0.0
        %778 = vmatprep.subr.mxu0 0.0
        %779 = vmatpush1.msra.mxu0 0.0
        %780 = vmatprep.subr.mxu0 0.0
        %781 = vmatpush1.msra.mxu0 0.0
        %782 = vmatprep.subr.mxu0 0.0
        %783 = vmatpush1.msra.mxu0 0.0
        %784 = vmatprep.subr.mxu0 0.0
        %785 = vmatpush1.msra.mxu0 0.0
        %786 = vmatprep.subr.mxu0 0.0
        %787 = vmatpush1.msra.mxu0 0.0
        %788 = vmatprep.subr.mxu0 0.0
        %789 = vmatpush1.msra.mxu0 0.0
        %790 = vmatprep.subr.mxu0 0.0
        %791 = vmatpush1.msra.mxu0 0.0
        %792 = vmatprep.subr.mxu0 0.0
        %793 = vmatpush1.msra.mxu0 0.0
        %794 = vmatprep.subr.mxu0 0.0
        %795 = vmatpush1.msra.mxu0 0.0
        %796 = vmatprep.mubr.f32.mxu0 0.0
        %797 = vmatmul.mubr.f32.gmra.mrb[0].mxu0 %v715
        %v798 = vpop.f32.mrb[0].mxu0
        %v799 = vadd.f32 0.0, %v798
        %v800 = vpop.f32.mrb[0].mxu0
        %801 = vmatprep.mubr.f32.mxu0 0.0
        %802 = vmatmul.mubr.f32.gmra.mrb[0].mxu0 %v718
        %v803 = vpop.f32.mrb[0].mxu0
        %v804 = vadd.f32 0.0, %v803
        %v805 = vpop.f32.mrb[0].mxu0
        %806 = vmatprep.mubr.f32.mxu0 0.0
        %807 = vmatmul.mubr.f32.gmra.mrb[0].mxu0 %v721
        %v808 = vpop.f32.mrb[0].mxu0
        %v809 = vadd.f32 0.0, %v808
        %v810 = vpop.f32.mrb[0].mxu0
        %811 = vmatprep.mubr.f32.mxu0 0.0
        %812 = vmatmul.mubr.f32.gmra.mrb[0].mxu0 %v724
        %v813 = vpop.f32.mrb[0].mxu0
        %v814 = vadd.f32 0.0, %v813
        %v815 = vpop.f32.mrb[0].mxu0
        %816 = vmatprep.mubr.f32.mxu0 0.0
        %817 = vmatmul.mubr.f32.gmra.mrb[0].mxu0 %v727
        %v818 = vpop.f32.mrb[0].mxu0
        %v819 = vadd.f32 0.0, %v818
        %v820 = vpop.f32.mrb[0].mxu0
        %821 = vmatprep.mubr.f32.mxu0 0.0
        %822 = vmatmul.mubr.f32.gmra.mrb[0].mxu0 %v730
        %v823 = vpop.f32.mrb[0].mxu0
        %v824 = vadd.f32 0.0, %v823
        %v825 = vpop.f32.mrb[0].mxu0
        %826 = vdwg.mxu0
        %s827 = scalar_lea.vmem [#allocation2], 256
        %v828 = vld [vmem:[%s827] sm:$0xff]
        %v829 = vld [vmem:[%s827 + $0x8] sm:$0xff]
        %v830 = vld [vmem:[%s827 + $0x10] sm:$0xff]
        %v831 = vld [vmem:[%s827 + $0x18] sm:$0xff]
        %v832 = vld [vmem:[%s827 + $0x20] sm:$0xff]
        %v833 = vld [vmem:[%s827 + $0x28] sm:$0xff]
        %v834 = vld [vmem:[%s827 + $0x30] sm:$0xff]
        %v835 = vld [vmem:[%s827 + $0x38] sm:$0xff]
        %v836 = vld [vmem:[%s827 + $0x40] sm:$0xff]
        %v837 = vld [vmem:[%s827 + $0x48] sm:$0xff]
        %v838 = vld [vmem:[%s827 + $0x50] sm:$0xff]
        %v839 = vld [vmem:[%s827 + $0x58] sm:$0xff]
        %v840 = vld [vmem:[%s827 + $0x60] sm:$0xff]
        %v841 = vld [vmem:[%s827 + $0x68] sm:$0xff]
        %v842 = vld [vmem:[%s827 + $0x70] sm:$0xff]
        %v843 = vld [vmem:[%s827 + $0x78] sm:$0xff]
        %v844 = vld [vmem:[%s827 + $0x80] sm:$0xff]
        %v845 = vld [vmem:[%s827 + $0x88] sm:$0xff]
        %v846 = vld [vmem:[%s827 + $0x90] sm:$0xff]
        %v847 = vld [vmem:[%s827 + $0x98] sm:$0xff]
        %v848 = vld [vmem:[%s827 + $0xa0] sm:$0xff]
        %v849 = vld [vmem:[%s827 + $0xa8] sm:$0xff]
        %v850 = vld [vmem:[%s827 + $0xb0] sm:$0xff]
        %v851 = vld [vmem:[%s827 + $0xb8] sm:$0xff]
        %v852 = vld [vmem:[%s827 + $0xc0] sm:$0xff]
        %v853 = vld [vmem:[%s827 + $0xc8] sm:$0xff]
        %v854 = vld [vmem:[%s827 + $0xd0] sm:$0xff]
        %v855 = vld [vmem:[%s827 + $0xd8] sm:$0xff]
        %v856 = vld [vmem:[%s827 + $0xe0] sm:$0xff]
        %v857 = vld [vmem:[%s827 + $0xe8] sm:$0xff]
        %v858 = vld [vmem:[%s827 + $0xf0] sm:$0xff]
        %v859 = vld [vmem:[%s827 + $0xf8] sm:$0xff]
        %v860 = vunpack.c.l.bf16 %v828
        %v861 = vunpack.c.h.bf16 %v828
        %v862 = vunpack.c.l.bf16 %v829
        %v863 = vunpack.c.h.bf16 %v829
        %v864 = vunpack.c.l.bf16 %v830
        %v865 = vunpack.c.h.bf16 %v830
        %v866 = vunpack.c.l.bf16 %v831
        %v867 = vunpack.c.h.bf16 %v831
        %v868 = vunpack.c.l.bf16 %v832
        %v869 = vunpack.c.h.bf16 %v832
        %v870 = vunpack.c.l.bf16 %v833
        %v871 = vunpack.c.h.bf16 %v833
        %v872 = vunpack.c.l.bf16 %v834
        %v873 = vunpack.c.h.bf16 %v834
        %v874 = vunpack.c.l.bf16 %v835
        %v875 = vunpack.c.h.bf16 %v835
        %v876 = vunpack.c.l.bf16 %v836
        %v877 = vunpack.c.h.bf16 %v836
        %v878 = vunpack.c.l.bf16 %v837
        %v879 = vunpack.c.h.bf16 %v837
        %v880 = vunpack.c.l.bf16 %v838
        %v881 = vunpack.c.h.bf16 %v838
        %v882 = vunpack.c.l.bf16 %v839
        %v883 = vunpack.c.h.bf16 %v839
        %v884 = vunpack.c.l.bf16 %v840
        %v885 = vunpack.c.h.bf16 %v840
        %v886 = vunpack.c.l.bf16 %v841
        %v887 = vunpack.c.h.bf16 %v841
        %v888 = vunpack.c.l.bf16 %v842
        %v889 = vunpack.c.h.bf16 %v842
        %v890 = vunpack.c.l.bf16 %v843
        %v891 = vunpack.c.h.bf16 %v843
        %v892 = vunpack.c.l.bf16 %v844
        %v893 = vunpack.c.h.bf16 %v844
        %v894 = vunpack.c.l.bf16 %v845
        %v895 = vunpack.c.h.bf16 %v845
        %v896 = vunpack.c.l.bf16 %v846
        %v897 = vunpack.c.h.bf16 %v846
        %v898 = vunpack.c.l.bf16 %v847
        %v899 = vunpack.c.h.bf16 %v847
        %v900 = vunpack.c.l.bf16 %v848
        %v901 = vunpack.c.h.bf16 %v848
        %v902 = vunpack.c.l.bf16 %v849
        %v903 = vunpack.c.h.bf16 %v849
        %v904 = vunpack.c.l.bf16 %v850
        %v905 = vunpack.c.h.bf16 %v850
        %v906 = vunpack.c.l.bf16 %v851
        %v907 = vunpack.c.h.bf16 %v851
        %v908 = vunpack.c.l.bf16 %v852
        %v909 = vunpack.c.h.bf16 %v852
        %v910 = vunpack.c.l.bf16 %v853
        %v911 = vunpack.c.h.bf16 %v853
        %v912 = vunpack.c.l.bf16 %v854
        %v913 = vunpack.c.h.bf16 %v854
        %v914 = vunpack.c.l.bf16 %v855
        %v915 = vunpack.c.h.bf16 %v855
        %v916 = vunpack.c.l.bf16 %v856
        %v917 = vunpack.c.h.bf16 %v856
        %v918 = vunpack.c.l.bf16 %v857
        %v919 = vunpack.c.h.bf16 %v857
        %v920 = vunpack.c.l.bf16 %v858
        %v921 = vunpack.c.h.bf16 %v858
        %v922 = vunpack.c.l.bf16 %v859
        %v923 = vunpack.c.h.bf16 %v859
        %924 = vmatprep.subr.mxu0 %v861
        %925 = vmatpush1.msra.mxu0 %v860
        %926 = vmatprep.subr.mxu0 %v865
        %927 = vmatpush1.msra.mxu0 %v864
        %928 = vmatprep.subr.mxu0 %v869
        %929 = vmatpush1.msra.mxu0 %v868
        %930 = vmatprep.subr.mxu0 %v873
        %931 = vmatpush1.msra.mxu0 %v872
        %932 = vmatprep.subr.mxu0 %v877
        %933 = vmatpush1.msra.mxu0 %v876
        %934 = vmatprep.subr.mxu0 %v881
        %935 = vmatpush1.msra.mxu0 %v880
        %936 = vmatprep.subr.mxu0 %v885
        %937 = vmatpush1.msra.mxu0 %v884
        %938 = vmatprep.subr.mxu0 %v889
        %939 = vmatpush1.msra.mxu0 %v888
        %940 = vmatprep.subr.mxu0 %v893
        %941 = vmatpush1.msra.mxu0 %v892
        %942 = vmatprep.subr.mxu0 %v897
        %943 = vmatpush1.msra.mxu0 %v896
        %944 = vmatprep.subr.mxu0 %v901
        %945 = vmatpush1.msra.mxu0 %v900
        %946 = vmatprep.subr.mxu0 %v905
        %947 = vmatpush1.msra.mxu0 %v904
        %948 = vmatprep.subr.mxu0 %v909
        %949 = vmatpush1.msra.mxu0 %v908
        %950 = vmatprep.subr.mxu0 %v913
        %951 = vmatpush1.msra.mxu0 %v912
        %952 = vmatprep.subr.mxu0 %v917
        %953 = vmatpush1.msra.mxu0 %v916
        %954 = vmatprep.subr.mxu0 %v921
        %955 = vmatpush1.msra.mxu0 %v920
        %956 = vmatprep.subr.mxu0 0.0
        %957 = vmatpush1.msra.mxu0 0.0
        %958 = vmatprep.subr.mxu0 0.0
        %959 = vmatpush1.msra.mxu0 0.0
        %960 = vmatprep.subr.mxu0 0.0
        %961 = vmatpush1.msra.mxu0 0.0
        %962 = vmatprep.subr.mxu0 0.0
        %963 = vmatpush1.msra.mxu0 0.0
        %964 = vmatprep.subr.mxu0 0.0
        %965 = vmatpush1.msra.mxu0 0.0
        %966 = vmatprep.subr.mxu0 0.0
        %967 = vmatpush1.msra.mxu0 0.0
        %968 = vmatprep.subr.mxu0 0.0
        %969 = vmatpush1.msra.mxu0 0.0
        %970 = vmatprep.subr.mxu0 0.0
        %971 = vmatpush1.msra.mxu0 0.0
        %972 = vmatprep.subr.mxu0 0.0
        %973 = vmatpush1.msra.mxu0 0.0
        %974 = vmatprep.subr.mxu0 0.0
        %975 = vmatpush1.msra.mxu0 0.0
        %976 = vmatprep.subr.mxu0 0.0
        %977 = vmatpush1.msra.mxu0 0.0
        %978 = vmatprep.subr.mxu0 0.0
        %979 = vmatpush1.msra.mxu0 0.0
        %980 = vmatprep.subr.mxu0 0.0
        %981 = vmatpush1.msra.mxu0 0.0
        %982 = vmatprep.subr.mxu0 0.0
        %983 = vmatpush1.msra.mxu0 0.0
        %984 = vmatprep.subr.mxu0 0.0
        %985 = vmatpush1.msra.mxu0 0.0
        %986 = vmatprep.subr.mxu0 0.0
        %987 = vmatpush1.msra.mxu0 0.0
        %988 = vmatprep.mubr.f32.mxu0 0.0
        %989 = vmatmul.mubr.f32.gmra.mrb[0].mxu0 %v799
        %v990 = vpop.f32.mrb[0].mxu0
        %v991 = vadd.f32 0.0, %v990
        %v992 = vpop.f32.mrb[0].mxu0
        %v993 = vadd.f32 0.0, %v992
        %994 = vmatprep.mubr.f32.mxu0 0.0
        %995 = vmatmul.mubr.f32.gmra.mrb[0].mxu0 %v804
        %v996 = vpop.f32.mrb[0].mxu0
        %v997 = vadd.f32 0.0, %v996
        %v998 = vpop.f32.mrb[0].mxu0
        %v999 = vadd.f32 0.0, %v998
        %1000 = vmatprep.mubr.f32.mxu0 0.0
        %1001 = vmatmul.mubr.f32.gmra.mrb[0].mxu0 %v809
        %v1002 = vpop.f32.mrb[0].mxu0
        %v1003 = vadd.f32 0.0, %v1002
        %v1004 = vpop.f32.mrb[0].mxu0
        %v1005 = vadd.f32 0.0, %v1004
        %1006 = vmatprep.mubr.f32.mxu0 0.0
        %1007 = vmatmul.mubr.f32.gmra.mrb[0].mxu0 %v814
        %v1008 = vpop.f32.mrb[0].mxu0
        %v1009 = vadd.f32 0.0, %v1008
        %v1010 = vpop.f32.mrb[0].mxu0
        %v1011 = vadd.f32 0.0, %v1010
        %1012 = vmatprep.mubr.f32.mxu0 0.0
        %1013 = vmatmul.mubr.f32.gmra.mrb[0].mxu0 %v819
        %v1014 = vpop.f32.mrb[0].mxu0
        %v1015 = vadd.f32 0.0, %v1014
        %v1016 = vpop.f32.mrb[0].mxu0
        %v1017 = vadd.f32 0.0, %v1016
        %1018 = vmatprep.mubr.f32.mxu0 0.0
        %1019 = vmatmul.mubr.f32.gmra.mrb[0].mxu0 %v824
        %v1020 = vpop.f32.mrb[0].mxu0
        %v1021 = vadd.f32 0.0, %v1020
        %v1022 = vpop.f32.mrb[0].mxu0
        %v1023 = vadd.f32 0.0, %v1022
        %1024 = vdwg.mxu0
        %1025 = vmatprep.subr.mxu0 %v863
        %1026 = vmatpush1.msra.mxu0 %v862
        %1027 = vmatprep.subr.mxu0 %v867
        %1028 = vmatpush1.msra.mxu0 %v866
        %1029 = vmatprep.subr.mxu0 %v871
        %1030 = vmatpush1.msra.mxu0 %v870
        %1031 = vmatprep.subr.mxu0 %v875
        %1032 = vmatpush1.msra.mxu0 %v874
        %1033 = vmatprep.subr.mxu0 %v879
        %1034 = vmatpush1.msra.mxu0 %v878
        %1035 = vmatprep.subr.mxu0 %v883
        %1036 = vmatpush1.msra.mxu0 %v882
        %1037 = vmatprep.subr.mxu0 %v887
        %1038 = vmatpush1.msra.mxu0 %v886
        %1039 = vmatprep.subr.mxu0 %v891
        %1040 = vmatpush1.msra.mxu0 %v890
        %1041 = vmatprep.subr.mxu0 %v895
        %1042 = vmatpush1.msra.mxu0 %v894
        %1043 = vmatprep.subr.mxu0 %v899
        %1044 = vmatpush1.msra.mxu0 %v898
        %1045 = vmatprep.subr.mxu0 %v903
        %1046 = vmatpush1.msra.mxu0 %v902
        %1047 = vmatprep.subr.mxu0 %v907
        %1048 = vmatpush1.msra.mxu0 %v906
        %1049 = vmatprep.subr.mxu0 %v911
        %1050 = vmatpush1.msra.mxu0 %v910
        %1051 = vmatprep.subr.mxu0 %v915
        %1052 = vmatpush1.msra.mxu0 %v914
        %1053 = vmatprep.subr.mxu0 %v919
        %1054 = vmatpush1.msra.mxu0 %v918
        %1055 = vmatprep.subr.mxu0 %v923
        %1056 = vmatpush1.msra.mxu0 %v922
        %1057 = vmatprep.subr.mxu0 0.0
        %1058 = vmatpush1.msra.mxu0 0.0
        %1059 = vmatprep.subr.mxu0 0.0
        %1060 = vmatpush1.msra.mxu0 0.0
        %1061 = vmatprep.subr.mxu0 0.0
        %1062 = vmatpush1.msra.mxu0 0.0
        %1063 = vmatprep.subr.mxu0 0.0
        %1064 = vmatpush1.msra.mxu0 0.0
        %1065 = vmatprep.subr.mxu0 0.0
        %1066 = vmatpush1.msra.mxu0 0.0
        %1067 = vmatprep.subr.mxu0 0.0
        %1068 = vmatpush1.msra.mxu0 0.0
        %1069 = vmatprep.subr.mxu0 0.0
        %1070 = vmatpush1.msra.mxu0 0.0
        %1071 = vmatprep.subr.mxu0 0.0
        %1072 = vmatpush1.msra.mxu0 0.0
        %1073 = vmatprep.subr.mxu0 0.0
        %1074 = vmatpush1.msra.mxu0 0.0
        %1075 = vmatprep.subr.mxu0 0.0
        %1076 = vmatpush1.msra.mxu0 0.0
        %1077 = vmatprep.subr.mxu0 0.0
        %1078 = vmatpush1.msra.mxu0 0.0
        %1079 = vmatprep.subr.mxu0 0.0
        %1080 = vmatpush1.msra.mxu0 0.0
        %1081 = vmatprep.subr.mxu0 0.0
        %1082 = vmatpush1.msra.mxu0 0.0
        %1083 = vmatprep.subr.mxu0 0.0
        %1084 = vmatpush1.msra.mxu0 0.0
        %1085 = vmatprep.subr.mxu0 0.0
        %1086 = vmatpush1.msra.mxu0 0.0
        %1087 = vmatprep.subr.mxu0 0.0
        %1088 = vmatpush1.msra.mxu0 0.0
        %1089 = vmatprep.mubr.f32.mxu0 0.0
        %1090 = vmatmul.mubr.f32.gmra.mrb[0].mxu0 %v799
        %v1091 = vpop.f32.mrb[0].mxu0
        %v1092 = vadd.f32 0.0, %v1091
        %v1093 = vpop.f32.mrb[0].mxu0
        %v1094 = vadd.f32 0.0, %v1093
        %1095 = vmatprep.mubr.f32.mxu0 0.0
        %1096 = vmatmul.mubr.f32.gmra.mrb[0].mxu0 %v804
        %v1097 = vpop.f32.mrb[0].mxu0
        %v1098 = vadd.f32 0.0, %v1097
        %v1099 = vpop.f32.mrb[0].mxu0
        %v1100 = vadd.f32 0.0, %v1099
        %1101 = vmatprep.mubr.f32.mxu0 0.0
        %1102 = vmatmul.mubr.f32.gmra.mrb[0].mxu0 %v809
        %v1103 = vpop.f32.mrb[0].mxu0
        %v1104 = vadd.f32 0.0, %v1103
        %v1105 = vpop.f32.mrb[0].mxu0
        %v1106 = vadd.f32 0.0, %v1105
        %1107 = vmatprep.mubr.f32.mxu0 0.0
        %1108 = vmatmul.mubr.f32.gmra.mrb[0].mxu0 %v814
        %v1109 = vpop.f32.mrb[0].mxu0
        %v1110 = vadd.f32 0.0, %v1109
        %v1111 = vpop.f32.mrb[0].mxu0
        %v1112 = vadd.f32 0.0, %v1111
        %1113 = vmatprep.mubr.f32.mxu0 0.0
        %1114 = vmatmul.mubr.f32.gmra.mrb[0].mxu0 %v819
        %v1115 = vpop.f32.mrb[0].mxu0
        %v1116 = vadd.f32 0.0, %v1115
        %v1117 = vpop.f32.mrb[0].mxu0
        %v1118 = vadd.f32 0.0, %v1117
        %1119 = vmatprep.mubr.f32.mxu0 0.0
        %1120 = vmatmul.mubr.f32.gmra.mrb[0].mxu0 %v824
        %v1121 = vpop.f32.mrb[0].mxu0
        %v1122 = vadd.f32 0.0, %v1121
        %v1123 = vpop.f32.mrb[0].mxu0
        %v1124 = vadd.f32 0.0, %v1123
        %1125 = vdwg.mxu0
        %1126 = vmatprep.subr.mxu0 %v644
        %1127 = vmatpush1.msra.mxu0 %v643
        %1128 = vmatprep.subr.mxu0 %v648
        %1129 = vmatpush1.msra.mxu0 %v647
        %1130 = vmatprep.subr.mxu0 %v652
        %1131 = vmatpush1.msra.mxu0 %v651
        %1132 = vmatprep.subr.mxu0 %v656
        %1133 = vmatpush1.msra.mxu0 %v655
        %1134 = vmatprep.subr.mxu0 %v660
        %1135 = vmatpush1.msra.mxu0 %v659
        %1136 = vmatprep.subr.mxu0 %v664
        %1137 = vmatpush1.msra.mxu0 %v663
        %1138 = vmatprep.subr.mxu0 %v668
        %1139 = vmatpush1.msra.mxu0 %v667
        %1140 = vmatprep.subr.mxu0 %v672
        %1141 = vmatpush1.msra.mxu0 %v671
        %1142 = vmatprep.subr.mxu0 %v676
        %1143 = vmatpush1.msra.mxu0 %v675
        %1144 = vmatprep.subr.mxu0 %v680
        %1145 = vmatpush1.msra.mxu0 %v679
        %1146 = vmatprep.subr.mxu0 %v684
        %1147 = vmatpush1.msra.mxu0 %v683
        %1148 = vmatprep.subr.mxu0 %v688
        %1149 = vmatpush1.msra.mxu0 %v687
        %1150 = vmatprep.subr.mxu0 %v692
        %1151 = vmatpush1.msra.mxu0 %v691
        %1152 = vmatprep.subr.mxu0 %v696
        %1153 = vmatpush1.msra.mxu0 %v695
        %1154 = vmatprep.subr.mxu0 %v700
        %1155 = vmatpush1.msra.mxu0 %v699
        %1156 = vmatprep.subr.mxu0 %v704
        %1157 = vmatpush1.msra.mxu0 %v703
        %1158 = vmatprep.subr.mxu0 0.0
        %1159 = vmatpush1.msra.mxu0 0.0
        %1160 = vmatprep.subr.mxu0 0.0
        %1161 = vmatpush1.msra.mxu0 0.0
        %1162 = vmatprep.subr.mxu0 0.0
        %1163 = vmatpush1.msra.mxu0 0.0
        %1164 = vmatprep.subr.mxu0 0.0
        %1165 = vmatpush1.msra.mxu0 0.0
        %1166 = vmatprep.subr.mxu0 0.0
        %1167 = vmatpush1.msra.mxu0 0.0
        %1168 = vmatprep.subr.mxu0 0.0
        %1169 = vmatpush1.msra.mxu0 0.0
        %1170 = vmatprep.subr.mxu0 0.0
        %1171 = vmatpush1.msra.mxu0 0.0
        %1172 = vmatprep.subr.mxu0 0.0
        %1173 = vmatpush1.msra.mxu0 0.0
        %1174 = vmatprep.subr.mxu0 0.0
        %1175 = vmatpush1.msra.mxu0 0.0
        %1176 = vmatprep.subr.mxu0 0.0
        %1177 = vmatpush1.msra.mxu0 0.0
        %1178 = vmatprep.subr.mxu0 0.0
        %1179 = vmatpush1.msra.mxu0 0.0
        %1180 = vmatprep.subr.mxu0 0.0
        %1181 = vmatpush1.msra.mxu0 0.0
        %1182 = vmatprep.subr.mxu0 0.0
        %1183 = vmatpush1.msra.mxu0 0.0
        %1184 = vmatprep.subr.mxu0 0.0
        %1185 = vmatpush1.msra.mxu0 0.0
        %1186 = vmatprep.subr.mxu0 0.0
        %1187 = vmatpush1.msra.mxu0 0.0
        %1188 = vmatprep.subr.mxu0 0.0
        %1189 = vmatpush1.msra.mxu0 0.0
        %1190 = vmatprep.mubr.f32.mxu0 0.0
        %1191 = vmatmul.mubr.f32.gmra.mrb[0].mxu0 %v583
        %v1192 = vpop.f32.mrb[0].mxu0
        %v1193 = vadd.f32 %v991, %v1192
        %v1194 = vpop.f32.mrb[0].mxu0
        %v1195 = vadd.f32 %v993, %v1194
        %1196 = vmatprep.mubr.f32.mxu0 0.0
        %1197 = vmatmul.mubr.f32.gmra.mrb[0].mxu0 %v588
        %v1198 = vpop.f32.mrb[0].mxu0
        %v1199 = vadd.f32 %v997, %v1198
        %v1200 = vpop.f32.mrb[0].mxu0
        %v1201 = vadd.f32 %v999, %v1200
        %1202 = vmatprep.mubr.f32.mxu0 0.0
        %1203 = vmatmul.mubr.f32.gmra.mrb[0].mxu0 %v593
        %v1204 = vpop.f32.mrb[0].mxu0
        %v1205 = vadd.f32 %v1003, %v1204
        %v1206 = vpop.f32.mrb[0].mxu0
        %v1207 = vadd.f32 %v1005, %v1206
        %1208 = vmatprep.mubr.f32.mxu0 0.0
        %1209 = vmatmul.mubr.f32.gmra.mrb[0].mxu0 %v598
        %v1210 = vpop.f32.mrb[0].mxu0
        %v1211 = vadd.f32 %v1009, %v1210
        %v1212 = vpop.f32.mrb[0].mxu0
        %v1213 = vadd.f32 %v1011, %v1212
        %1214 = vmatprep.mubr.f32.mxu0 0.0
        %1215 = vmatmul.mubr.f32.gmra.mrb[0].mxu0 %v603
        %v1216 = vpop.f32.mrb[0].mxu0
        %v1217 = vadd.f32 %v1015, %v1216
        %v1218 = vpop.f32.mrb[0].mxu0
        %v1219 = vadd.f32 %v1017, %v1218
        %1220 = vmatprep.mubr.f32.mxu0 0.0
        %1221 = vmatmul.mubr.f32.gmra.mrb[0].mxu0 %v608
        %v1222 = vpop.f32.mrb[0].mxu0
        %v1223 = vadd.f32 %v1021, %v1222
        %v1224 = vpop.f32.mrb[0].mxu0
        %v1225 = vadd.f32 %v1023, %v1224
        %1226 = vdwg.mxu0
        %1227 = vmatprep.subr.mxu0 %v646
        %1228 = vmatpush1.msra.mxu0 %v645
        %1229 = vmatprep.subr.mxu0 %v650
        %1230 = vmatpush1.msra.mxu0 %v649
        %1231 = vmatprep.subr.mxu0 %v654
        %1232 = vmatpush1.msra.mxu0 %v653
        %1233 = vmatprep.subr.mxu0 %v658
        %1234 = vmatpush1.msra.mxu0 %v657
        %1235 = vmatprep.subr.mxu0 %v662
        %1236 = vmatpush1.msra.mxu0 %v661
        %1237 = vmatprep.subr.mxu0 %v666
        %1238 = vmatpush1.msra.mxu0 %v665
        %1239 = vmatprep.subr.mxu0 %v670
        %1240 = vmatpush1.msra.mxu0 %v669
        %1241 = vmatprep.subr.mxu0 %v674
        %1242 = vmatpush1.msra.mxu0 %v673
        %1243 = vmatprep.subr.mxu0 %v678
        %1244 = vmatpush1.msra.mxu0 %v677
        %1245 = vmatprep.subr.mxu0 %v682
        %1246 = vmatpush1.msra.mxu0 %v681
        %1247 = vmatprep.subr.mxu0 %v686
        %1248 = vmatpush1.msra.mxu0 %v685
        %1249 = vmatprep.subr.mxu0 %v690
        %1250 = vmatpush1.msra.mxu0 %v689
        %1251 = vmatprep.subr.mxu0 %v694
        %1252 = vmatpush1.msra.mxu0 %v693
        %1253 = vmatprep.subr.mxu0 %v698
        %1254 = vmatpush1.msra.mxu0 %v697
        %1255 = vmatprep.subr.mxu0 %v702
        %1256 = vmatpush1.msra.mxu0 %v701
        %1257 = vmatprep.subr.mxu0 %v706
        %1258 = vmatpush1.msra.mxu0 %v705
        %1259 = vmatprep.subr.mxu0 0.0
        %1260 = vmatpush1.msra.mxu0 0.0
        %1261 = vmatprep.subr.mxu0 0.0
        %1262 = vmatpush1.msra.mxu0 0.0
        %1263 = vmatprep.subr.mxu0 0.0
        %1264 = vmatpush1.msra.mxu0 0.0
        %1265 = vmatprep.subr.mxu0 0.0
        %1266 = vmatpush1.msra.mxu0 0.0
        %1267 = vmatprep.subr.mxu0 0.0
        %1268 = vmatpush1.msra.mxu0 0.0
        %1269 = vmatprep.subr.mxu0 0.0
        %1270 = vmatpush1.msra.mxu0 0.0
        %1271 = vmatprep.subr.mxu0 0.0
        %1272 = vmatpush1.msra.mxu0 0.0
        %1273 = vmatprep.subr.mxu0 0.0
        %1274 = vmatpush1.msra.mxu0 0.0
        %1275 = vmatprep.subr.mxu0 0.0
        %1276 = vmatpush1.msra.mxu0 0.0
        %1277 = vmatprep.subr.mxu0 0.0
        %1278 = vmatpush1.msra.mxu0 0.0
        %1279 = vmatprep.subr.mxu0 0.0
        %1280 = vmatpush1.msra.mxu0 0.0
        %1281 = vmatprep.subr.mxu0 0.0
        %1282 = vmatpush1.msra.mxu0 0.0
        %1283 = vmatprep.subr.mxu0 0.0
        %1284 = vmatpush1.msra.mxu0 0.0
        %1285 = vmatprep.subr.mxu0 0.0
        %1286 = vmatpush1.msra.mxu0 0.0
        %1287 = vmatprep.subr.mxu0 0.0
        %1288 = vmatpush1.msra.mxu0 0.0
        %1289 = vmatprep.subr.mxu0 0.0
        %1290 = vmatpush1.msra.mxu0 0.0
        %1291 = vmatprep.mubr.f32.mxu0 0.0
        %1292 = vmatmul.mubr.f32.gmra.mrb[0].mxu0 %v583
        %v1293 = vpop.f32.mrb[0].mxu0
        %v1294 = vadd.f32 %v1092, %v1293
        %v1295 = vpop.f32.mrb[0].mxu0
        %v1296 = vadd.f32 %v1094, %v1295
        %1297 = vmatprep.mubr.f32.mxu0 0.0
        %1298 = vmatmul.mubr.f32.gmra.mrb[0].mxu0 %v588
        %v1299 = vpop.f32.mrb[0].mxu0
        %v1300 = vadd.f32 %v1098, %v1299
        %v1301 = vpop.f32.mrb[0].mxu0
        %v1302 = vadd.f32 %v1100, %v1301
        %1303 = vmatprep.mubr.f32.mxu0 0.0
        %1304 = vmatmul.mubr.f32.gmra.mrb[0].mxu0 %v593
        %v1305 = vpop.f32.mrb[0].mxu0
        %v1306 = vadd.f32 %v1104, %v1305
        %v1307 = vpop.f32.mrb[0].mxu0
        %v1308 = vadd.f32 %v1106, %v1307
        %1309 = vmatprep.mubr.f32.mxu0 0.0
        %1310 = vmatmul.mubr.f32.gmra.mrb[0].mxu0 %v598
        %v1311 = vpop.f32.mrb[0].mxu0
        %v1312 = vadd.f32 %v1110, %v1311
        %v1313 = vpop.f32.mrb[0].mxu0
        %v1314 = vadd.f32 %v1112, %v1313
        %1315 = vmatprep.mubr.f32.mxu0 0.0
        %1316 = vmatmul.mubr.f32.gmra.mrb[0].mxu0 %v603
        %v1317 = vpop.f32.mrb[0].mxu0
        %v1318 = vadd.f32 %v1116, %v1317
        %v1319 = vpop.f32.mrb[0].mxu0
        %v1320 = vadd.f32 %v1118, %v1319
        %1321 = vmatprep.mubr.f32.mxu0 0.0
        %1322 = vmatmul.mubr.f32.gmra.mrb[0].mxu0 %v608
        %v1323 = vpop.f32.mrb[0].mxu0
        %v1324 = vadd.f32 %v1122, %v1323
        %v1325 = vpop.f32.mrb[0].mxu0
        %v1326 = vadd.f32 %v1124, %v1325
        %1327 = vdwg.mxu0
        %s1328 = scalar_lea.vmem %s1, 96
        %v1329 = vld [vmem:[%s1328] sm:$0xff]
        %v1330 = vld [vmem:[%s1328 + $0x8] sm:$0xff]
        %v1331 = vld [vmem:[%s1328 + $0x10] sm:$0xff]
        %v1332 = vld [vmem:[%s1328 + $0x18] sm:$0xff]
        %v1333 = vld [vmem:[%s1328 + $0x20] sm:$0xff]
        %v1334 = vld [vmem:[%s1328 + $0x28] sm:$0xf]
        %v1336 = vsel %vm497, %v1329, 0
        %v1339 = vsel %vm497, %v1330, 0
        %v1342 = vsel %vm497, %v1331, 0
        %v1345 = vsel %vm497, %v1332, 0
        %v1348 = vsel %vm497, %v1333, 0
        %v1351 = vsel %vm497, %v1334, 0
        %1353 = vmatprep.subr.mxu0 0.0
        %1354 = vmatpush1.msra.mxu0 %v480
        %1355 = vmatprep.subr.mxu0 0.0
        %1356 = vmatpush1.msra.mxu0 %v481
        %1357 = vmatprep.subr.mxu0 0.0
        %1358 = vmatpush1.msra.mxu0 %v482
        %1359 = vmatprep.subr.mxu0 0.0
        %1360 = vmatpush1.msra.mxu0 %v483
        %1361 = vmatprep.subr.mxu0 0.0
        %1362 = vmatpush1.msra.mxu0 %v484
        %1363 = vmatprep.subr.mxu0 0.0
        %1364 = vmatpush1.msra.mxu0 %v485
        %1365 = vmatprep.subr.mxu0 0.0
        %1366 = vmatpush1.msra.mxu0 %v486
        %1367 = vmatprep.subr.mxu0 0.0
        %1368 = vmatpush1.msra.mxu0 %v487
        %1369 = vmatprep.subr.mxu0 0.0
        %1370 = vmatpush1.msra.mxu0 %v488
        %1371 = vmatprep.subr.mxu0 0.0
        %1372 = vmatpush1.msra.mxu0 %v489
        %1373 = vmatprep.subr.mxu0 0.0
        %1374 = vmatpush1.msra.mxu0 %v490
        %1375 = vmatprep.subr.mxu0 0.0
        %1376 = vmatpush1.msra.mxu0 0.0
        %1377 = vmatprep.subr.mxu0 0.0
        %1378 = vmatpush1.msra.mxu0 0.0
        %1379 = vmatprep.subr.mxu0 0.0
        %1380 = vmatpush1.msra.mxu0 0.0
        %1381 = vmatprep.subr.mxu0 0.0
        %1382 = vmatpush1.msra.mxu0 0.0
        %1383 = vmatprep.subr.mxu0 0.0
        %1384 = vmatpush1.msra.mxu0 0.0
        %1385 = vmatprep.subr.mxu0 0.0
        %1386 = vmatpush1.msra.mxu0 0.0
        %1387 = vmatprep.subr.mxu0 0.0
        %1388 = vmatpush1.msra.mxu0 0.0
        %1389 = vmatprep.subr.mxu0 0.0
        %1390 = vmatpush1.msra.mxu0 0.0
        %1391 = vmatprep.subr.mxu0 0.0
        %1392 = vmatpush1.msra.mxu0 0.0
        %1393 = vmatprep.subr.mxu0 0.0
        %1394 = vmatpush1.msra.mxu0 0.0
        %1395 = vmatprep.subr.mxu0 0.0
        %1396 = vmatpush1.msra.mxu0 0.0
        %1397 = vmatprep.subr.mxu0 0.0
        %1398 = vmatpush1.msra.mxu0 0.0
        %1399 = vmatprep.subr.mxu0 0.0
        %1400 = vmatpush1.msra.mxu0 0.0
        %1401 = vmatprep.subr.mxu0 0.0
        %1402 = vmatpush1.msra.mxu0 0.0
        %1403 = vmatprep.subr.mxu0 0.0
        %1404 = vmatpush1.msra.mxu0 0.0
        %1405 = vmatprep.subr.mxu0 0.0
        %1406 = vmatpush1.msra.mxu0 0.0
        %1407 = vmatprep.subr.mxu0 0.0
        %1408 = vmatpush1.msra.mxu0 0.0
        %1409 = vmatprep.subr.mxu0 0.0
        %1410 = vmatpush1.msra.mxu0 0.0
        %1411 = vmatprep.subr.mxu0 0.0
        %1412 = vmatpush1.msra.mxu0 0.0
        %1413 = vmatprep.subr.mxu0 0.0
        %1414 = vmatpush1.msra.mxu0 0.0
        %1415 = vmatprep.subr.mxu0 0.0
        %1416 = vmatpush1.msra.mxu0 0.0
        %1417 = vmatprep.mubr.f32.mxu0 0.0
        %1418 = vmatmul.mubr.f32.gmra.mrb[0].mxu0 %v1336
        %v1419 = vpop.f32.mrb[0].mxu0
        %v1420 = vadd.f32 0.0, %v1419
        %v1421 = vpop.f32.mrb[0].mxu0
        %1422 = vmatprep.mubr.f32.mxu0 0.0
        %1423 = vmatmul.mubr.f32.gmra.mrb[0].mxu0 %v1339
        %v1424 = vpop.f32.mrb[0].mxu0
        %v1425 = vadd.f32 0.0, %v1424
        %v1426 = vpop.f32.mrb[0].mxu0
        %1427 = vmatprep.mubr.f32.mxu0 0.0
        %1428 = vmatmul.mubr.f32.gmra.mrb[0].mxu0 %v1342
        %v1429 = vpop.f32.mrb[0].mxu0
        %v1430 = vadd.f32 0.0, %v1429
        %v1431 = vpop.f32.mrb[0].mxu0
        %1432 = vmatprep.mubr.f32.mxu0 0.0
        %1433 = vmatmul.mubr.f32.gmra.mrb[0].mxu0 %v1345
        %v1434 = vpop.f32.mrb[0].mxu0
        %v1435 = vadd.f32 0.0, %v1434
        %v1436 = vpop.f32.mrb[0].mxu0
        %1437 = vmatprep.mubr.f32.mxu0 0.0
        %1438 = vmatmul.mubr.f32.gmra.mrb[0].mxu0 %v1348
        %v1439 = vpop.f32.mrb[0].mxu0
        %v1440 = vadd.f32 0.0, %v1439
        %v1441 = vpop.f32.mrb[0].mxu0
        %1442 = vmatprep.mubr.f32.mxu0 0.0
        %1443 = vmatmul.mubr.f32.gmra.mrb[0].mxu0 %v1351
        %v1444 = vpop.f32.mrb[0].mxu0
        %v1445 = vadd.f32 0.0, %v1444
        %v1446 = vpop.f32.mrb[0].mxu0
        %1447 = vdwg.mxu0
        %s1448 = scalar_lea.vmem [#allocation2], 512
        %v1449 = vld [vmem:[%s1448] sm:$0xff]
        %v1450 = vld [vmem:[%s1448 + $0x8] sm:$0xff]
        %v1451 = vld [vmem:[%s1448 + $0x10] sm:$0xff]
        %v1452 = vld [vmem:[%s1448 + $0x18] sm:$0xff]
        %v1453 = vld [vmem:[%s1448 + $0x20] sm:$0xff]
        %v1454 = vld [vmem:[%s1448 + $0x28] sm:$0xff]
        %v1455 = vld [vmem:[%s1448 + $0x30] sm:$0xff]
        %v1456 = vld [vmem:[%s1448 + $0x38] sm:$0xff]
        %v1457 = vld [vmem:[%s1448 + $0x40] sm:$0xff]
        %v1458 = vld [vmem:[%s1448 + $0x48] sm:$0xff]
        %v1459 = vld [vmem:[%s1448 + $0x50] sm:$0xff]
        %v1460 = vld [vmem:[%s1448 + $0x58] sm:$0xff]
        %v1461 = vld [vmem:[%s1448 + $0x60] sm:$0xff]
        %v1462 = vld [vmem:[%s1448 + $0x68] sm:$0xff]
        %v1463 = vld [vmem:[%s1448 + $0x70] sm:$0xff]
        %v1464 = vld [vmem:[%s1448 + $0x78] sm:$0xff]
        %v1465 = vld [vmem:[%s1448 + $0x80] sm:$0xff]
        %v1466 = vld [vmem:[%s1448 + $0x88] sm:$0xff]
        %v1467 = vld [vmem:[%s1448 + $0x90] sm:$0xff]
        %v1468 = vld [vmem:[%s1448 + $0x98] sm:$0xff]
        %v1469 = vld [vmem:[%s1448 + $0xa0] sm:$0xff]
        %v1470 = vld [vmem:[%s1448 + $0xa8] sm:$0xff]
        %v1471 = vld [vmem:[%s1448 + $0xb0] sm:$0xff]
        %v1472 = vld [vmem:[%s1448 + $0xb8] sm:$0xff]
        %v1473 = vld [vmem:[%s1448 + $0xc0] sm:$0xff]
        %v1474 = vld [vmem:[%s1448 + $0xc8] sm:$0xff]
        %v1475 = vld [vmem:[%s1448 + $0xd0] sm:$0xff]
        %v1476 = vld [vmem:[%s1448 + $0xd8] sm:$0xff]
        %v1477 = vld [vmem:[%s1448 + $0xe0] sm:$0xff]
        %v1478 = vld [vmem:[%s1448 + $0xe8] sm:$0xff]
        %v1479 = vld [vmem:[%s1448 + $0xf0] sm:$0xff]
        %v1480 = vld [vmem:[%s1448 + $0xf8] sm:$0xff]
        %v1481 = vunpack.c.l.bf16 %v1449
        %v1482 = vunpack.c.h.bf16 %v1449
        %v1483 = vunpack.c.l.bf16 %v1450
        %v1484 = vunpack.c.h.bf16 %v1450
        %v1485 = vunpack.c.l.bf16 %v1451
        %v1486 = vunpack.c.h.bf16 %v1451
        %v1487 = vunpack.c.l.bf16 %v1452
        %v1488 = vunpack.c.h.bf16 %v1452
        %v1489 = vunpack.c.l.bf16 %v1453
        %v1490 = vunpack.c.h.bf16 %v1453
        %v1491 = vunpack.c.l.bf16 %v1454
        %v1492 = vunpack.c.h.bf16 %v1454
        %v1493 = vunpack.c.l.bf16 %v1455
        %v1494 = vunpack.c.h.bf16 %v1455
        %v1495 = vunpack.c.l.bf16 %v1456
        %v1496 = vunpack.c.h.bf16 %v1456
        %v1497 = vunpack.c.l.bf16 %v1457
        %v1498 = vunpack.c.h.bf16 %v1457
        %v1499 = vunpack.c.l.bf16 %v1458
        %v1500 = vunpack.c.h.bf16 %v1458
        %v1501 = vunpack.c.l.bf16 %v1459
        %v1502 = vunpack.c.h.bf16 %v1459
        %v1503 = vunpack.c.l.bf16 %v1460
        %v1504 = vunpack.c.h.bf16 %v1460
        %v1505 = vunpack.c.l.bf16 %v1461
        %v1506 = vunpack.c.h.bf16 %v1461
        %v1507 = vunpack.c.l.bf16 %v1462
        %v1508 = vunpack.c.h.bf16 %v1462
        %v1509 = vunpack.c.l.bf16 %v1463
        %v1510 = vunpack.c.h.bf16 %v1463
        %v1511 = vunpack.c.l.bf16 %v1464
        %v1512 = vunpack.c.h.bf16 %v1464
        %v1513 = vunpack.c.l.bf16 %v1465
        %v1514 = vunpack.c.h.bf16 %v1465
        %v1515 = vunpack.c.l.bf16 %v1466
        %v1516 = vunpack.c.h.bf16 %v1466
        %v1517 = vunpack.c.l.bf16 %v1467
        %v1518 = vunpack.c.h.bf16 %v1467
        %v1519 = vunpack.c.l.bf16 %v1468
        %v1520 = vunpack.c.h.bf16 %v1468
        %v1521 = vunpack.c.l.bf16 %v1469
        %v1522 = vunpack.c.h.bf16 %v1469
        %v1523 = vunpack.c.l.bf16 %v1470
        %v1524 = vunpack.c.h.bf16 %v1470
        %v1525 = vunpack.c.l.bf16 %v1471
        %v1526 = vunpack.c.h.bf16 %v1471
        %v1527 = vunpack.c.l.bf16 %v1472
        %v1528 = vunpack.c.h.bf16 %v1472
        %v1529 = vunpack.c.l.bf16 %v1473
        %v1530 = vunpack.c.h.bf16 %v1473
        %v1531 = vunpack.c.l.bf16 %v1474
        %v1532 = vunpack.c.h.bf16 %v1474
        %v1533 = vunpack.c.l.bf16 %v1475
        %v1534 = vunpack.c.h.bf16 %v1475
        %v1535 = vunpack.c.l.bf16 %v1476
        %v1536 = vunpack.c.h.bf16 %v1476
        %v1537 = vunpack.c.l.bf16 %v1477
        %v1538 = vunpack.c.h.bf16 %v1477
        %v1539 = vunpack.c.l.bf16 %v1478
        %v1540 = vunpack.c.h.bf16 %v1478
        %v1541 = vunpack.c.l.bf16 %v1479
        %v1542 = vunpack.c.h.bf16 %v1479
        %v1543 = vunpack.c.l.bf16 %v1480
        %v1544 = vunpack.c.h.bf16 %v1480
        %1545 = vmatprep.subr.mxu0 %v1482
        %1546 = vmatpush1.msra.mxu0 %v1481
        %1547 = vmatprep.subr.mxu0 %v1486
        %1548 = vmatpush1.msra.mxu0 %v1485
        %1549 = vmatprep.subr.mxu0 %v1490
        %1550 = vmatpush1.msra.mxu0 %v1489
        %1551 = vmatprep.subr.mxu0 %v1494
        %1552 = vmatpush1.msra.mxu0 %v1493
        %1553 = vmatprep.subr.mxu0 %v1498
        %1554 = vmatpush1.msra.mxu0 %v1497
        %1555 = vmatprep.subr.mxu0 %v1502
        %1556 = vmatpush1.msra.mxu0 %v1501
        %1557 = vmatprep.subr.mxu0 %v1506
        %1558 = vmatpush1.msra.mxu0 %v1505
        %1559 = vmatprep.subr.mxu0 %v1510
        %1560 = vmatpush1.msra.mxu0 %v1509
        %1561 = vmatprep.subr.mxu0 %v1514
        %1562 = vmatpush1.msra.mxu0 %v1513
        %1563 = vmatprep.subr.mxu0 %v1518
        %1564 = vmatpush1.msra.mxu0 %v1517
        %1565 = vmatprep.subr.mxu0 %v1522
        %1566 = vmatpush1.msra.mxu0 %v1521
        %1567 = vmatprep.subr.mxu0 %v1526
        %1568 = vmatpush1.msra.mxu0 %v1525
        %1569 = vmatprep.subr.mxu0 %v1530
        %1570 = vmatpush1.msra.mxu0 %v1529
        %1571 = vmatprep.subr.mxu0 %v1534
        %1572 = vmatpush1.msra.mxu0 %v1533
        %1573 = vmatprep.subr.mxu0 %v1538
        %1574 = vmatpush1.msra.mxu0 %v1537
        %1575 = vmatprep.subr.mxu0 %v1542
        %1576 = vmatpush1.msra.mxu0 %v1541
        %1577 = vmatprep.subr.mxu0 0.0
        %1578 = vmatpush1.msra.mxu0 0.0
        %1579 = vmatprep.subr.mxu0 0.0
        %1580 = vmatpush1.msra.mxu0 0.0
        %1581 = vmatprep.subr.mxu0 0.0
        %1582 = vmatpush1.msra.mxu0 0.0
        %1583 = vmatprep.subr.mxu0 0.0
        %1584 = vmatpush1.msra.mxu0 0.0
        %1585 = vmatprep.subr.mxu0 0.0
        %1586 = vmatpush1.msra.mxu0 0.0
        %1587 = vmatprep.subr.mxu0 0.0
        %1588 = vmatpush1.msra.mxu0 0.0
        %1589 = vmatprep.subr.mxu0 0.0
        %1590 = vmatpush1.msra.mxu0 0.0
        %1591 = vmatprep.subr.mxu0 0.0
        %1592 = vmatpush1.msra.mxu0 0.0
        %1593 = vmatprep.subr.mxu0 0.0
        %1594 = vmatpush1.msra.mxu0 0.0
        %1595 = vmatprep.subr.mxu0 0.0
        %1596 = vmatpush1.msra.mxu0 0.0
        %1597 = vmatprep.subr.mxu0 0.0
        %1598 = vmatpush1.msra.mxu0 0.0
        %1599 = vmatprep.subr.mxu0 0.0
        %1600 = vmatpush1.msra.mxu0 0.0
        %1601 = vmatprep.subr.mxu0 0.0
        %1602 = vmatpush1.msra.mxu0 0.0
        %1603 = vmatprep.subr.mxu0 0.0
        %1604 = vmatpush1.msra.mxu0 0.0
        %1605 = vmatprep.subr.mxu0 0.0
        %1606 = vmatpush1.msra.mxu0 0.0
        %1607 = vmatprep.subr.mxu0 0.0
        %1608 = vmatpush1.msra.mxu0 0.0
        %1609 = vmatprep.mubr.f32.mxu0 0.0
        %1610 = vmatmul.mubr.f32.gmra.mrb[0].mxu0 %v1420
        %v1611 = vpop.f32.mrb[0].mxu0
        %v1612 = vadd.f32 0.0, %v1611
        %v1613 = vpop.f32.mrb[0].mxu0
        %v1614 = vadd.f32 0.0, %v1613
        %1615 = vmatprep.mubr.f32.mxu0 0.0
        %1616 = vmatmul.mubr.f32.gmra.mrb[0].mxu0 %v1425
        %v1617 = vpop.f32.mrb[0].mxu0
        %v1618 = vadd.f32 0.0, %v1617
        %v1619 = vpop.f32.mrb[0].mxu0
        %v1620 = vadd.f32 0.0, %v1619
        %1621 = vmatprep.mubr.f32.mxu0 0.0
        %1622 = vmatmul.mubr.f32.gmra.mrb[0].mxu0 %v1430
        %v1623 = vpop.f32.mrb[0].mxu0
        %v1624 = vadd.f32 0.0, %v1623
        %v1625 = vpop.f32.mrb[0].mxu0
        %v1626 = vadd.f32 0.0, %v1625
        %1627 = vmatprep.mubr.f32.mxu0 0.0
        %1628 = vmatmul.mubr.f32.gmra.mrb[0].mxu0 %v1435
        %v1629 = vpop.f32.mrb[0].mxu0
        %v1630 = vadd.f32 0.0, %v1629
        %v1631 = vpop.f32.mrb[0].mxu0
        %v1632 = vadd.f32 0.0, %v1631
        %1633 = vmatprep.mubr.f32.mxu0 0.0
        %1634 = vmatmul.mubr.f32.gmra.mrb[0].mxu0 %v1440
        %v1635 = vpop.f32.mrb[0].mxu0
        %v1636 = vadd.f32 0.0, %v1635
        %v1637 = vpop.f32.mrb[0].mxu0
        %v1638 = vadd.f32 0.0, %v1637
        %1639 = vmatprep.mubr.f32.mxu0 0.0
        %1640 = vmatmul.mubr.f32.gmra.mrb[0].mxu0 %v1445
        %v1641 = vpop.f32.mrb[0].mxu0
        %v1642 = vadd.f32 0.0, %v1641
        %v1643 = vpop.f32.mrb[0].mxu0
        %v1644 = vadd.f32 0.0, %v1643
        %1645 = vdwg.mxu0
        %1646 = vmatprep.subr.mxu0 %v1484
        %1647 = vmatpush1.msra.mxu0 %v1483
        %1648 = vmatprep.subr.mxu0 %v1488
        %1649 = vmatpush1.msra.mxu0 %v1487
        %1650 = vmatprep.subr.mxu0 %v1492
        %1651 = vmatpush1.msra.mxu0 %v1491
        %1652 = vmatprep.subr.mxu0 %v1496
        %1653 = vmatpush1.msra.mxu0 %v1495
        %1654 = vmatprep.subr.mxu0 %v1500
        %1655 = vmatpush1.msra.mxu0 %v1499
        %1656 = vmatprep.subr.mxu0 %v1504
        %1657 = vmatpush1.msra.mxu0 %v1503
        %1658 = vmatprep.subr.mxu0 %v1508
        %1659 = vmatpush1.msra.mxu0 %v1507
        %1660 = vmatprep.subr.mxu0 %v1512
        %1661 = vmatpush1.msra.mxu0 %v1511
        %1662 = vmatprep.subr.mxu0 %v1516
        %1663 = vmatpush1.msra.mxu0 %v1515
        %1664 = vmatprep.subr.mxu0 %v1520
        %1665 = vmatpush1.msra.mxu0 %v1519
        %1666 = vmatprep.subr.mxu0 %v1524
        %1667 = vmatpush1.msra.mxu0 %v1523
        %1668 = vmatprep.subr.mxu0 %v1528
        %1669 = vmatpush1.msra.mxu0 %v1527
        %1670 = vmatprep.subr.mxu0 %v1532
        %1671 = vmatpush1.msra.mxu0 %v1531
        %1672 = vmatprep.subr.mxu0 %v1536
        %1673 = vmatpush1.msra.mxu0 %v1535
        %1674 = vmatprep.subr.mxu0 %v1540
        %1675 = vmatpush1.msra.mxu0 %v1539
        %1676 = vmatprep.subr.mxu0 %v1544
        %1677 = vmatpush1.msra.mxu0 %v1543
        %1678 = vmatprep.subr.mxu0 0.0
        %1679 = vmatpush1.msra.mxu0 0.0
        %1680 = vmatprep.subr.mxu0 0.0
        %1681 = vmatpush1.msra.mxu0 0.0
        %1682 = vmatprep.subr.mxu0 0.0
        %1683 = vmatpush1.msra.mxu0 0.0
        %1684 = vmatprep.subr.mxu0 0.0
        %1685 = vmatpush1.msra.mxu0 0.0
        %1686 = vmatprep.subr.mxu0 0.0
        %1687 = vmatpush1.msra.mxu0 0.0
        %1688 = vmatprep.subr.mxu0 0.0
        %1689 = vmatpush1.msra.mxu0 0.0
        %1690 = vmatprep.subr.mxu0 0.0
        %1691 = vmatpush1.msra.mxu0 0.0
        %1692 = vmatprep.subr.mxu0 0.0
        %1693 = vmatpush1.msra.mxu0 0.0
        %1694 = vmatprep.subr.mxu0 0.0
        %1695 = vmatpush1.msra.mxu0 0.0
        %1696 = vmatprep.subr.mxu0 0.0
        %1697 = vmatpush1.msra.mxu0 0.0
        %1698 = vmatprep.subr.mxu0 0.0
        %1699 = vmatpush1.msra.mxu0 0.0
        %1700 = vmatprep.subr.mxu0 0.0
        %1701 = vmatpush1.msra.mxu0 0.0
        %1702 = vmatprep.subr.mxu0 0.0
        %1703 = vmatpush1.msra.mxu0 0.0
        %1704 = vmatprep.subr.mxu0 0.0
        %1705 = vmatpush1.msra.mxu0 0.0
        %1706 = vmatprep.subr.mxu0 0.0
        %1707 = vmatpush1.msra.mxu0 0.0
        %1708 = vmatprep.subr.mxu0 0.0
        %1709 = vmatpush1.msra.mxu0 0.0
        %1710 = vmatprep.mubr.f32.mxu0 0.0
        %1711 = vmatmul.mubr.f32.gmra.mrb[0].mxu0 %v1420
        %v1712 = vpop.f32.mrb[0].mxu0
        %v1713 = vadd.f32 0.0, %v1712
        %v1714 = vpop.f32.mrb[0].mxu0
        %v1715 = vadd.f32 0.0, %v1714
        %1716 = vmatprep.mubr.f32.mxu0 0.0
        %1717 = vmatmul.mubr.f32.gmra.mrb[0].mxu0 %v1425
        %v1718 = vpop.f32.mrb[0].mxu0
        %v1719 = vadd.f32 0.0, %v1718
        %v1720 = vpop.f32.mrb[0].mxu0
        %v1721 = vadd.f32 0.0, %v1720
        %1722 = vmatprep.mubr.f32.mxu0 0.0
        %1723 = vmatmul.mubr.f32.gmra.mrb[0].mxu0 %v1430
        %v1724 = vpop.f32.mrb[0].mxu0
        %v1725 = vadd.f32 0.0, %v1724
        %v1726 = vpop.f32.mrb[0].mxu0
        %v1727 = vadd.f32 0.0, %v1726
        %1728 = vmatprep.mubr.f32.mxu0 0.0
        %1729 = vmatmul.mubr.f32.gmra.mrb[0].mxu0 %v1435
        %v1730 = vpop.f32.mrb[0].mxu0
        %v1731 = vadd.f32 0.0, %v1730
        %v1732 = vpop.f32.mrb[0].mxu0
        %v1733 = vadd.f32 0.0, %v1732
        %1734 = vmatprep.mubr.f32.mxu0 0.0
        %1735 = vmatmul.mubr.f32.gmra.mrb[0].mxu0 %v1440
        %v1736 = vpop.f32.mrb[0].mxu0
        %v1737 = vadd.f32 0.0, %v1736
        %v1738 = vpop.f32.mrb[0].mxu0
        %v1739 = vadd.f32 0.0, %v1738
        %1740 = vmatprep.mubr.f32.mxu0 0.0
        %1741 = vmatmul.mubr.f32.gmra.mrb[0].mxu0 %v1445
        %v1742 = vpop.f32.mrb[0].mxu0
        %v1743 = vadd.f32 0.0, %v1742
        %v1744 = vpop.f32.mrb[0].mxu0
        %v1745 = vadd.f32 0.0, %v1744
        %1746 = vdwg.mxu0
        %v1747 = vadd.f32 %v1193, %v1612
        %v1748 = vadd.f32 %v1195, %v1614
        %v1749 = vadd.f32 %v1294, %v1713
        %v1750 = vadd.f32 %v1296, %v1715
        %v1751 = vadd.f32 %v1199, %v1618
        %v1752 = vadd.f32 %v1201, %v1620
        %v1753 = vadd.f32 %v1300, %v1719
        %v1754 = vadd.f32 %v1302, %v1721
        %v1755 = vadd.f32 %v1205, %v1624
        %v1756 = vadd.f32 %v1207, %v1626
        %v1757 = vadd.f32 %v1306, %v1725
        %v1758 = vadd.f32 %v1308, %v1727
        %v1759 = vadd.f32 %v1211, %v1630
        %v1760 = vadd.f32 %v1213, %v1632
        %v1761 = vadd.f32 %v1312, %v1731
        %v1762 = vadd.f32 %v1314, %v1733
        %v1763 = vadd.f32 %v1217, %v1636
        %v1764 = vadd.f32 %v1219, %v1638
        %v1765 = vadd.f32 %v1318, %v1737
        %v1766 = vadd.f32 %v1320, %v1739
        %v1767 = vadd.f32 %v1223, %v1642
        %v1768 = vadd.f32 %v1225, %v1644
        %v1769 = vadd.f32 %v1324, %v1743
        %v1770 = vadd.f32 %v1326, %v1745
        %v1771 = vld [vmem:[%s3] sm:$0xf]
        %v1773 = vlaneseq
        %v1774 = vshrl.u32 %v1773, 7
        %v1775 = vsub.s32 0, %v1774
        %v1776 = vrot.slane %v1771, %v1775
        %v1777 = vlaneseq
        %v1778 = vshrl.u32 %v1777, 7
        %v1779 = vsub.s32 1, %v1778
        %v1780 = vrot.slane %v1771, %v1779
        %v1781 = vlaneseq
        %v1782 = vshrl.u32 %v1781, 7
        %v1783 = vsub.s32 2, %v1782
        %v1784 = vrot.slane %v1771, %v1783
        %v1785 = vlaneseq
        %v1786 = vshrl.u32 %v1785, 7
        %v1787 = vsub.s32 3, %v1786
        %v1788 = vrot.slane %v1771, %v1787
        %v1793 = vadd.f32 %v1747, %v1776
        %v1794 = vadd.f32 %v1748, %v1780
        %v1795 = vadd.f32 %v1749, %v1784
        %v1796 = vadd.f32 %v1750, %v1788
        %v1797 = vadd.f32 %v1751, %v1776
        %v1798 = vadd.f32 %v1752, %v1780
        %v1799 = vadd.f32 %v1753, %v1784
        %v1800 = vadd.f32 %v1754, %v1788
        %v1801 = vadd.f32 %v1755, %v1776
        %v1802 = vadd.f32 %v1756, %v1780
        %v1803 = vadd.f32 %v1757, %v1784
        %v1804 = vadd.f32 %v1758, %v1788
        %v1805 = vadd.f32 %v1759, %v1776
        %v1806 = vadd.f32 %v1760, %v1780
        %v1807 = vadd.f32 %v1761, %v1784
        %v1808 = vadd.f32 %v1762, %v1788
        %v1809 = vadd.f32 %v1763, %v1776
        %v1810 = vadd.f32 %v1764, %v1780
        %v1811 = vadd.f32 %v1765, %v1784
        %v1812 = vadd.f32 %v1766, %v1788
        %v1813 = vadd.f32 %v1767, %v1776
        %v1814 = vadd.f32 %v1768, %v1780
        %v1815 = vadd.f32 %v1769, %v1784
        %v1816 = vadd.f32 %v1770, %v1788
        %v1817 = vmax.f32 %v1793, 0.0
        %v1818 = vmax.f32 %v1794, 0.0
        %v1819 = vmax.f32 %v1795, 0.0
        %v1820 = vmax.f32 %v1796, 0.0
        %v1821 = vmax.f32 %v1797, 0.0
        %v1822 = vmax.f32 %v1798, 0.0
        %v1823 = vmax.f32 %v1799, 0.0
        %v1824 = vmax.f32 %v1800, 0.0
        %v1825 = vmax.f32 %v1801, 0.0
        %v1826 = vmax.f32 %v1802, 0.0
        %v1827 = vmax.f32 %v1803, 0.0
        %v1828 = vmax.f32 %v1804, 0.0
        %v1829 = vmax.f32 %v1805, 0.0
        %v1830 = vmax.f32 %v1806, 0.0
        %v1831 = vmax.f32 %v1807, 0.0
        %v1832 = vmax.f32 %v1808, 0.0
        %v1833 = vmax.f32 %v1809, 0.0
        %v1834 = vmax.f32 %v1810, 0.0
        %v1835 = vmax.f32 %v1811, 0.0
        %v1836 = vmax.f32 %v1812, 0.0
        %v1837 = vmax.f32 %v1813, 0.0
        %v1838 = vmax.f32 %v1814, 0.0
        %v1839 = vmax.f32 %v1815, 0.0
        %v1840 = vmax.f32 %v1816, 0.0
        %v1841 = vld [vmem:[%s4] sm:$0xff]
        %v1842 = vld [vmem:[%s4 + $0x8] sm:$0xff]
        %v1843 = vld [vmem:[%s4 + $0x10] sm:$0x3f]
        %vm1844 = vcmask 359424
        %v1846 = vsel %vm1844, %v1841, 0
        %v1849 = vsel %vm1844, %v1842, 0
        %v1852 = vsel %vm1844, %v1843, 0
        %vm1854 = vcmask 1043456
        %v1856 = vsel %vm1854, %v1837, 0
        %v1859 = vsel %vm1854, %v1838, 0
        %v1862 = vsel %vm1854, %v1839, 0
        %v1865 = vsel %vm1854, %v1840, 0
        %1867 = vmatprep.subr.mxu0 %v1818
        %1868 = vmatpush1.msra.mxu0 %v1817
        %1869 = vmatprep.subr.mxu0 %v1822
        %1870 = vmatpush1.msra.mxu0 %v1821
        %1871 = vmatprep.subr.mxu0 %v1826
        %1872 = vmatpush1.msra.mxu0 %v1825
        %1873 = vmatprep.subr.mxu0 %v1830
        %1874 = vmatpush1.msra.mxu0 %v1829
        %1875 = vmatprep.subr.mxu0 %v1834
        %1876 = vmatpush1.msra.mxu0 %v1833
        %1877 = vmatprep.subr.mxu0 %v1859
        %1878 = vmatpush1.msra.mxu0 %v1856
        %1879 = vmatprep.subr.mxu0 0.0
        %1880 = vmatpush1.msra.mxu0 0.0
        %1881 = vmatprep.subr.mxu0 0.0
        %1882 = vmatpush1.msra.mxu0 0.0
        %1883 = vmatprep.subr.mxu0 0.0
        %1884 = vmatpush1.msra.mxu0 0.0
        %1885 = vmatprep.subr.mxu0 0.0
        %1886 = vmatpush1.msra.mxu0 0.0
        %1887 = vmatprep.subr.mxu0 0.0
        %1888 = vmatpush1.msra.mxu0 0.0
        %1889 = vmatprep.subr.mxu0 0.0
        %1890 = vmatpush1.msra.mxu0 0.0
        %1891 = vmatprep.subr.mxu0 0.0
        %1892 = vmatpush1.msra.mxu0 0.0
        %1893 = vmatprep.subr.mxu0 0.0
        %1894 = vmatpush1.msra.mxu0 0.0
        %1895 = vmatprep.subr.mxu0 0.0
        %1896 = vmatpush1.msra.mxu0 0.0
        %1897 = vmatprep.subr.mxu0 0.0
        %1898 = vmatpush1.msra.mxu0 0.0
        %1899 = vmatprep.subr.mxu0 0.0
        %1900 = vmatpush1.msra.mxu0 0.0
        %1901 = vmatprep.subr.mxu0 0.0
        %1902 = vmatpush1.msra.mxu0 0.0
        %1903 = vmatprep.subr.mxu0 0.0
        %1904 = vmatpush1.msra.mxu0 0.0
        %1905 = vmatprep.subr.mxu0 0.0
        %1906 = vmatpush1.msra.mxu0 0.0
        %1907 = vmatprep.subr.mxu0 0.0
        %1908 = vmatpush1.msra.mxu0 0.0
        %1909 = vmatprep.subr.mxu0 0.0
        %1910 = vmatpush1.msra.mxu0 0.0
        %1911 = vmatprep.subr.mxu0 0.0
        %1912 = vmatpush1.msra.mxu0 0.0
        %1913 = vmatprep.subr.mxu0 0.0
        %1914 = vmatpush1.msra.mxu0 0.0
        %1915 = vmatprep.subr.mxu0 0.0
        %1916 = vmatpush1.msra.mxu0 0.0
        %1917 = vmatprep.subr.mxu0 0.0
        %1918 = vmatpush1.msra.mxu0 0.0
        %1919 = vmatprep.subr.mxu0 0.0
        %1920 = vmatpush1.msra.mxu0 0.0
        %1921 = vmatprep.subr.mxu0 0.0
        %1922 = vmatpush1.msra.mxu0 0.0
        %1923 = vmatprep.subr.mxu0 0.0
        %1924 = vmatpush1.msra.mxu0 0.0
        %1925 = vmatprep.subr.mxu0 0.0
        %1926 = vmatpush1.msra.mxu0 0.0
        %1927 = vmatprep.subr.mxu0 0.0
        %1928 = vmatpush1.msra.mxu0 0.0
        %1929 = vmatprep.subr.mxu0 0.0
        %1930 = vmatpush1.msra.mxu0 0.0
        %1931 = vmatprep.mubr.f32.mxu0 0.0
        %1932 = vmatmul.mubr.f32.gmra.mrb[0].mxu0 %v1846
        %v1933 = vpop.f32.mrb[0].mxu0
        %v1934 = vadd.f32 0.0, %v1933
        %v1935 = vpop.f32.mrb[0].mxu0
        %v1936 = vadd.f32 0.0, %v1935
        %1937 = vmatprep.mubr.f32.mxu0 0.0
        %1938 = vmatmul.mubr.f32.gmra.mrb[0].mxu0 %v1849
        %v1939 = vpop.f32.mrb[0].mxu0
        %v1940 = vadd.f32 0.0, %v1939
        %v1941 = vpop.f32.mrb[0].mxu0
        %v1942 = vadd.f32 0.0, %v1941
        %1943 = vmatprep.mubr.f32.mxu0 0.0
        %1944 = vmatmul.mubr.f32.gmra.mrb[0].mxu0 %v1852
        %v1945 = vpop.f32.mrb[0].mxu0
        %v1946 = vadd.f32 0.0, %v1945
        %v1947 = vpop.f32.mrb[0].mxu0
        %v1948 = vadd.f32 0.0, %v1947
        %1949 = vdwg.mxu0
        %1950 = vmatprep.subr.mxu0 %v1820
        %1951 = vmatpush1.msra.mxu0 %v1819
        %1952 = vmatprep.subr.mxu0 %v1824
        %1953 = vmatpush1.msra.mxu0 %v1823
        %1954 = vmatprep.subr.mxu0 %v1828
        %1955 = vmatpush1.msra.mxu0 %v1827
        %1956 = vmatprep.subr.mxu0 %v1832
        %1957 = vmatpush1.msra.mxu0 %v1831
        %1958 = vmatprep.subr.mxu0 %v1836
        %1959 = vmatpush1.msra.mxu0 %v1835
        %1960 = vmatprep.subr.mxu0 %v1865
        %1961 = vmatpush1.msra.mxu0 %v1862
        %1962 = vmatprep.subr.mxu0 0.0
        %1963 = vmatpush1.msra.mxu0 0.0
        %1964 = vmatprep.subr.mxu0 0.0
        %1965 = vmatpush1.msra.mxu0 0.0
        %1966 = vmatprep.subr.mxu0 0.0
        %1967 = vmatpush1.msra.mxu0 0.0
        %1968 = vmatprep.subr.mxu0 0.0
        %1969 = vmatpush1.msra.mxu0 0.0
        %1970 = vmatprep.subr.mxu0 0.0
        %1971 = vmatpush1.msra.mxu0 0.0
        %1972 = vmatprep.subr.mxu0 0.0
        %1973 = vmatpush1.msra.mxu0 0.0
        %1974 = vmatprep.subr.mxu0 0.0
        %1975 = vmatpush1.msra.mxu0 0.0
        %1976 = vmatprep.subr.mxu0 0.0
        %1977 = vmatpush1.msra.mxu0 0.0
        %1978 = vmatprep.subr.mxu0 0.0
        %1979 = vmatpush1.msra.mxu0 0.0
        %1980 = vmatprep.subr.mxu0 0.0
        %1981 = vmatpush1.msra.mxu0 0.0
        %1982 = vmatprep.subr.mxu0 0.0
        %1983 = vmatpush1.msra.mxu0 0.0
        %1984 = vmatprep.subr.mxu0 0.0
        %1985 = vmatpush1.msra.mxu0 0.0
        %1986 = vmatprep.subr.mxu0 0.0
        %1987 = vmatpush1.msra.mxu0 0.0
        %1988 = vmatprep.subr.mxu0 0.0
        %1989 = vmatpush1.msra.mxu0 0.0
        %1990 = vmatprep.subr.mxu0 0.0
        %1991 = vmatpush1.msra.mxu0 0.0
        %1992 = vmatprep.subr.mxu0 0.0
        %1993 = vmatpush1.msra.mxu0 0.0
        %1994 = vmatprep.subr.mxu0 0.0
        %1995 = vmatpush1.msra.mxu0 0.0
        %1996 = vmatprep.subr.mxu0 0.0
        %1997 = vmatpush1.msra.mxu0 0.0
        %1998 = vmatprep.subr.mxu0 0.0
        %1999 = vmatpush1.msra.mxu0 0.0
        %2000 = vmatprep.subr.mxu0 0.0
        %2001 = vmatpush1.msra.mxu0 0.0
        %2002 = vmatprep.subr.mxu0 0.0
        %2003 = vmatpush1.msra.mxu0 0.0
        %2004 = vmatprep.subr.mxu0 0.0
        %2005 = vmatpush1.msra.mxu0 0.0
        %2006 = vmatprep.subr.mxu0 0.0
        %2007 = vmatpush1.msra.mxu0 0.0
        %2008 = vmatprep.subr.mxu0 0.0
        %2009 = vmatpush1.msra.mxu0 0.0
        %2010 = vmatprep.subr.mxu0 0.0
        %2011 = vmatpush1.msra.mxu0 0.0
        %2012 = vmatprep.subr.mxu0 0.0
        %2013 = vmatpush1.msra.mxu0 0.0
        %2014 = vmatprep.mubr.f32.mxu0 0.0
        %2015 = vmatmul.mubr.f32.gmra.mrb[0].mxu0 %v1846
        %v2016 = vpop.f32.mrb[0].mxu0
        %v2017 = vadd.f32 0.0, %v2016
        %v2018 = vpop.f32.mrb[0].mxu0
        %v2019 = vadd.f32 0.0, %v2018
        %2020 = vmatprep.mubr.f32.mxu0 0.0
        %2021 = vmatmul.mubr.f32.gmra.mrb[0].mxu0 %v1849
        %v2022 = vpop.f32.mrb[0].mxu0
        %v2023 = vadd.f32 0.0, %v2022
        %v2024 = vpop.f32.mrb[0].mxu0
        %v2025 = vadd.f32 0.0, %v2024
        %2026 = vmatprep.mubr.f32.mxu0 0.0
        %2027 = vmatmul.mubr.f32.gmra.mrb[0].mxu0 %v1852
        %v2028 = vpop.f32.mrb[0].mxu0
        %v2029 = vadd.f32 0.0, %v2028
        %v2030 = vpop.f32.mrb[0].mxu0
        %v2031 = vadd.f32 0.0, %v2030
        %2032 = vdwg.mxu0
        %v2033 = vld [vmem:[%s5] sm:$0xff]
        %v2034 = vld [vmem:[%s5 + $0x8] sm:$0xff]
        %v2035 = vld [vmem:[%s5 + $0x10] sm:$0xff]
        %v2036 = vld [vmem:[%s5 + $0x18] sm:$0xff]
        %v2037 = vld [vmem:[%s5 + $0x20] sm:$0xff]
        %v2038 = vld [vmem:[%s5 + $0x28] sm:$0xff]
        %v2039 = vld [vmem:[%s5 + $0x30] sm:$0xff]
        %v2040 = vld [vmem:[%s5 + $0x38] sm:$0xff]
        %v2041 = vld [vmem:[%s5 + $0x40] sm:$0xff]
        %v2042 = vld [vmem:[%s5 + $0x48] sm:$0xff]
        %v2043 = vld [vmem:[%s5 + $0x50] sm:$0xff]
        %v2044 = vld [vmem:[%s5 + $0x58] sm:$0xff]
        %v2045 = vld [vmem:[%s5 + $0x60] sm:$0xff]
        %v2046 = vld [vmem:[%s5 + $0x68] sm:$0xff]
        %v2047 = vld [vmem:[%s5 + $0x70] sm:$0xff]
        %v2048 = vld [vmem:[%s5 + $0x78] sm:$0xff]
        %v2049 = vld [vmem:[%s5 + $0x80] sm:$0xff]
        %v2050 = vld [vmem:[%s5 + $0x88] sm:$0xff]
        %v2051 = vld [vmem:[%s5 + $0x90] sm:$0xff]
        %v2052 = vld [vmem:[%s5 + $0x98] sm:$0xff]
        %v2053 = vld [vmem:[%s5 + $0xa0] sm:$0xff]
        %v2054 = vld [vmem:[%s5 + $0xa8] sm:$0xff]
        %v2055 = vld [vmem:[%s5 + $0xb0] sm:$0xff]
        %v2056 = vld [vmem:[%s5 + $0xb8] sm:$0xff]
        %v2057 = vld [vmem:[%s5 + $0xc0] sm:$0xff]
        %v2058 = vld [vmem:[%s5 + $0xc8] sm:$0xff]
        %v2059 = vld [vmem:[%s5 + $0xd0] sm:$0xff]
        %v2060 = vld [vmem:[%s5 + $0xd8] sm:$0xff]
        %v2061 = vld [vmem:[%s5 + $0xe0] sm:$0xff]
        %v2062 = vld [vmem:[%s5 + $0xe8] sm:$0xff]
        %v2063 = vld [vmem:[%s5 + $0xf0] sm:$0xff]
        %v2064 = vld [vmem:[%s5 + $0xf8] sm:$0xff]
        %v2065 = vld [vmem:[%s5 + $0x100] sm:$0xff]
        %v2066 = vld [vmem:[%s5 + $0x108] sm:$0xff]
        %v2067 = vld [vmem:[%s5 + $0x110] sm:$0xff]
        %v2068 = vld [vmem:[%s5 + $0x118] sm:$0xff]
        %v2069 = vld [vmem:[%s5 + $0x120] sm:$0xff]
        %v2070 = vld [vmem:[%s5 + $0x128] sm:$0xff]
        %v2071 = vld [vmem:[%s5 + $0x130] sm:$0xff]
        %v2072 = vld [vmem:[%s5 + $0x138] sm:$0xff]
        %v2073 = vld [vmem:[%s5 + $0x140] sm:$0xff]
        %v2074 = vld [vmem:[%s5 + $0x148] sm:$0xff]
        %v2075 = vld [vmem:[%s5 + $0x150] sm:$0xff]
        %v2076 = vld [vmem:[%s5 + $0x158] sm:$0xff]
        %v2077 = vld [vmem:[%s5 + $0x160] sm:$0xff]
        %v2078 = vld [vmem:[%s5 + $0x168] sm:$0xff]
        %v2079 = vld [vmem:[%s5 + $0x170] sm:$0xff]
        %v2080 = vld [vmem:[%s5 + $0x178] sm:$0xff]
        %v2081 = vld [vmem:[%s5 + $0x180] sm:$0xff]
        %v2082 = vld [vmem:[%s5 + $0x188] sm:$0xff]
        %v2083 = vld [vmem:[%s5 + $0x190] sm:$0xff]
        %v2084 = vld [vmem:[%s5 + $0x198] sm:$0xff]
        %v2085 = vld [vmem:[%s5 + $0x1a0] sm:$0xff]
        %v2086 = vld [vmem:[%s5 + $0x1a8] sm:$0xff]
        %v2087 = vld [vmem:[%s5 + $0x1b0] sm:$0xff]
        %v2088 = vld [vmem:[%s5 + $0x1b8] sm:$0xff]
        %v2089 = vld [vmem:[%s5 + $0x1c0] sm:$0xff]
        %v2090 = vld [vmem:[%s5 + $0x1c8] sm:$0xff]
        %v2091 = vld [vmem:[%s5 + $0x1d0] sm:$0xff]
        %v2092 = vld [vmem:[%s5 + $0x1d8] sm:$0xff]
        %v2093 = vld [vmem:[%s5 + $0x1e0] sm:$0xff]
        %v2094 = vld [vmem:[%s5 + $0x1e8] sm:$0xff]
        %v2095 = vld [vmem:[%s5 + $0x1f0] sm:$0xff]
        %v2096 = vld [vmem:[%s5 + $0x1f8] sm:$0xff]
        %v2097 = vld [vmem:[%s5 + $0x200] sm:$0xff]
        %v2098 = vld [vmem:[%s5 + $0x208] sm:$0xff]
        %v2099 = vld [vmem:[%s5 + $0x210] sm:$0xff]
        %v2100 = vld [vmem:[%s5 + $0x218] sm:$0xff]
        %v2101 = vld [vmem:[%s5 + $0x220] sm:$0xff]
        %v2102 = vld [vmem:[%s5 + $0x228] sm:$0xff]
        %v2103 = vld [vmem:[%s5 + $0x230] sm:$0xff]
        %v2104 = vld [vmem:[%s5 + $0x238] sm:$0xff]
        %v2105 = vld [vmem:[%s5 + $0x240] sm:$0xff]
        %v2106 = vld [vmem:[%s5 + $0x248] sm:$0xff]
        %v2107 = vld [vmem:[%s5 + $0x250] sm:$0xff]
        %v2108 = vld [vmem:[%s5 + $0x258] sm:$0xff]
        %v2109 = vld [vmem:[%s5 + $0x260] sm:$0xff]
        %v2110 = vld [vmem:[%s5 + $0x268] sm:$0xff]
        %v2111 = vld [vmem:[%s5 + $0x270] sm:$0xff]
        %v2112 = vld [vmem:[%s5 + $0x278] sm:$0xff]
        %v2113 = vld [vmem:[%s5 + $0x280] sm:$0xff]
        %v2114 = vld [vmem:[%s5 + $0x288] sm:$0xff]
        %v2115 = vld [vmem:[%s5 + $0x290] sm:$0xff]
        %v2116 = vld [vmem:[%s5 + $0x298] sm:$0xff]
        %v2117 = vld [vmem:[%s5 + $0x2a0] sm:$0xff]
        %v2118 = vld [vmem:[%s5 + $0x2a8] sm:$0xff]
        %v2119 = vld [vmem:[%s5 + $0x2b0] sm:$0xff]
        %v2120 = vld [vmem:[%s5 + $0x2b8] sm:$0xff]
        %v2121 = vld [vmem:[%s5 + $0x2c0] sm:$0xff]
        %v2122 = vld [vmem:[%s5 + $0x2c8] sm:$0xff]
        %v2123 = vld [vmem:[%s5 + $0x2d0] sm:$0xff]
        %v2124 = vld [vmem:[%s5 + $0x2d8] sm:$0xff]
        %v2125 = vld [vmem:[%s5 + $0x2e0] sm:$0xff]
        %v2126 = vld [vmem:[%s5 + $0x2e8] sm:$0xff]
        %v2127 = vld [vmem:[%s5 + $0x2f0] sm:$0xff]
        %v2128 = vld [vmem:[%s5 + $0x2f8] sm:$0xff]
        %v2129 = vld [vmem:[%s5 + $0x300] sm:$0xff]
        %v2130 = vld [vmem:[%s5 + $0x308] sm:$0xff]
        %v2131 = vld [vmem:[%s5 + $0x310] sm:$0xff]
        %v2132 = vld [vmem:[%s5 + $0x318] sm:$0xff]
        %v2133 = vld [vmem:[%s5 + $0x320] sm:$0xff]
        %v2134 = vld [vmem:[%s5 + $0x328] sm:$0xff]
        %v2135 = vld [vmem:[%s5 + $0x330] sm:$0xff]
        %v2136 = vld [vmem:[%s5 + $0x338] sm:$0xff]
        %v2137 = vld [vmem:[%s5 + $0x340] sm:$0xff]
        %v2138 = vld [vmem:[%s5 + $0x348] sm:$0xff]
        %v2139 = vld [vmem:[%s5 + $0x350] sm:$0xff]
        %v2140 = vld [vmem:[%s5 + $0x358] sm:$0xff]
        %v2141 = vld [vmem:[%s5 + $0x360] sm:$0xff]
        %v2142 = vld [vmem:[%s5 + $0x368] sm:$0xff]
        %v2143 = vld [vmem:[%s5 + $0x370] sm:$0xff]
        %v2144 = vld [vmem:[%s5 + $0x378] sm:$0xff]
        %v2145 = vld [vmem:[%s5 + $0x380] sm:$0xff]
        %v2146 = vld [vmem:[%s5 + $0x388] sm:$0xff]
        %v2147 = vld [vmem:[%s5 + $0x390] sm:$0xff]
        %v2148 = vld [vmem:[%s5 + $0x398] sm:$0xff]
        %v2149 = vld [vmem:[%s5 + $0x3a0] sm:$0xff]
        %v2150 = vld [vmem:[%s5 + $0x3a8] sm:$0xff]
        %v2151 = vld [vmem:[%s5 + $0x3b0] sm:$0xff]
        %v2152 = vld [vmem:[%s5 + $0x3b8] sm:$0xff]
        %v2153 = vld [vmem:[%s5 + $0x3c0] sm:$0xff]
        %v2154 = vld [vmem:[%s5 + $0x3c8] sm:$0xff]
        %v2155 = vld [vmem:[%s5 + $0x3d0] sm:$0xff]
        %v2156 = vld [vmem:[%s5 + $0x3d8] sm:$0xff]
        %v2157 = vld [vmem:[%s5 + $0x3e0] sm:$0xff]
        %v2158 = vld [vmem:[%s5 + $0x3e8] sm:$0xff]
        %v2159 = vld [vmem:[%s5 + $0x3f0] sm:$0xff]
        %v2160 = vld [vmem:[%s5 + $0x3f8] sm:$0xff]
        %v2161 = vunpack.c.l.bf16 %v2033
        %v2162 = vunpack.c.h.bf16 %v2033
        %v2163 = vunpack.c.l.bf16 %v2034
        %v2164 = vunpack.c.h.bf16 %v2034
        %v2165 = vunpack.c.l.bf16 %v2035
        %v2166 = vunpack.c.h.bf16 %v2035
        %v2167 = vunpack.c.l.bf16 %v2036
        %v2168 = vunpack.c.h.bf16 %v2036
        %v2169 = vunpack.c.l.bf16 %v2037
        %v2170 = vunpack.c.h.bf16 %v2037
        %v2171 = vunpack.c.l.bf16 %v2038
        %v2172 = vunpack.c.h.bf16 %v2038
        %v2173 = vunpack.c.l.bf16 %v2039
        %v2174 = vunpack.c.h.bf16 %v2039
        %v2175 = vunpack.c.l.bf16 %v2040
        %v2176 = vunpack.c.h.bf16 %v2040
        %v2177 = vunpack.c.l.bf16 %v2041
        %v2178 = vunpack.c.h.bf16 %v2041
        %v2179 = vunpack.c.l.bf16 %v2042
        %v2180 = vunpack.c.h.bf16 %v2042
        %v2181 = vunpack.c.l.bf16 %v2043
        %v2182 = vunpack.c.h.bf16 %v2043
        %v2183 = vunpack.c.l.bf16 %v2044
        %v2184 = vunpack.c.h.bf16 %v2044
        %v2185 = vunpack.c.l.bf16 %v2045
        %v2186 = vunpack.c.h.bf16 %v2045
        %v2187 = vunpack.c.l.bf16 %v2046
        %v2188 = vunpack.c.h.bf16 %v2046
        %v2189 = vunpack.c.l.bf16 %v2047
        %v2190 = vunpack.c.h.bf16 %v2047
        %v2191 = vunpack.c.l.bf16 %v2048
        %v2192 = vunpack.c.h.bf16 %v2048
        %v2193 = vunpack.c.l.bf16 %v2049
        %v2194 = vunpack.c.h.bf16 %v2049
        %v2195 = vunpack.c.l.bf16 %v2050
        %v2196 = vunpack.c.h.bf16 %v2050
        %v2197 = vunpack.c.l.bf16 %v2051
        %v2198 = vunpack.c.h.bf16 %v2051
        %v2199 = vunpack.c.l.bf16 %v2052
        %v2200 = vunpack.c.h.bf16 %v2052
        %v2201 = vunpack.c.l.bf16 %v2053
        %v2202 = vunpack.c.h.bf16 %v2053
        %v2203 = vunpack.c.l.bf16 %v2054
        %v2204 = vunpack.c.h.bf16 %v2054
        %v2205 = vunpack.c.l.bf16 %v2055
        %v2206 = vunpack.c.h.bf16 %v2055
        %v2207 = vunpack.c.l.bf16 %v2056
        %v2208 = vunpack.c.h.bf16 %v2056
        %v2209 = vunpack.c.l.bf16 %v2057
        %v2210 = vunpack.c.h.bf16 %v2057
        %v2211 = vunpack.c.l.bf16 %v2058
        %v2212 = vunpack.c.h.bf16 %v2058
        %v2213 = vunpack.c.l.bf16 %v2059
        %v2214 = vunpack.c.h.bf16 %v2059
        %v2215 = vunpack.c.l.bf16 %v2060
        %v2216 = vunpack.c.h.bf16 %v2060
        %v2217 = vunpack.c.l.bf16 %v2061
        %v2218 = vunpack.c.h.bf16 %v2061
        %v2219 = vunpack.c.l.bf16 %v2062
        %v2220 = vunpack.c.h.bf16 %v2062
        %v2221 = vunpack.c.l.bf16 %v2063
        %v2222 = vunpack.c.h.bf16 %v2063
        %v2223 = vunpack.c.l.bf16 %v2064
        %v2224 = vunpack.c.h.bf16 %v2064
        %v2225 = vunpack.c.l.bf16 %v2065
        %v2226 = vunpack.c.h.bf16 %v2065
        %v2227 = vunpack.c.l.bf16 %v2066
        %v2228 = vunpack.c.h.bf16 %v2066
        %v2229 = vunpack.c.l.bf16 %v2067
        %v2230 = vunpack.c.h.bf16 %v2067
        %v2231 = vunpack.c.l.bf16 %v2068
        %v2232 = vunpack.c.h.bf16 %v2068
        %v2233 = vunpack.c.l.bf16 %v2069
        %v2234 = vunpack.c.h.bf16 %v2069
        %v2235 = vunpack.c.l.bf16 %v2070
        %v2236 = vunpack.c.h.bf16 %v2070
        %v2237 = vunpack.c.l.bf16 %v2071
        %v2238 = vunpack.c.h.bf16 %v2071
        %v2239 = vunpack.c.l.bf16 %v2072
        %v2240 = vunpack.c.h.bf16 %v2072
        %v2241 = vunpack.c.l.bf16 %v2073
        %v2242 = vunpack.c.h.bf16 %v2073
        %v2243 = vunpack.c.l.bf16 %v2074
        %v2244 = vunpack.c.h.bf16 %v2074
        %v2245 = vunpack.c.l.bf16 %v2075
        %v2246 = vunpack.c.h.bf16 %v2075
        %v2247 = vunpack.c.l.bf16 %v2076
        %v2248 = vunpack.c.h.bf16 %v2076
        %v2249 = vunpack.c.l.bf16 %v2077
        %v2250 = vunpack.c.h.bf16 %v2077
        %v2251 = vunpack.c.l.bf16 %v2078
        %v2252 = vunpack.c.h.bf16 %v2078
        %v2253 = vunpack.c.l.bf16 %v2079
        %v2254 = vunpack.c.h.bf16 %v2079
        %v2255 = vunpack.c.l.bf16 %v2080
        %v2256 = vunpack.c.h.bf16 %v2080
        %v2257 = vunpack.c.l.bf16 %v2081
        %v2258 = vunpack.c.h.bf16 %v2081
        %v2259 = vunpack.c.l.bf16 %v2082
        %v2260 = vunpack.c.h.bf16 %v2082
        %v2261 = vunpack.c.l.bf16 %v2083
        %v2262 = vunpack.c.h.bf16 %v2083
        %v2263 = vunpack.c.l.bf16 %v2084
        %v2264 = vunpack.c.h.bf16 %v2084
        %v2265 = vunpack.c.l.bf16 %v2085
        %v2266 = vunpack.c.h.bf16 %v2085
        %v2267 = vunpack.c.l.bf16 %v2086
        %v2268 = vunpack.c.h.bf16 %v2086
        %v2269 = vunpack.c.l.bf16 %v2087
        %v2270 = vunpack.c.h.bf16 %v2087
        %v2271 = vunpack.c.l.bf16 %v2088
        %v2272 = vunpack.c.h.bf16 %v2088
        %v2273 = vunpack.c.l.bf16 %v2089
        %v2274 = vunpack.c.h.bf16 %v2089
        %v2275 = vunpack.c.l.bf16 %v2090
        %v2276 = vunpack.c.h.bf16 %v2090
        %v2277 = vunpack.c.l.bf16 %v2091
        %v2278 = vunpack.c.h.bf16 %v2091
        %v2279 = vunpack.c.l.bf16 %v2092
        %v2280 = vunpack.c.h.bf16 %v2092
        %v2281 = vunpack.c.l.bf16 %v2093
        %v2282 = vunpack.c.h.bf16 %v2093
        %v2283 = vunpack.c.l.bf16 %v2094
        %v2284 = vunpack.c.h.bf16 %v2094
        %v2285 = vunpack.c.l.bf16 %v2095
        %v2286 = vunpack.c.h.bf16 %v2095
        %v2287 = vunpack.c.l.bf16 %v2096
        %v2288 = vunpack.c.h.bf16 %v2096
        %v2289 = vunpack.c.l.bf16 %v2097
        %v2290 = vunpack.c.h.bf16 %v2097
        %v2291 = vunpack.c.l.bf16 %v2098
        %v2292 = vunpack.c.h.bf16 %v2098
        %v2293 = vunpack.c.l.bf16 %v2099
        %v2294 = vunpack.c.h.bf16 %v2099
        %v2295 = vunpack.c.l.bf16 %v2100
        %v2296 = vunpack.c.h.bf16 %v2100
        %v2297 = vunpack.c.l.bf16 %v2101
        %v2298 = vunpack.c.h.bf16 %v2101
        %v2299 = vunpack.c.l.bf16 %v2102
        %v2300 = vunpack.c.h.bf16 %v2102
        %v2301 = vunpack.c.l.bf16 %v2103
        %v2302 = vunpack.c.h.bf16 %v2103
        %v2303 = vunpack.c.l.bf16 %v2104
        %v2304 = vunpack.c.h.bf16 %v2104
        %v2305 = vunpack.c.l.bf16 %v2105
        %v2306 = vunpack.c.h.bf16 %v2105
        %v2307 = vunpack.c.l.bf16 %v2106
        %v2308 = vunpack.c.h.bf16 %v2106
        %v2309 = vunpack.c.l.bf16 %v2107
        %v2310 = vunpack.c.h.bf16 %v2107
        %v2311 = vunpack.c.l.bf16 %v2108
        %v2312 = vunpack.c.h.bf16 %v2108
        %v2313 = vunpack.c.l.bf16 %v2109
        %v2314 = vunpack.c.h.bf16 %v2109
        %v2315 = vunpack.c.l.bf16 %v2110
        %v2316 = vunpack.c.h.bf16 %v2110
        %v2317 = vunpack.c.l.bf16 %v2111
        %v2318 = vunpack.c.h.bf16 %v2111
        %v2319 = vunpack.c.l.bf16 %v2112
        %v2320 = vunpack.c.h.bf16 %v2112
        %v2321 = vunpack.c.l.bf16 %v2113
        %v2322 = vunpack.c.h.bf16 %v2113
        %v2323 = vunpack.c.l.bf16 %v2114
        %v2324 = vunpack.c.h.bf16 %v2114
        %v2325 = vunpack.c.l.bf16 %v2115
        %v2326 = vunpack.c.h.bf16 %v2115
        %v2327 = vunpack.c.l.bf16 %v2116
        %v2328 = vunpack.c.h.bf16 %v2116
        %v2329 = vunpack.c.l.bf16 %v2117
        %v2330 = vunpack.c.h.bf16 %v2117
        %v2331 = vunpack.c.l.bf16 %v2118
        %v2332 = vunpack.c.h.bf16 %v2118
        %v2333 = vunpack.c.l.bf16 %v2119
        %v2334 = vunpack.c.h.bf16 %v2119
        %v2335 = vunpack.c.l.bf16 %v2120
        %v2336 = vunpack.c.h.bf16 %v2120
        %v2337 = vunpack.c.l.bf16 %v2121
        %v2338 = vunpack.c.h.bf16 %v2121
        %v2339 = vunpack.c.l.bf16 %v2122
        %v2340 = vunpack.c.h.bf16 %v2122
        %v2341 = vunpack.c.l.bf16 %v2123
        %v2342 = vunpack.c.h.bf16 %v2123
        %v2343 = vunpack.c.l.bf16 %v2124
        %v2344 = vunpack.c.h.bf16 %v2124
        %v2345 = vunpack.c.l.bf16 %v2125
        %v2346 = vunpack.c.h.bf16 %v2125
        %v2347 = vunpack.c.l.bf16 %v2126
        %v2348 = vunpack.c.h.bf16 %v2126
        %v2349 = vunpack.c.l.bf16 %v2127
        %v2350 = vunpack.c.h.bf16 %v2127
        %v2351 = vunpack.c.l.bf16 %v2128
        %v2352 = vunpack.c.h.bf16 %v2128
        %v2353 = vunpack.c.l.bf16 %v2129
        %v2354 = vunpack.c.h.bf16 %v2129
        %v2355 = vunpack.c.l.bf16 %v2130
        %v2356 = vunpack.c.h.bf16 %v2130
        %v2357 = vunpack.c.l.bf16 %v2131
        %v2358 = vunpack.c.h.bf16 %v2131
        %v2359 = vunpack.c.l.bf16 %v2132
        %v2360 = vunpack.c.h.bf16 %v2132
        %v2361 = vunpack.c.l.bf16 %v2133
        %v2362 = vunpack.c.h.bf16 %v2133
        %v2363 = vunpack.c.l.bf16 %v2134
        %v2364 = vunpack.c.h.bf16 %v2134
        %v2365 = vunpack.c.l.bf16 %v2135
        %v2366 = vunpack.c.h.bf16 %v2135
        %v2367 = vunpack.c.l.bf16 %v2136
        %v2368 = vunpack.c.h.bf16 %v2136
        %v2369 = vunpack.c.l.bf16 %v2137
        %v2370 = vunpack.c.h.bf16 %v2137
        %v2371 = vunpack.c.l.bf16 %v2138
        %v2372 = vunpack.c.h.bf16 %v2138
        %v2373 = vunpack.c.l.bf16 %v2139
        %v2374 = vunpack.c.h.bf16 %v2139
        %v2375 = vunpack.c.l.bf16 %v2140
        %v2376 = vunpack.c.h.bf16 %v2140
        %v2377 = vunpack.c.l.bf16 %v2141
        %v2378 = vunpack.c.h.bf16 %v2141
        %v2379 = vunpack.c.l.bf16 %v2142
        %v2380 = vunpack.c.h.bf16 %v2142
        %v2381 = vunpack.c.l.bf16 %v2143
        %v2382 = vunpack.c.h.bf16 %v2143
        %v2383 = vunpack.c.l.bf16 %v2144
        %v2384 = vunpack.c.h.bf16 %v2144
        %v2385 = vunpack.c.l.bf16 %v2145
        %v2386 = vunpack.c.h.bf16 %v2145
        %v2387 = vunpack.c.l.bf16 %v2146
        %v2388 = vunpack.c.h.bf16 %v2146
        %v2389 = vunpack.c.l.bf16 %v2147
        %v2390 = vunpack.c.h.bf16 %v2147
        %v2391 = vunpack.c.l.bf16 %v2148
        %v2392 = vunpack.c.h.bf16 %v2148
        %v2393 = vunpack.c.l.bf16 %v2149
        %v2394 = vunpack.c.h.bf16 %v2149
        %v2395 = vunpack.c.l.bf16 %v2150
        %v2396 = vunpack.c.h.bf16 %v2150
        %v2397 = vunpack.c.l.bf16 %v2151
        %v2398 = vunpack.c.h.bf16 %v2151
        %v2399 = vunpack.c.l.bf16 %v2152
        %v2400 = vunpack.c.h.bf16 %v2152
        %v2401 = vunpack.c.l.bf16 %v2153
        %v2402 = vunpack.c.h.bf16 %v2153
        %v2403 = vunpack.c.l.bf16 %v2154
        %v2404 = vunpack.c.h.bf16 %v2154
        %v2405 = vunpack.c.l.bf16 %v2155
        %v2406 = vunpack.c.h.bf16 %v2155
        %v2407 = vunpack.c.l.bf16 %v2156
        %v2408 = vunpack.c.h.bf16 %v2156
        %v2409 = vunpack.c.l.bf16 %v2157
        %v2410 = vunpack.c.h.bf16 %v2157
        %v2411 = vunpack.c.l.bf16 %v2158
        %v2412 = vunpack.c.h.bf16 %v2158
        %v2413 = vunpack.c.l.bf16 %v2159
        %v2414 = vunpack.c.h.bf16 %v2159
        %v2415 = vunpack.c.l.bf16 %v2160
        %v2416 = vunpack.c.h.bf16 %v2160
        %s2417 = scalar_lea.vmem %s4, 24
        %v2418 = vld [vmem:[%s2417] sm:$0xff]
        %v2419 = vld [vmem:[%s2417 + $0x8] sm:$0xff]
        %v2420 = vld [vmem:[%s2417 + $0x10] sm:$0x3f]
        %v2422 = vsel %vm1844, %v2418, 0
        %v2425 = vsel %vm1844, %v2419, 0
        %v2428 = vsel %vm1844, %v2420, 0
        %2430 = vmatprep.subr.mxu0 %v1818
        %2431 = vmatpush1.msra.mxu0 %v1817
        %2432 = vmatprep.subr.mxu0 %v1822
        %2433 = vmatpush1.msra.mxu0 %v1821
        %2434 = vmatprep.subr.mxu0 %v1826
        %2435 = vmatpush1.msra.mxu0 %v1825
        %2436 = vmatprep.subr.mxu0 %v1830
        %2437 = vmatpush1.msra.mxu0 %v1829
        %2438 = vmatprep.subr.mxu0 %v1834
        %2439 = vmatpush1.msra.mxu0 %v1833
        %2440 = vmatprep.subr.mxu0 %v1859
        %2441 = vmatpush1.msra.mxu0 %v1856
        %2442 = vmatprep.subr.mxu0 0.0
        %2443 = vmatpush1.msra.mxu0 0.0
        %2444 = vmatprep.subr.mxu0 0.0
        %2445 = vmatpush1.msra.mxu0 0.0
        %2446 = vmatprep.subr.mxu0 0.0
        %2447 = vmatpush1.msra.mxu0 0.0
        %2448 = vmatprep.subr.mxu0 0.0
        %2449 = vmatpush1.msra.mxu0 0.0
        %2450 = vmatprep.subr.mxu0 0.0
        %2451 = vmatpush1.msra.mxu0 0.0
        %2452 = vmatprep.subr.mxu0 0.0
        %2453 = vmatpush1.msra.mxu0 0.0
        %2454 = vmatprep.subr.mxu0 0.0
        %2455 = vmatpush1.msra.mxu0 0.0
        %2456 = vmatprep.subr.mxu0 0.0
        %2457 = vmatpush1.msra.mxu0 0.0
        %2458 = vmatprep.subr.mxu0 0.0
        %2459 = vmatpush1.msra.mxu0 0.0
        %2460 = vmatprep.subr.mxu0 0.0
        %2461 = vmatpush1.msra.mxu0 0.0
        %2462 = vmatprep.subr.mxu0 0.0
        %2463 = vmatpush1.msra.mxu0 0.0
        %2464 = vmatprep.subr.mxu0 0.0
        %2465 = vmatpush1.msra.mxu0 0.0
        %2466 = vmatprep.subr.mxu0 0.0
        %2467 = vmatpush1.msra.mxu0 0.0
        %2468 = vmatprep.subr.mxu0 0.0
        %2469 = vmatpush1.msra.mxu0 0.0
        %2470 = vmatprep.subr.mxu0 0.0
        %2471 = vmatpush1.msra.mxu0 0.0
        %2472 = vmatprep.subr.mxu0 0.0
        %2473 = vmatpush1.msra.mxu0 0.0
        %2474 = vmatprep.subr.mxu0 0.0
        %2475 = vmatpush1.msra.mxu0 0.0
        %2476 = vmatprep.subr.mxu0 0.0
        %2477 = vmatpush1.msra.mxu0 0.0
        %2478 = vmatprep.subr.mxu0 0.0
        %2479 = vmatpush1.msra.mxu0 0.0
        %2480 = vmatprep.subr.mxu0 0.0
        %2481 = vmatpush1.msra.mxu0 0.0
        %2482 = vmatprep.subr.mxu0 0.0
        %2483 = vmatpush1.msra.mxu0 0.0
        %2484 = vmatprep.subr.mxu0 0.0
        %2485 = vmatpush1.msra.mxu0 0.0
        %2486 = vmatprep.subr.mxu0 0.0
        %2487 = vmatpush1.msra.mxu0 0.0
        %2488 = vmatprep.subr.mxu0 0.0
        %2489 = vmatpush1.msra.mxu0 0.0
        %2490 = vmatprep.subr.mxu0 0.0
        %2491 = vmatpush1.msra.mxu0 0.0
        %2492 = vmatprep.subr.mxu0 0.0
        %2493 = vmatpush1.msra.mxu0 0.0
        %2494 = vmatprep.mubr.f32.mxu0 0.0
        %2495 = vmatmul.mubr.f32.gmra.mrb[0].mxu0 %v2422
        %v2496 = vpop.f32.mrb[0].mxu0
        %v2497 = vadd.f32 0.0, %v2496
        %v2498 = vpop.f32.mrb[0].mxu0
        %v2499 = vadd.f32 0.0, %v2498
        %2500 = vmatprep.mubr.f32.mxu0 0.0
        %2501 = vmatmul.mubr.f32.gmra.mrb[0].mxu0 %v2425
        %v2502 = vpop.f32.mrb[0].mxu0
        %v2503 = vadd.f32 0.0, %v2502
        %v2504 = vpop.f32.mrb[0].mxu0
        %v2505 = vadd.f32 0.0, %v2504
        %2506 = vmatprep.mubr.f32.mxu0 0.0
        %2507 = vmatmul.mubr.f32.gmra.mrb[0].mxu0 %v2428
        %v2508 = vpop.f32.mrb[0].mxu0
        %v2509 = vadd.f32 0.0, %v2508
        %v2510 = vpop.f32.mrb[0].mxu0
        %v2511 = vadd.f32 0.0, %v2510
        %2512 = vdwg.mxu0
        %2513 = vmatprep.subr.mxu0 %v1820
        %2514 = vmatpush1.msra.mxu0 %v1819
        %2515 = vmatprep.subr.mxu0 %v1824
        %2516 = vmatpush1.msra.mxu0 %v1823
        %2517 = vmatprep.subr.mxu0 %v1828
        %2518 = vmatpush1.msra.mxu0 %v1827
        %2519 = vmatprep.subr.mxu0 %v1832
        %2520 = vmatpush1.msra.mxu0 %v1831
        %2521 = vmatprep.subr.mxu0 %v1836
        %2522 = vmatpush1.msra.mxu0 %v1835
        %2523 = vmatprep.subr.mxu0 %v1865
        %2524 = vmatpush1.msra.mxu0 %v1862
        %2525 = vmatprep.subr.mxu0 0.0
        %2526 = vmatpush1.msra.mxu0 0.0
        %2527 = vmatprep.subr.mxu0 0.0
        %2528 = vmatpush1.msra.mxu0 0.0
        %2529 = vmatprep.subr.mxu0 0.0
        %2530 = vmatpush1.msra.mxu0 0.0
        %2531 = vmatprep.subr.mxu0 0.0
        %2532 = vmatpush1.msra.mxu0 0.0
        %2533 = vmatprep.subr.mxu0 0.0
        %2534 = vmatpush1.msra.mxu0 0.0
        %2535 = vmatprep.subr.mxu0 0.0
        %2536 = vmatpush1.msra.mxu0 0.0
        %2537 = vmatprep.subr.mxu0 0.0
        %2538 = vmatpush1.msra.mxu0 0.0
        %2539 = vmatprep.subr.mxu0 0.0
        %2540 = vmatpush1.msra.mxu0 0.0
        %2541 = vmatprep.subr.mxu0 0.0
        %2542 = vmatpush1.msra.mxu0 0.0
        %2543 = vmatprep.subr.mxu0 0.0
        %2544 = vmatpush1.msra.mxu0 0.0
        %2545 = vmatprep.subr.mxu0 0.0
        %2546 = vmatpush1.msra.mxu0 0.0
        %2547 = vmatprep.subr.mxu0 0.0
        %2548 = vmatpush1.msra.mxu0 0.0
        %2549 = vmatprep.subr.mxu0 0.0
        %2550 = vmatpush1.msra.mxu0 0.0
        %2551 = vmatprep.subr.mxu0 0.0
        %2552 = vmatpush1.msra.mxu0 0.0
        %2553 = vmatprep.subr.mxu0 0.0
        %2554 = vmatpush1.msra.mxu0 0.0
        %2555 = vmatprep.subr.mxu0 0.0
        %2556 = vmatpush1.msra.mxu0 0.0
        %2557 = vmatprep.subr.mxu0 0.0
        %2558 = vmatpush1.msra.mxu0 0.0
        %2559 = vmatprep.subr.mxu0 0.0
        %2560 = vmatpush1.msra.mxu0 0.0
        %2561 = vmatprep.subr.mxu0 0.0
        %2562 = vmatpush1.msra.mxu0 0.0
        %2563 = vmatprep.subr.mxu0 0.0
        %2564 = vmatpush1.msra.mxu0 0.0
        %2565 = vmatprep.subr.mxu0 0.0
        %2566 = vmatpush1.msra.mxu0 0.0
        %2567 = vmatprep.subr.mxu0 0.0
        %2568 = vmatpush1.msra.mxu0 0.0
        %2569 = vmatprep.subr.mxu0 0.0
        %2570 = vmatpush1.msra.mxu0 0.0
        %2571 = vmatprep.subr.mxu0 0.0
        %2572 = vmatpush1.msra.mxu0 0.0
        %2573 = vmatprep.subr.mxu0 0.0
        %2574 = vmatpush1.msra.mxu0 0.0
        %2575 = vmatprep.subr.mxu0 0.0
        %2576 = vmatpush1.msra.mxu0 0.0
        %2577 = vmatprep.mubr.f32.mxu0 0.0
        %2578 = vmatmul.mubr.f32.gmra.mrb[0].mxu0 %v2422
        %v2579 = vpop.f32.mrb[0].mxu0
        %v2580 = vadd.f32 0.0, %v2579
        %v2581 = vpop.f32.mrb[0].mxu0
        %v2582 = vadd.f32 0.0, %v2581
        %2583 = vmatprep.mubr.f32.mxu0 0.0
        %2584 = vmatmul.mubr.f32.gmra.mrb[0].mxu0 %v2425
        %v2585 = vpop.f32.mrb[0].mxu0
        %v2586 = vadd.f32 0.0, %v2585
        %v2587 = vpop.f32.mrb[0].mxu0
        %v2588 = vadd.f32 0.0, %v2587
        %2589 = vmatprep.mubr.f32.mxu0 0.0
        %2590 = vmatmul.mubr.f32.gmra.mrb[0].mxu0 %v2428
        %v2591 = vpop.f32.mrb[0].mxu0
        %v2592 = vadd.f32 0.0, %v2591
        %v2593 = vpop.f32.mrb[0].mxu0
        %v2594 = vadd.f32 0.0, %v2593
        %2595 = vdwg.mxu0
        %s2596 = scalar_lea.vmem %s5, 1024
        %v2597 = vld [vmem:[%s2596] sm:$0xff]
        %v2598 = vld [vmem:[%s2596 + $0x8] sm:$0xff]
        %v2599 = vld [vmem:[%s2596 + $0x10] sm:$0xff]
        %v2600 = vld [vmem:[%s2596 + $0x18] sm:$0xff]
        %v2601 = vld [vmem:[%s2596 + $0x20] sm:$0xff]
        %v2602 = vld [vmem:[%s2596 + $0x28] sm:$0xff]
        %v2603 = vld [vmem:[%s2596 + $0x30] sm:$0xff]
        %v2604 = vld [vmem:[%s2596 + $0x38] sm:$0xff]
        %v2605 = vld [vmem:[%s2596 + $0x40] sm:$0xff]
        %v2606 = vld [vmem:[%s2596 + $0x48] sm:$0xff]
        %v2607 = vld [vmem:[%s2596 + $0x50] sm:$0xff]
        %v2608 = vld [vmem:[%s2596 + $0x58] sm:$0xff]
        %v2609 = vld [vmem:[%s2596 + $0x60] sm:$0xff]
        %v2610 = vld [vmem:[%s2596 + $0x68] sm:$0xff]
        %v2611 = vld [vmem:[%s2596 + $0x70] sm:$0xff]
        %v2612 = vld [vmem:[%s2596 + $0x78] sm:$0xff]
        %v2613 = vld [vmem:[%s2596 + $0x80] sm:$0xff]
        %v2614 = vld [vmem:[%s2596 + $0x88] sm:$0xff]
        %v2615 = vld [vmem:[%s2596 + $0x90] sm:$0xff]
        %v2616 = vld [vmem:[%s2596 + $0x98] sm:$0xff]
        %v2617 = vld [vmem:[%s2596 + $0xa0] sm:$0xff]
        %v2618 = vld [vmem:[%s2596 + $0xa8] sm:$0xff]
        %v2619 = vld [vmem:[%s2596 + $0xb0] sm:$0xff]
        %v2620 = vld [vmem:[%s2596 + $0xb8] sm:$0xff]
        %v2621 = vld [vmem:[%s2596 + $0xc0] sm:$0xff]
        %v2622 = vld [vmem:[%s2596 + $0xc8] sm:$0xff]
        %v2623 = vld [vmem:[%s2596 + $0xd0] sm:$0xff]
        %v2624 = vld [vmem:[%s2596 + $0xd8] sm:$0xff]
        %v2625 = vld [vmem:[%s2596 + $0xe0] sm:$0xff]
        %v2626 = vld [vmem:[%s2596 + $0xe8] sm:$0xff]
        %v2627 = vld [vmem:[%s2596 + $0xf0] sm:$0xff]
        %v2628 = vld [vmem:[%s2596 + $0xf8] sm:$0xff]
        %v2629 = vld [vmem:[%s2596 + $0x100] sm:$0xff]
        %v2630 = vld [vmem:[%s2596 + $0x108] sm:$0xff]
        %v2631 = vld [vmem:[%s2596 + $0x110] sm:$0xff]
        %v2632 = vld [vmem:[%s2596 + $0x118] sm:$0xff]
        %v2633 = vld [vmem:[%s2596 + $0x120] sm:$0xff]
        %v2634 = vld [vmem:[%s2596 + $0x128] sm:$0xff]
        %v2635 = vld [vmem:[%s2596 + $0x130] sm:$0xff]
        %v2636 = vld [vmem:[%s2596 + $0x138] sm:$0xff]
        %v2637 = vld [vmem:[%s2596 + $0x140] sm:$0xff]
        %v2638 = vld [vmem:[%s2596 + $0x148] sm:$0xff]
        %v2639 = vld [vmem:[%s2596 + $0x150] sm:$0xff]
        %v2640 = vld [vmem:[%s2596 + $0x158] sm:$0xff]
        %v2641 = vld [vmem:[%s2596 + $0x160] sm:$0xff]
        %v2642 = vld [vmem:[%s2596 + $0x168] sm:$0xff]
        %v2643 = vld [vmem:[%s2596 + $0x170] sm:$0xff]
        %v2644 = vld [vmem:[%s2596 + $0x178] sm:$0xff]
        %v2645 = vld [vmem:[%s2596 + $0x180] sm:$0xff]
        %v2646 = vld [vmem:[%s2596 + $0x188] sm:$0xff]
        %v2647 = vld [vmem:[%s2596 + $0x190] sm:$0xff]
        %v2648 = vld [vmem:[%s2596 + $0x198] sm:$0xff]
        %v2649 = vld [vmem:[%s2596 + $0x1a0] sm:$0xff]
        %v2650 = vld [vmem:[%s2596 + $0x1a8] sm:$0xff]
        %v2651 = vld [vmem:[%s2596 + $0x1b0] sm:$0xff]
        %v2652 = vld [vmem:[%s2596 + $0x1b8] sm:$0xff]
        %v2653 = vld [vmem:[%s2596 + $0x1c0] sm:$0xff]
        %v2654 = vld [vmem:[%s2596 + $0x1c8] sm:$0xff]
        %v2655 = vld [vmem:[%s2596 + $0x1d0] sm:$0xff]
        %v2656 = vld [vmem:[%s2596 + $0x1d8] sm:$0xff]
        %v2657 = vld [vmem:[%s2596 + $0x1e0] sm:$0xff]
        %v2658 = vld [vmem:[%s2596 + $0x1e8] sm:$0xff]
        %v2659 = vld [vmem:[%s2596 + $0x1f0] sm:$0xff]
        %v2660 = vld [vmem:[%s2596 + $0x1f8] sm:$0xff]
        %v2661 = vld [vmem:[%s2596 + $0x200] sm:$0xff]
        %v2662 = vld [vmem:[%s2596 + $0x208] sm:$0xff]
        %v2663 = vld [vmem:[%s2596 + $0x210] sm:$0xff]
        %v2664 = vld [vmem:[%s2596 + $0x218] sm:$0xff]
        %v2665 = vld [vmem:[%s2596 + $0x220] sm:$0xff]
        %v2666 = vld [vmem:[%s2596 + $0x228] sm:$0xff]
        %v2667 = vld [vmem:[%s2596 + $0x230] sm:$0xff]
        %v2668 = vld [vmem:[%s2596 + $0x238] sm:$0xff]
        %v2669 = vld [vmem:[%s2596 + $0x240] sm:$0xff]
        %v2670 = vld [vmem:[%s2596 + $0x248] sm:$0xff]
        %v2671 = vld [vmem:[%s2596 + $0x250] sm:$0xff]
        %v2672 = vld [vmem:[%s2596 + $0x258] sm:$0xff]
        %v2673 = vld [vmem:[%s2596 + $0x260] sm:$0xff]
        %v2674 = vld [vmem:[%s2596 + $0x268] sm:$0xff]
        %v2675 = vld [vmem:[%s2596 + $0x270] sm:$0xff]
        %v2676 = vld [vmem:[%s2596 + $0x278] sm:$0xff]
        %v2677 = vld [vmem:[%s2596 + $0x280] sm:$0xff]
        %v2678 = vld [vmem:[%s2596 + $0x288] sm:$0xff]
        %v2679 = vld [vmem:[%s2596 + $0x290] sm:$0xff]
        %v2680 = vld [vmem:[%s2596 + $0x298] sm:$0xff]
        %v2681 = vld [vmem:[%s2596 + $0x2a0] sm:$0xff]
        %v2682 = vld [vmem:[%s2596 + $0x2a8] sm:$0xff]
        %v2683 = vld [vmem:[%s2596 + $0x2b0] sm:$0xff]
        %v2684 = vld [vmem:[%s2596 + $0x2b8] sm:$0xff]
        %v2685 = vld [vmem:[%s2596 + $0x2c0] sm:$0xff]
        %v2686 = vld [vmem:[%s2596 + $0x2c8] sm:$0xff]
        %v2687 = vld [vmem:[%s2596 + $0x2d0] sm:$0xff]
        %v2688 = vld [vmem:[%s2596 + $0x2d8] sm:$0xff]
        %v2689 = vld [vmem:[%s2596 + $0x2e0] sm:$0xff]
        %v2690 = vld [vmem:[%s2596 + $0x2e8] sm:$0xff]
        %v2691 = vld [vmem:[%s2596 + $0x2f0] sm:$0xff]
        %v2692 = vld [vmem:[%s2596 + $0x2f8] sm:$0xff]
        %v2693 = vld [vmem:[%s2596 + $0x300] sm:$0xff]
        %v2694 = vld [vmem:[%s2596 + $0x308] sm:$0xff]
        %v2695 = vld [vmem:[%s2596 + $0x310] sm:$0xff]
        %v2696 = vld [vmem:[%s2596 + $0x318] sm:$0xff]
        %v2697 = vld [vmem:[%s2596 + $0x320] sm:$0xff]
        %v2698 = vld [vmem:[%s2596 + $0x328] sm:$0xff]
        %v2699 = vld [vmem:[%s2596 + $0x330] sm:$0xff]
        %v2700 = vld [vmem:[%s2596 + $0x338] sm:$0xff]
        %v2701 = vld [vmem:[%s2596 + $0x340] sm:$0xff]
        %v2702 = vld [vmem:[%s2596 + $0x348] sm:$0xff]
        %v2703 = vld [vmem:[%s2596 + $0x350] sm:$0xff]
        %v2704 = vld [vmem:[%s2596 + $0x358] sm:$0xff]
        %v2705 = vld [vmem:[%s2596 + $0x360] sm:$0xff]
        %v2706 = vld [vmem:[%s2596 + $0x368] sm:$0xff]
        %v2707 = vld [vmem:[%s2596 + $0x370] sm:$0xff]
        %v2708 = vld [vmem:[%s2596 + $0x378] sm:$0xff]
        %v2709 = vld [vmem:[%s2596 + $0x380] sm:$0xff]
        %v2710 = vld [vmem:[%s2596 + $0x388] sm:$0xff]
        %v2711 = vld [vmem:[%s2596 + $0x390] sm:$0xff]
        %v2712 = vld [vmem:[%s2596 + $0x398] sm:$0xff]
        %v2713 = vld [vmem:[%s2596 + $0x3a0] sm:$0xff]
        %v2714 = vld [vmem:[%s2596 + $0x3a8] sm:$0xff]
        %v2715 = vld [vmem:[%s2596 + $0x3b0] sm:$0xff]
        %v2716 = vld [vmem:[%s2596 + $0x3b8] sm:$0xff]
        %v2717 = vld [vmem:[%s2596 + $0x3c0] sm:$0xff]
        %v2718 = vld [vmem:[%s2596 + $0x3c8] sm:$0xff]
        %v2719 = vld [vmem:[%s2596 + $0x3d0] sm:$0xff]
        %v2720 = vld [vmem:[%s2596 + $0x3d8] sm:$0xff]
        %v2721 = vld [vmem:[%s2596 + $0x3e0] sm:$0xff]
        %v2722 = vld [vmem:[%s2596 + $0x3e8] sm:$0xff]
        %v2723 = vld [vmem:[%s2596 + $0x3f0] sm:$0xff]
        %v2724 = vld [vmem:[%s2596 + $0x3f8] sm:$0xff]
        %v2725 = vunpack.c.l.bf16 %v2597
        %v2726 = vunpack.c.h.bf16 %v2597
        %v2727 = vunpack.c.l.bf16 %v2598
        %v2728 = vunpack.c.h.bf16 %v2598
        %v2729 = vunpack.c.l.bf16 %v2599
        %v2730 = vunpack.c.h.bf16 %v2599
        %v2731 = vunpack.c.l.bf16 %v2600
        %v2732 = vunpack.c.h.bf16 %v2600
        %v2733 = vunpack.c.l.bf16 %v2601
        %v2734 = vunpack.c.h.bf16 %v2601
        %v2735 = vunpack.c.l.bf16 %v2602
        %v2736 = vunpack.c.h.bf16 %v2602
        %v2737 = vunpack.c.l.bf16 %v2603
        %v2738 = vunpack.c.h.bf16 %v2603
        %v2739 = vunpack.c.l.bf16 %v2604
        %v2740 = vunpack.c.h.bf16 %v2604
        %v2741 = vunpack.c.l.bf16 %v2605
        %v2742 = vunpack.c.h.bf16 %v2605
        %v2743 = vunpack.c.l.bf16 %v2606
        %v2744 = vunpack.c.h.bf16 %v2606
        %v2745 = vunpack.c.l.bf16 %v2607
        %v2746 = vunpack.c.h.bf16 %v2607
        %v2747 = vunpack.c.l.bf16 %v2608
        %v2748 = vunpack.c.h.bf16 %v2608
        %v2749 = vunpack.c.l.bf16 %v2609
        %v2750 = vunpack.c.h.bf16 %v2609
        %v2751 = vunpack.c.l.bf16 %v2610
        %v2752 = vunpack.c.h.bf16 %v2610
        %v2753 = vunpack.c.l.bf16 %v2611
        %v2754 = vunpack.c.h.bf16 %v2611
        %v2755 = vunpack.c.l.bf16 %v2612
        %v2756 = vunpack.c.h.bf16 %v2612
        %v2757 = vunpack.c.l.bf16 %v2613
        %v2758 = vunpack.c.h.bf16 %v2613
        %v2759 = vunpack.c.l.bf16 %v2614
        %v2760 = vunpack.c.h.bf16 %v2614
        %v2761 = vunpack.c.l.bf16 %v2615
        %v2762 = vunpack.c.h.bf16 %v2615
        %v2763 = vunpack.c.l.bf16 %v2616
        %v2764 = vunpack.c.h.bf16 %v2616
        %v2765 = vunpack.c.l.bf16 %v2617
        %v2766 = vunpack.c.h.bf16 %v2617
        %v2767 = vunpack.c.l.bf16 %v2618
        %v2768 = vunpack.c.h.bf16 %v2618
        %v2769 = vunpack.c.l.bf16 %v2619
        %v2770 = vunpack.c.h.bf16 %v2619
        %v2771 = vunpack.c.l.bf16 %v2620
        %v2772 = vunpack.c.h.bf16 %v2620
        %v2773 = vunpack.c.l.bf16 %v2621
        %v2774 = vunpack.c.h.bf16 %v2621
        %v2775 = vunpack.c.l.bf16 %v2622
        %v2776 = vunpack.c.h.bf16 %v2622
        %v2777 = vunpack.c.l.bf16 %v2623
        %v2778 = vunpack.c.h.bf16 %v2623
        %v2779 = vunpack.c.l.bf16 %v2624
        %v2780 = vunpack.c.h.bf16 %v2624
        %v2781 = vunpack.c.l.bf16 %v2625
        %v2782 = vunpack.c.h.bf16 %v2625
        %v2783 = vunpack.c.l.bf16 %v2626
        %v2784 = vunpack.c.h.bf16 %v2626
        %v2785 = vunpack.c.l.bf16 %v2627
        %v2786 = vunpack.c.h.bf16 %v2627
        %v2787 = vunpack.c.l.bf16 %v2628
        %v2788 = vunpack.c.h.bf16 %v2628
        %v2789 = vunpack.c.l.bf16 %v2629
        %v2790 = vunpack.c.h.bf16 %v2629
        %v2791 = vunpack.c.l.bf16 %v2630
        %v2792 = vunpack.c.h.bf16 %v2630
        %v2793 = vunpack.c.l.bf16 %v2631
        %v2794 = vunpack.c.h.bf16 %v2631
        %v2795 = vunpack.c.l.bf16 %v2632
        %v2796 = vunpack.c.h.bf16 %v2632
        %v2797 = vunpack.c.l.bf16 %v2633
        %v2798 = vunpack.c.h.bf16 %v2633
        %v2799 = vunpack.c.l.bf16 %v2634
        %v2800 = vunpack.c.h.bf16 %v2634
        %v2801 = vunpack.c.l.bf16 %v2635
        %v2802 = vunpack.c.h.bf16 %v2635
        %v2803 = vunpack.c.l.bf16 %v2636
        %v2804 = vunpack.c.h.bf16 %v2636
        %v2805 = vunpack.c.l.bf16 %v2637
        %v2806 = vunpack.c.h.bf16 %v2637
        %v2807 = vunpack.c.l.bf16 %v2638
        %v2808 = vunpack.c.h.bf16 %v2638
        %v2809 = vunpack.c.l.bf16 %v2639
        %v2810 = vunpack.c.h.bf16 %v2639
        %v2811 = vunpack.c.l.bf16 %v2640
        %v2812 = vunpack.c.h.bf16 %v2640
        %v2813 = vunpack.c.l.bf16 %v2641
        %v2814 = vunpack.c.h.bf16 %v2641
        %v2815 = vunpack.c.l.bf16 %v2642
        %v2816 = vunpack.c.h.bf16 %v2642
        %v2817 = vunpack.c.l.bf16 %v2643
        %v2818 = vunpack.c.h.bf16 %v2643
        %v2819 = vunpack.c.l.bf16 %v2644
        %v2820 = vunpack.c.h.bf16 %v2644
        %v2821 = vunpack.c.l.bf16 %v2645
        %v2822 = vunpack.c.h.bf16 %v2645
        %v2823 = vunpack.c.l.bf16 %v2646
        %v2824 = vunpack.c.h.bf16 %v2646
        %v2825 = vunpack.c.l.bf16 %v2647
        %v2826 = vunpack.c.h.bf16 %v2647
        %v2827 = vunpack.c.l.bf16 %v2648
        %v2828 = vunpack.c.h.bf16 %v2648
        %v2829 = vunpack.c.l.bf16 %v2649
        %v2830 = vunpack.c.h.bf16 %v2649
        %v2831 = vunpack.c.l.bf16 %v2650
        %v2832 = vunpack.c.h.bf16 %v2650
        %v2833 = vunpack.c.l.bf16 %v2651
        %v2834 = vunpack.c.h.bf16 %v2651
        %v2835 = vunpack.c.l.bf16 %v2652
        %v2836 = vunpack.c.h.bf16 %v2652
        %v2837 = vunpack.c.l.bf16 %v2653
        %v2838 = vunpack.c.h.bf16 %v2653
        %v2839 = vunpack.c.l.bf16 %v2654
        %v2840 = vunpack.c.h.bf16 %v2654
        %v2841 = vunpack.c.l.bf16 %v2655
        %v2842 = vunpack.c.h.bf16 %v2655
        %v2843 = vunpack.c.l.bf16 %v2656
        %v2844 = vunpack.c.h.bf16 %v2656
        %v2845 = vunpack.c.l.bf16 %v2657
        %v2846 = vunpack.c.h.bf16 %v2657
        %v2847 = vunpack.c.l.bf16 %v2658
        %v2848 = vunpack.c.h.bf16 %v2658
        %v2849 = vunpack.c.l.bf16 %v2659
        %v2850 = vunpack.c.h.bf16 %v2659
        %v2851 = vunpack.c.l.bf16 %v2660
        %v2852 = vunpack.c.h.bf16 %v2660
        %v2853 = vunpack.c.l.bf16 %v2661
        %v2854 = vunpack.c.h.bf16 %v2661
        %v2855 = vunpack.c.l.bf16 %v2662
        %v2856 = vunpack.c.h.bf16 %v2662
        %v2857 = vunpack.c.l.bf16 %v2663
        %v2858 = vunpack.c.h.bf16 %v2663
        %v2859 = vunpack.c.l.bf16 %v2664
        %v2860 = vunpack.c.h.bf16 %v2664
        %v2861 = vunpack.c.l.bf16 %v2665
        %v2862 = vunpack.c.h.bf16 %v2665
        %v2863 = vunpack.c.l.bf16 %v2666
        %v2864 = vunpack.c.h.bf16 %v2666
        %v2865 = vunpack.c.l.bf16 %v2667
        %v2866 = vunpack.c.h.bf16 %v2667
        %v2867 = vunpack.c.l.bf16 %v2668
        %v2868 = vunpack.c.h.bf16 %v2668
        %v2869 = vunpack.c.l.bf16 %v2669
        %v2870 = vunpack.c.h.bf16 %v2669
        %v2871 = vunpack.c.l.bf16 %v2670
        %v2872 = vunpack.c.h.bf16 %v2670
        %v2873 = vunpack.c.l.bf16 %v2671
        %v2874 = vunpack.c.h.bf16 %v2671
        %v2875 = vunpack.c.l.bf16 %v2672
        %v2876 = vunpack.c.h.bf16 %v2672
        %v2877 = vunpack.c.l.bf16 %v2673
        %v2878 = vunpack.c.h.bf16 %v2673
        %v2879 = vunpack.c.l.bf16 %v2674
        %v2880 = vunpack.c.h.bf16 %v2674
        %v2881 = vunpack.c.l.bf16 %v2675
        %v2882 = vunpack.c.h.bf16 %v2675
        %v2883 = vunpack.c.l.bf16 %v2676
        %v2884 = vunpack.c.h.bf16 %v2676
        %v2885 = vunpack.c.l.bf16 %v2677
        %v2886 = vunpack.c.h.bf16 %v2677
        %v2887 = vunpack.c.l.bf16 %v2678
        %v2888 = vunpack.c.h.bf16 %v2678
        %v2889 = vunpack.c.l.bf16 %v2679
        %v2890 = vunpack.c.h.bf16 %v2679
        %v2891 = vunpack.c.l.bf16 %v2680
        %v2892 = vunpack.c.h.bf16 %v2680
        %v2893 = vunpack.c.l.bf16 %v2681
        %v2894 = vunpack.c.h.bf16 %v2681
        %v2895 = vunpack.c.l.bf16 %v2682
        %v2896 = vunpack.c.h.bf16 %v2682
        %v2897 = vunpack.c.l.bf16 %v2683
        %v2898 = vunpack.c.h.bf16 %v2683
        %v2899 = vunpack.c.l.bf16 %v2684
        %v2900 = vunpack.c.h.bf16 %v2684
        %v2901 = vunpack.c.l.bf16 %v2685
        %v2902 = vunpack.c.h.bf16 %v2685
        %v2903 = vunpack.c.l.bf16 %v2686
        %v2904 = vunpack.c.h.bf16 %v2686
        %v2905 = vunpack.c.l.bf16 %v2687
        %v2906 = vunpack.c.h.bf16 %v2687
        %v2907 = vunpack.c.l.bf16 %v2688
        %v2908 = vunpack.c.h.bf16 %v2688
        %v2909 = vunpack.c.l.bf16 %v2689
        %v2910 = vunpack.c.h.bf16 %v2689
        %v2911 = vunpack.c.l.bf16 %v2690
        %v2912 = vunpack.c.h.bf16 %v2690
        %v2913 = vunpack.c.l.bf16 %v2691
        %v2914 = vunpack.c.h.bf16 %v2691
        %v2915 = vunpack.c.l.bf16 %v2692
        %v2916 = vunpack.c.h.bf16 %v2692
        %v2917 = vunpack.c.l.bf16 %v2693
        %v2918 = vunpack.c.h.bf16 %v2693
        %v2919 = vunpack.c.l.bf16 %v2694
        %v2920 = vunpack.c.h.bf16 %v2694
        %v2921 = vunpack.c.l.bf16 %v2695
        %v2922 = vunpack.c.h.bf16 %v2695
        %v2923 = vunpack.c.l.bf16 %v2696
        %v2924 = vunpack.c.h.bf16 %v2696
        %v2925 = vunpack.c.l.bf16 %v2697
        %v2926 = vunpack.c.h.bf16 %v2697
        %v2927 = vunpack.c.l.bf16 %v2698
        %v2928 = vunpack.c.h.bf16 %v2698
        %v2929 = vunpack.c.l.bf16 %v2699
        %v2930 = vunpack.c.h.bf16 %v2699
        %v2931 = vunpack.c.l.bf16 %v2700
        %v2932 = vunpack.c.h.bf16 %v2700
        %v2933 = vunpack.c.l.bf16 %v2701
        %v2934 = vunpack.c.h.bf16 %v2701
        %v2935 = vunpack.c.l.bf16 %v2702
        %v2936 = vunpack.c.h.bf16 %v2702
        %v2937 = vunpack.c.l.bf16 %v2703
        %v2938 = vunpack.c.h.bf16 %v2703
        %v2939 = vunpack.c.l.bf16 %v2704
        %v2940 = vunpack.c.h.bf16 %v2704
        %v2941 = vunpack.c.l.bf16 %v2705
        %v2942 = vunpack.c.h.bf16 %v2705
        %v2943 = vunpack.c.l.bf16 %v2706
        %v2944 = vunpack.c.h.bf16 %v2706
        %v2945 = vunpack.c.l.bf16 %v2707
        %v2946 = vunpack.c.h.bf16 %v2707
        %v2947 = vunpack.c.l.bf16 %v2708
        %v2948 = vunpack.c.h.bf16 %v2708
        %v2949 = vunpack.c.l.bf16 %v2709
        %v2950 = vunpack.c.h.bf16 %v2709
        %v2951 = vunpack.c.l.bf16 %v2710
        %v2952 = vunpack.c.h.bf16 %v2710
        %v2953 = vunpack.c.l.bf16 %v2711
        %v2954 = vunpack.c.h.bf16 %v2711
        %v2955 = vunpack.c.l.bf16 %v2712
        %v2956 = vunpack.c.h.bf16 %v2712
        %v2957 = vunpack.c.l.bf16 %v2713
        %v2958 = vunpack.c.h.bf16 %v2713
        %v2959 = vunpack.c.l.bf16 %v2714
        %v2960 = vunpack.c.h.bf16 %v2714
        %v2961 = vunpack.c.l.bf16 %v2715
        %v2962 = vunpack.c.h.bf16 %v2715
        %v2963 = vunpack.c.l.bf16 %v2716
        %v2964 = vunpack.c.h.bf16 %v2716
        %v2965 = vunpack.c.l.bf16 %v2717
        %v2966 = vunpack.c.h.bf16 %v2717
        %v2967 = vunpack.c.l.bf16 %v2718
        %v2968 = vunpack.c.h.bf16 %v2718
        %v2969 = vunpack.c.l.bf16 %v2719
        %v2970 = vunpack.c.h.bf16 %v2719
        %v2971 = vunpack.c.l.bf16 %v2720
        %v2972 = vunpack.c.h.bf16 %v2720
        %v2973 = vunpack.c.l.bf16 %v2721
        %v2974 = vunpack.c.h.bf16 %v2721
        %v2975 = vunpack.c.l.bf16 %v2722
        %v2976 = vunpack.c.h.bf16 %v2722
        %v2977 = vunpack.c.l.bf16 %v2723
        %v2978 = vunpack.c.h.bf16 %v2723
        %v2979 = vunpack.c.l.bf16 %v2724
        %v2980 = vunpack.c.h.bf16 %v2724
        %2981 = vmatprep.subr.mxu0 %v2726
        %2982 = vmatpush1.msra.mxu0 %v2725
        %2983 = vmatprep.subr.mxu0 %v2730
        %2984 = vmatpush1.msra.mxu0 %v2729
        %2985 = vmatprep.subr.mxu0 %v2734
        %2986 = vmatpush1.msra.mxu0 %v2733
        %2987 = vmatprep.subr.mxu0 %v2738
        %2988 = vmatpush1.msra.mxu0 %v2737
        %2989 = vmatprep.subr.mxu0 %v2742
        %2990 = vmatpush1.msra.mxu0 %v2741
        %2991 = vmatprep.subr.mxu0 %v2746
        %2992 = vmatpush1.msra.mxu0 %v2745
        %2993 = vmatprep.subr.mxu0 %v2750
        %2994 = vmatpush1.msra.mxu0 %v2749
        %2995 = vmatprep.subr.mxu0 %v2754
        %2996 = vmatpush1.msra.mxu0 %v2753
        %2997 = vmatprep.subr.mxu0 %v2758
        %2998 = vmatpush1.msra.mxu0 %v2757
        %2999 = vmatprep.subr.mxu0 %v2762
        %3000 = vmatpush1.msra.mxu0 %v2761
        %3001 = vmatprep.subr.mxu0 %v2766
        %3002 = vmatpush1.msra.mxu0 %v2765
        %3003 = vmatprep.subr.mxu0 %v2770
        %3004 = vmatpush1.msra.mxu0 %v2769
        %3005 = vmatprep.subr.mxu0 %v2774
        %3006 = vmatpush1.msra.mxu0 %v2773
        %3007 = vmatprep.subr.mxu0 %v2778
        %3008 = vmatpush1.msra.mxu0 %v2777
        %3009 = vmatprep.subr.mxu0 %v2782
        %3010 = vmatpush1.msra.mxu0 %v2781
        %3011 = vmatprep.subr.mxu0 %v2786
        %3012 = vmatpush1.msra.mxu0 %v2785
        %3013 = vmatprep.subr.mxu0 %v2790
        %3014 = vmatpush1.msra.mxu0 %v2789
        %3015 = vmatprep.subr.mxu0 %v2794
        %3016 = vmatpush1.msra.mxu0 %v2793
        %3017 = vmatprep.subr.mxu0 %v2798
        %3018 = vmatpush1.msra.mxu0 %v2797
        %3019 = vmatprep.subr.mxu0 %v2802
        %3020 = vmatpush1.msra.mxu0 %v2801
        %3021 = vmatprep.subr.mxu0 %v2806
        %3022 = vmatpush1.msra.mxu0 %v2805
        %3023 = vmatprep.subr.mxu0 %v2810
        %3024 = vmatpush1.msra.mxu0 %v2809
        %3025 = vmatprep.subr.mxu0 %v2814
        %3026 = vmatpush1.msra.mxu0 %v2813
        %3027 = vmatprep.subr.mxu0 %v2818
        %3028 = vmatpush1.msra.mxu0 %v2817
        %3029 = vmatprep.subr.mxu0 %v2822
        %3030 = vmatpush1.msra.mxu0 %v2821
        %3031 = vmatprep.subr.mxu0 %v2826
        %3032 = vmatpush1.msra.mxu0 %v2825
        %3033 = vmatprep.subr.mxu0 %v2830
        %3034 = vmatpush1.msra.mxu0 %v2829
        %3035 = vmatprep.subr.mxu0 %v2834
        %3036 = vmatpush1.msra.mxu0 %v2833
        %3037 = vmatprep.subr.mxu0 %v2838
        %3038 = vmatpush1.msra.mxu0 %v2837
        %3039 = vmatprep.subr.mxu0 %v2842
        %3040 = vmatpush1.msra.mxu0 %v2841
        %3041 = vmatprep.subr.mxu0 %v2846
        %3042 = vmatpush1.msra.mxu0 %v2845
        %3043 = vmatprep.subr.mxu0 %v2850
        %3044 = vmatpush1.msra.mxu0 %v2849
        %3045 = vmatprep.mubr.f32.mxu0 %v2499
        %3046 = vmatmul.mubr.f32.gmra.mrb[0].mxu0 %v2497
        %v3047 = vpop.f32.mrb[0].mxu0
        %v3048 = vadd.f32 0.0, %v3047
        %v3049 = vpop.f32.mrb[0].mxu0
        %v3050 = vadd.f32 0.0, %v3049
        %3051 = vmatprep.mubr.f32.mxu0 %v2505
        %3052 = vmatmul.mubr.f32.gmra.mrb[0].mxu0 %v2503
        %v3053 = vpop.f32.mrb[0].mxu0
        %v3054 = vadd.f32 0.0, %v3053
        %v3055 = vpop.f32.mrb[0].mxu0
        %v3056 = vadd.f32 0.0, %v3055
        %3057 = vmatprep.mubr.f32.mxu0 %v2511
        %3058 = vmatmul.mubr.f32.gmra.mrb[0].mxu0 %v2509
        %v3059 = vpop.f32.mrb[0].mxu0
        %v3060 = vadd.f32 0.0, %v3059
        %v3061 = vpop.f32.mrb[0].mxu0
        %v3062 = vadd.f32 0.0, %v3061
        %3063 = vdwg.mxu0
        %3064 = vmatprep.subr.mxu0 %v2854
        %3065 = vmatpush1.msra.mxu0 %v2853
        %3066 = vmatprep.subr.mxu0 %v2858
        %3067 = vmatpush1.msra.mxu0 %v2857
        %3068 = vmatprep.subr.mxu0 %v2862
        %3069 = vmatpush1.msra.mxu0 %v2861
        %3070 = vmatprep.subr.mxu0 %v2866
        %3071 = vmatpush1.msra.mxu0 %v2865
        %3072 = vmatprep.subr.mxu0 %v2870
        %3073 = vmatpush1.msra.mxu0 %v2869
        %3074 = vmatprep.subr.mxu0 %v2874
        %3075 = vmatpush1.msra.mxu0 %v2873
        %3076 = vmatprep.subr.mxu0 %v2878
        %3077 = vmatpush1.msra.mxu0 %v2877
        %3078 = vmatprep.subr.mxu0 %v2882
        %3079 = vmatpush1.msra.mxu0 %v2881
        %3080 = vmatprep.subr.mxu0 %v2886
        %3081 = vmatpush1.msra.mxu0 %v2885
        %3082 = vmatprep.subr.mxu0 %v2890
        %3083 = vmatpush1.msra.mxu0 %v2889
        %3084 = vmatprep.subr.mxu0 %v2894
        %3085 = vmatpush1.msra.mxu0 %v2893
        %3086 = vmatprep.subr.mxu0 %v2898
        %3087 = vmatpush1.msra.mxu0 %v2897
        %3088 = vmatprep.subr.mxu0 %v2902
        %3089 = vmatpush1.msra.mxu0 %v2901
        %3090 = vmatprep.subr.mxu0 %v2906
        %3091 = vmatpush1.msra.mxu0 %v2905
        %3092 = vmatprep.subr.mxu0 %v2910
        %3093 = vmatpush1.msra.mxu0 %v2909
        %3094 = vmatprep.subr.mxu0 %v2914
        %3095 = vmatpush1.msra.mxu0 %v2913
        %3096 = vmatprep.subr.mxu0 %v2918
        %3097 = vmatpush1.msra.mxu0 %v2917
        %3098 = vmatprep.subr.mxu0 %v2922
        %3099 = vmatpush1.msra.mxu0 %v2921
        %3100 = vmatprep.subr.mxu0 %v2926
        %3101 = vmatpush1.msra.mxu0 %v2925
        %3102 = vmatprep.subr.mxu0 %v2930
        %3103 = vmatpush1.msra.mxu0 %v2929
        %3104 = vmatprep.subr.mxu0 %v2934
        %3105 = vmatpush1.msra.mxu0 %v2933
        %3106 = vmatprep.subr.mxu0 %v2938
        %3107 = vmatpush1.msra.mxu0 %v2937
        %3108 = vmatprep.subr.mxu0 %v2942
        %3109 = vmatpush1.msra.mxu0 %v2941
        %3110 = vmatprep.subr.mxu0 %v2946
        %3111 = vmatpush1.msra.mxu0 %v2945
        %3112 = vmatprep.subr.mxu0 %v2950
        %3113 = vmatpush1.msra.mxu0 %v2949
        %3114 = vmatprep.subr.mxu0 %v2954
        %3115 = vmatpush1.msra.mxu0 %v2953
        %3116 = vmatprep.subr.mxu0 %v2958
        %3117 = vmatpush1.msra.mxu0 %v2957
        %3118 = vmatprep.subr.mxu0 %v2962
        %3119 = vmatpush1.msra.mxu0 %v2961
        %3120 = vmatprep.subr.mxu0 %v2966
        %3121 = vmatpush1.msra.mxu0 %v2965
        %3122 = vmatprep.subr.mxu0 %v2970
        %3123 = vmatpush1.msra.mxu0 %v2969
        %3124 = vmatprep.subr.mxu0 %v2974
        %3125 = vmatpush1.msra.mxu0 %v2973
        %3126 = vmatprep.subr.mxu0 %v2978
        %3127 = vmatpush1.msra.mxu0 %v2977
        %3128 = vmatprep.mubr.f32.mxu0 %v2582
        %3129 = vmatmul.mubr.f32.gmra.mrb[0].mxu0 %v2580
        %v3130 = vpop.f32.mrb[0].mxu0
        %v3131 = vadd.f32 %v3048, %v3130
        %v3132 = vpop.f32.mrb[0].mxu0
        %v3133 = vadd.f32 %v3050, %v3132
        %3134 = vmatprep.mubr.f32.mxu0 %v2588
        %3135 = vmatmul.mubr.f32.gmra.mrb[0].mxu0 %v2586
        %v3136 = vpop.f32.mrb[0].mxu0
        %v3137 = vadd.f32 %v3054, %v3136
        %v3138 = vpop.f32.mrb[0].mxu0
        %v3139 = vadd.f32 %v3056, %v3138
        %3140 = vmatprep.mubr.f32.mxu0 %v2594
        %3141 = vmatmul.mubr.f32.gmra.mrb[0].mxu0 %v2592
        %v3142 = vpop.f32.mrb[0].mxu0
        %v3143 = vadd.f32 %v3060, %v3142
        %v3144 = vpop.f32.mrb[0].mxu0
        %v3145 = vadd.f32 %v3062, %v3144
        %3146 = vdwg.mxu0
        %3147 = vmatprep.subr.mxu0 %v2728
        %3148 = vmatpush1.msra.mxu0 %v2727
        %3149 = vmatprep.subr.mxu0 %v2732
        %3150 = vmatpush1.msra.mxu0 %v2731
        %3151 = vmatprep.subr.mxu0 %v2736
        %3152 = vmatpush1.msra.mxu0 %v2735
        %3153 = vmatprep.subr.mxu0 %v2740
        %3154 = vmatpush1.msra.mxu0 %v2739
        %3155 = vmatprep.subr.mxu0 %v2744
        %3156 = vmatpush1.msra.mxu0 %v2743
        %3157 = vmatprep.subr.mxu0 %v2748
        %3158 = vmatpush1.msra.mxu0 %v2747
        %3159 = vmatprep.subr.mxu0 %v2752
        %3160 = vmatpush1.msra.mxu0 %v2751
        %3161 = vmatprep.subr.mxu0 %v2756
        %3162 = vmatpush1.msra.mxu0 %v2755
        %3163 = vmatprep.subr.mxu0 %v2760
        %3164 = vmatpush1.msra.mxu0 %v2759
        %3165 = vmatprep.subr.mxu0 %v2764
        %3166 = vmatpush1.msra.mxu0 %v2763
        %3167 = vmatprep.subr.mxu0 %v2768
        %3168 = vmatpush1.msra.mxu0 %v2767
        %3169 = vmatprep.subr.mxu0 %v2772
        %3170 = vmatpush1.msra.mxu0 %v2771
        %3171 = vmatprep.subr.mxu0 %v2776
        %3172 = vmatpush1.msra.mxu0 %v2775
        %3173 = vmatprep.subr.mxu0 %v2780
        %3174 = vmatpush1.msra.mxu0 %v2779
        %3175 = vmatprep.subr.mxu0 %v2784
        %3176 = vmatpush1.msra.mxu0 %v2783
        %3177 = vmatprep.subr.mxu0 %v2788
        %3178 = vmatpush1.msra.mxu0 %v2787
        %3179 = vmatprep.subr.mxu0 %v2792
        %3180 = vmatpush1.msra.mxu0 %v2791
        %3181 = vmatprep.subr.mxu0 %v2796
        %3182 = vmatpush1.msra.mxu0 %v2795
        %3183 = vmatprep.subr.mxu0 %v2800
        %3184 = vmatpush1.msra.mxu0 %v2799
        %3185 = vmatprep.subr.mxu0 %v2804
        %3186 = vmatpush1.msra.mxu0 %v2803
        %3187 = vmatprep.subr.mxu0 %v2808
        %3188 = vmatpush1.msra.mxu0 %v2807
        %3189 = vmatprep.subr.mxu0 %v2812
        %3190 = vmatpush1.msra.mxu0 %v2811
        %3191 = vmatprep.subr.mxu0 %v2816
        %3192 = vmatpush1.msra.mxu0 %v2815
        %3193 = vmatprep.subr.mxu0 %v2820
        %3194 = vmatpush1.msra.mxu0 %v2819
        %3195 = vmatprep.subr.mxu0 %v2824
        %3196 = vmatpush1.msra.mxu0 %v2823
        %3197 = vmatprep.subr.mxu0 %v2828
        %3198 = vmatpush1.msra.mxu0 %v2827
        %3199 = vmatprep.subr.mxu0 %v2832
        %3200 = vmatpush1.msra.mxu0 %v2831
        %3201 = vmatprep.subr.mxu0 %v2836
        %3202 = vmatpush1.msra.mxu0 %v2835
        %3203 = vmatprep.subr.mxu0 %v2840
        %3204 = vmatpush1.msra.mxu0 %v2839
        %3205 = vmatprep.subr.mxu0 %v2844
        %3206 = vmatpush1.msra.mxu0 %v2843
        %3207 = vmatprep.subr.mxu0 %v2848
        %3208 = vmatpush1.msra.mxu0 %v2847
        %3209 = vmatprep.subr.mxu0 %v2852
        %3210 = vmatpush1.msra.mxu0 %v2851
        %3211 = vmatprep.mubr.f32.mxu0 %v2499
        %3212 = vmatmul.mubr.f32.gmra.mrb[0].mxu0 %v2497
        %v3213 = vpop.f32.mrb[0].mxu0
        %v3214 = vadd.f32 0.0, %v3213
        %v3215 = vpop.f32.mrb[0].mxu0
        %v3216 = vadd.f32 0.0, %v3215
        %3217 = vmatprep.mubr.f32.mxu0 %v2505
        %3218 = vmatmul.mubr.f32.gmra.mrb[0].mxu0 %v2503
        %v3219 = vpop.f32.mrb[0].mxu0
        %v3220 = vadd.f32 0.0, %v3219
        %v3221 = vpop.f32.mrb[0].mxu0
        %v3222 = vadd.f32 0.0, %v3221
        %3223 = vmatprep.mubr.f32.mxu0 %v2511
        %3224 = vmatmul.mubr.f32.gmra.mrb[0].mxu0 %v2509
        %v3225 = vpop.f32.mrb[0].mxu0
        %v3226 = vadd.f32 0.0, %v3225
        %v3227 = vpop.f32.mrb[0].mxu0
        %v3228 = vadd.f32 0.0, %v3227
        %3229 = vdwg.mxu0
        %3230 = vmatprep.subr.mxu0 %v2856
        %3231 = vmatpush1.msra.mxu0 %v2855
        %3232 = vmatprep.subr.mxu0 %v2860
        %3233 = vmatpush1.msra.mxu0 %v2859
        %3234 = vmatprep.subr.mxu0 %v2864
        %3235 = vmatpush1.msra.mxu0 %v2863
        %3236 = vmatprep.subr.mxu0 %v2868
        %3237 = vmatpush1.msra.mxu0 %v2867
        %3238 = vmatprep.subr.mxu0 %v2872
        %3239 = vmatpush1.msra.mxu0 %v2871
        %3240 = vmatprep.subr.mxu0 %v2876
        %3241 = vmatpush1.msra.mxu0 %v2875
        %3242 = vmatprep.subr.mxu0 %v2880
        %3243 = vmatpush1.msra.mxu0 %v2879
        %3244 = vmatprep.subr.mxu0 %v2884
        %3245 = vmatpush1.msra.mxu0 %v2883
        %3246 = vmatprep.subr.mxu0 %v2888
        %3247 = vmatpush1.msra.mxu0 %v2887
        %3248 = vmatprep.subr.mxu0 %v2892
        %3249 = vmatpush1.msra.mxu0 %v2891
        %3250 = vmatprep.subr.mxu0 %v2896
        %3251 = vmatpush1.msra.mxu0 %v2895
        %3252 = vmatprep.subr.mxu0 %v2900
        %3253 = vmatpush1.msra.mxu0 %v2899
        %3254 = vmatprep.subr.mxu0 %v2904
        %3255 = vmatpush1.msra.mxu0 %v2903
        %3256 = vmatprep.subr.mxu0 %v2908
        %3257 = vmatpush1.msra.mxu0 %v2907
        %3258 = vmatprep.subr.mxu0 %v2912
        %3259 = vmatpush1.msra.mxu0 %v2911
        %3260 = vmatprep.subr.mxu0 %v2916
        %3261 = vmatpush1.msra.mxu0 %v2915
        %3262 = vmatprep.subr.mxu0 %v2920
        %3263 = vmatpush1.msra.mxu0 %v2919
        %3264 = vmatprep.subr.mxu0 %v2924
        %3265 = vmatpush1.msra.mxu0 %v2923
        %3266 = vmatprep.subr.mxu0 %v2928
        %3267 = vmatpush1.msra.mxu0 %v2927
        %3268 = vmatprep.subr.mxu0 %v2932
        %3269 = vmatpush1.msra.mxu0 %v2931
        %3270 = vmatprep.subr.mxu0 %v2936
        %3271 = vmatpush1.msra.mxu0 %v2935
        %3272 = vmatprep.subr.mxu0 %v2940
        %3273 = vmatpush1.msra.mxu0 %v2939
        %3274 = vmatprep.subr.mxu0 %v2944
        %3275 = vmatpush1.msra.mxu0 %v2943
        %3276 = vmatprep.subr.mxu0 %v2948
        %3277 = vmatpush1.msra.mxu0 %v2947
        %3278 = vmatprep.subr.mxu0 %v2952
        %3279 = vmatpush1.msra.mxu0 %v2951
        %3280 = vmatprep.subr.mxu0 %v2956
        %3281 = vmatpush1.msra.mxu0 %v2955
        %3282 = vmatprep.subr.mxu0 %v2960
        %3283 = vmatpush1.msra.mxu0 %v2959
        %3284 = vmatprep.subr.mxu0 %v2964
        %3285 = vmatpush1.msra.mxu0 %v2963
        %3286 = vmatprep.subr.mxu0 %v2968
        %3287 = vmatpush1.msra.mxu0 %v2967
        %3288 = vmatprep.subr.mxu0 %v2972
        %3289 = vmatpush1.msra.mxu0 %v2971
        %3290 = vmatprep.subr.mxu0 %v2976
        %3291 = vmatpush1.msra.mxu0 %v2975
        %3292 = vmatprep.subr.mxu0 %v2980
        %3293 = vmatpush1.msra.mxu0 %v2979
        %3294 = vmatprep.mubr.f32.mxu0 %v2582
        %3295 = vmatmul.mubr.f32.gmra.mrb[0].mxu0 %v2580
        %v3296 = vpop.f32.mrb[0].mxu0
        %v3297 = vadd.f32 %v3214, %v3296
        %v3298 = vpop.f32.mrb[0].mxu0
        %v3299 = vadd.f32 %v3216, %v3298
        %3300 = vmatprep.mubr.f32.mxu0 %v2588
        %3301 = vmatmul.mubr.f32.gmra.mrb[0].mxu0 %v2586
        %v3302 = vpop.f32.mrb[0].mxu0
        %v3303 = vadd.f32 %v3220, %v3302
        %v3304 = vpop.f32.mrb[0].mxu0
        %v3305 = vadd.f32 %v3222, %v3304
        %3306 = vmatprep.mubr.f32.mxu0 %v2594
        %3307 = vmatmul.mubr.f32.gmra.mrb[0].mxu0 %v2592
        %v3308 = vpop.f32.mrb[0].mxu0
        %v3309 = vadd.f32 %v3226, %v3308
        %v3310 = vpop.f32.mrb[0].mxu0
        %v3311 = vadd.f32 %v3228, %v3310
        %3312 = vdwg.mxu0
        %3313 = vmatprep.subr.mxu0 %v2162
        %3314 = vmatpush1.msra.mxu0 %v2161
        %3315 = vmatprep.subr.mxu0 %v2166
        %3316 = vmatpush1.msra.mxu0 %v2165
        %3317 = vmatprep.subr.mxu0 %v2170
        %3318 = vmatpush1.msra.mxu0 %v2169
        %3319 = vmatprep.subr.mxu0 %v2174
        %3320 = vmatpush1.msra.mxu0 %v2173
        %3321 = vmatprep.subr.mxu0 %v2178
        %3322 = vmatpush1.msra.mxu0 %v2177
        %3323 = vmatprep.subr.mxu0 %v2182
        %3324 = vmatpush1.msra.mxu0 %v2181
        %3325 = vmatprep.subr.mxu0 %v2186
        %3326 = vmatpush1.msra.mxu0 %v2185
        %3327 = vmatprep.subr.mxu0 %v2190
        %3328 = vmatpush1.msra.mxu0 %v2189
        %3329 = vmatprep.subr.mxu0 %v2194
        %3330 = vmatpush1.msra.mxu0 %v2193
        %3331 = vmatprep.subr.mxu0 %v2198
        %3332 = vmatpush1.msra.mxu0 %v2197
        %3333 = vmatprep.subr.mxu0 %v2202
        %3334 = vmatpush1.msra.mxu0 %v2201
        %3335 = vmatprep.subr.mxu0 %v2206
        %3336 = vmatpush1.msra.mxu0 %v2205
        %3337 = vmatprep.subr.mxu0 %v2210
        %3338 = vmatpush1.msra.mxu0 %v2209
        %3339 = vmatprep.subr.mxu0 %v2214
        %3340 = vmatpush1.msra.mxu0 %v2213
        %3341 = vmatprep.subr.mxu0 %v2218
        %3342 = vmatpush1.msra.mxu0 %v2217
        %3343 = vmatprep.subr.mxu0 %v2222
        %3344 = vmatpush1.msra.mxu0 %v2221
        %3345 = vmatprep.subr.mxu0 %v2226
        %3346 = vmatpush1.msra.mxu0 %v2225
        %3347 = vmatprep.subr.mxu0 %v2230
        %3348 = vmatpush1.msra.mxu0 %v2229
        %3349 = vmatprep.subr.mxu0 %v2234
        %3350 = vmatpush1.msra.mxu0 %v2233
        %3351 = vmatprep.subr.mxu0 %v2238
        %3352 = vmatpush1.msra.mxu0 %v2237
        %3353 = vmatprep.subr.mxu0 %v2242
        %3354 = vmatpush1.msra.mxu0 %v2241
        %3355 = vmatprep.subr.mxu0 %v2246
        %3356 = vmatpush1.msra.mxu0 %v2245
        %3357 = vmatprep.subr.mxu0 %v2250
        %3358 = vmatpush1.msra.mxu0 %v2249
        %3359 = vmatprep.subr.mxu0 %v2254
        %3360 = vmatpush1.msra.mxu0 %v2253
        %3361 = vmatprep.subr.mxu0 %v2258
        %3362 = vmatpush1.msra.mxu0 %v2257
        %3363 = vmatprep.subr.mxu0 %v2262
        %3364 = vmatpush1.msra.mxu0 %v2261
        %3365 = vmatprep.subr.mxu0 %v2266
        %3366 = vmatpush1.msra.mxu0 %v2265
        %3367 = vmatprep.subr.mxu0 %v2270
        %3368 = vmatpush1.msra.mxu0 %v2269
        %3369 = vmatprep.subr.mxu0 %v2274
        %3370 = vmatpush1.msra.mxu0 %v2273
        %3371 = vmatprep.subr.mxu0 %v2278
        %3372 = vmatpush1.msra.mxu0 %v2277
        %3373 = vmatprep.subr.mxu0 %v2282
        %3374 = vmatpush1.msra.mxu0 %v2281
        %3375 = vmatprep.subr.mxu0 %v2286
        %3376 = vmatpush1.msra.mxu0 %v2285
        %3377 = vmatprep.mubr.f32.mxu0 %v1936
        %3378 = vmatmul.mubr.f32.gmra.mrb[0].mxu0 %v1934
        %v3379 = vpop.f32.mrb[0].mxu0
        %v3380 = vadd.f32 %v3131, %v3379
        %v3381 = vpop.f32.mrb[0].mxu0
        %v3382 = vadd.f32 %v3133, %v3381
        %3383 = vmatprep.mubr.f32.mxu0 %v1942
        %3384 = vmatmul.mubr.f32.gmra.mrb[0].mxu0 %v1940
        %v3385 = vpop.f32.mrb[0].mxu0
        %v3386 = vadd.f32 %v3137, %v3385
        %v3387 = vpop.f32.mrb[0].mxu0
        %v3388 = vadd.f32 %v3139, %v3387
        %3389 = vmatprep.mubr.f32.mxu0 %v1948
        %3390 = vmatmul.mubr.f32.gmra.mrb[0].mxu0 %v1946
        %v3391 = vpop.f32.mrb[0].mxu0
        %v3392 = vadd.f32 %v3143, %v3391
        %v3393 = vpop.f32.mrb[0].mxu0
        %v3394 = vadd.f32 %v3145, %v3393
        %3395 = vdwg.mxu0
        %3396 = vmatprep.subr.mxu0 %v2290
        %3397 = vmatpush1.msra.mxu0 %v2289
        %3398 = vmatprep.subr.mxu0 %v2294
        %3399 = vmatpush1.msra.mxu0 %v2293
        %3400 = vmatprep.subr.mxu0 %v2298
        %3401 = vmatpush1.msra.mxu0 %v2297
        %3402 = vmatprep.subr.mxu0 %v2302
        %3403 = vmatpush1.msra.mxu0 %v2301
        %3404 = vmatprep.subr.mxu0 %v2306
        %3405 = vmatpush1.msra.mxu0 %v2305
        %3406 = vmatprep.subr.mxu0 %v2310
        %3407 = vmatpush1.msra.mxu0 %v2309
        %3408 = vmatprep.subr.mxu0 %v2314
        %3409 = vmatpush1.msra.mxu0 %v2313
        %3410 = vmatprep.subr.mxu0 %v2318
        %3411 = vmatpush1.msra.mxu0 %v2317
        %3412 = vmatprep.subr.mxu0 %v2322
        %3413 = vmatpush1.msra.mxu0 %v2321
        %3414 = vmatprep.subr.mxu0 %v2326
        %3415 = vmatpush1.msra.mxu0 %v2325
        %3416 = vmatprep.subr.mxu0 %v2330
        %3417 = vmatpush1.msra.mxu0 %v2329
        %3418 = vmatprep.subr.mxu0 %v2334
        %3419 = vmatpush1.msra.mxu0 %v2333
        %3420 = vmatprep.subr.mxu0 %v2338
        %3421 = vmatpush1.msra.mxu0 %v2337
        %3422 = vmatprep.subr.mxu0 %v2342
        %3423 = vmatpush1.msra.mxu0 %v2341
        %3424 = vmatprep.subr.mxu0 %v2346
        %3425 = vmatpush1.msra.mxu0 %v2345
        %3426 = vmatprep.subr.mxu0 %v2350
        %3427 = vmatpush1.msra.mxu0 %v2349
        %3428 = vmatprep.subr.mxu0 %v2354
        %3429 = vmatpush1.msra.mxu0 %v2353
        %3430 = vmatprep.subr.mxu0 %v2358
        %3431 = vmatpush1.msra.mxu0 %v2357
        %3432 = vmatprep.subr.mxu0 %v2362
        %3433 = vmatpush1.msra.mxu0 %v2361
        %3434 = vmatprep.subr.mxu0 %v2366
        %3435 = vmatpush1.msra.mxu0 %v2365
        %3436 = vmatprep.subr.mxu0 %v2370
        %3437 = vmatpush1.msra.mxu0 %v2369
        %3438 = vmatprep.subr.mxu0 %v2374
        %3439 = vmatpush1.msra.mxu0 %v2373
        %3440 = vmatprep.subr.mxu0 %v2378
        %3441 = vmatpush1.msra.mxu0 %v2377
        %3442 = vmatprep.subr.mxu0 %v2382
        %3443 = vmatpush1.msra.mxu0 %v2381
        %3444 = vmatprep.subr.mxu0 %v2386
        %3445 = vmatpush1.msra.mxu0 %v2385
        %3446 = vmatprep.subr.mxu0 %v2390
        %3447 = vmatpush1.msra.mxu0 %v2389
        %3448 = vmatprep.subr.mxu0 %v2394
        %3449 = vmatpush1.msra.mxu0 %v2393
        %3450 = vmatprep.subr.mxu0 %v2398
        %3451 = vmatpush1.msra.mxu0 %v2397
        %3452 = vmatprep.subr.mxu0 %v2402
        %3453 = vmatpush1.msra.mxu0 %v2401
        %3454 = vmatprep.subr.mxu0 %v2406
        %3455 = vmatpush1.msra.mxu0 %v2405
        %3456 = vmatprep.subr.mxu0 %v2410
        %3457 = vmatpush1.msra.mxu0 %v2409
        %3458 = vmatprep.subr.mxu0 %v2414
        %3459 = vmatpush1.msra.mxu0 %v2413
        %3460 = vmatprep.mubr.f32.mxu0 %v2019
        %3461 = vmatmul.mubr.f32.gmra.mrb[0].mxu0 %v2017
        %v3462 = vpop.f32.mrb[0].mxu0
        %v3463 = vadd.f32 %v3380, %v3462
        %v3464 = vpop.f32.mrb[0].mxu0
        %v3465 = vadd.f32 %v3382, %v3464
        %3466 = vmatprep.mubr.f32.mxu0 %v2025
        %3467 = vmatmul.mubr.f32.gmra.mrb[0].mxu0 %v2023
        %v3468 = vpop.f32.mrb[0].mxu0
        %v3469 = vadd.f32 %v3386, %v3468
        %v3470 = vpop.f32.mrb[0].mxu0
        %v3471 = vadd.f32 %v3388, %v3470
        %3472 = vmatprep.mubr.f32.mxu0 %v2031
        %3473 = vmatmul.mubr.f32.gmra.mrb[0].mxu0 %v2029
        %v3474 = vpop.f32.mrb[0].mxu0
        %v3475 = vadd.f32 %v3392, %v3474
        %v3476 = vpop.f32.mrb[0].mxu0
        %v3477 = vadd.f32 %v3394, %v3476
        %3478 = vdwg.mxu0
        %3479 = vmatprep.subr.mxu0 %v2164
        %3480 = vmatpush1.msra.mxu0 %v2163
        %3481 = vmatprep.subr.mxu0 %v2168
        %3482 = vmatpush1.msra.mxu0 %v2167
        %3483 = vmatprep.subr.mxu0 %v2172
        %3484 = vmatpush1.msra.mxu0 %v2171
        %3485 = vmatprep.subr.mxu0 %v2176
        %3486 = vmatpush1.msra.mxu0 %v2175
        %3487 = vmatprep.subr.mxu0 %v2180
        %3488 = vmatpush1.msra.mxu0 %v2179
        %3489 = vmatprep.subr.mxu0 %v2184
        %3490 = vmatpush1.msra.mxu0 %v2183
        %3491 = vmatprep.subr.mxu0 %v2188
        %3492 = vmatpush1.msra.mxu0 %v2187
        %3493 = vmatprep.subr.mxu0 %v2192
        %3494 = vmatpush1.msra.mxu0 %v2191
        %3495 = vmatprep.subr.mxu0 %v2196
        %3496 = vmatpush1.msra.mxu0 %v2195
        %3497 = vmatprep.subr.mxu0 %v2200
        %3498 = vmatpush1.msra.mxu0 %v2199
        %3499 = vmatprep.subr.mxu0 %v2204
        %3500 = vmatpush1.msra.mxu0 %v2203
        %3501 = vmatprep.subr.mxu0 %v2208
        %3502 = vmatpush1.msra.mxu0 %v2207
        %3503 = vmatprep.subr.mxu0 %v2212
        %3504 = vmatpush1.msra.mxu0 %v2211
        %3505 = vmatprep.subr.mxu0 %v2216
        %3506 = vmatpush1.msra.mxu0 %v2215
        %3507 = vmatprep.subr.mxu0 %v2220
        %3508 = vmatpush1.msra.mxu0 %v2219
        %3509 = vmatprep.subr.mxu0 %v2224
        %3510 = vmatpush1.msra.mxu0 %v2223
        %3511 = vmatprep.subr.mxu0 %v2228
        %3512 = vmatpush1.msra.mxu0 %v2227
        %3513 = vmatprep.subr.mxu0 %v2232
        %3514 = vmatpush1.msra.mxu0 %v2231
        %3515 = vmatprep.subr.mxu0 %v2236
        %3516 = vmatpush1.msra.mxu0 %v2235
        %3517 = vmatprep.subr.mxu0 %v2240
        %3518 = vmatpush1.msra.mxu0 %v2239
        %3519 = vmatprep.subr.mxu0 %v2244
        %3520 = vmatpush1.msra.mxu0 %v2243
        %3521 = vmatprep.subr.mxu0 %v2248
        %3522 = vmatpush1.msra.mxu0 %v2247
        %3523 = vmatprep.subr.mxu0 %v2252
        %3524 = vmatpush1.msra.mxu0 %v2251
        %3525 = vmatprep.subr.mxu0 %v2256
        %3526 = vmatpush1.msra.mxu0 %v2255
        %3527 = vmatprep.subr.mxu0 %v2260
        %3528 = vmatpush1.msra.mxu0 %v2259
        %3529 = vmatprep.subr.mxu0 %v2264
        %3530 = vmatpush1.msra.mxu0 %v2263
        %3531 = vmatprep.subr.mxu0 %v2268
        %3532 = vmatpush1.msra.mxu0 %v2267
        %3533 = vmatprep.subr.mxu0 %v2272
        %3534 = vmatpush1.msra.mxu0 %v2271
        %3535 = vmatprep.subr.mxu0 %v2276
        %3536 = vmatpush1.msra.mxu0 %v2275
        %3537 = vmatprep.subr.mxu0 %v2280
        %3538 = vmatpush1.msra.mxu0 %v2279
        %3539 = vmatprep.subr.mxu0 %v2284
        %3540 = vmatpush1.msra.mxu0 %v2283
        %3541 = vmatprep.subr.mxu0 %v2288
        %3542 = vmatpush1.msra.mxu0 %v2287
        %3543 = vmatprep.mubr.f32.mxu0 %v1936
        %3544 = vmatmul.mubr.f32.gmra.mrb[0].mxu0 %v1934
        %v3545 = vpop.f32.mrb[0].mxu0
        %v3546 = vadd.f32 %v3297, %v3545
        %v3547 = vpop.f32.mrb[0].mxu0
        %v3548 = vadd.f32 %v3299, %v3547
        %3549 = vmatprep.mubr.f32.mxu0 %v1942
        %3550 = vmatmul.mubr.f32.gmra.mrb[0].mxu0 %v1940
        %v3551 = vpop.f32.mrb[0].mxu0
        %v3552 = vadd.f32 %v3303, %v3551
        %v3553 = vpop.f32.mrb[0].mxu0
        %v3554 = vadd.f32 %v3305, %v3553
        %3555 = vmatprep.mubr.f32.mxu0 %v1948
        %3556 = vmatmul.mubr.f32.gmra.mrb[0].mxu0 %v1946
        %v3557 = vpop.f32.mrb[0].mxu0
        %v3558 = vadd.f32 %v3309, %v3557
        %v3559 = vpop.f32.mrb[0].mxu0
        %v3560 = vadd.f32 %v3311, %v3559
        %3561 = vdwg.mxu0
        %3562 = vmatprep.subr.mxu0 %v2292
        %3563 = vmatpush1.msra.mxu0 %v2291
        %3564 = vmatprep.subr.mxu0 %v2296
        %3565 = vmatpush1.msra.mxu0 %v2295
        %3566 = vmatprep.subr.mxu0 %v2300
        %3567 = vmatpush1.msra.mxu0 %v2299
        %3568 = vmatprep.subr.mxu0 %v2304
        %3569 = vmatpush1.msra.mxu0 %v2303
        %3570 = vmatprep.subr.mxu0 %v2308
        %3571 = vmatpush1.msra.mxu0 %v2307
        %3572 = vmatprep.subr.mxu0 %v2312
        %3573 = vmatpush1.msra.mxu0 %v2311
        %3574 = vmatprep.subr.mxu0 %v2316
        %3575 = vmatpush1.msra.mxu0 %v2315
        %3576 = vmatprep.subr.mxu0 %v2320
        %3577 = vmatpush1.msra.mxu0 %v2319
        %3578 = vmatprep.subr.mxu0 %v2324
        %3579 = vmatpush1.msra.mxu0 %v2323
        %3580 = vmatprep.subr.mxu0 %v2328
        %3581 = vmatpush1.msra.mxu0 %v2327
        %3582 = vmatprep.subr.mxu0 %v2332
        %3583 = vmatpush1.msra.mxu0 %v2331
        %3584 = vmatprep.subr.mxu0 %v2336
        %3585 = vmatpush1.msra.mxu0 %v2335
        %3586 = vmatprep.subr.mxu0 %v2340
        %3587 = vmatpush1.msra.mxu0 %v2339
        %3588 = vmatprep.subr.mxu0 %v2344
        %3589 = vmatpush1.msra.mxu0 %v2343
        %3590 = vmatprep.subr.mxu0 %v2348
        %3591 = vmatpush1.msra.mxu0 %v2347
        %3592 = vmatprep.subr.mxu0 %v2352
        %3593 = vmatpush1.msra.mxu0 %v2351
        %3594 = vmatprep.subr.mxu0 %v2356
        %3595 = vmatpush1.msra.mxu0 %v2355
        %3596 = vmatprep.subr.mxu0 %v2360
        %3597 = vmatpush1.msra.mxu0 %v2359
        %3598 = vmatprep.subr.mxu0 %v2364
        %3599 = vmatpush1.msra.mxu0 %v2363
        %3600 = vmatprep.subr.mxu0 %v2368
        %3601 = vmatpush1.msra.mxu0 %v2367
        %3602 = vmatprep.subr.mxu0 %v2372
        %3603 = vmatpush1.msra.mxu0 %v2371
        %3604 = vmatprep.subr.mxu0 %v2376
        %3605 = vmatpush1.msra.mxu0 %v2375
        %3606 = vmatprep.subr.mxu0 %v2380
        %3607 = vmatpush1.msra.mxu0 %v2379
        %3608 = vmatprep.subr.mxu0 %v2384
        %3609 = vmatpush1.msra.mxu0 %v2383
        %3610 = vmatprep.subr.mxu0 %v2388
        %3611 = vmatpush1.msra.mxu0 %v2387
        %3612 = vmatprep.subr.mxu0 %v2392
        %3613 = vmatpush1.msra.mxu0 %v2391
        %3614 = vmatprep.subr.mxu0 %v2396
        %3615 = vmatpush1.msra.mxu0 %v2395
        %3616 = vmatprep.subr.mxu0 %v2400
        %3617 = vmatpush1.msra.mxu0 %v2399
        %3618 = vmatprep.subr.mxu0 %v2404
        %3619 = vmatpush1.msra.mxu0 %v2403
        %3620 = vmatprep.subr.mxu0 %v2408
        %3621 = vmatpush1.msra.mxu0 %v2407
        %3622 = vmatprep.subr.mxu0 %v2412
        %3623 = vmatpush1.msra.mxu0 %v2411
        %3624 = vmatprep.subr.mxu0 %v2416
        %3625 = vmatpush1.msra.mxu0 %v2415
        %3626 = vmatprep.mubr.f32.mxu0 %v2019
        %3627 = vmatmul.mubr.f32.gmra.mrb[0].mxu0 %v2017
        %v3628 = vpop.f32.mrb[0].mxu0
        %v3629 = vadd.f32 %v3546, %v3628
        %v3630 = vpop.f32.mrb[0].mxu0
        %v3631 = vadd.f32 %v3548, %v3630
        %3632 = vmatprep.mubr.f32.mxu0 %v2025
        %3633 = vmatmul.mubr.f32.gmra.mrb[0].mxu0 %v2023
        %v3634 = vpop.f32.mrb[0].mxu0
        %v3635 = vadd.f32 %v3552, %v3634
        %v3636 = vpop.f32.mrb[0].mxu0
        %v3637 = vadd.f32 %v3554, %v3636
        %3638 = vmatprep.mubr.f32.mxu0 %v2031
        %3639 = vmatmul.mubr.f32.gmra.mrb[0].mxu0 %v2029
        %v3640 = vpop.f32.mrb[0].mxu0
        %v3641 = vadd.f32 %v3558, %v3640
        %v3642 = vpop.f32.mrb[0].mxu0
        %v3643 = vadd.f32 %v3560, %v3642
        %3644 = vdwg.mxu0
        %s3645 = scalar_lea.vmem %s4, 48
        %v3646 = vld [vmem:[%s3645] sm:$0xff]
        %v3647 = vld [vmem:[%s3645 + $0x8] sm:$0xff]
        %v3648 = vld [vmem:[%s3645 + $0x10] sm:$0x3f]
        %v3650 = vsel %vm1844, %v3646, 0
        %v3653 = vsel %vm1844, %v3647, 0
        %v3656 = vsel %vm1844, %v3648, 0
        %3658 = vmatprep.subr.mxu0 %v1818
        %3659 = vmatpush1.msra.mxu0 %v1817
        %3660 = vmatprep.subr.mxu0 %v1822
        %3661 = vmatpush1.msra.mxu0 %v1821
        %3662 = vmatprep.subr.mxu0 %v1826
        %3663 = vmatpush1.msra.mxu0 %v1825
        %3664 = vmatprep.subr.mxu0 %v1830
        %3665 = vmatpush1.msra.mxu0 %v1829
        %3666 = vmatprep.subr.mxu0 %v1834
        %3667 = vmatpush1.msra.mxu0 %v1833
        %3668 = vmatprep.subr.mxu0 %v1859
        %3669 = vmatpush1.msra.mxu0 %v1856
        %3670 = vmatprep.subr.mxu0 0.0
        %3671 = vmatpush1.msra.mxu0 0.0
        %3672 = vmatprep.subr.mxu0 0.0
        %3673 = vmatpush1.msra.mxu0 0.0
        %3674 = vmatprep.subr.mxu0 0.0
        %3675 = vmatpush1.msra.mxu0 0.0
        %3676 = vmatprep.subr.mxu0 0.0
        %3677 = vmatpush1.msra.mxu0 0.0
        %3678 = vmatprep.subr.mxu0 0.0
        %3679 = vmatpush1.msra.mxu0 0.0
        %3680 = vmatprep.subr.mxu0 0.0
        %3681 = vmatpush1.msra.mxu0 0.0
        %3682 = vmatprep.subr.mxu0 0.0
        %3683 = vmatpush1.msra.mxu0 0.0
        %3684 = vmatprep.subr.mxu0 0.0
        %3685 = vmatpush1.msra.mxu0 0.0
        %3686 = vmatprep.subr.mxu0 0.0
        %3687 = vmatpush1.msra.mxu0 0.0
        %3688 = vmatprep.subr.mxu0 0.0
        %3689 = vmatpush1.msra.mxu0 0.0
        %3690 = vmatprep.subr.mxu0 0.0
        %3691 = vmatpush1.msra.mxu0 0.0
        %3692 = vmatprep.subr.mxu0 0.0
        %3693 = vmatpush1.msra.mxu0 0.0
        %3694 = vmatprep.subr.mxu0 0.0
        %3695 = vmatpush1.msra.mxu0 0.0
        %3696 = vmatprep.subr.mxu0 0.0
        %3697 = vmatpush1.msra.mxu0 0.0
        %3698 = vmatprep.subr.mxu0 0.0
        %3699 = vmatpush1.msra.mxu0 0.0
        %3700 = vmatprep.subr.mxu0 0.0
        %3701 = vmatpush1.msra.mxu0 0.0
        %3702 = vmatprep.subr.mxu0 0.0
        %3703 = vmatpush1.msra.mxu0 0.0
        %3704 = vmatprep.subr.mxu0 0.0
        %3705 = vmatpush1.msra.mxu0 0.0
        %3706 = vmatprep.subr.mxu0 0.0
        %3707 = vmatpush1.msra.mxu0 0.0
        %3708 = vmatprep.subr.mxu0 0.0
        %3709 = vmatpush1.msra.mxu0 0.0
        %3710 = vmatprep.subr.mxu0 0.0
        %3711 = vmatpush1.msra.mxu0 0.0
        %3712 = vmatprep.subr.mxu0 0.0
        %3713 = vmatpush1.msra.mxu0 0.0
        %3714 = vmatprep.subr.mxu0 0.0
        %3715 = vmatpush1.msra.mxu0 0.0
        %3716 = vmatprep.subr.mxu0 0.0
        %3717 = vmatpush1.msra.mxu0 0.0
        %3718 = vmatprep.subr.mxu0 0.0
        %3719 = vmatpush1.msra.mxu0 0.0
        %3720 = vmatprep.subr.mxu0 0.0
        %3721 = vmatpush1.msra.mxu0 0.0
        %3722 = vmatprep.mubr.f32.mxu0 0.0
        %3723 = vmatmul.mubr.f32.gmra.mrb[0].mxu0 %v3650
        %v3724 = vpop.f32.mrb[0].mxu0
        %v3725 = vadd.f32 0.0, %v3724
        %v3726 = vpop.f32.mrb[0].mxu0
        %v3727 = vadd.f32 0.0, %v3726
        %3728 = vmatprep.mubr.f32.mxu0 0.0
        %3729 = vmatmul.mubr.f32.gmra.mrb[0].mxu0 %v3653
        %v3730 = vpop.f32.mrb[0].mxu0
        %v3731 = vadd.f32 0.0, %v3730
        %v3732 = vpop.f32.mrb[0].mxu0
        %v3733 = vadd.f32 0.0, %v3732
        %3734 = vmatprep.mubr.f32.mxu0 0.0
        %3735 = vmatmul.mubr.f32.gmra.mrb[0].mxu0 %v3656
        %v3736 = vpop.f32.mrb[0].mxu0
        %v3737 = vadd.f32 0.0, %v3736
        %v3738 = vpop.f32.mrb[0].mxu0
        %v3739 = vadd.f32 0.0, %v3738
        %3740 = vdwg.mxu0
        %3741 = vmatprep.subr.mxu0 %v1820
        %3742 = vmatpush1.msra.mxu0 %v1819
        %3743 = vmatprep.subr.mxu0 %v1824
        %3744 = vmatpush1.msra.mxu0 %v1823
        %3745 = vmatprep.subr.mxu0 %v1828
        %3746 = vmatpush1.msra.mxu0 %v1827
        %3747 = vmatprep.subr.mxu0 %v1832
        %3748 = vmatpush1.msra.mxu0 %v1831
        %3749 = vmatprep.subr.mxu0 %v1836
        %3750 = vmatpush1.msra.mxu0 %v1835
        %3751 = vmatprep.subr.mxu0 %v1865
        %3752 = vmatpush1.msra.mxu0 %v1862
        %3753 = vmatprep.subr.mxu0 0.0
        %3754 = vmatpush1.msra.mxu0 0.0
        %3755 = vmatprep.subr.mxu0 0.0
        %3756 = vmatpush1.msra.mxu0 0.0
        %3757 = vmatprep.subr.mxu0 0.0
        %3758 = vmatpush1.msra.mxu0 0.0
        %3759 = vmatprep.subr.mxu0 0.0
        %3760 = vmatpush1.msra.mxu0 0.0
        %3761 = vmatprep.subr.mxu0 0.0
        %3762 = vmatpush1.msra.mxu0 0.0
        %3763 = vmatprep.subr.mxu0 0.0
        %3764 = vmatpush1.msra.mxu0 0.0
        %3765 = vmatprep.subr.mxu0 0.0
        %3766 = vmatpush1.msra.mxu0 0.0
        %3767 = vmatprep.subr.mxu0 0.0
        %3768 = vmatpush1.msra.mxu0 0.0
        %3769 = vmatprep.subr.mxu0 0.0
        %3770 = vmatpush1.msra.mxu0 0.0
        %3771 = vmatprep.subr.mxu0 0.0
        %3772 = vmatpush1.msra.mxu0 0.0
        %3773 = vmatprep.subr.mxu0 0.0
        %3774 = vmatpush1.msra.mxu0 0.0
        %3775 = vmatprep.subr.mxu0 0.0
        %3776 = vmatpush1.msra.mxu0 0.0
        %3777 = vmatprep.subr.mxu0 0.0
        %3778 = vmatpush1.msra.mxu0 0.0
        %3779 = vmatprep.subr.mxu0 0.0
        %3780 = vmatpush1.msra.mxu0 0.0
        %3781 = vmatprep.subr.mxu0 0.0
        %3782 = vmatpush1.msra.mxu0 0.0
        %3783 = vmatprep.subr.mxu0 0.0
        %3784 = vmatpush1.msra.mxu0 0.0
        %3785 = vmatprep.subr.mxu0 0.0
        %3786 = vmatpush1.msra.mxu0 0.0
        %3787 = vmatprep.subr.mxu0 0.0
        %3788 = vmatpush1.msra.mxu0 0.0
        %3789 = vmatprep.subr.mxu0 0.0
        %3790 = vmatpush1.msra.mxu0 0.0
        %3791 = vmatprep.subr.mxu0 0.0
        %3792 = vmatpush1.msra.mxu0 0.0
        %3793 = vmatprep.subr.mxu0 0.0
        %3794 = vmatpush1.msra.mxu0 0.0
        %3795 = vmatprep.subr.mxu0 0.0
        %3796 = vmatpush1.msra.mxu0 0.0
        %3797 = vmatprep.subr.mxu0 0.0
        %3798 = vmatpush1.msra.mxu0 0.0
        %3799 = vmatprep.subr.mxu0 0.0
        %3800 = vmatpush1.msra.mxu0 0.0
        %3801 = vmatprep.subr.mxu0 0.0
        %3802 = vmatpush1.msra.mxu0 0.0
        %3803 = vmatprep.subr.mxu0 0.0
        %3804 = vmatpush1.msra.mxu0 0.0
        %3805 = vmatprep.mubr.f32.mxu0 0.0
        %3806 = vmatmul.mubr.f32.gmra.mrb[0].mxu0 %v3650
        %v3807 = vpop.f32.mrb[0].mxu0
        %v3808 = vadd.f32 0.0, %v3807
        %v3809 = vpop.f32.mrb[0].mxu0
        %v3810 = vadd.f32 0.0, %v3809
        %3811 = vmatprep.mubr.f32.mxu0 0.0
        %3812 = vmatmul.mubr.f32.gmra.mrb[0].mxu0 %v3653
        %v3813 = vpop.f32.mrb[0].mxu0
        %v3814 = vadd.f32 0.0, %v3813
        %v3815 = vpop.f32.mrb[0].mxu0
        %v3816 = vadd.f32 0.0, %v3815
        %3817 = vmatprep.mubr.f32.mxu0 0.0
        %3818 = vmatmul.mubr.f32.gmra.mrb[0].mxu0 %v3656
        %v3819 = vpop.f32.mrb[0].mxu0
        %v3820 = vadd.f32 0.0, %v3819
        %v3821 = vpop.f32.mrb[0].mxu0
        %v3822 = vadd.f32 0.0, %v3821
        %3823 = vdwg.mxu0
        %s3824 = scalar_lea.vmem %s5, 2048
        %v3825 = vld [vmem:[%s3824] sm:$0xff]
        %v3826 = vld [vmem:[%s3824 + $0x8] sm:$0xff]
        %v3827 = vld [vmem:[%s3824 + $0x10] sm:$0xff]
        %v3828 = vld [vmem:[%s3824 + $0x18] sm:$0xff]
        %v3829 = vld [vmem:[%s3824 + $0x20] sm:$0xff]
        %v3830 = vld [vmem:[%s3824 + $0x28] sm:$0xff]
        %v3831 = vld [vmem:[%s3824 + $0x30] sm:$0xff]
        %v3832 = vld [vmem:[%s3824 + $0x38] sm:$0xff]
        %v3833 = vld [vmem:[%s3824 + $0x40] sm:$0xff]
        %v3834 = vld [vmem:[%s3824 + $0x48] sm:$0xff]
        %v3835 = vld [vmem:[%s3824 + $0x50] sm:$0xff]
        %v3836 = vld [vmem:[%s3824 + $0x58] sm:$0xff]
        %v3837 = vld [vmem:[%s3824 + $0x60] sm:$0xff]
        %v3838 = vld [vmem:[%s3824 + $0x68] sm:$0xff]
        %v3839 = vld [vmem:[%s3824 + $0x70] sm:$0xff]
        %v3840 = vld [vmem:[%s3824 + $0x78] sm:$0xff]
        %v3841 = vld [vmem:[%s3824 + $0x80] sm:$0xff]
        %v3842 = vld [vmem:[%s3824 + $0x88] sm:$0xff]
        %v3843 = vld [vmem:[%s3824 + $0x90] sm:$0xff]
        %v3844 = vld [vmem:[%s3824 + $0x98] sm:$0xff]
        %v3845 = vld [vmem:[%s3824 + $0xa0] sm:$0xff]
        %v3846 = vld [vmem:[%s3824 + $0xa8] sm:$0xff]
        %v3847 = vld [vmem:[%s3824 + $0xb0] sm:$0xff]
        %v3848 = vld [vmem:[%s3824 + $0xb8] sm:$0xff]
        %v3849 = vld [vmem:[%s3824 + $0xc0] sm:$0xff]
        %v3850 = vld [vmem:[%s3824 + $0xc8] sm:$0xff]
        %v3851 = vld [vmem:[%s3824 + $0xd0] sm:$0xff]
        %v3852 = vld [vmem:[%s3824 + $0xd8] sm:$0xff]
        %v3853 = vld [vmem:[%s3824 + $0xe0] sm:$0xff]
        %v3854 = vld [vmem:[%s3824 + $0xe8] sm:$0xff]
        %v3855 = vld [vmem:[%s3824 + $0xf0] sm:$0xff]
        %v3856 = vld [vmem:[%s3824 + $0xf8] sm:$0xff]
        %v3857 = vld [vmem:[%s3824 + $0x100] sm:$0xff]
        %v3858 = vld [vmem:[%s3824 + $0x108] sm:$0xff]
        %v3859 = vld [vmem:[%s3824 + $0x110] sm:$0xff]
        %v3860 = vld [vmem:[%s3824 + $0x118] sm:$0xff]
        %v3861 = vld [vmem:[%s3824 + $0x120] sm:$0xff]
        %v3862 = vld [vmem:[%s3824 + $0x128] sm:$0xff]
        %v3863 = vld [vmem:[%s3824 + $0x130] sm:$0xff]
        %v3864 = vld [vmem:[%s3824 + $0x138] sm:$0xff]
        %v3865 = vld [vmem:[%s3824 + $0x140] sm:$0xff]
        %v3866 = vld [vmem:[%s3824 + $0x148] sm:$0xff]
        %v3867 = vld [vmem:[%s3824 + $0x150] sm:$0xff]
        %v3868 = vld [vmem:[%s3824 + $0x158] sm:$0xff]
        %v3869 = vld [vmem:[%s3824 + $0x160] sm:$0xff]
        %v3870 = vld [vmem:[%s3824 + $0x168] sm:$0xff]
        %v3871 = vld [vmem:[%s3824 + $0x170] sm:$0xff]
        %v3872 = vld [vmem:[%s3824 + $0x178] sm:$0xff]
        %v3873 = vld [vmem:[%s3824 + $0x180] sm:$0xff]
        %v3874 = vld [vmem:[%s3824 + $0x188] sm:$0xff]
        %v3875 = vld [vmem:[%s3824 + $0x190] sm:$0xff]
        %v3876 = vld [vmem:[%s3824 + $0x198] sm:$0xff]
        %v3877 = vld [vmem:[%s3824 + $0x1a0] sm:$0xff]
        %v3878 = vld [vmem:[%s3824 + $0x1a8] sm:$0xff]
        %v3879 = vld [vmem:[%s3824 + $0x1b0] sm:$0xff]
        %v3880 = vld [vmem:[%s3824 + $0x1b8] sm:$0xff]
        %v3881 = vld [vmem:[%s3824 + $0x1c0] sm:$0xff]
        %v3882 = vld [vmem:[%s3824 + $0x1c8] sm:$0xff]
        %v3883 = vld [vmem:[%s3824 + $0x1d0] sm:$0xff]
        %v3884 = vld [vmem:[%s3824 + $0x1d8] sm:$0xff]
        %v3885 = vld [vmem:[%s3824 + $0x1e0] sm:$0xff]
        %v3886 = vld [vmem:[%s3824 + $0x1e8] sm:$0xff]
        %v3887 = vld [vmem:[%s3824 + $0x1f0] sm:$0xff]
        %v3888 = vld [vmem:[%s3824 + $0x1f8] sm:$0xff]
        %v3889 = vld [vmem:[%s3824 + $0x200] sm:$0xff]
        %v3890 = vld [vmem:[%s3824 + $0x208] sm:$0xff]
        %v3891 = vld [vmem:[%s3824 + $0x210] sm:$0xff]
        %v3892 = vld [vmem:[%s3824 + $0x218] sm:$0xff]
        %v3893 = vld [vmem:[%s3824 + $0x220] sm:$0xff]
        %v3894 = vld [vmem:[%s3824 + $0x228] sm:$0xff]
        %v3895 = vld [vmem:[%s3824 + $0x230] sm:$0xff]
        %v3896 = vld [vmem:[%s3824 + $0x238] sm:$0xff]
        %v3897 = vld [vmem:[%s3824 + $0x240] sm:$0xff]
        %v3898 = vld [vmem:[%s3824 + $0x248] sm:$0xff]
        %v3899 = vld [vmem:[%s3824 + $0x250] sm:$0xff]
        %v3900 = vld [vmem:[%s3824 + $0x258] sm:$0xff]
        %v3901 = vld [vmem:[%s3824 + $0x260] sm:$0xff]
        %v3902 = vld [vmem:[%s3824 + $0x268] sm:$0xff]
        %v3903 = vld [vmem:[%s3824 + $0x270] sm:$0xff]
        %v3904 = vld [vmem:[%s3824 + $0x278] sm:$0xff]
        %v3905 = vld [vmem:[%s3824 + $0x280] sm:$0xff]
        %v3906 = vld [vmem:[%s3824 + $0x288] sm:$0xff]
        %v3907 = vld [vmem:[%s3824 + $0x290] sm:$0xff]
        %v3908 = vld [vmem:[%s3824 + $0x298] sm:$0xff]
        %v3909 = vld [vmem:[%s3824 + $0x2a0] sm:$0xff]
        %v3910 = vld [vmem:[%s3824 + $0x2a8] sm:$0xff]
        %v3911 = vld [vmem:[%s3824 + $0x2b0] sm:$0xff]
        %v3912 = vld [vmem:[%s3824 + $0x2b8] sm:$0xff]
        %v3913 = vld [vmem:[%s3824 + $0x2c0] sm:$0xff]
        %v3914 = vld [vmem:[%s3824 + $0x2c8] sm:$0xff]
        %v3915 = vld [vmem:[%s3824 + $0x2d0] sm:$0xff]
        %v3916 = vld [vmem:[%s3824 + $0x2d8] sm:$0xff]
        %v3917 = vld [vmem:[%s3824 + $0x2e0] sm:$0xff]
        %v3918 = vld [vmem:[%s3824 + $0x2e8] sm:$0xff]
        %v3919 = vld [vmem:[%s3824 + $0x2f0] sm:$0xff]
        %v3920 = vld [vmem:[%s3824 + $0x2f8] sm:$0xff]
        %v3921 = vld [vmem:[%s3824 + $0x300] sm:$0xff]
        %v3922 = vld [vmem:[%s3824 + $0x308] sm:$0xff]
        %v3923 = vld [vmem:[%s3824 + $0x310] sm:$0xff]
        %v3924 = vld [vmem:[%s3824 + $0x318] sm:$0xff]
        %v3925 = vld [vmem:[%s3824 + $0x320] sm:$0xff]
        %v3926 = vld [vmem:[%s3824 + $0x328] sm:$0xff]
        %v3927 = vld [vmem:[%s3824 + $0x330] sm:$0xff]
        %v3928 = vld [vmem:[%s3824 + $0x338] sm:$0xff]
        %v3929 = vld [vmem:[%s3824 + $0x340] sm:$0xff]
        %v3930 = vld [vmem:[%s3824 + $0x348] sm:$0xff]
        %v3931 = vld [vmem:[%s3824 + $0x350] sm:$0xff]
        %v3932 = vld [vmem:[%s3824 + $0x358] sm:$0xff]
        %v3933 = vld [vmem:[%s3824 + $0x360] sm:$0xff]
        %v3934 = vld [vmem:[%s3824 + $0x368] sm:$0xff]
        %v3935 = vld [vmem:[%s3824 + $0x370] sm:$0xff]
        %v3936 = vld [vmem:[%s3824 + $0x378] sm:$0xff]
        %v3937 = vld [vmem:[%s3824 + $0x380] sm:$0xff]
        %v3938 = vld [vmem:[%s3824 + $0x388] sm:$0xff]
        %v3939 = vld [vmem:[%s3824 + $0x390] sm:$0xff]
        %v3940 = vld [vmem:[%s3824 + $0x398] sm:$0xff]
        %v3941 = vld [vmem:[%s3824 + $0x3a0] sm:$0xff]
        %v3942 = vld [vmem:[%s3824 + $0x3a8] sm:$0xff]
        %v3943 = vld [vmem:[%s3824 + $0x3b0] sm:$0xff]
        %v3944 = vld [vmem:[%s3824 + $0x3b8] sm:$0xff]
        %v3945 = vld [vmem:[%s3824 + $0x3c0] sm:$0xff]
        %v3946 = vld [vmem:[%s3824 + $0x3c8] sm:$0xff]
        %v3947 = vld [vmem:[%s3824 + $0x3d0] sm:$0xff]
        %v3948 = vld [vmem:[%s3824 + $0x3d8] sm:$0xff]
        %v3949 = vld [vmem:[%s3824 + $0x3e0] sm:$0xff]
        %v3950 = vld [vmem:[%s3824 + $0x3e8] sm:$0xff]
        %v3951 = vld [vmem:[%s3824 + $0x3f0] sm:$0xff]
        %v3952 = vld [vmem:[%s3824 + $0x3f8] sm:$0xff]
        %v3953 = vunpack.c.l.bf16 %v3825
        %v3954 = vunpack.c.h.bf16 %v3825
        %v3955 = vunpack.c.l.bf16 %v3826
        %v3956 = vunpack.c.h.bf16 %v3826
        %v3957 = vunpack.c.l.bf16 %v3827
        %v3958 = vunpack.c.h.bf16 %v3827
        %v3959 = vunpack.c.l.bf16 %v3828
        %v3960 = vunpack.c.h.bf16 %v3828
        %v3961 = vunpack.c.l.bf16 %v3829
        %v3962 = vunpack.c.h.bf16 %v3829
        %v3963 = vunpack.c.l.bf16 %v3830
        %v3964 = vunpack.c.h.bf16 %v3830
        %v3965 = vunpack.c.l.bf16 %v3831
        %v3966 = vunpack.c.h.bf16 %v3831
        %v3967 = vunpack.c.l.bf16 %v3832
        %v3968 = vunpack.c.h.bf16 %v3832
        %v3969 = vunpack.c.l.bf16 %v3833
        %v3970 = vunpack.c.h.bf16 %v3833
        %v3971 = vunpack.c.l.bf16 %v3834
        %v3972 = vunpack.c.h.bf16 %v3834
        %v3973 = vunpack.c.l.bf16 %v3835
        %v3974 = vunpack.c.h.bf16 %v3835
        %v3975 = vunpack.c.l.bf16 %v3836
        %v3976 = vunpack.c.h.bf16 %v3836
        %v3977 = vunpack.c.l.bf16 %v3837
        %v3978 = vunpack.c.h.bf16 %v3837
        %v3979 = vunpack.c.l.bf16 %v3838
        %v3980 = vunpack.c.h.bf16 %v3838
        %v3981 = vunpack.c.l.bf16 %v3839
        %v3982 = vunpack.c.h.bf16 %v3839
        %v3983 = vunpack.c.l.bf16 %v3840
        %v3984 = vunpack.c.h.bf16 %v3840
        %v3985 = vunpack.c.l.bf16 %v3841
        %v3986 = vunpack.c.h.bf16 %v3841
        %v3987 = vunpack.c.l.bf16 %v3842
        %v3988 = vunpack.c.h.bf16 %v3842
        %v3989 = vunpack.c.l.bf16 %v3843
        %v3990 = vunpack.c.h.bf16 %v3843
        %v3991 = vunpack.c.l.bf16 %v3844
        %v3992 = vunpack.c.h.bf16 %v3844
        %v3993 = vunpack.c.l.bf16 %v3845
        %v3994 = vunpack.c.h.bf16 %v3845
        %v3995 = vunpack.c.l.bf16 %v3846
        %v3996 = vunpack.c.h.bf16 %v3846
        %v3997 = vunpack.c.l.bf16 %v3847
        %v3998 = vunpack.c.h.bf16 %v3847
        %v3999 = vunpack.c.l.bf16 %v3848
        %v4000 = vunpack.c.h.bf16 %v3848
        %v4001 = vunpack.c.l.bf16 %v3849
        %v4002 = vunpack.c.h.bf16 %v3849
        %v4003 = vunpack.c.l.bf16 %v3850
        %v4004 = vunpack.c.h.bf16 %v3850
        %v4005 = vunpack.c.l.bf16 %v3851
        %v4006 = vunpack.c.h.bf16 %v3851
        %v4007 = vunpack.c.l.bf16 %v3852
        %v4008 = vunpack.c.h.bf16 %v3852
        %v4009 = vunpack.c.l.bf16 %v3853
        %v4010 = vunpack.c.h.bf16 %v3853
        %v4011 = vunpack.c.l.bf16 %v3854
        %v4012 = vunpack.c.h.bf16 %v3854
        %v4013 = vunpack.c.l.bf16 %v3855
        %v4014 = vunpack.c.h.bf16 %v3855
        %v4015 = vunpack.c.l.bf16 %v3856
        %v4016 = vunpack.c.h.bf16 %v3856
        %v4017 = vunpack.c.l.bf16 %v3857
        %v4018 = vunpack.c.h.bf16 %v3857
        %v4019 = vunpack.c.l.bf16 %v3858
        %v4020 = vunpack.c.h.bf16 %v3858
        %v4021 = vunpack.c.l.bf16 %v3859
        %v4022 = vunpack.c.h.bf16 %v3859
        %v4023 = vunpack.c.l.bf16 %v3860
        %v4024 = vunpack.c.h.bf16 %v3860
        %v4025 = vunpack.c.l.bf16 %v3861
        %v4026 = vunpack.c.h.bf16 %v3861
        %v4027 = vunpack.c.l.bf16 %v3862
        %v4028 = vunpack.c.h.bf16 %v3862
        %v4029 = vunpack.c.l.bf16 %v3863
        %v4030 = vunpack.c.h.bf16 %v3863
        %v4031 = vunpack.c.l.bf16 %v3864
        %v4032 = vunpack.c.h.bf16 %v3864
        %v4033 = vunpack.c.l.bf16 %v3865
        %v4034 = vunpack.c.h.bf16 %v3865
        %v4035 = vunpack.c.l.bf16 %v3866
        %v4036 = vunpack.c.h.bf16 %v3866
        %v4037 = vunpack.c.l.bf16 %v3867
        %v4038 = vunpack.c.h.bf16 %v3867
        %v4039 = vunpack.c.l.bf16 %v3868
        %v4040 = vunpack.c.h.bf16 %v3868
        %v4041 = vunpack.c.l.bf16 %v3869
        %v4042 = vunpack.c.h.bf16 %v3869
        %v4043 = vunpack.c.l.bf16 %v3870
        %v4044 = vunpack.c.h.bf16 %v3870
        %v4045 = vunpack.c.l.bf16 %v3871
        %v4046 = vunpack.c.h.bf16 %v3871
        %v4047 = vunpack.c.l.bf16 %v3872
        %v4048 = vunpack.c.h.bf16 %v3872
        %v4049 = vunpack.c.l.bf16 %v3873
        %v4050 = vunpack.c.h.bf16 %v3873
        %v4051 = vunpack.c.l.bf16 %v3874
        %v4052 = vunpack.c.h.bf16 %v3874
        %v4053 = vunpack.c.l.bf16 %v3875
        %v4054 = vunpack.c.h.bf16 %v3875
        %v4055 = vunpack.c.l.bf16 %v3876
        %v4056 = vunpack.c.h.bf16 %v3876
        %v4057 = vunpack.c.l.bf16 %v3877
        %v4058 = vunpack.c.h.bf16 %v3877
        %v4059 = vunpack.c.l.bf16 %v3878
        %v4060 = vunpack.c.h.bf16 %v3878
        %v4061 = vunpack.c.l.bf16 %v3879
        %v4062 = vunpack.c.h.bf16 %v3879
        %v4063 = vunpack.c.l.bf16 %v3880
        %v4064 = vunpack.c.h.bf16 %v3880
        %v4065 = vunpack.c.l.bf16 %v3881
        %v4066 = vunpack.c.h.bf16 %v3881
        %v4067 = vunpack.c.l.bf16 %v3882
        %v4068 = vunpack.c.h.bf16 %v3882
        %v4069 = vunpack.c.l.bf16 %v3883
        %v4070 = vunpack.c.h.bf16 %v3883
        %v4071 = vunpack.c.l.bf16 %v3884
        %v4072 = vunpack.c.h.bf16 %v3884
        %v4073 = vunpack.c.l.bf16 %v3885
        %v4074 = vunpack.c.h.bf16 %v3885
        %v4075 = vunpack.c.l.bf16 %v3886
        %v4076 = vunpack.c.h.bf16 %v3886
        %v4077 = vunpack.c.l.bf16 %v3887
        %v4078 = vunpack.c.h.bf16 %v3887
        %v4079 = vunpack.c.l.bf16 %v3888
        %v4080 = vunpack.c.h.bf16 %v3888
        %v4081 = vunpack.c.l.bf16 %v3889
        %v4082 = vunpack.c.h.bf16 %v3889
        %v4083 = vunpack.c.l.bf16 %v3890
        %v4084 = vunpack.c.h.bf16 %v3890
        %v4085 = vunpack.c.l.bf16 %v3891
        %v4086 = vunpack.c.h.bf16 %v3891
        %v4087 = vunpack.c.l.bf16 %v3892
        %v4088 = vunpack.c.h.bf16 %v3892
        %v4089 = vunpack.c.l.bf16 %v3893
        %v4090 = vunpack.c.h.bf16 %v3893
        %v4091 = vunpack.c.l.bf16 %v3894
        %v4092 = vunpack.c.h.bf16 %v3894
        %v4093 = vunpack.c.l.bf16 %v3895
        %v4094 = vunpack.c.h.bf16 %v3895
        %v4095 = vunpack.c.l.bf16 %v3896
        %v4096 = vunpack.c.h.bf16 %v3896
        %v4097 = vunpack.c.l.bf16 %v3897
        %v4098 = vunpack.c.h.bf16 %v3897
        %v4099 = vunpack.c.l.bf16 %v3898
        %v4100 = vunpack.c.h.bf16 %v3898
        %v4101 = vunpack.c.l.bf16 %v3899
        %v4102 = vunpack.c.h.bf16 %v3899
        %v4103 = vunpack.c.l.bf16 %v3900
        %v4104 = vunpack.c.h.bf16 %v3900
        %v4105 = vunpack.c.l.bf16 %v3901
        %v4106 = vunpack.c.h.bf16 %v3901
        %v4107 = vunpack.c.l.bf16 %v3902
        %v4108 = vunpack.c.h.bf16 %v3902
        %v4109 = vunpack.c.l.bf16 %v3903
        %v4110 = vunpack.c.h.bf16 %v3903
        %v4111 = vunpack.c.l.bf16 %v3904
        %v4112 = vunpack.c.h.bf16 %v3904
        %v4113 = vunpack.c.l.bf16 %v3905
        %v4114 = vunpack.c.h.bf16 %v3905
        %v4115 = vunpack.c.l.bf16 %v3906
        %v4116 = vunpack.c.h.bf16 %v3906
        %v4117 = vunpack.c.l.bf16 %v3907
        %v4118 = vunpack.c.h.bf16 %v3907
        %v4119 = vunpack.c.l.bf16 %v3908
        %v4120 = vunpack.c.h.bf16 %v3908
        %v4121 = vunpack.c.l.bf16 %v3909
        %v4122 = vunpack.c.h.bf16 %v3909
        %v4123 = vunpack.c.l.bf16 %v3910
        %v4124 = vunpack.c.h.bf16 %v3910
        %v4125 = vunpack.c.l.bf16 %v3911
        %v4126 = vunpack.c.h.bf16 %v3911
        %v4127 = vunpack.c.l.bf16 %v3912
        %v4128 = vunpack.c.h.bf16 %v3912
        %v4129 = vunpack.c.l.bf16 %v3913
        %v4130 = vunpack.c.h.bf16 %v3913
        %v4131 = vunpack.c.l.bf16 %v3914
        %v4132 = vunpack.c.h.bf16 %v3914
        %v4133 = vunpack.c.l.bf16 %v3915
        %v4134 = vunpack.c.h.bf16 %v3915
        %v4135 = vunpack.c.l.bf16 %v3916
        %v4136 = vunpack.c.h.bf16 %v3916
        %v4137 = vunpack.c.l.bf16 %v3917
        %v4138 = vunpack.c.h.bf16 %v3917
        %v4139 = vunpack.c.l.bf16 %v3918
        %v4140 = vunpack.c.h.bf16 %v3918
        %v4141 = vunpack.c.l.bf16 %v3919
        %v4142 = vunpack.c.h.bf16 %v3919
        %v4143 = vunpack.c.l.bf16 %v3920
        %v4144 = vunpack.c.h.bf16 %v3920
        %v4145 = vunpack.c.l.bf16 %v3921
        %v4146 = vunpack.c.h.bf16 %v3921
        %v4147 = vunpack.c.l.bf16 %v3922
        %v4148 = vunpack.c.h.bf16 %v3922
        %v4149 = vunpack.c.l.bf16 %v3923
        %v4150 = vunpack.c.h.bf16 %v3923
        %v4151 = vunpack.c.l.bf16 %v3924
        %v4152 = vunpack.c.h.bf16 %v3924
        %v4153 = vunpack.c.l.bf16 %v3925
        %v4154 = vunpack.c.h.bf16 %v3925
        %v4155 = vunpack.c.l.bf16 %v3926
        %v4156 = vunpack.c.h.bf16 %v3926
        %v4157 = vunpack.c.l.bf16 %v3927
        %v4158 = vunpack.c.h.bf16 %v3927
        %v4159 = vunpack.c.l.bf16 %v3928
        %v4160 = vunpack.c.h.bf16 %v3928
        %v4161 = vunpack.c.l.bf16 %v3929
        %v4162 = vunpack.c.h.bf16 %v3929
        %v4163 = vunpack.c.l.bf16 %v3930
        %v4164 = vunpack.c.h.bf16 %v3930
        %v4165 = vunpack.c.l.bf16 %v3931
        %v4166 = vunpack.c.h.bf16 %v3931
        %v4167 = vunpack.c.l.bf16 %v3932
        %v4168 = vunpack.c.h.bf16 %v3932
        %v4169 = vunpack.c.l.bf16 %v3933
        %v4170 = vunpack.c.h.bf16 %v3933
        %v4171 = vunpack.c.l.bf16 %v3934
        %v4172 = vunpack.c.h.bf16 %v3934
        %v4173 = vunpack.c.l.bf16 %v3935
        %v4174 = vunpack.c.h.bf16 %v3935
        %v4175 = vunpack.c.l.bf16 %v3936
        %v4176 = vunpack.c.h.bf16 %v3936
        %v4177 = vunpack.c.l.bf16 %v3937
        %v4178 = vunpack.c.h.bf16 %v3937
        %v4179 = vunpack.c.l.bf16 %v3938
        %v4180 = vunpack.c.h.bf16 %v3938
        %v4181 = vunpack.c.l.bf16 %v3939
        %v4182 = vunpack.c.h.bf16 %v3939
        %v4183 = vunpack.c.l.bf16 %v3940
        %v4184 = vunpack.c.h.bf16 %v3940
        %v4185 = vunpack.c.l.bf16 %v3941
        %v4186 = vunpack.c.h.bf16 %v3941
        %v4187 = vunpack.c.l.bf16 %v3942
        %v4188 = vunpack.c.h.bf16 %v3942
        %v4189 = vunpack.c.l.bf16 %v3943
        %v4190 = vunpack.c.h.bf16 %v3943
        %v4191 = vunpack.c.l.bf16 %v3944
        %v4192 = vunpack.c.h.bf16 %v3944
        %v4193 = vunpack.c.l.bf16 %v3945
        %v4194 = vunpack.c.h.bf16 %v3945
        %v4195 = vunpack.c.l.bf16 %v3946
        %v4196 = vunpack.c.h.bf16 %v3946
        %v4197 = vunpack.c.l.bf16 %v3947
        %v4198 = vunpack.c.h.bf16 %v3947
        %v4199 = vunpack.c.l.bf16 %v3948
        %v4200 = vunpack.c.h.bf16 %v3948
        %v4201 = vunpack.c.l.bf16 %v3949
        %v4202 = vunpack.c.h.bf16 %v3949
        %v4203 = vunpack.c.l.bf16 %v3950
        %v4204 = vunpack.c.h.bf16 %v3950
        %v4205 = vunpack.c.l.bf16 %v3951
        %v4206 = vunpack.c.h.bf16 %v3951
        %v4207 = vunpack.c.l.bf16 %v3952
        %v4208 = vunpack.c.h.bf16 %v3952
        %4209 = vmatprep.subr.mxu0 %v3954
        %4210 = vmatpush1.msra.mxu0 %v3953
        %4211 = vmatprep.subr.mxu0 %v3958
        %4212 = vmatpush1.msra.mxu0 %v3957
        %4213 = vmatprep.subr.mxu0 %v3962
        %4214 = vmatpush1.msra.mxu0 %v3961
        %4215 = vmatprep.subr.mxu0 %v3966
        %4216 = vmatpush1.msra.mxu0 %v3965
        %4217 = vmatprep.subr.mxu0 %v3970
        %4218 = vmatpush1.msra.mxu0 %v3969
        %4219 = vmatprep.subr.mxu0 %v3974
        %4220 = vmatpush1.msra.mxu0 %v3973
        %4221 = vmatprep.subr.mxu0 %v3978
        %4222 = vmatpush1.msra.mxu0 %v3977
        %4223 = vmatprep.subr.mxu0 %v3982
        %4224 = vmatpush1.msra.mxu0 %v3981
        %4225 = vmatprep.subr.mxu0 %v3986
        %4226 = vmatpush1.msra.mxu0 %v3985
        %4227 = vmatprep.subr.mxu0 %v3990
        %4228 = vmatpush1.msra.mxu0 %v3989
        %4229 = vmatprep.subr.mxu0 %v3994
        %4230 = vmatpush1.msra.mxu0 %v3993
        %4231 = vmatprep.subr.mxu0 %v3998
        %4232 = vmatpush1.msra.mxu0 %v3997
        %4233 = vmatprep.subr.mxu0 %v4002
        %4234 = vmatpush1.msra.mxu0 %v4001
        %4235 = vmatprep.subr.mxu0 %v4006
        %4236 = vmatpush1.msra.mxu0 %v4005
        %4237 = vmatprep.subr.mxu0 %v4010
        %4238 = vmatpush1.msra.mxu0 %v4009
        %4239 = vmatprep.subr.mxu0 %v4014
        %4240 = vmatpush1.msra.mxu0 %v4013
        %4241 = vmatprep.subr.mxu0 %v4018
        %4242 = vmatpush1.msra.mxu0 %v4017
        %4243 = vmatprep.subr.mxu0 %v4022
        %4244 = vmatpush1.msra.mxu0 %v4021
        %4245 = vmatprep.subr.mxu0 %v4026
        %4246 = vmatpush1.msra.mxu0 %v4025
        %4247 = vmatprep.subr.mxu0 %v4030
        %4248 = vmatpush1.msra.mxu0 %v4029
        %4249 = vmatprep.subr.mxu0 %v4034
        %4250 = vmatpush1.msra.mxu0 %v4033
        %4251 = vmatprep.subr.mxu0 %v4038
        %4252 = vmatpush1.msra.mxu0 %v4037
        %4253 = vmatprep.subr.mxu0 %v4042
        %4254 = vmatpush1.msra.mxu0 %v4041
        %4255 = vmatprep.subr.mxu0 %v4046
        %4256 = vmatpush1.msra.mxu0 %v4045
        %4257 = vmatprep.subr.mxu0 %v4050
        %4258 = vmatpush1.msra.mxu0 %v4049
        %4259 = vmatprep.subr.mxu0 %v4054
        %4260 = vmatpush1.msra.mxu0 %v4053
        %4261 = vmatprep.subr.mxu0 %v4058
        %4262 = vmatpush1.msra.mxu0 %v4057
        %4263 = vmatprep.subr.mxu0 %v4062
        %4264 = vmatpush1.msra.mxu0 %v4061
        %4265 = vmatprep.subr.mxu0 %v4066
        %4266 = vmatpush1.msra.mxu0 %v4065
        %4267 = vmatprep.subr.mxu0 %v4070
        %4268 = vmatpush1.msra.mxu0 %v4069
        %4269 = vmatprep.subr.mxu0 %v4074
        %4270 = vmatpush1.msra.mxu0 %v4073
        %4271 = vmatprep.subr.mxu0 %v4078
        %4272 = vmatpush1.msra.mxu0 %v4077
        %4273 = vmatprep.mubr.f32.mxu0 %v3727
        %4274 = vmatmul.mubr.f32.gmra.mrb[0].mxu0 %v3725
        %v4275 = vpop.f32.mrb[0].mxu0
        %v4276 = vadd.f32 0.0, %v4275
        %v4277 = vpop.f32.mrb[0].mxu0
        %v4278 = vadd.f32 0.0, %v4277
        %4279 = vmatprep.mubr.f32.mxu0 %v3733
        %4280 = vmatmul.mubr.f32.gmra.mrb[0].mxu0 %v3731
        %v4281 = vpop.f32.mrb[0].mxu0
        %v4282 = vadd.f32 0.0, %v4281
        %v4283 = vpop.f32.mrb[0].mxu0
        %v4284 = vadd.f32 0.0, %v4283
        %4285 = vmatprep.mubr.f32.mxu0 %v3739
        %4286 = vmatmul.mubr.f32.gmra.mrb[0].mxu0 %v3737
        %v4287 = vpop.f32.mrb[0].mxu0
        %v4288 = vadd.f32 0.0, %v4287
        %v4289 = vpop.f32.mrb[0].mxu0
        %v4290 = vadd.f32 0.0, %v4289
        %4291 = vdwg.mxu0
        %4292 = vmatprep.subr.mxu0 %v4082
        %4293 = vmatpush1.msra.mxu0 %v4081
        %4294 = vmatprep.subr.mxu0 %v4086
        %4295 = vmatpush1.msra.mxu0 %v4085
        %4296 = vmatprep.subr.mxu0 %v4090
        %4297 = vmatpush1.msra.mxu0 %v4089
        %4298 = vmatprep.subr.mxu0 %v4094
        %4299 = vmatpush1.msra.mxu0 %v4093
        %4300 = vmatprep.subr.mxu0 %v4098
        %4301 = vmatpush1.msra.mxu0 %v4097
        %4302 = vmatprep.subr.mxu0 %v4102
        %4303 = vmatpush1.msra.mxu0 %v4101
        %4304 = vmatprep.subr.mxu0 %v4106
        %4305 = vmatpush1.msra.mxu0 %v4105
        %4306 = vmatprep.subr.mxu0 %v4110
        %4307 = vmatpush1.msra.mxu0 %v4109
        %4308 = vmatprep.subr.mxu0 %v4114
        %4309 = vmatpush1.msra.mxu0 %v4113
        %4310 = vmatprep.subr.mxu0 %v4118
        %4311 = vmatpush1.msra.mxu0 %v4117
        %4312 = vmatprep.subr.mxu0 %v4122
        %4313 = vmatpush1.msra.mxu0 %v4121
        %4314 = vmatprep.subr.mxu0 %v4126
        %4315 = vmatpush1.msra.mxu0 %v4125
        %4316 = vmatprep.subr.mxu0 %v4130
        %4317 = vmatpush1.msra.mxu0 %v4129
        %4318 = vmatprep.subr.mxu0 %v4134
        %4319 = vmatpush1.msra.mxu0 %v4133
        %4320 = vmatprep.subr.mxu0 %v4138
        %4321 = vmatpush1.msra.mxu0 %v4137
        %4322 = vmatprep.subr.mxu0 %v4142
        %4323 = vmatpush1.msra.mxu0 %v4141
        %4324 = vmatprep.subr.mxu0 %v4146
        %4325 = vmatpush1.msra.mxu0 %v4145
        %4326 = vmatprep.subr.mxu0 %v4150
        %4327 = vmatpush1.msra.mxu0 %v4149
        %4328 = vmatprep.subr.mxu0 %v4154
        %4329 = vmatpush1.msra.mxu0 %v4153
        %4330 = vmatprep.subr.mxu0 %v4158
        %4331 = vmatpush1.msra.mxu0 %v4157
        %4332 = vmatprep.subr.mxu0 %v4162
        %4333 = vmatpush1.msra.mxu0 %v4161
        %4334 = vmatprep.subr.mxu0 %v4166
        %4335 = vmatpush1.msra.mxu0 %v4165
        %4336 = vmatprep.subr.mxu0 %v4170
        %4337 = vmatpush1.msra.mxu0 %v4169
        %4338 = vmatprep.subr.mxu0 %v4174
        %4339 = vmatpush1.msra.mxu0 %v4173
        %4340 = vmatprep.subr.mxu0 %v4178
        %4341 = vmatpush1.msra.mxu0 %v4177
        %4342 = vmatprep.subr.mxu0 %v4182
        %4343 = vmatpush1.msra.mxu0 %v4181
        %4344 = vmatprep.subr.mxu0 %v4186
        %4345 = vmatpush1.msra.mxu0 %v4185
        %4346 = vmatprep.subr.mxu0 %v4190
        %4347 = vmatpush1.msra.mxu0 %v4189
        %4348 = vmatprep.subr.mxu0 %v4194
        %4349 = vmatpush1.msra.mxu0 %v4193
        %4350 = vmatprep.subr.mxu0 %v4198
        %4351 = vmatpush1.msra.mxu0 %v4197
        %4352 = vmatprep.subr.mxu0 %v4202
        %4353 = vmatpush1.msra.mxu0 %v4201
        %4354 = vmatprep.subr.mxu0 %v4206
        %4355 = vmatpush1.msra.mxu0 %v4205
        %4356 = vmatprep.mubr.f32.mxu0 %v3810
        %4357 = vmatmul.mubr.f32.gmra.mrb[0].mxu0 %v3808
        %v4358 = vpop.f32.mrb[0].mxu0
        %v4359 = vadd.f32 %v4276, %v4358
        %v4360 = vpop.f32.mrb[0].mxu0
        %v4361 = vadd.f32 %v4278, %v4360
        %4362 = vmatprep.mubr.f32.mxu0 %v3816
        %4363 = vmatmul.mubr.f32.gmra.mrb[0].mxu0 %v3814
        %v4364 = vpop.f32.mrb[0].mxu0
        %v4365 = vadd.f32 %v4282, %v4364
        %v4366 = vpop.f32.mrb[0].mxu0
        %v4367 = vadd.f32 %v4284, %v4366
        %4368 = vmatprep.mubr.f32.mxu0 %v3822
        %4369 = vmatmul.mubr.f32.gmra.mrb[0].mxu0 %v3820
        %v4370 = vpop.f32.mrb[0].mxu0
        %v4371 = vadd.f32 %v4288, %v4370
        %v4372 = vpop.f32.mrb[0].mxu0
        %v4373 = vadd.f32 %v4290, %v4372
        %4374 = vdwg.mxu0
        %4375 = vmatprep.subr.mxu0 %v3956
        %4376 = vmatpush1.msra.mxu0 %v3955
        %4377 = vmatprep.subr.mxu0 %v3960
        %4378 = vmatpush1.msra.mxu0 %v3959
        %4379 = vmatprep.subr.mxu0 %v3964
        %4380 = vmatpush1.msra.mxu0 %v3963
        %4381 = vmatprep.subr.mxu0 %v3968
        %4382 = vmatpush1.msra.mxu0 %v3967
        %4383 = vmatprep.subr.mxu0 %v3972
        %4384 = vmatpush1.msra.mxu0 %v3971
        %4385 = vmatprep.subr.mxu0 %v3976
        %4386 = vmatpush1.msra.mxu0 %v3975
        %4387 = vmatprep.subr.mxu0 %v3980
        %4388 = vmatpush1.msra.mxu0 %v3979
        %4389 = vmatprep.subr.mxu0 %v3984
        %4390 = vmatpush1.msra.mxu0 %v3983
        %4391 = vmatprep.subr.mxu0 %v3988
        %4392 = vmatpush1.msra.mxu0 %v3987
        %4393 = vmatprep.subr.mxu0 %v3992
        %4394 = vmatpush1.msra.mxu0 %v3991
        %4395 = vmatprep.subr.mxu0 %v3996
        %4396 = vmatpush1.msra.mxu0 %v3995
        %4397 = vmatprep.subr.mxu0 %v4000
        %4398 = vmatpush1.msra.mxu0 %v3999
        %4399 = vmatprep.subr.mxu0 %v4004
        %4400 = vmatpush1.msra.mxu0 %v4003
        %4401 = vmatprep.subr.mxu0 %v4008
        %4402 = vmatpush1.msra.mxu0 %v4007
        %4403 = vmatprep.subr.mxu0 %v4012
        %4404 = vmatpush1.msra.mxu0 %v4011
        %4405 = vmatprep.subr.mxu0 %v4016
        %4406 = vmatpush1.msra.mxu0 %v4015
        %4407 = vmatprep.subr.mxu0 %v4020
        %4408 = vmatpush1.msra.mxu0 %v4019
        %4409 = vmatprep.subr.mxu0 %v4024
        %4410 = vmatpush1.msra.mxu0 %v4023
        %4411 = vmatprep.subr.mxu0 %v4028
        %4412 = vmatpush1.msra.mxu0 %v4027
        %4413 = vmatprep.subr.mxu0 %v4032
        %4414 = vmatpush1.msra.mxu0 %v4031
        %4415 = vmatprep.subr.mxu0 %v4036
        %4416 = vmatpush1.msra.mxu0 %v4035
        %4417 = vmatprep.subr.mxu0 %v4040
        %4418 = vmatpush1.msra.mxu0 %v4039
        %4419 = vmatprep.subr.mxu0 %v4044
        %4420 = vmatpush1.msra.mxu0 %v4043
        %4421 = vmatprep.subr.mxu0 %v4048
        %4422 = vmatpush1.msra.mxu0 %v4047
        %4423 = vmatprep.subr.mxu0 %v4052
        %4424 = vmatpush1.msra.mxu0 %v4051
        %4425 = vmatprep.subr.mxu0 %v4056
        %4426 = vmatpush1.msra.mxu0 %v4055
        %4427 = vmatprep.subr.mxu0 %v4060
        %4428 = vmatpush1.msra.mxu0 %v4059
        %4429 = vmatprep.subr.mxu0 %v4064
        %4430 = vmatpush1.msra.mxu0 %v4063
        %4431 = vmatprep.subr.mxu0 %v4068
        %4432 = vmatpush1.msra.mxu0 %v4067
        %4433 = vmatprep.subr.mxu0 %v4072
        %4434 = vmatpush1.msra.mxu0 %v4071
        %4435 = vmatprep.subr.mxu0 %v4076
        %4436 = vmatpush1.msra.mxu0 %v4075
        %4437 = vmatprep.subr.mxu0 %v4080
        %4438 = vmatpush1.msra.mxu0 %v4079
        %4439 = vmatprep.mubr.f32.mxu0 %v3727
        %4440 = vmatmul.mubr.f32.gmra.mrb[0].mxu0 %v3725
        %v4441 = vpop.f32.mrb[0].mxu0
        %v4442 = vadd.f32 0.0, %v4441
        %v4443 = vpop.f32.mrb[0].mxu0
        %v4444 = vadd.f32 0.0, %v4443
        %4445 = vmatprep.mubr.f32.mxu0 %v3733
        %4446 = vmatmul.mubr.f32.gmra.mrb[0].mxu0 %v3731
        %v4447 = vpop.f32.mrb[0].mxu0
        %v4448 = vadd.f32 0.0, %v4447
        %v4449 = vpop.f32.mrb[0].mxu0
        %v4450 = vadd.f32 0.0, %v4449
        %4451 = vmatprep.mubr.f32.mxu0 %v3739
        %4452 = vmatmul.mubr.f32.gmra.mrb[0].mxu0 %v3737
        %v4453 = vpop.f32.mrb[0].mxu0
        %v4454 = vadd.f32 0.0, %v4453
        %v4455 = vpop.f32.mrb[0].mxu0
        %v4456 = vadd.f32 0.0, %v4455
        %4457 = vdwg.mxu0
        %4458 = vmatprep.subr.mxu0 %v4084
        %4459 = vmatpush1.msra.mxu0 %v4083
        %4460 = vmatprep.subr.mxu0 %v4088
        %4461 = vmatpush1.msra.mxu0 %v4087
        %4462 = vmatprep.subr.mxu0 %v4092
        %4463 = vmatpush1.msra.mxu0 %v4091
        %4464 = vmatprep.subr.mxu0 %v4096
        %4465 = vmatpush1.msra.mxu0 %v4095
        %4466 = vmatprep.subr.mxu0 %v4100
        %4467 = vmatpush1.msra.mxu0 %v4099
        %4468 = vmatprep.subr.mxu0 %v4104
        %4469 = vmatpush1.msra.mxu0 %v4103
        %4470 = vmatprep.subr.mxu0 %v4108
        %4471 = vmatpush1.msra.mxu0 %v4107
        %4472 = vmatprep.subr.mxu0 %v4112
        %4473 = vmatpush1.msra.mxu0 %v4111
        %4474 = vmatprep.subr.mxu0 %v4116
        %4475 = vmatpush1.msra.mxu0 %v4115
        %4476 = vmatprep.subr.mxu0 %v4120
        %4477 = vmatpush1.msra.mxu0 %v4119
        %4478 = vmatprep.subr.mxu0 %v4124
        %4479 = vmatpush1.msra.mxu0 %v4123
        %4480 = vmatprep.subr.mxu0 %v4128
        %4481 = vmatpush1.msra.mxu0 %v4127
        %4482 = vmatprep.subr.mxu0 %v4132
        %4483 = vmatpush1.msra.mxu0 %v4131
        %4484 = vmatprep.subr.mxu0 %v4136
        %4485 = vmatpush1.msra.mxu0 %v4135
        %4486 = vmatprep.subr.mxu0 %v4140
        %4487 = vmatpush1.msra.mxu0 %v4139
        %4488 = vmatprep.subr.mxu0 %v4144
        %4489 = vmatpush1.msra.mxu0 %v4143
        %4490 = vmatprep.subr.mxu0 %v4148
        %4491 = vmatpush1.msra.mxu0 %v4147
        %4492 = vmatprep.subr.mxu0 %v4152
        %4493 = vmatpush1.msra.mxu0 %v4151
        %4494 = vmatprep.subr.mxu0 %v4156
        %4495 = vmatpush1.msra.mxu0 %v4155
        %4496 = vmatprep.subr.mxu0 %v4160
        %4497 = vmatpush1.msra.mxu0 %v4159
        %4498 = vmatprep.subr.mxu0 %v4164
        %4499 = vmatpush1.msra.mxu0 %v4163
        %4500 = vmatprep.subr.mxu0 %v4168
        %4501 = vmatpush1.msra.mxu0 %v4167
        %4502 = vmatprep.subr.mxu0 %v4172
        %4503 = vmatpush1.msra.mxu0 %v4171
        %4504 = vmatprep.subr.mxu0 %v4176
        %4505 = vmatpush1.msra.mxu0 %v4175
        %4506 = vmatprep.subr.mxu0 %v4180
        %4507 = vmatpush1.msra.mxu0 %v4179
        %4508 = vmatprep.subr.mxu0 %v4184
        %4509 = vmatpush1.msra.mxu0 %v4183
        %4510 = vmatprep.subr.mxu0 %v4188
        %4511 = vmatpush1.msra.mxu0 %v4187
        %4512 = vmatprep.subr.mxu0 %v4192
        %4513 = vmatpush1.msra.mxu0 %v4191
        %4514 = vmatprep.subr.mxu0 %v4196
        %4515 = vmatpush1.msra.mxu0 %v4195
        %4516 = vmatprep.subr.mxu0 %v4200
        %4517 = vmatpush1.msra.mxu0 %v4199
        %4518 = vmatprep.subr.mxu0 %v4204
        %4519 = vmatpush1.msra.mxu0 %v4203
        %4520 = vmatprep.subr.mxu0 %v4208
        %4521 = vmatpush1.msra.mxu0 %v4207
        %4522 = vmatprep.mubr.f32.mxu0 %v3810
        %4523 = vmatmul.mubr.f32.gmra.mrb[0].mxu0 %v3808
        %v4524 = vpop.f32.mrb[0].mxu0
        %v4525 = vadd.f32 %v4442, %v4524
        %v4526 = vpop.f32.mrb[0].mxu0
        %v4527 = vadd.f32 %v4444, %v4526
        %4528 = vmatprep.mubr.f32.mxu0 %v3816
        %4529 = vmatmul.mubr.f32.gmra.mrb[0].mxu0 %v3814
        %v4530 = vpop.f32.mrb[0].mxu0
        %v4531 = vadd.f32 %v4448, %v4530
        %v4532 = vpop.f32.mrb[0].mxu0
        %v4533 = vadd.f32 %v4450, %v4532
        %4534 = vmatprep.mubr.f32.mxu0 %v3822
        %4535 = vmatmul.mubr.f32.gmra.mrb[0].mxu0 %v3820
        %v4536 = vpop.f32.mrb[0].mxu0
        %v4537 = vadd.f32 %v4454, %v4536
        %v4538 = vpop.f32.mrb[0].mxu0
        %v4539 = vadd.f32 %v4456, %v4538
        %4540 = vdwg.mxu0
        %v4541 = vadd.f32 %v3463, %v4359
        %v4542 = vadd.f32 %v3465, %v4361
        %v4543 = vadd.f32 %v3629, %v4525
        %v4544 = vadd.f32 %v3631, %v4527
        %v4545 = vadd.f32 %v3469, %v4365
        %v4546 = vadd.f32 %v3471, %v4367
        %v4547 = vadd.f32 %v3635, %v4531
        %v4548 = vadd.f32 %v3637, %v4533
        %v4549 = vadd.f32 %v3475, %v4371
        %v4550 = vadd.f32 %v3477, %v4373
        %v4551 = vadd.f32 %v3641, %v4537
        %v4552 = vadd.f32 %v3643, %v4539
        %v4553 = vld [vmem:[%s6] sm:$0xf]
        %v4555 = vlaneseq
        %v4556 = vshrl.u32 %v4555, 7
        %v4557 = vsub.s32 0, %v4556
        %v4558 = vrot.slane %v4553, %v4557
        %v4559 = vlaneseq
        %v4560 = vshrl.u32 %v4559, 7
        %v4561 = vsub.s32 1, %v4560
        %v4562 = vrot.slane %v4553, %v4561
        %v4563 = vlaneseq
        %v4564 = vshrl.u32 %v4563, 7
        %v4565 = vsub.s32 2, %v4564
        %v4566 = vrot.slane %v4553, %v4565
        %v4567 = vlaneseq
        %v4568 = vshrl.u32 %v4567, 7
        %v4569 = vsub.s32 3, %v4568
        %v4570 = vrot.slane %v4553, %v4569
        %v4575 = vadd.f32 %v4541, %v4558
        %v4576 = vadd.f32 %v4542, %v4562
        %v4577 = vadd.f32 %v4543, %v4566
        %v4578 = vadd.f32 %v4544, %v4570
        %v4579 = vadd.f32 %v4545, %v4558
        %v4580 = vadd.f32 %v4546, %v4562
        %v4581 = vadd.f32 %v4547, %v4566
        %v4582 = vadd.f32 %v4548, %v4570
        %v4583 = vadd.f32 %v4549, %v4558
        %v4584 = vadd.f32 %v4550, %v4562
        %v4585 = vadd.f32 %v4551, %v4566
        %v4586 = vadd.f32 %v4552, %v4570
        %v4587 = vmax.f32 %v4575, 0.0
        %v4588 = vmax.f32 %v4576, 0.0
        %v4589 = vmax.f32 %v4577, 0.0
        %v4590 = vmax.f32 %v4578, 0.0
        %v4591 = vmax.f32 %v4579, 0.0
        %v4592 = vmax.f32 %v4580, 0.0
        %v4593 = vmax.f32 %v4581, 0.0
        %v4594 = vmax.f32 %v4582, 0.0
        %v4595 = vmax.f32 %v4583, 0.0
        %v4596 = vmax.f32 %v4584, 0.0
        %v4597 = vmax.f32 %v4585, 0.0
        %v4598 = vmax.f32 %v4586, 0.0
        %v4599 = vld [vmem:[%s7] sm:$0xff]
        %v4600 = vld [vmem:[%s7 + $0x8] sm:$0x3]
        %vm4601 = vcmask 179200
        %v4603 = vsel %vm4601, %v4599, 0
        %v4606 = vsel %vm4601, %v4600, 0
        %vm4608 = vcmask 1045504
        %v4610 = vsel %vm4608, %v4595, 0
        %v4613 = vsel %vm4608, %v4596, 0
        %v4616 = vsel %vm4608, %v4597, 0
        %v4619 = vsel %vm4608, %v4598, 0
        %4621 = vmatprep.subr.mxu0 %v4588
        %4622 = vmatpush1.msra.mxu0 %v4587
        %4623 = vmatprep.subr.mxu0 %v4592
        %4624 = vmatpush1.msra.mxu0 %v4591
        %4625 = vmatprep.subr.mxu0 %v4613
        %4626 = vmatpush1.msra.mxu0 %v4610
        %4627 = vmatprep.subr.mxu0 0.0
        %4628 = vmatpush1.msra.mxu0 0.0
        %4629 = vmatprep.subr.mxu0 0.0
        %4630 = vmatpush1.msra.mxu0 0.0
        %4631 = vmatprep.subr.mxu0 0.0
        %4632 = vmatpush1.msra.mxu0 0.0
        %4633 = vmatprep.subr.mxu0 0.0
        %4634 = vmatpush1.msra.mxu0 0.0
        %4635 = vmatprep.subr.mxu0 0.0
        %4636 = vmatpush1.msra.mxu0 0.0
        %4637 = vmatprep.subr.mxu0 0.0
        %4638 = vmatpush1.msra.mxu0 0.0
        %4639 = vmatprep.subr.mxu0 0.0
        %4640 = vmatpush1.msra.mxu0 0.0
        %4641 = vmatprep.subr.mxu0 0.0
        %4642 = vmatpush1.msra.mxu0 0.0
        %4643 = vmatprep.subr.mxu0 0.0
        %4644 = vmatpush1.msra.mxu0 0.0
        %4645 = vmatprep.subr.mxu0 0.0
        %4646 = vmatpush1.msra.mxu0 0.0
        %4647 = vmatprep.subr.mxu0 0.0
        %4648 = vmatpush1.msra.mxu0 0.0
        %4649 = vmatprep.subr.mxu0 0.0
        %4650 = vmatpush1.msra.mxu0 0.0
        %4651 = vmatprep.subr.mxu0 0.0
        %4652 = vmatpush1.msra.mxu0 0.0
        %4653 = vmatprep.subr.mxu0 0.0
        %4654 = vmatpush1.msra.mxu0 0.0
        %4655 = vmatprep.subr.mxu0 0.0
        %4656 = vmatpush1.msra.mxu0 0.0
        %4657 = vmatprep.subr.mxu0 0.0
        %4658 = vmatpush1.msra.mxu0 0.0
        %4659 = vmatprep.subr.mxu0 0.0
        %4660 = vmatpush1.msra.mxu0 0.0
        %4661 = vmatprep.subr.mxu0 0.0
        %4662 = vmatpush1.msra.mxu0 0.0
        %4663 = vmatprep.subr.mxu0 0.0
        %4664 = vmatpush1.msra.mxu0 0.0
        %4665 = vmatprep.subr.mxu0 0.0
        %4666 = vmatpush1.msra.mxu0 0.0
        %4667 = vmatprep.subr.mxu0 0.0
        %4668 = vmatpush1.msra.mxu0 0.0
        %4669 = vmatprep.subr.mxu0 0.0
        %4670 = vmatpush1.msra.mxu0 0.0
        %4671 = vmatprep.subr.mxu0 0.0
        %4672 = vmatpush1.msra.mxu0 0.0
        %4673 = vmatprep.subr.mxu0 0.0
        %4674 = vmatpush1.msra.mxu0 0.0
        %4675 = vmatprep.subr.mxu0 0.0
        %4676 = vmatpush1.msra.mxu0 0.0
        %4677 = vmatprep.subr.mxu0 0.0
        %4678 = vmatpush1.msra.mxu0 0.0
        %4679 = vmatprep.subr.mxu0 0.0
        %4680 = vmatpush1.msra.mxu0 0.0
        %4681 = vmatprep.subr.mxu0 0.0
        %4682 = vmatpush1.msra.mxu0 0.0
        %4683 = vmatprep.subr.mxu0 0.0
        %4684 = vmatpush1.msra.mxu0 0.0
        %4685 = vmatprep.mubr.f32.mxu0 0.0
        %4686 = vmatmul.mubr.f32.gmra.mrb[0].mxu0 %v4603
        %v4687 = vpop.f32.mrb[0].mxu0
        %v4688 = vadd.f32 0.0, %v4687
        %v4689 = vpop.f32.mrb[0].mxu0
        %v4690 = vadd.f32 0.0, %v4689
        %4691 = vmatprep.mubr.f32.mxu0 0.0
        %4692 = vmatmul.mubr.f32.gmra.mrb[0].mxu0 %v4606
        %v4693 = vpop.f32.mrb[0].mxu0
        %v4694 = vadd.f32 0.0, %v4693
        %v4695 = vpop.f32.mrb[0].mxu0
        %v4696 = vadd.f32 0.0, %v4695
        %4697 = vdwg.mxu0
        %4698 = vmatprep.subr.mxu0 %v4590
        %4699 = vmatpush1.msra.mxu0 %v4589
        %4700 = vmatprep.subr.mxu0 %v4594
        %4701 = vmatpush1.msra.mxu0 %v4593
        %4702 = vmatprep.subr.mxu0 %v4619
        %4703 = vmatpush1.msra.mxu0 %v4616
        %4704 = vmatprep.subr.mxu0 0.0
        %4705 = vmatpush1.msra.mxu0 0.0
        %4706 = vmatprep.subr.mxu0 0.0
        %4707 = vmatpush1.msra.mxu0 0.0
        %4708 = vmatprep.subr.mxu0 0.0
        %4709 = vmatpush1.msra.mxu0 0.0
        %4710 = vmatprep.subr.mxu0 0.0
        %4711 = vmatpush1.msra.mxu0 0.0
        %4712 = vmatprep.subr.mxu0 0.0
        %4713 = vmatpush1.msra.mxu0 0.0
        %4714 = vmatprep.subr.mxu0 0.0
        %4715 = vmatpush1.msra.mxu0 0.0
        %4716 = vmatprep.subr.mxu0 0.0
        %4717 = vmatpush1.msra.mxu0 0.0
        %4718 = vmatprep.subr.mxu0 0.0
        %4719 = vmatpush1.msra.mxu0 0.0
        %4720 = vmatprep.subr.mxu0 0.0
        %4721 = vmatpush1.msra.mxu0 0.0
        %4722 = vmatprep.subr.mxu0 0.0
        %4723 = vmatpush1.msra.mxu0 0.0
        %4724 = vmatprep.subr.mxu0 0.0
        %4725 = vmatpush1.msra.mxu0 0.0
        %4726 = vmatprep.subr.mxu0 0.0
        %4727 = vmatpush1.msra.mxu0 0.0
        %4728 = vmatprep.subr.mxu0 0.0
        %4729 = vmatpush1.msra.mxu0 0.0
        %4730 = vmatprep.subr.mxu0 0.0
        %4731 = vmatpush1.msra.mxu0 0.0
        %4732 = vmatprep.subr.mxu0 0.0
        %4733 = vmatpush1.msra.mxu0 0.0
        %4734 = vmatprep.subr.mxu0 0.0
        %4735 = vmatpush1.msra.mxu0 0.0
        %4736 = vmatprep.subr.mxu0 0.0
        %4737 = vmatpush1.msra.mxu0 0.0
        %4738 = vmatprep.subr.mxu0 0.0
        %4739 = vmatpush1.msra.mxu0 0.0
        %4740 = vmatprep.subr.mxu0 0.0
        %4741 = vmatpush1.msra.mxu0 0.0
        %4742 = vmatprep.subr.mxu0 0.0
        %4743 = vmatpush1.msra.mxu0 0.0
        %4744 = vmatprep.subr.mxu0 0.0
        %4745 = vmatpush1.msra.mxu0 0.0
        %4746 = vmatprep.subr.mxu0 0.0
        %4747 = vmatpush1.msra.mxu0 0.0
        %4748 = vmatprep.subr.mxu0 0.0
        %4749 = vmatpush1.msra.mxu0 0.0
        %4750 = vmatprep.subr.mxu0 0.0
        %4751 = vmatpush1.msra.mxu0 0.0
        %4752 = vmatprep.subr.mxu0 0.0
        %4753 = vmatpush1.msra.mxu0 0.0
        %4754 = vmatprep.subr.mxu0 0.0
        %4755 = vmatpush1.msra.mxu0 0.0
        %4756 = vmatprep.subr.mxu0 0.0
        %4757 = vmatpush1.msra.mxu0 0.0
        %4758 = vmatprep.subr.mxu0 0.0
        %4759 = vmatpush1.msra.mxu0 0.0
        %4760 = vmatprep.subr.mxu0 0.0
        %4761 = vmatpush1.msra.mxu0 0.0
        %4762 = vmatprep.mubr.f32.mxu0 0.0
        %4763 = vmatmul.mubr.f32.gmra.mrb[0].mxu0 %v4603
        %v4764 = vpop.f32.mrb[0].mxu0
        %v4765 = vadd.f32 0.0, %v4764
        %v4766 = vpop.f32.mrb[0].mxu0
        %v4767 = vadd.f32 0.0, %v4766
        %4768 = vmatprep.mubr.f32.mxu0 0.0
        %4769 = vmatmul.mubr.f32.gmra.mrb[0].mxu0 %v4606
        %v4770 = vpop.f32.mrb[0].mxu0
        %v4771 = vadd.f32 0.0, %v4770
        %v4772 = vpop.f32.mrb[0].mxu0
        %v4773 = vadd.f32 0.0, %v4772
        %4774 = vdwg.mxu0
        %v4775 = vld [vmem:[%s8] sm:$0xff]
        %v4776 = vld [vmem:[%s8 + $0x8] sm:$0xff]
        %v4777 = vld [vmem:[%s8 + $0x10] sm:$0xff]
        %v4778 = vld [vmem:[%s8 + $0x18] sm:$0xff]
        %v4779 = vld [vmem:[%s8 + $0x20] sm:$0xff]
        %v4780 = vld [vmem:[%s8 + $0x28] sm:$0xff]
        %v4781 = vld [vmem:[%s8 + $0x30] sm:$0xff]
        %v4782 = vld [vmem:[%s8 + $0x38] sm:$0xff]
        %v4783 = vld [vmem:[%s8 + $0x40] sm:$0xff]
        %v4784 = vld [vmem:[%s8 + $0x48] sm:$0xff]
        %v4785 = vld [vmem:[%s8 + $0x50] sm:$0xff]
        %v4786 = vld [vmem:[%s8 + $0x58] sm:$0xff]
        %v4787 = vld [vmem:[%s8 + $0x60] sm:$0xff]
        %v4788 = vld [vmem:[%s8 + $0x68] sm:$0xff]
        %v4789 = vld [vmem:[%s8 + $0x70] sm:$0xff]
        %v4790 = vld [vmem:[%s8 + $0x78] sm:$0xff]
        %v4791 = vld [vmem:[%s8 + $0x80] sm:$0xff]
        %v4792 = vld [vmem:[%s8 + $0x88] sm:$0xff]
        %v4793 = vld [vmem:[%s8 + $0x90] sm:$0xff]
        %v4794 = vld [vmem:[%s8 + $0x98] sm:$0xff]
        %v4795 = vld [vmem:[%s8 + $0xa0] sm:$0xff]
        %v4796 = vld [vmem:[%s8 + $0xa8] sm:$0xff]
        %v4797 = vld [vmem:[%s8 + $0xb0] sm:$0xff]
        %v4798 = vld [vmem:[%s8 + $0xb8] sm:$0xff]
        %v4799 = vld [vmem:[%s8 + $0xc0] sm:$0xff]
        %v4800 = vld [vmem:[%s8 + $0xc8] sm:$0xff]
        %v4801 = vld [vmem:[%s8 + $0xd0] sm:$0xff]
        %v4802 = vld [vmem:[%s8 + $0xd8] sm:$0xff]
        %v4803 = vld [vmem:[%s8 + $0xe0] sm:$0xff]
        %v4804 = vld [vmem:[%s8 + $0xe8] sm:$0xff]
        %v4805 = vld [vmem:[%s8 + $0xf0] sm:$0xff]
        %v4806 = vld [vmem:[%s8 + $0xf8] sm:$0xff]
        %v4807 = vld [vmem:[%s8 + $0x100] sm:$0xff]
        %v4808 = vld [vmem:[%s8 + $0x108] sm:$0xff]
        %v4809 = vld [vmem:[%s8 + $0x110] sm:$0xff]
        %v4810 = vld [vmem:[%s8 + $0x118] sm:$0xff]
        %v4811 = vld [vmem:[%s8 + $0x120] sm:$0xff]
        %v4812 = vld [vmem:[%s8 + $0x128] sm:$0xff]
        %v4813 = vld [vmem:[%s8 + $0x130] sm:$0xff]
        %v4814 = vld [vmem:[%s8 + $0x138] sm:$0xff]
        %v4815 = vld [vmem:[%s8 + $0x140] sm:$0xff]
        %v4816 = vld [vmem:[%s8 + $0x148] sm:$0xff]
        %v4817 = vld [vmem:[%s8 + $0x150] sm:$0xff]
        %v4818 = vld [vmem:[%s8 + $0x158] sm:$0xff]
        %v4819 = vld [vmem:[%s8 + $0x160] sm:$0xff]
        %v4820 = vld [vmem:[%s8 + $0x168] sm:$0xff]
        %v4821 = vld [vmem:[%s8 + $0x170] sm:$0xff]
        %v4822 = vld [vmem:[%s8 + $0x178] sm:$0xff]
        %v4823 = vld [vmem:[%s8 + $0x180] sm:$0xff]
        %v4824 = vld [vmem:[%s8 + $0x188] sm:$0xff]
        %v4825 = vld [vmem:[%s8 + $0x190] sm:$0xff]
        %v4826 = vld [vmem:[%s8 + $0x198] sm:$0xff]
        %v4827 = vld [vmem:[%s8 + $0x1a0] sm:$0xff]
        %v4828 = vld [vmem:[%s8 + $0x1a8] sm:$0xff]
        %v4829 = vld [vmem:[%s8 + $0x1b0] sm:$0xff]
        %v4830 = vld [vmem:[%s8 + $0x1b8] sm:$0xff]
        %v4831 = vld [vmem:[%s8 + $0x1c0] sm:$0xff]
        %v4832 = vld [vmem:[%s8 + $0x1c8] sm:$0xff]
        %v4833 = vld [vmem:[%s8 + $0x1d0] sm:$0xff]
        %v4834 = vld [vmem:[%s8 + $0x1d8] sm:$0xff]
        %v4835 = vld [vmem:[%s8 + $0x1e0] sm:$0xff]
        %v4836 = vld [vmem:[%s8 + $0x1e8] sm:$0xff]
        %v4837 = vld [vmem:[%s8 + $0x1f0] sm:$0xff]
        %v4838 = vld [vmem:[%s8 + $0x1f8] sm:$0xff]
        %v4839 = vld [vmem:[%s8 + $0x200] sm:$0xff]
        %v4840 = vld [vmem:[%s8 + $0x208] sm:$0xff]
        %v4841 = vld [vmem:[%s8 + $0x210] sm:$0xff]
        %v4842 = vld [vmem:[%s8 + $0x218] sm:$0xff]
        %v4843 = vld [vmem:[%s8 + $0x220] sm:$0xff]
        %v4844 = vld [vmem:[%s8 + $0x228] sm:$0xff]
        %v4845 = vld [vmem:[%s8 + $0x230] sm:$0xff]
        %v4846 = vld [vmem:[%s8 + $0x238] sm:$0xff]
        %v4847 = vld [vmem:[%s8 + $0x240] sm:$0xff]
        %v4848 = vld [vmem:[%s8 + $0x248] sm:$0xff]
        %v4849 = vld [vmem:[%s8 + $0x250] sm:$0xff]
        %v4850 = vld [vmem:[%s8 + $0x258] sm:$0xff]
        %v4851 = vld [vmem:[%s8 + $0x260] sm:$0xff]
        %v4852 = vld [vmem:[%s8 + $0x268] sm:$0xff]
        %v4853 = vld [vmem:[%s8 + $0x270] sm:$0xff]
        %v4854 = vld [vmem:[%s8 + $0x278] sm:$0xff]
        %v4855 = vld [vmem:[%s8 + $0x280] sm:$0xff]
        %v4856 = vld [vmem:[%s8 + $0x288] sm:$0xff]
        %v4857 = vld [vmem:[%s8 + $0x290] sm:$0xff]
        %v4858 = vld [vmem:[%s8 + $0x298] sm:$0xff]
        %v4859 = vld [vmem:[%s8 + $0x2a0] sm:$0xff]
        %v4860 = vld [vmem:[%s8 + $0x2a8] sm:$0xff]
        %v4861 = vld [vmem:[%s8 + $0x2b0] sm:$0xff]
        %v4862 = vld [vmem:[%s8 + $0x2b8] sm:$0xff]
        %v4863 = vld [vmem:[%s8 + $0x2c0] sm:$0xff]
        %v4864 = vld [vmem:[%s8 + $0x2c8] sm:$0xff]
        %v4865 = vld [vmem:[%s8 + $0x2d0] sm:$0xff]
        %v4866 = vld [vmem:[%s8 + $0x2d8] sm:$0xff]
        %v4867 = vld [vmem:[%s8 + $0x2e0] sm:$0xff]
        %v4868 = vld [vmem:[%s8 + $0x2e8] sm:$0xff]
        %v4869 = vld [vmem:[%s8 + $0x2f0] sm:$0xff]
        %v4870 = vld [vmem:[%s8 + $0x2f8] sm:$0xff]
        %v4871 = vld [vmem:[%s8 + $0x300] sm:$0xff]
        %v4872 = vld [vmem:[%s8 + $0x308] sm:$0xff]
        %v4873 = vld [vmem:[%s8 + $0x310] sm:$0xff]
        %v4874 = vld [vmem:[%s8 + $0x318] sm:$0xff]
        %v4875 = vld [vmem:[%s8 + $0x320] sm:$0xff]
        %v4876 = vld [vmem:[%s8 + $0x328] sm:$0xff]
        %v4877 = vld [vmem:[%s8 + $0x330] sm:$0xff]
        %v4878 = vld [vmem:[%s8 + $0x338] sm:$0xff]
        %v4879 = vld [vmem:[%s8 + $0x340] sm:$0xff]
        %v4880 = vld [vmem:[%s8 + $0x348] sm:$0xff]
        %v4881 = vld [vmem:[%s8 + $0x350] sm:$0xff]
        %v4882 = vld [vmem:[%s8 + $0x358] sm:$0xff]
        %v4883 = vld [vmem:[%s8 + $0x360] sm:$0xff]
        %v4884 = vld [vmem:[%s8 + $0x368] sm:$0xff]
        %v4885 = vld [vmem:[%s8 + $0x370] sm:$0xff]
        %v4886 = vld [vmem:[%s8 + $0x378] sm:$0xff]
        %v4887 = vld [vmem:[%s8 + $0x380] sm:$0xff]
        %v4888 = vld [vmem:[%s8 + $0x388] sm:$0xff]
        %v4889 = vld [vmem:[%s8 + $0x390] sm:$0xff]
        %v4890 = vld [vmem:[%s8 + $0x398] sm:$0xff]
        %v4891 = vld [vmem:[%s8 + $0x3a0] sm:$0xff]
        %v4892 = vld [vmem:[%s8 + $0x3a8] sm:$0xff]
        %v4893 = vld [vmem:[%s8 + $0x3b0] sm:$0xff]
        %v4894 = vld [vmem:[%s8 + $0x3b8] sm:$0xff]
        %v4895 = vld [vmem:[%s8 + $0x3c0] sm:$0xff]
        %v4896 = vld [vmem:[%s8 + $0x3c8] sm:$0xff]
        %v4897 = vld [vmem:[%s8 + $0x3d0] sm:$0xff]
        %v4898 = vld [vmem:[%s8 + $0x3d8] sm:$0xff]
        %v4899 = vld [vmem:[%s8 + $0x3e0] sm:$0xff]
        %v4900 = vld [vmem:[%s8 + $0x3e8] sm:$0xff]
        %v4901 = vld [vmem:[%s8 + $0x3f0] sm:$0xff]
        %v4902 = vld [vmem:[%s8 + $0x3f8] sm:$0xff]
        %v4903 = vunpack.c.l.bf16 %v4775
        %v4904 = vunpack.c.h.bf16 %v4775
        %v4905 = vunpack.c.l.bf16 %v4776
        %v4906 = vunpack.c.h.bf16 %v4776
        %v4907 = vunpack.c.l.bf16 %v4777
        %v4908 = vunpack.c.h.bf16 %v4777
        %v4909 = vunpack.c.l.bf16 %v4778
        %v4910 = vunpack.c.h.bf16 %v4778
        %v4911 = vunpack.c.l.bf16 %v4779
        %v4912 = vunpack.c.h.bf16 %v4779
        %v4913 = vunpack.c.l.bf16 %v4780
        %v4914 = vunpack.c.h.bf16 %v4780
        %v4915 = vunpack.c.l.bf16 %v4781
        %v4916 = vunpack.c.h.bf16 %v4781
        %v4917 = vunpack.c.l.bf16 %v4782
        %v4918 = vunpack.c.h.bf16 %v4782
        %v4919 = vunpack.c.l.bf16 %v4783
        %v4920 = vunpack.c.h.bf16 %v4783
        %v4921 = vunpack.c.l.bf16 %v4784
        %v4922 = vunpack.c.h.bf16 %v4784
        %v4923 = vunpack.c.l.bf16 %v4785
        %v4924 = vunpack.c.h.bf16 %v4785
        %v4925 = vunpack.c.l.bf16 %v4786
        %v4926 = vunpack.c.h.bf16 %v4786
        %v4927 = vunpack.c.l.bf16 %v4787
        %v4928 = vunpack.c.h.bf16 %v4787
        %v4929 = vunpack.c.l.bf16 %v4788
        %v4930 = vunpack.c.h.bf16 %v4788
        %v4931 = vunpack.c.l.bf16 %v4789
        %v4932 = vunpack.c.h.bf16 %v4789
        %v4933 = vunpack.c.l.bf16 %v4790
        %v4934 = vunpack.c.h.bf16 %v4790
        %v4935 = vunpack.c.l.bf16 %v4791
        %v4936 = vunpack.c.h.bf16 %v4791
        %v4937 = vunpack.c.l.bf16 %v4792
        %v4938 = vunpack.c.h.bf16 %v4792
        %v4939 = vunpack.c.l.bf16 %v4793
        %v4940 = vunpack.c.h.bf16 %v4793
        %v4941 = vunpack.c.l.bf16 %v4794
        %v4942 = vunpack.c.h.bf16 %v4794
        %v4943 = vunpack.c.l.bf16 %v4795
        %v4944 = vunpack.c.h.bf16 %v4795
        %v4945 = vunpack.c.l.bf16 %v4796
        %v4946 = vunpack.c.h.bf16 %v4796
        %v4947 = vunpack.c.l.bf16 %v4797
        %v4948 = vunpack.c.h.bf16 %v4797
        %v4949 = vunpack.c.l.bf16 %v4798
        %v4950 = vunpack.c.h.bf16 %v4798
        %v4951 = vunpack.c.l.bf16 %v4799
        %v4952 = vunpack.c.h.bf16 %v4799
        %v4953 = vunpack.c.l.bf16 %v4800
        %v4954 = vunpack.c.h.bf16 %v4800
        %v4955 = vunpack.c.l.bf16 %v4801
        %v4956 = vunpack.c.h.bf16 %v4801
        %v4957 = vunpack.c.l.bf16 %v4802
        %v4958 = vunpack.c.h.bf16 %v4802
        %v4959 = vunpack.c.l.bf16 %v4803
        %v4960 = vunpack.c.h.bf16 %v4803
        %v4961 = vunpack.c.l.bf16 %v4804
        %v4962 = vunpack.c.h.bf16 %v4804
        %v4963 = vunpack.c.l.bf16 %v4805
        %v4964 = vunpack.c.h.bf16 %v4805
        %v4965 = vunpack.c.l.bf16 %v4806
        %v4966 = vunpack.c.h.bf16 %v4806
        %v4967 = vunpack.c.l.bf16 %v4807
        %v4968 = vunpack.c.h.bf16 %v4807
        %v4969 = vunpack.c.l.bf16 %v4808
        %v4970 = vunpack.c.h.bf16 %v4808
        %v4971 = vunpack.c.l.bf16 %v4809
        %v4972 = vunpack.c.h.bf16 %v4809
        %v4973 = vunpack.c.l.bf16 %v4810
        %v4974 = vunpack.c.h.bf16 %v4810
        %v4975 = vunpack.c.l.bf16 %v4811
        %v4976 = vunpack.c.h.bf16 %v4811
        %v4977 = vunpack.c.l.bf16 %v4812
        %v4978 = vunpack.c.h.bf16 %v4812
        %v4979 = vunpack.c.l.bf16 %v4813
        %v4980 = vunpack.c.h.bf16 %v4813
        %v4981 = vunpack.c.l.bf16 %v4814
        %v4982 = vunpack.c.h.bf16 %v4814
        %v4983 = vunpack.c.l.bf16 %v4815
        %v4984 = vunpack.c.h.bf16 %v4815
        %v4985 = vunpack.c.l.bf16 %v4816
        %v4986 = vunpack.c.h.bf16 %v4816
        %v4987 = vunpack.c.l.bf16 %v4817
        %v4988 = vunpack.c.h.bf16 %v4817
        %v4989 = vunpack.c.l.bf16 %v4818
        %v4990 = vunpack.c.h.bf16 %v4818
        %v4991 = vunpack.c.l.bf16 %v4819
        %v4992 = vunpack.c.h.bf16 %v4819
        %v4993 = vunpack.c.l.bf16 %v4820
        %v4994 = vunpack.c.h.bf16 %v4820
        %v4995 = vunpack.c.l.bf16 %v4821
        %v4996 = vunpack.c.h.bf16 %v4821
        %v4997 = vunpack.c.l.bf16 %v4822
        %v4998 = vunpack.c.h.bf16 %v4822
        %v4999 = vunpack.c.l.bf16 %v4823
        %v5000 = vunpack.c.h.bf16 %v4823
        %v5001 = vunpack.c.l.bf16 %v4824
        %v5002 = vunpack.c.h.bf16 %v4824
        %v5003 = vunpack.c.l.bf16 %v4825
        %v5004 = vunpack.c.h.bf16 %v4825
        %v5005 = vunpack.c.l.bf16 %v4826
        %v5006 = vunpack.c.h.bf16 %v4826
        %v5007 = vunpack.c.l.bf16 %v4827
        %v5008 = vunpack.c.h.bf16 %v4827
        %v5009 = vunpack.c.l.bf16 %v4828
        %v5010 = vunpack.c.h.bf16 %v4828
        %v5011 = vunpack.c.l.bf16 %v4829
        %v5012 = vunpack.c.h.bf16 %v4829
        %v5013 = vunpack.c.l.bf16 %v4830
        %v5014 = vunpack.c.h.bf16 %v4830
        %v5015 = vunpack.c.l.bf16 %v4831
        %v5016 = vunpack.c.h.bf16 %v4831
        %v5017 = vunpack.c.l.bf16 %v4832
        %v5018 = vunpack.c.h.bf16 %v4832
        %v5019 = vunpack.c.l.bf16 %v4833
        %v5020 = vunpack.c.h.bf16 %v4833
        %v5021 = vunpack.c.l.bf16 %v4834
        %v5022 = vunpack.c.h.bf16 %v4834
        %v5023 = vunpack.c.l.bf16 %v4835
        %v5024 = vunpack.c.h.bf16 %v4835
        %v5025 = vunpack.c.l.bf16 %v4836
        %v5026 = vunpack.c.h.bf16 %v4836
        %v5027 = vunpack.c.l.bf16 %v4837
        %v5028 = vunpack.c.h.bf16 %v4837
        %v5029 = vunpack.c.l.bf16 %v4838
        %v5030 = vunpack.c.h.bf16 %v4838
        %v5031 = vunpack.c.l.bf16 %v4839
        %v5032 = vunpack.c.h.bf16 %v4839
        %v5033 = vunpack.c.l.bf16 %v4840
        %v5034 = vunpack.c.h.bf16 %v4840
        %v5035 = vunpack.c.l.bf16 %v4841
        %v5036 = vunpack.c.h.bf16 %v4841
        %v5037 = vunpack.c.l.bf16 %v4842
        %v5038 = vunpack.c.h.bf16 %v4842
        %v5039 = vunpack.c.l.bf16 %v4843
        %v5040 = vunpack.c.h.bf16 %v4843
        %v5041 = vunpack.c.l.bf16 %v4844
        %v5042 = vunpack.c.h.bf16 %v4844
        %v5043 = vunpack.c.l.bf16 %v4845
        %v5044 = vunpack.c.h.bf16 %v4845
        %v5045 = vunpack.c.l.bf16 %v4846
        %v5046 = vunpack.c.h.bf16 %v4846
        %v5047 = vunpack.c.l.bf16 %v4847
        %v5048 = vunpack.c.h.bf16 %v4847
        %v5049 = vunpack.c.l.bf16 %v4848
        %v5050 = vunpack.c.h.bf16 %v4848
        %v5051 = vunpack.c.l.bf16 %v4849
        %v5052 = vunpack.c.h.bf16 %v4849
        %v5053 = vunpack.c.l.bf16 %v4850
        %v5054 = vunpack.c.h.bf16 %v4850
        %v5055 = vunpack.c.l.bf16 %v4851
        %v5056 = vunpack.c.h.bf16 %v4851
        %v5057 = vunpack.c.l.bf16 %v4852
        %v5058 = vunpack.c.h.bf16 %v4852
        %v5059 = vunpack.c.l.bf16 %v4853
        %v5060 = vunpack.c.h.bf16 %v4853
        %v5061 = vunpack.c.l.bf16 %v4854
        %v5062 = vunpack.c.h.bf16 %v4854
        %v5063 = vunpack.c.l.bf16 %v4855
        %v5064 = vunpack.c.h.bf16 %v4855
        %v5065 = vunpack.c.l.bf16 %v4856
        %v5066 = vunpack.c.h.bf16 %v4856
        %v5067 = vunpack.c.l.bf16 %v4857
        %v5068 = vunpack.c.h.bf16 %v4857
        %v5069 = vunpack.c.l.bf16 %v4858
        %v5070 = vunpack.c.h.bf16 %v4858
        %v5071 = vunpack.c.l.bf16 %v4859
        %v5072 = vunpack.c.h.bf16 %v4859
        %v5073 = vunpack.c.l.bf16 %v4860
        %v5074 = vunpack.c.h.bf16 %v4860
        %v5075 = vunpack.c.l.bf16 %v4861
        %v5076 = vunpack.c.h.bf16 %v4861
        %v5077 = vunpack.c.l.bf16 %v4862
        %v5078 = vunpack.c.h.bf16 %v4862
        %v5079 = vunpack.c.l.bf16 %v4863
        %v5080 = vunpack.c.h.bf16 %v4863
        %v5081 = vunpack.c.l.bf16 %v4864
        %v5082 = vunpack.c.h.bf16 %v4864
        %v5083 = vunpack.c.l.bf16 %v4865
        %v5084 = vunpack.c.h.bf16 %v4865
        %v5085 = vunpack.c.l.bf16 %v4866
        %v5086 = vunpack.c.h.bf16 %v4866
        %v5087 = vunpack.c.l.bf16 %v4867
        %v5088 = vunpack.c.h.bf16 %v4867
        %v5089 = vunpack.c.l.bf16 %v4868
        %v5090 = vunpack.c.h.bf16 %v4868
        %v5091 = vunpack.c.l.bf16 %v4869
        %v5092 = vunpack.c.h.bf16 %v4869
        %v5093 = vunpack.c.l.bf16 %v4870
        %v5094 = vunpack.c.h.bf16 %v4870
        %v5095 = vunpack.c.l.bf16 %v4871
        %v5096 = vunpack.c.h.bf16 %v4871
        %v5097 = vunpack.c.l.bf16 %v4872
        %v5098 = vunpack.c.h.bf16 %v4872
        %v5099 = vunpack.c.l.bf16 %v4873
        %v5100 = vunpack.c.h.bf16 %v4873
        %v5101 = vunpack.c.l.bf16 %v4874
        %v5102 = vunpack.c.h.bf16 %v4874
        %v5103 = vunpack.c.l.bf16 %v4875
        %v5104 = vunpack.c.h.bf16 %v4875
        %v5105 = vunpack.c.l.bf16 %v4876
        %v5106 = vunpack.c.h.bf16 %v4876
        %v5107 = vunpack.c.l.bf16 %v4877
        %v5108 = vunpack.c.h.bf16 %v4877
        %v5109 = vunpack.c.l.bf16 %v4878
        %v5110 = vunpack.c.h.bf16 %v4878
        %v5111 = vunpack.c.l.bf16 %v4879
        %v5112 = vunpack.c.h.bf16 %v4879
        %v5113 = vunpack.c.l.bf16 %v4880
        %v5114 = vunpack.c.h.bf16 %v4880
        %v5115 = vunpack.c.l.bf16 %v4881
        %v5116 = vunpack.c.h.bf16 %v4881
        %v5117 = vunpack.c.l.bf16 %v4882
        %v5118 = vunpack.c.h.bf16 %v4882
        %v5119 = vunpack.c.l.bf16 %v4883
        %v5120 = vunpack.c.h.bf16 %v4883
        %v5121 = vunpack.c.l.bf16 %v4884
        %v5122 = vunpack.c.h.bf16 %v4884
        %v5123 = vunpack.c.l.bf16 %v4885
        %v5124 = vunpack.c.h.bf16 %v4885
        %v5125 = vunpack.c.l.bf16 %v4886
        %v5126 = vunpack.c.h.bf16 %v4886
        %v5127 = vunpack.c.l.bf16 %v4887
        %v5128 = vunpack.c.h.bf16 %v4887
        %v5129 = vunpack.c.l.bf16 %v4888
        %v5130 = vunpack.c.h.bf16 %v4888
        %v5131 = vunpack.c.l.bf16 %v4889
        %v5132 = vunpack.c.h.bf16 %v4889
        %v5133 = vunpack.c.l.bf16 %v4890
        %v5134 = vunpack.c.h.bf16 %v4890
        %v5135 = vunpack.c.l.bf16 %v4891
        %v5136 = vunpack.c.h.bf16 %v4891
        %v5137 = vunpack.c.l.bf16 %v4892
        %v5138 = vunpack.c.h.bf16 %v4892
        %v5139 = vunpack.c.l.bf16 %v4893
        %v5140 = vunpack.c.h.bf16 %v4893
        %v5141 = vunpack.c.l.bf16 %v4894
        %v5142 = vunpack.c.h.bf16 %v4894
        %v5143 = vunpack.c.l.bf16 %v4895
        %v5144 = vunpack.c.h.bf16 %v4895
        %v5145 = vunpack.c.l.bf16 %v4896
        %v5146 = vunpack.c.h.bf16 %v4896
        %v5147 = vunpack.c.l.bf16 %v4897
        %v5148 = vunpack.c.h.bf16 %v4897
        %v5149 = vunpack.c.l.bf16 %v4898
        %v5150 = vunpack.c.h.bf16 %v4898
        %v5151 = vunpack.c.l.bf16 %v4899
        %v5152 = vunpack.c.h.bf16 %v4899
        %v5153 = vunpack.c.l.bf16 %v4900
        %v5154 = vunpack.c.h.bf16 %v4900
        %v5155 = vunpack.c.l.bf16 %v4901
        %v5156 = vunpack.c.h.bf16 %v4901
        %v5157 = vunpack.c.l.bf16 %v4902
        %v5158 = vunpack.c.h.bf16 %v4902
        %s5159 = scalar_lea.vmem %s7, 16
        %v5160 = vld [vmem:[%s5159] sm:$0xff]
        %v5161 = vld [vmem:[%s5159 + $0x8] sm:$0x3]
        %v5163 = vsel %vm4601, %v5160, 0
        %v5166 = vsel %vm4601, %v5161, 0
        %5168 = vmatprep.subr.mxu0 %v4588
        %5169 = vmatpush1.msra.mxu0 %v4587
        %5170 = vmatprep.subr.mxu0 %v4592
        %5171 = vmatpush1.msra.mxu0 %v4591
        %5172 = vmatprep.subr.mxu0 %v4613
        %5173 = vmatpush1.msra.mxu0 %v4610
        %5174 = vmatprep.subr.mxu0 0.0
        %5175 = vmatpush1.msra.mxu0 0.0
        %5176 = vmatprep.subr.mxu0 0.0
        %5177 = vmatpush1.msra.mxu0 0.0
        %5178 = vmatprep.subr.mxu0 0.0
        %5179 = vmatpush1.msra.mxu0 0.0
        %5180 = vmatprep.subr.mxu0 0.0
        %5181 = vmatpush1.msra.mxu0 0.0
        %5182 = vmatprep.subr.mxu0 0.0
        %5183 = vmatpush1.msra.mxu0 0.0
        %5184 = vmatprep.subr.mxu0 0.0
        %5185 = vmatpush1.msra.mxu0 0.0
        %5186 = vmatprep.subr.mxu0 0.0
        %5187 = vmatpush1.msra.mxu0 0.0
        %5188 = vmatprep.subr.mxu0 0.0
        %5189 = vmatpush1.msra.mxu0 0.0
        %5190 = vmatprep.subr.mxu0 0.0
        %5191 = vmatpush1.msra.mxu0 0.0
        %5192 = vmatprep.subr.mxu0 0.0
        %5193 = vmatpush1.msra.mxu0 0.0
        %5194 = vmatprep.subr.mxu0 0.0
        %5195 = vmatpush1.msra.mxu0 0.0
        %5196 = vmatprep.subr.mxu0 0.0
        %5197 = vmatpush1.msra.mxu0 0.0
        %5198 = vmatprep.subr.mxu0 0.0
        %5199 = vmatpush1.msra.mxu0 0.0
        %5200 = vmatprep.subr.mxu0 0.0
        %5201 = vmatpush1.msra.mxu0 0.0
        %5202 = vmatprep.subr.mxu0 0.0
        %5203 = vmatpush1.msra.mxu0 0.0
        %5204 = vmatprep.subr.mxu0 0.0
        %5205 = vmatpush1.msra.mxu0 0.0
        %5206 = vmatprep.subr.mxu0 0.0
        %5207 = vmatpush1.msra.mxu0 0.0
        %5208 = vmatprep.subr.mxu0 0.0
        %5209 = vmatpush1.msra.mxu0 0.0
        %5210 = vmatprep.subr.mxu0 0.0
        %5211 = vmatpush1.msra.mxu0 0.0
        %5212 = vmatprep.subr.mxu0 0.0
        %5213 = vmatpush1.msra.mxu0 0.0
        %5214 = vmatprep.subr.mxu0 0.0
        %5215 = vmatpush1.msra.mxu0 0.0
        %5216 = vmatprep.subr.mxu0 0.0
        %5217 = vmatpush1.msra.mxu0 0.0
        %5218 = vmatprep.subr.mxu0 0.0
        %5219 = vmatpush1.msra.mxu0 0.0
        %5220 = vmatprep.subr.mxu0 0.0
        %5221 = vmatpush1.msra.mxu0 0.0
        %5222 = vmatprep.subr.mxu0 0.0
        %5223 = vmatpush1.msra.mxu0 0.0
        %5224 = vmatprep.subr.mxu0 0.0
        %5225 = vmatpush1.msra.mxu0 0.0
        %5226 = vmatprep.subr.mxu0 0.0
        %5227 = vmatpush1.msra.mxu0 0.0
        %5228 = vmatprep.subr.mxu0 0.0
        %5229 = vmatpush1.msra.mxu0 0.0
        %5230 = vmatprep.subr.mxu0 0.0
        %5231 = vmatpush1.msra.mxu0 0.0
        %5232 = vmatprep.mubr.f32.mxu0 0.0
        %5233 = vmatmul.mubr.f32.gmra.mrb[0].mxu0 %v5163
        %v5234 = vpop.f32.mrb[0].mxu0
        %v5235 = vadd.f32 0.0, %v5234
        %v5236 = vpop.f32.mrb[0].mxu0
        %v5237 = vadd.f32 0.0, %v5236
        %5238 = vmatprep.mubr.f32.mxu0 0.0
        %5239 = vmatmul.mubr.f32.gmra.mrb[0].mxu0 %v5166
        %v5240 = vpop.f32.mrb[0].mxu0
        %v5241 = vadd.f32 0.0, %v5240
        %v5242 = vpop.f32.mrb[0].mxu0
        %v5243 = vadd.f32 0.0, %v5242
        %5244 = vdwg.mxu0
        %5245 = vmatprep.subr.mxu0 %v4590
        %5246 = vmatpush1.msra.mxu0 %v4589
        %5247 = vmatprep.subr.mxu0 %v4594
        %5248 = vmatpush1.msra.mxu0 %v4593
        %5249 = vmatprep.subr.mxu0 %v4619
        %5250 = vmatpush1.msra.mxu0 %v4616
        %5251 = vmatprep.subr.mxu0 0.0
        %5252 = vmatpush1.msra.mxu0 0.0
        %5253 = vmatprep.subr.mxu0 0.0
        %5254 = vmatpush1.msra.mxu0 0.0
        %5255 = vmatprep.subr.mxu0 0.0
        %5256 = vmatpush1.msra.mxu0 0.0
        %5257 = vmatprep.subr.mxu0 0.0
        %5258 = vmatpush1.msra.mxu0 0.0
        %5259 = vmatprep.subr.mxu0 0.0
        %5260 = vmatpush1.msra.mxu0 0.0
        %5261 = vmatprep.subr.mxu0 0.0
        %5262 = vmatpush1.msra.mxu0 0.0
        %5263 = vmatprep.subr.mxu0 0.0
        %5264 = vmatpush1.msra.mxu0 0.0
        %5265 = vmatprep.subr.mxu0 0.0
        %5266 = vmatpush1.msra.mxu0 0.0
        %5267 = vmatprep.subr.mxu0 0.0
        %5268 = vmatpush1.msra.mxu0 0.0
        %5269 = vmatprep.subr.mxu0 0.0
        %5270 = vmatpush1.msra.mxu0 0.0
        %5271 = vmatprep.subr.mxu0 0.0
        %5272 = vmatpush1.msra.mxu0 0.0
        %5273 = vmatprep.subr.mxu0 0.0
        %5274 = vmatpush1.msra.mxu0 0.0
        %5275 = vmatprep.subr.mxu0 0.0
        %5276 = vmatpush1.msra.mxu0 0.0
        %5277 = vmatprep.subr.mxu0 0.0
        %5278 = vmatpush1.msra.mxu0 0.0
        %5279 = vmatprep.subr.mxu0 0.0
        %5280 = vmatpush1.msra.mxu0 0.0
        %5281 = vmatprep.subr.mxu0 0.0
        %5282 = vmatpush1.msra.mxu0 0.0
        %5283 = vmatprep.subr.mxu0 0.0
        %5284 = vmatpush1.msra.mxu0 0.0
        %5285 = vmatprep.subr.mxu0 0.0
        %5286 = vmatpush1.msra.mxu0 0.0
        %5287 = vmatprep.subr.mxu0 0.0
        %5288 = vmatpush1.msra.mxu0 0.0
        %5289 = vmatprep.subr.mxu0 0.0
        %5290 = vmatpush1.msra.mxu0 0.0
        %5291 = vmatprep.subr.mxu0 0.0
        %5292 = vmatpush1.msra.mxu0 0.0
        %5293 = vmatprep.subr.mxu0 0.0
        %5294 = vmatpush1.msra.mxu0 0.0
        %5295 = vmatprep.subr.mxu0 0.0
        %5296 = vmatpush1.msra.mxu0 0.0
        %5297 = vmatprep.subr.mxu0 0.0
        %5298 = vmatpush1.msra.mxu0 0.0
        %5299 = vmatprep.subr.mxu0 0.0
        %5300 = vmatpush1.msra.mxu0 0.0
        %5301 = vmatprep.subr.mxu0 0.0
        %5302 = vmatpush1.msra.mxu0 0.0
        %5303 = vmatprep.subr.mxu0 0.0
        %5304 = vmatpush1.msra.mxu0 0.0
        %5305 = vmatprep.subr.mxu0 0.0
        %5306 = vmatpush1.msra.mxu0 0.0
        %5307 = vmatprep.subr.mxu0 0.0
        %5308 = vmatpush1.msra.mxu0 0.0
        %5309 = vmatprep.mubr.f32.mxu0 0.0
        %5310 = vmatmul.mubr.f32.gmra.mrb[0].mxu0 %v5163
        %v5311 = vpop.f32.mrb[0].mxu0
        %v5312 = vadd.f32 0.0, %v5311
        %v5313 = vpop.f32.mrb[0].mxu0
        %v5314 = vadd.f32 0.0, %v5313
        %5315 = vmatprep.mubr.f32.mxu0 0.0
        %5316 = vmatmul.mubr.f32.gmra.mrb[0].mxu0 %v5166
        %v5317 = vpop.f32.mrb[0].mxu0
        %v5318 = vadd.f32 0.0, %v5317
        %v5319 = vpop.f32.mrb[0].mxu0
        %v5320 = vadd.f32 0.0, %v5319
        %5321 = vdwg.mxu0
        %s5322 = scalar_lea.vmem %s8, 1024
        %v5323 = vld [vmem:[%s5322] sm:$0xff]
        %v5324 = vld [vmem:[%s5322 + $0x8] sm:$0xff]
        %v5325 = vld [vmem:[%s5322 + $0x10] sm:$0xff]
        %v5326 = vld [vmem:[%s5322 + $0x18] sm:$0xff]
        %v5327 = vld [vmem:[%s5322 + $0x20] sm:$0xff]
        %v5328 = vld [vmem:[%s5322 + $0x28] sm:$0xff]
        %v5329 = vld [vmem:[%s5322 + $0x30] sm:$0xff]
        %v5330 = vld [vmem:[%s5322 + $0x38] sm:$0xff]
        %v5331 = vld [vmem:[%s5322 + $0x40] sm:$0xff]
        %v5332 = vld [vmem:[%s5322 + $0x48] sm:$0xff]
        %v5333 = vld [vmem:[%s5322 + $0x50] sm:$0xff]
        %v5334 = vld [vmem:[%s5322 + $0x58] sm:$0xff]
        %v5335 = vld [vmem:[%s5322 + $0x60] sm:$0xff]
        %v5336 = vld [vmem:[%s5322 + $0x68] sm:$0xff]
        %v5337 = vld [vmem:[%s5322 + $0x70] sm:$0xff]
        %v5338 = vld [vmem:[%s5322 + $0x78] sm:$0xff]
        %v5339 = vld [vmem:[%s5322 + $0x80] sm:$0xff]
        %v5340 = vld [vmem:[%s5322 + $0x88] sm:$0xff]
        %v5341 = vld [vmem:[%s5322 + $0x90] sm:$0xff]
        %v5342 = vld [vmem:[%s5322 + $0x98] sm:$0xff]
        %v5343 = vld [vmem:[%s5322 + $0xa0] sm:$0xff]
        %v5344 = vld [vmem:[%s5322 + $0xa8] sm:$0xff]
        %v5345 = vld [vmem:[%s5322 + $0xb0] sm:$0xff]
        %v5346 = vld [vmem:[%s5322 + $0xb8] sm:$0xff]
        %v5347 = vld [vmem:[%s5322 + $0xc0] sm:$0xff]
        %v5348 = vld [vmem:[%s5322 + $0xc8] sm:$0xff]
        %v5349 = vld [vmem:[%s5322 + $0xd0] sm:$0xff]
        %v5350 = vld [vmem:[%s5322 + $0xd8] sm:$0xff]
        %v5351 = vld [vmem:[%s5322 + $0xe0] sm:$0xff]
        %v5352 = vld [vmem:[%s5322 + $0xe8] sm:$0xff]
        %v5353 = vld [vmem:[%s5322 + $0xf0] sm:$0xff]
        %v5354 = vld [vmem:[%s5322 + $0xf8] sm:$0xff]
        %v5355 = vld [vmem:[%s5322 + $0x100] sm:$0xff]
        %v5356 = vld [vmem:[%s5322 + $0x108] sm:$0xff]
        %v5357 = vld [vmem:[%s5322 + $0x110] sm:$0xff]
        %v5358 = vld [vmem:[%s5322 + $0x118] sm:$0xff]
        %v5359 = vld [vmem:[%s5322 + $0x120] sm:$0xff]
        %v5360 = vld [vmem:[%s5322 + $0x128] sm:$0xff]
        %v5361 = vld [vmem:[%s5322 + $0x130] sm:$0xff]
        %v5362 = vld [vmem:[%s5322 + $0x138] sm:$0xff]
        %v5363 = vld [vmem:[%s5322 + $0x140] sm:$0xff]
        %v5364 = vld [vmem:[%s5322 + $0x148] sm:$0xff]
        %v5365 = vld [vmem:[%s5322 + $0x150] sm:$0xff]
        %v5366 = vld [vmem:[%s5322 + $0x158] sm:$0xff]
        %v5367 = vld [vmem:[%s5322 + $0x160] sm:$0xff]
        %v5368 = vld [vmem:[%s5322 + $0x168] sm:$0xff]
        %v5369 = vld [vmem:[%s5322 + $0x170] sm:$0xff]
        %v5370 = vld [vmem:[%s5322 + $0x178] sm:$0xff]
        %v5371 = vld [vmem:[%s5322 + $0x180] sm:$0xff]
        %v5372 = vld [vmem:[%s5322 + $0x188] sm:$0xff]
        %v5373 = vld [vmem:[%s5322 + $0x190] sm:$0xff]
        %v5374 = vld [vmem:[%s5322 + $0x198] sm:$0xff]
        %v5375 = vld [vmem:[%s5322 + $0x1a0] sm:$0xff]
        %v5376 = vld [vmem:[%s5322 + $0x1a8] sm:$0xff]
        %v5377 = vld [vmem:[%s5322 + $0x1b0] sm:$0xff]
        %v5378 = vld [vmem:[%s5322 + $0x1b8] sm:$0xff]
        %v5379 = vld [vmem:[%s5322 + $0x1c0] sm:$0xff]
        %v5380 = vld [vmem:[%s5322 + $0x1c8] sm:$0xff]
        %v5381 = vld [vmem:[%s5322 + $0x1d0] sm:$0xff]
        %v5382 = vld [vmem:[%s5322 + $0x1d8] sm:$0xff]
        %v5383 = vld [vmem:[%s5322 + $0x1e0] sm:$0xff]
        %v5384 = vld [vmem:[%s5322 + $0x1e8] sm:$0xff]
        %v5385 = vld [vmem:[%s5322 + $0x1f0] sm:$0xff]
        %v5386 = vld [vmem:[%s5322 + $0x1f8] sm:$0xff]
        %v5387 = vld [vmem:[%s5322 + $0x200] sm:$0xff]
        %v5388 = vld [vmem:[%s5322 + $0x208] sm:$0xff]
        %v5389 = vld [vmem:[%s5322 + $0x210] sm:$0xff]
        %v5390 = vld [vmem:[%s5322 + $0x218] sm:$0xff]
        %v5391 = vld [vmem:[%s5322 + $0x220] sm:$0xff]
        %v5392 = vld [vmem:[%s5322 + $0x228] sm:$0xff]
        %v5393 = vld [vmem:[%s5322 + $0x230] sm:$0xff]
        %v5394 = vld [vmem:[%s5322 + $0x238] sm:$0xff]
        %v5395 = vld [vmem:[%s5322 + $0x240] sm:$0xff]
        %v5396 = vld [vmem:[%s5322 + $0x248] sm:$0xff]
        %v5397 = vld [vmem:[%s5322 + $0x250] sm:$0xff]
        %v5398 = vld [vmem:[%s5322 + $0x258] sm:$0xff]
        %v5399 = vld [vmem:[%s5322 + $0x260] sm:$0xff]
        %v5400 = vld [vmem:[%s5322 + $0x268] sm:$0xff]
        %v5401 = vld [vmem:[%s5322 + $0x270] sm:$0xff]
        %v5402 = vld [vmem:[%s5322 + $0x278] sm:$0xff]
        %v5403 = vld [vmem:[%s5322 + $0x280] sm:$0xff]
        %v5404 = vld [vmem:[%s5322 + $0x288] sm:$0xff]
        %v5405 = vld [vmem:[%s5322 + $0x290] sm:$0xff]
        %v5406 = vld [vmem:[%s5322 + $0x298] sm:$0xff]
        %v5407 = vld [vmem:[%s5322 + $0x2a0] sm:$0xff]
        %v5408 = vld [vmem:[%s5322 + $0x2a8] sm:$0xff]
        %v5409 = vld [vmem:[%s5322 + $0x2b0] sm:$0xff]
        %v5410 = vld [vmem:[%s5322 + $0x2b8] sm:$0xff]
        %v5411 = vld [vmem:[%s5322 + $0x2c0] sm:$0xff]
        %v5412 = vld [vmem:[%s5322 + $0x2c8] sm:$0xff]
        %v5413 = vld [vmem:[%s5322 + $0x2d0] sm:$0xff]
        %v5414 = vld [vmem:[%s5322 + $0x2d8] sm:$0xff]
        %v5415 = vld [vmem:[%s5322 + $0x2e0] sm:$0xff]
        %v5416 = vld [vmem:[%s5322 + $0x2e8] sm:$0xff]
        %v5417 = vld [vmem:[%s5322 + $0x2f0] sm:$0xff]
        %v5418 = vld [vmem:[%s5322 + $0x2f8] sm:$0xff]
        %v5419 = vld [vmem:[%s5322 + $0x300] sm:$0xff]
        %v5420 = vld [vmem:[%s5322 + $0x308] sm:$0xff]
        %v5421 = vld [vmem:[%s5322 + $0x310] sm:$0xff]
        %v5422 = vld [vmem:[%s5322 + $0x318] sm:$0xff]
        %v5423 = vld [vmem:[%s5322 + $0x320] sm:$0xff]
        %v5424 = vld [vmem:[%s5322 + $0x328] sm:$0xff]
        %v5425 = vld [vmem:[%s5322 + $0x330] sm:$0xff]
        %v5426 = vld [vmem:[%s5322 + $0x338] sm:$0xff]
        %v5427 = vld [vmem:[%s5322 + $0x340] sm:$0xff]
        %v5428 = vld [vmem:[%s5322 + $0x348] sm:$0xff]
        %v5429 = vld [vmem:[%s5322 + $0x350] sm:$0xff]
        %v5430 = vld [vmem:[%s5322 + $0x358] sm:$0xff]
        %v5431 = vld [vmem:[%s5322 + $0x360] sm:$0xff]
        %v5432 = vld [vmem:[%s5322 + $0x368] sm:$0xff]
        %v5433 = vld [vmem:[%s5322 + $0x370] sm:$0xff]
        %v5434 = vld [vmem:[%s5322 + $0x378] sm:$0xff]
        %v5435 = vld [vmem:[%s5322 + $0x380] sm:$0xff]
        %v5436 = vld [vmem:[%s5322 + $0x388] sm:$0xff]
        %v5437 = vld [vmem:[%s5322 + $0x390] sm:$0xff]
        %v5438 = vld [vmem:[%s5322 + $0x398] sm:$0xff]
        %v5439 = vld [vmem:[%s5322 + $0x3a0] sm:$0xff]
        %v5440 = vld [vmem:[%s5322 + $0x3a8] sm:$0xff]
        %v5441 = vld [vmem:[%s5322 + $0x3b0] sm:$0xff]
        %v5442 = vld [vmem:[%s5322 + $0x3b8] sm:$0xff]
        %v5443 = vld [vmem:[%s5322 + $0x3c0] sm:$0xff]
        %v5444 = vld [vmem:[%s5322 + $0x3c8] sm:$0xff]
        %v5445 = vld [vmem:[%s5322 + $0x3d0] sm:$0xff]
        %v5446 = vld [vmem:[%s5322 + $0x3d8] sm:$0xff]
        %v5447 = vld [vmem:[%s5322 + $0x3e0] sm:$0xff]
        %v5448 = vld [vmem:[%s5322 + $0x3e8] sm:$0xff]
        %v5449 = vld [vmem:[%s5322 + $0x3f0] sm:$0xff]
        %v5450 = vld [vmem:[%s5322 + $0x3f8] sm:$0xff]
        %v5451 = vunpack.c.l.bf16 %v5323
        %v5452 = vunpack.c.h.bf16 %v5323
        %v5453 = vunpack.c.l.bf16 %v5324
        %v5454 = vunpack.c.h.bf16 %v5324
        %v5455 = vunpack.c.l.bf16 %v5325
        %v5456 = vunpack.c.h.bf16 %v5325
        %v5457 = vunpack.c.l.bf16 %v5326
        %v5458 = vunpack.c.h.bf16 %v5326
        %v5459 = vunpack.c.l.bf16 %v5327
        %v5460 = vunpack.c.h.bf16 %v5327
        %v5461 = vunpack.c.l.bf16 %v5328
        %v5462 = vunpack.c.h.bf16 %v5328
        %v5463 = vunpack.c.l.bf16 %v5329
        %v5464 = vunpack.c.h.bf16 %v5329
        %v5465 = vunpack.c.l.bf16 %v5330
        %v5466 = vunpack.c.h.bf16 %v5330
        %v5467 = vunpack.c.l.bf16 %v5331
        %v5468 = vunpack.c.h.bf16 %v5331
        %v5469 = vunpack.c.l.bf16 %v5332
        %v5470 = vunpack.c.h.bf16 %v5332
        %v5471 = vunpack.c.l.bf16 %v5333
        %v5472 = vunpack.c.h.bf16 %v5333
        %v5473 = vunpack.c.l.bf16 %v5334
        %v5474 = vunpack.c.h.bf16 %v5334
        %v5475 = vunpack.c.l.bf16 %v5335
        %v5476 = vunpack.c.h.bf16 %v5335
        %v5477 = vunpack.c.l.bf16 %v5336
        %v5478 = vunpack.c.h.bf16 %v5336
        %v5479 = vunpack.c.l.bf16 %v5337
        %v5480 = vunpack.c.h.bf16 %v5337
        %v5481 = vunpack.c.l.bf16 %v5338
        %v5482 = vunpack.c.h.bf16 %v5338
        %v5483 = vunpack.c.l.bf16 %v5339
        %v5484 = vunpack.c.h.bf16 %v5339
        %v5485 = vunpack.c.l.bf16 %v5340
        %v5486 = vunpack.c.h.bf16 %v5340
        %v5487 = vunpack.c.l.bf16 %v5341
        %v5488 = vunpack.c.h.bf16 %v5341
        %v5489 = vunpack.c.l.bf16 %v5342
        %v5490 = vunpack.c.h.bf16 %v5342
        %v5491 = vunpack.c.l.bf16 %v5343
        %v5492 = vunpack.c.h.bf16 %v5343
        %v5493 = vunpack.c.l.bf16 %v5344
        %v5494 = vunpack.c.h.bf16 %v5344
        %v5495 = vunpack.c.l.bf16 %v5345
        %v5496 = vunpack.c.h.bf16 %v5345
        %v5497 = vunpack.c.l.bf16 %v5346
        %v5498 = vunpack.c.h.bf16 %v5346
        %v5499 = vunpack.c.l.bf16 %v5347
        %v5500 = vunpack.c.h.bf16 %v5347
        %v5501 = vunpack.c.l.bf16 %v5348
        %v5502 = vunpack.c.h.bf16 %v5348
        %v5503 = vunpack.c.l.bf16 %v5349
        %v5504 = vunpack.c.h.bf16 %v5349
        %v5505 = vunpack.c.l.bf16 %v5350
        %v5506 = vunpack.c.h.bf16 %v5350
        %v5507 = vunpack.c.l.bf16 %v5351
        %v5508 = vunpack.c.h.bf16 %v5351
        %v5509 = vunpack.c.l.bf16 %v5352
        %v5510 = vunpack.c.h.bf16 %v5352
        %v5511 = vunpack.c.l.bf16 %v5353
        %v5512 = vunpack.c.h.bf16 %v5353
        %v5513 = vunpack.c.l.bf16 %v5354
        %v5514 = vunpack.c.h.bf16 %v5354
        %v5515 = vunpack.c.l.bf16 %v5355
        %v5516 = vunpack.c.h.bf16 %v5355
        %v5517 = vunpack.c.l.bf16 %v5356
        %v5518 = vunpack.c.h.bf16 %v5356
        %v5519 = vunpack.c.l.bf16 %v5357
        %v5520 = vunpack.c.h.bf16 %v5357
        %v5521 = vunpack.c.l.bf16 %v5358
        %v5522 = vunpack.c.h.bf16 %v5358
        %v5523 = vunpack.c.l.bf16 %v5359
        %v5524 = vunpack.c.h.bf16 %v5359
        %v5525 = vunpack.c.l.bf16 %v5360
        %v5526 = vunpack.c.h.bf16 %v5360
        %v5527 = vunpack.c.l.bf16 %v5361
        %v5528 = vunpack.c.h.bf16 %v5361
        %v5529 = vunpack.c.l.bf16 %v5362
        %v5530 = vunpack.c.h.bf16 %v5362
        %v5531 = vunpack.c.l.bf16 %v5363
        %v5532 = vunpack.c.h.bf16 %v5363
        %v5533 = vunpack.c.l.bf16 %v5364
        %v5534 = vunpack.c.h.bf16 %v5364
        %v5535 = vunpack.c.l.bf16 %v5365
        %v5536 = vunpack.c.h.bf16 %v5365
        %v5537 = vunpack.c.l.bf16 %v5366
        %v5538 = vunpack.c.h.bf16 %v5366
        %v5539 = vunpack.c.l.bf16 %v5367
        %v5540 = vunpack.c.h.bf16 %v5367
        %v5541 = vunpack.c.l.bf16 %v5368
        %v5542 = vunpack.c.h.bf16 %v5368
        %v5543 = vunpack.c.l.bf16 %v5369
        %v5544 = vunpack.c.h.bf16 %v5369
        %v5545 = vunpack.c.l.bf16 %v5370
        %v5546 = vunpack.c.h.bf16 %v5370
        %v5547 = vunpack.c.l.bf16 %v5371
        %v5548 = vunpack.c.h.bf16 %v5371
        %v5549 = vunpack.c.l.bf16 %v5372
        %v5550 = vunpack.c.h.bf16 %v5372
        %v5551 = vunpack.c.l.bf16 %v5373
        %v5552 = vunpack.c.h.bf16 %v5373
        %v5553 = vunpack.c.l.bf16 %v5374
        %v5554 = vunpack.c.h.bf16 %v5374
        %v5555 = vunpack.c.l.bf16 %v5375
        %v5556 = vunpack.c.h.bf16 %v5375
        %v5557 = vunpack.c.l.bf16 %v5376
        %v5558 = vunpack.c.h.bf16 %v5376
        %v5559 = vunpack.c.l.bf16 %v5377
        %v5560 = vunpack.c.h.bf16 %v5377
        %v5561 = vunpack.c.l.bf16 %v5378
        %v5562 = vunpack.c.h.bf16 %v5378
        %v5563 = vunpack.c.l.bf16 %v5379
        %v5564 = vunpack.c.h.bf16 %v5379
        %v5565 = vunpack.c.l.bf16 %v5380
        %v5566 = vunpack.c.h.bf16 %v5380
        %v5567 = vunpack.c.l.bf16 %v5381
        %v5568 = vunpack.c.h.bf16 %v5381
        %v5569 = vunpack.c.l.bf16 %v5382
        %v5570 = vunpack.c.h.bf16 %v5382
        %v5571 = vunpack.c.l.bf16 %v5383
        %v5572 = vunpack.c.h.bf16 %v5383
        %v5573 = vunpack.c.l.bf16 %v5384
        %v5574 = vunpack.c.h.bf16 %v5384
        %v5575 = vunpack.c.l.bf16 %v5385
        %v5576 = vunpack.c.h.bf16 %v5385
        %v5577 = vunpack.c.l.bf16 %v5386
        %v5578 = vunpack.c.h.bf16 %v5386
        %v5579 = vunpack.c.l.bf16 %v5387
        %v5580 = vunpack.c.h.bf16 %v5387
        %v5581 = vunpack.c.l.bf16 %v5388
        %v5582 = vunpack.c.h.bf16 %v5388
        %v5583 = vunpack.c.l.bf16 %v5389
        %v5584 = vunpack.c.h.bf16 %v5389
        %v5585 = vunpack.c.l.bf16 %v5390
        %v5586 = vunpack.c.h.bf16 %v5390
        %v5587 = vunpack.c.l.bf16 %v5391
        %v5588 = vunpack.c.h.bf16 %v5391
        %v5589 = vunpack.c.l.bf16 %v5392
        %v5590 = vunpack.c.h.bf16 %v5392
        %v5591 = vunpack.c.l.bf16 %v5393
        %v5592 = vunpack.c.h.bf16 %v5393
        %v5593 = vunpack.c.l.bf16 %v5394
        %v5594 = vunpack.c.h.bf16 %v5394
        %v5595 = vunpack.c.l.bf16 %v5395
        %v5596 = vunpack.c.h.bf16 %v5395
        %v5597 = vunpack.c.l.bf16 %v5396
        %v5598 = vunpack.c.h.bf16 %v5396
        %v5599 = vunpack.c.l.bf16 %v5397
        %v5600 = vunpack.c.h.bf16 %v5397
        %v5601 = vunpack.c.l.bf16 %v5398
        %v5602 = vunpack.c.h.bf16 %v5398
        %v5603 = vunpack.c.l.bf16 %v5399
        %v5604 = vunpack.c.h.bf16 %v5399
        %v5605 = vunpack.c.l.bf16 %v5400
        %v5606 = vunpack.c.h.bf16 %v5400
        %v5607 = vunpack.c.l.bf16 %v5401
        %v5608 = vunpack.c.h.bf16 %v5401
        %v5609 = vunpack.c.l.bf16 %v5402
        %v5610 = vunpack.c.h.bf16 %v5402
        %v5611 = vunpack.c.l.bf16 %v5403
        %v5612 = vunpack.c.h.bf16 %v5403
        %v5613 = vunpack.c.l.bf16 %v5404
        %v5614 = vunpack.c.h.bf16 %v5404
        %v5615 = vunpack.c.l.bf16 %v5405
        %v5616 = vunpack.c.h.bf16 %v5405
        %v5617 = vunpack.c.l.bf16 %v5406
        %v5618 = vunpack.c.h.bf16 %v5406
        %v5619 = vunpack.c.l.bf16 %v5407
        %v5620 = vunpack.c.h.bf16 %v5407
        %v5621 = vunpack.c.l.bf16 %v5408
        %v5622 = vunpack.c.h.bf16 %v5408
        %v5623 = vunpack.c.l.bf16 %v5409
        %v5624 = vunpack.c.h.bf16 %v5409
        %v5625 = vunpack.c.l.bf16 %v5410
        %v5626 = vunpack.c.h.bf16 %v5410
        %v5627 = vunpack.c.l.bf16 %v5411
        %v5628 = vunpack.c.h.bf16 %v5411
        %v5629 = vunpack.c.l.bf16 %v5412
        %v5630 = vunpack.c.h.bf16 %v5412
        %v5631 = vunpack.c.l.bf16 %v5413
        %v5632 = vunpack.c.h.bf16 %v5413
        %v5633 = vunpack.c.l.bf16 %v5414
        %v5634 = vunpack.c.h.bf16 %v5414
        %v5635 = vunpack.c.l.bf16 %v5415
        %v5636 = vunpack.c.h.bf16 %v5415
        %v5637 = vunpack.c.l.bf16 %v5416
        %v5638 = vunpack.c.h.bf16 %v5416
        %v5639 = vunpack.c.l.bf16 %v5417
        %v5640 = vunpack.c.h.bf16 %v5417
        %v5641 = vunpack.c.l.bf16 %v5418
        %v5642 = vunpack.c.h.bf16 %v5418
        %v5643 = vunpack.c.l.bf16 %v5419
        %v5644 = vunpack.c.h.bf16 %v5419
        %v5645 = vunpack.c.l.bf16 %v5420
        %v5646 = vunpack.c.h.bf16 %v5420
        %v5647 = vunpack.c.l.bf16 %v5421
        %v5648 = vunpack.c.h.bf16 %v5421
        %v5649 = vunpack.c.l.bf16 %v5422
        %v5650 = vunpack.c.h.bf16 %v5422
        %v5651 = vunpack.c.l.bf16 %v5423
        %v5652 = vunpack.c.h.bf16 %v5423
        %v5653 = vunpack.c.l.bf16 %v5424
        %v5654 = vunpack.c.h.bf16 %v5424
        %v5655 = vunpack.c.l.bf16 %v5425
        %v5656 = vunpack.c.h.bf16 %v5425
        %v5657 = vunpack.c.l.bf16 %v5426
        %v5658 = vunpack.c.h.bf16 %v5426
        %v5659 = vunpack.c.l.bf16 %v5427
        %v5660 = vunpack.c.h.bf16 %v5427
        %v5661 = vunpack.c.l.bf16 %v5428
        %v5662 = vunpack.c.h.bf16 %v5428
        %v5663 = vunpack.c.l.bf16 %v5429
        %v5664 = vunpack.c.h.bf16 %v5429
        %v5665 = vunpack.c.l.bf16 %v5430
        %v5666 = vunpack.c.h.bf16 %v5430
        %v5667 = vunpack.c.l.bf16 %v5431
        %v5668 = vunpack.c.h.bf16 %v5431
        %v5669 = vunpack.c.l.bf16 %v5432
        %v5670 = vunpack.c.h.bf16 %v5432
        %v5671 = vunpack.c.l.bf16 %v5433
        %v5672 = vunpack.c.h.bf16 %v5433
        %v5673 = vunpack.c.l.bf16 %v5434
        %v5674 = vunpack.c.h.bf16 %v5434
        %v5675 = vunpack.c.l.bf16 %v5435
        %v5676 = vunpack.c.h.bf16 %v5435
        %v5677 = vunpack.c.l.bf16 %v5436
        %v5678 = vunpack.c.h.bf16 %v5436
        %v5679 = vunpack.c.l.bf16 %v5437
        %v5680 = vunpack.c.h.bf16 %v5437
        %v5681 = vunpack.c.l.bf16 %v5438
        %v5682 = vunpack.c.h.bf16 %v5438
        %v5683 = vunpack.c.l.bf16 %v5439
        %v5684 = vunpack.c.h.bf16 %v5439
        %v5685 = vunpack.c.l.bf16 %v5440
        %v5686 = vunpack.c.h.bf16 %v5440
        %v5687 = vunpack.c.l.bf16 %v5441
        %v5688 = vunpack.c.h.bf16 %v5441
        %v5689 = vunpack.c.l.bf16 %v5442
        %v5690 = vunpack.c.h.bf16 %v5442
        %v5691 = vunpack.c.l.bf16 %v5443
        %v5692 = vunpack.c.h.bf16 %v5443
        %v5693 = vunpack.c.l.bf16 %v5444
        %v5694 = vunpack.c.h.bf16 %v5444
        %v5695 = vunpack.c.l.bf16 %v5445
        %v5696 = vunpack.c.h.bf16 %v5445
        %v5697 = vunpack.c.l.bf16 %v5446
        %v5698 = vunpack.c.h.bf16 %v5446
        %v5699 = vunpack.c.l.bf16 %v5447
        %v5700 = vunpack.c.h.bf16 %v5447
        %v5701 = vunpack.c.l.bf16 %v5448
        %v5702 = vunpack.c.h.bf16 %v5448
        %v5703 = vunpack.c.l.bf16 %v5449
        %v5704 = vunpack.c.h.bf16 %v5449
        %v5705 = vunpack.c.l.bf16 %v5450
        %v5706 = vunpack.c.h.bf16 %v5450
        %5707 = vmatprep.subr.mxu0 %v5452
        %5708 = vmatpush1.msra.mxu0 %v5451
        %5709 = vmatprep.subr.mxu0 %v5456
        %5710 = vmatpush1.msra.mxu0 %v5455
        %5711 = vmatprep.subr.mxu0 %v5460
        %5712 = vmatpush1.msra.mxu0 %v5459
        %5713 = vmatprep.subr.mxu0 %v5464
        %5714 = vmatpush1.msra.mxu0 %v5463
        %5715 = vmatprep.subr.mxu0 %v5468
        %5716 = vmatpush1.msra.mxu0 %v5467
        %5717 = vmatprep.subr.mxu0 %v5472
        %5718 = vmatpush1.msra.mxu0 %v5471
        %5719 = vmatprep.subr.mxu0 %v5476
        %5720 = vmatpush1.msra.mxu0 %v5475
        %5721 = vmatprep.subr.mxu0 %v5480
        %5722 = vmatpush1.msra.mxu0 %v5479
        %5723 = vmatprep.subr.mxu0 %v5484
        %5724 = vmatpush1.msra.mxu0 %v5483
        %5725 = vmatprep.subr.mxu0 %v5488
        %5726 = vmatpush1.msra.mxu0 %v5487
        %5727 = vmatprep.subr.mxu0 %v5492
        %5728 = vmatpush1.msra.mxu0 %v5491
        %5729 = vmatprep.subr.mxu0 %v5496
        %5730 = vmatpush1.msra.mxu0 %v5495
        %5731 = vmatprep.subr.mxu0 %v5500
        %5732 = vmatpush1.msra.mxu0 %v5499
        %5733 = vmatprep.subr.mxu0 %v5504
        %5734 = vmatpush1.msra.mxu0 %v5503
        %5735 = vmatprep.subr.mxu0 %v5508
        %5736 = vmatpush1.msra.mxu0 %v5507
        %5737 = vmatprep.subr.mxu0 %v5512
        %5738 = vmatpush1.msra.mxu0 %v5511
        %5739 = vmatprep.subr.mxu0 %v5516
        %5740 = vmatpush1.msra.mxu0 %v5515
        %5741 = vmatprep.subr.mxu0 %v5520
        %5742 = vmatpush1.msra.mxu0 %v5519
        %5743 = vmatprep.subr.mxu0 %v5524
        %5744 = vmatpush1.msra.mxu0 %v5523
        %5745 = vmatprep.subr.mxu0 %v5528
        %5746 = vmatpush1.msra.mxu0 %v5527
        %5747 = vmatprep.subr.mxu0 %v5532
        %5748 = vmatpush1.msra.mxu0 %v5531
        %5749 = vmatprep.subr.mxu0 %v5536
        %5750 = vmatpush1.msra.mxu0 %v5535
        %5751 = vmatprep.subr.mxu0 %v5540
        %5752 = vmatpush1.msra.mxu0 %v5539
        %5753 = vmatprep.subr.mxu0 %v5544
        %5754 = vmatpush1.msra.mxu0 %v5543
        %5755 = vmatprep.subr.mxu0 %v5548
        %5756 = vmatpush1.msra.mxu0 %v5547
        %5757 = vmatprep.subr.mxu0 %v5552
        %5758 = vmatpush1.msra.mxu0 %v5551
        %5759 = vmatprep.subr.mxu0 %v5556
        %5760 = vmatpush1.msra.mxu0 %v5555
        %5761 = vmatprep.subr.mxu0 %v5560
        %5762 = vmatpush1.msra.mxu0 %v5559
        %5763 = vmatprep.subr.mxu0 %v5564
        %5764 = vmatpush1.msra.mxu0 %v5563
        %5765 = vmatprep.subr.mxu0 %v5568
        %5766 = vmatpush1.msra.mxu0 %v5567
        %5767 = vmatprep.subr.mxu0 %v5572
        %5768 = vmatpush1.msra.mxu0 %v5571
        %5769 = vmatprep.subr.mxu0 %v5576
        %5770 = vmatpush1.msra.mxu0 %v5575
        %5771 = vmatprep.mubr.f32.mxu0 %v5237
        %5772 = vmatmul.mubr.f32.gmra.mrb[0].mxu0 %v5235
        %v5773 = vpop.f32.mrb[0].mxu0
        %v5774 = vadd.f32 0.0, %v5773
        %v5775 = vpop.f32.mrb[0].mxu0
        %v5776 = vadd.f32 0.0, %v5775
        %5777 = vmatprep.mubr.f32.mxu0 %v5243
        %5778 = vmatmul.mubr.f32.gmra.mrb[0].mxu0 %v5241
        %v5779 = vpop.f32.mrb[0].mxu0
        %v5780 = vadd.f32 0.0, %v5779
        %v5781 = vpop.f32.mrb[0].mxu0
        %v5782 = vadd.f32 0.0, %v5781
        %5783 = vdwg.mxu0
        %5784 = vmatprep.subr.mxu0 %v5580
        %5785 = vmatpush1.msra.mxu0 %v5579
        %5786 = vmatprep.subr.mxu0 %v5584
        %5787 = vmatpush1.msra.mxu0 %v5583
        %5788 = vmatprep.subr.mxu0 %v5588
        %5789 = vmatpush1.msra.mxu0 %v5587
        %5790 = vmatprep.subr.mxu0 %v5592
        %5791 = vmatpush1.msra.mxu0 %v5591
        %5792 = vmatprep.subr.mxu0 %v5596
        %5793 = vmatpush1.msra.mxu0 %v5595
        %5794 = vmatprep.subr.mxu0 %v5600
        %5795 = vmatpush1.msra.mxu0 %v5599
        %5796 = vmatprep.subr.mxu0 %v5604
        %5797 = vmatpush1.msra.mxu0 %v5603
        %5798 = vmatprep.subr.mxu0 %v5608
        %5799 = vmatpush1.msra.mxu0 %v5607
        %5800 = vmatprep.subr.mxu0 %v5612
        %5801 = vmatpush1.msra.mxu0 %v5611
        %5802 = vmatprep.subr.mxu0 %v5616
        %5803 = vmatpush1.msra.mxu0 %v5615
        %5804 = vmatprep.subr.mxu0 %v5620
        %5805 = vmatpush1.msra.mxu0 %v5619
        %5806 = vmatprep.subr.mxu0 %v5624
        %5807 = vmatpush1.msra.mxu0 %v5623
        %5808 = vmatprep.subr.mxu0 %v5628
        %5809 = vmatpush1.msra.mxu0 %v5627
        %5810 = vmatprep.subr.mxu0 %v5632
        %5811 = vmatpush1.msra.mxu0 %v5631
        %5812 = vmatprep.subr.mxu0 %v5636
        %5813 = vmatpush1.msra.mxu0 %v5635
        %5814 = vmatprep.subr.mxu0 %v5640
        %5815 = vmatpush1.msra.mxu0 %v5639
        %5816 = vmatprep.subr.mxu0 %v5644
        %5817 = vmatpush1.msra.mxu0 %v5643
        %5818 = vmatprep.subr.mxu0 %v5648
        %5819 = vmatpush1.msra.mxu0 %v5647
        %5820 = vmatprep.subr.mxu0 %v5652
        %5821 = vmatpush1.msra.mxu0 %v5651
        %5822 = vmatprep.subr.mxu0 %v5656
        %5823 = vmatpush1.msra.mxu0 %v5655
        %5824 = vmatprep.subr.mxu0 %v5660
        %5825 = vmatpush1.msra.mxu0 %v5659
        %5826 = vmatprep.subr.mxu0 %v5664
        %5827 = vmatpush1.msra.mxu0 %v5663
        %5828 = vmatprep.subr.mxu0 %v5668
        %5829 = vmatpush1.msra.mxu0 %v5667
        %5830 = vmatprep.subr.mxu0 %v5672
        %5831 = vmatpush1.msra.mxu0 %v5671
        %5832 = vmatprep.subr.mxu0 %v5676
        %5833 = vmatpush1.msra.mxu0 %v5675
        %5834 = vmatprep.subr.mxu0 %v5680
        %5835 = vmatpush1.msra.mxu0 %v5679
        %5836 = vmatprep.subr.mxu0 %v5684
        %5837 = vmatpush1.msra.mxu0 %v5683
        %5838 = vmatprep.subr.mxu0 %v5688
        %5839 = vmatpush1.msra.mxu0 %v5687
        %5840 = vmatprep.subr.mxu0 %v5692
        %5841 = vmatpush1.msra.mxu0 %v5691
        %5842 = vmatprep.subr.mxu0 %v5696
        %5843 = vmatpush1.msra.mxu0 %v5695
        %5844 = vmatprep.subr.mxu0 %v5700
        %5845 = vmatpush1.msra.mxu0 %v5699
        %5846 = vmatprep.subr.mxu0 %v5704
        %5847 = vmatpush1.msra.mxu0 %v5703
        %5848 = vmatprep.mubr.f32.mxu0 %v5314
        %5849 = vmatmul.mubr.f32.gmra.mrb[0].mxu0 %v5312
        %v5850 = vpop.f32.mrb[0].mxu0
        %v5851 = vadd.f32 %v5774, %v5850
        %v5852 = vpop.f32.mrb[0].mxu0
        %v5853 = vadd.f32 %v5776, %v5852
        %5854 = vmatprep.mubr.f32.mxu0 %v5320
        %5855 = vmatmul.mubr.f32.gmra.mrb[0].mxu0 %v5318
        %v5856 = vpop.f32.mrb[0].mxu0
        %v5857 = vadd.f32 %v5780, %v5856
        %v5858 = vpop.f32.mrb[0].mxu0
        %v5859 = vadd.f32 %v5782, %v5858
        %5860 = vdwg.mxu0
        %5861 = vmatprep.subr.mxu0 %v5454
        %5862 = vmatpush1.msra.mxu0 %v5453
        %5863 = vmatprep.subr.mxu0 %v5458
        %5864 = vmatpush1.msra.mxu0 %v5457
        %5865 = vmatprep.subr.mxu0 %v5462
        %5866 = vmatpush1.msra.mxu0 %v5461
        %5867 = vmatprep.subr.mxu0 %v5466
        %5868 = vmatpush1.msra.mxu0 %v5465
        %5869 = vmatprep.subr.mxu0 %v5470
        %5870 = vmatpush1.msra.mxu0 %v5469
        %5871 = vmatprep.subr.mxu0 %v5474
        %5872 = vmatpush1.msra.mxu0 %v5473
        %5873 = vmatprep.subr.mxu0 %v5478
        %5874 = vmatpush1.msra.mxu0 %v5477
        %5875 = vmatprep.subr.mxu0 %v5482
        %5876 = vmatpush1.msra.mxu0 %v5481
        %5877 = vmatprep.subr.mxu0 %v5486
        %5878 = vmatpush1.msra.mxu0 %v5485
        %5879 = vmatprep.subr.mxu0 %v5490
        %5880 = vmatpush1.msra.mxu0 %v5489
        %5881 = vmatprep.subr.mxu0 %v5494
        %5882 = vmatpush1.msra.mxu0 %v5493
        %5883 = vmatprep.subr.mxu0 %v5498
        %5884 = vmatpush1.msra.mxu0 %v5497
        %5885 = vmatprep.subr.mxu0 %v5502
        %5886 = vmatpush1.msra.mxu0 %v5501
        %5887 = vmatprep.subr.mxu0 %v5506
        %5888 = vmatpush1.msra.mxu0 %v5505
        %5889 = vmatprep.subr.mxu0 %v5510
        %5890 = vmatpush1.msra.mxu0 %v5509
        %5891 = vmatprep.subr.mxu0 %v5514
        %5892 = vmatpush1.msra.mxu0 %v5513
        %5893 = vmatprep.subr.mxu0 %v5518
        %5894 = vmatpush1.msra.mxu0 %v5517
        %5895 = vmatprep.subr.mxu0 %v5522
        %5896 = vmatpush1.msra.mxu0 %v5521
        %5897 = vmatprep.subr.mxu0 %v5526
        %5898 = vmatpush1.msra.mxu0 %v5525
        %5899 = vmatprep.subr.mxu0 %v5530
        %5900 = vmatpush1.msra.mxu0 %v5529
        %5901 = vmatprep.subr.mxu0 %v5534
        %5902 = vmatpush1.msra.mxu0 %v5533
        %5903 = vmatprep.subr.mxu0 %v5538
        %5904 = vmatpush1.msra.mxu0 %v5537
        %5905 = vmatprep.subr.mxu0 %v5542
        %5906 = vmatpush1.msra.mxu0 %v5541
        %5907 = vmatprep.subr.mxu0 %v5546
        %5908 = vmatpush1.msra.mxu0 %v5545
        %5909 = vmatprep.subr.mxu0 %v5550
        %5910 = vmatpush1.msra.mxu0 %v5549
        %5911 = vmatprep.subr.mxu0 %v5554
        %5912 = vmatpush1.msra.mxu0 %v5553
        %5913 = vmatprep.subr.mxu0 %v5558
        %5914 = vmatpush1.msra.mxu0 %v5557
        %5915 = vmatprep.subr.mxu0 %v5562
        %5916 = vmatpush1.msra.mxu0 %v5561
        %5917 = vmatprep.subr.mxu0 %v5566
        %5918 = vmatpush1.msra.mxu0 %v5565
        %5919 = vmatprep.subr.mxu0 %v5570
        %5920 = vmatpush1.msra.mxu0 %v5569
        %5921 = vmatprep.subr.mxu0 %v5574
        %5922 = vmatpush1.msra.mxu0 %v5573
        %5923 = vmatprep.subr.mxu0 %v5578
        %5924 = vmatpush1.msra.mxu0 %v5577
        %5925 = vmatprep.mubr.f32.mxu0 %v5237
        %5926 = vmatmul.mubr.f32.gmra.mrb[0].mxu0 %v5235
        %v5927 = vpop.f32.mrb[0].mxu0
        %v5928 = vadd.f32 0.0, %v5927
        %v5929 = vpop.f32.mrb[0].mxu0
        %v5930 = vadd.f32 0.0, %v5929
        %5931 = vmatprep.mubr.f32.mxu0 %v5243
        %5932 = vmatmul.mubr.f32.gmra.mrb[0].mxu0 %v5241
        %v5933 = vpop.f32.mrb[0].mxu0
        %v5934 = vadd.f32 0.0, %v5933
        %v5935 = vpop.f32.mrb[0].mxu0
        %v5936 = vadd.f32 0.0, %v5935
        %5937 = vdwg.mxu0
        %5938 = vmatprep.subr.mxu0 %v5582
        %5939 = vmatpush1.msra.mxu0 %v5581
        %5940 = vmatprep.subr.mxu0 %v5586
        %5941 = vmatpush1.msra.mxu0 %v5585
        %5942 = vmatprep.subr.mxu0 %v5590
        %5943 = vmatpush1.msra.mxu0 %v5589
        %5944 = vmatprep.subr.mxu0 %v5594
        %5945 = vmatpush1.msra.mxu0 %v5593
        %5946 = vmatprep.subr.mxu0 %v5598
        %5947 = vmatpush1.msra.mxu0 %v5597
        %5948 = vmatprep.subr.mxu0 %v5602
        %5949 = vmatpush1.msra.mxu0 %v5601
        %5950 = vmatprep.subr.mxu0 %v5606
        %5951 = vmatpush1.msra.mxu0 %v5605
        %5952 = vmatprep.subr.mxu0 %v5610
        %5953 = vmatpush1.msra.mxu0 %v5609
        %5954 = vmatprep.subr.mxu0 %v5614
        %5955 = vmatpush1.msra.mxu0 %v5613
        %5956 = vmatprep.subr.mxu0 %v5618
        %5957 = vmatpush1.msra.mxu0 %v5617
        %5958 = vmatprep.subr.mxu0 %v5622
        %5959 = vmatpush1.msra.mxu0 %v5621
        %5960 = vmatprep.subr.mxu0 %v5626
        %5961 = vmatpush1.msra.mxu0 %v5625
        %5962 = vmatprep.subr.mxu0 %v5630
        %5963 = vmatpush1.msra.mxu0 %v5629
        %5964 = vmatprep.subr.mxu0 %v5634
        %5965 = vmatpush1.msra.mxu0 %v5633
        %5966 = vmatprep.subr.mxu0 %v5638
        %5967 = vmatpush1.msra.mxu0 %v5637
        %5968 = vmatprep.subr.mxu0 %v5642
        %5969 = vmatpush1.msra.mxu0 %v5641
        %5970 = vmatprep.subr.mxu0 %v5646
        %5971 = vmatpush1.msra.mxu0 %v5645
        %5972 = vmatprep.subr.mxu0 %v5650
        %5973 = vmatpush1.msra.mxu0 %v5649
        %5974 = vmatprep.subr.mxu0 %v5654
        %5975 = vmatpush1.msra.mxu0 %v5653
        %5976 = vmatprep.subr.mxu0 %v5658
        %5977 = vmatpush1.msra.mxu0 %v5657
        %5978 = vmatprep.subr.mxu0 %v5662
        %5979 = vmatpush1.msra.mxu0 %v5661
        %5980 = vmatprep.subr.mxu0 %v5666
        %5981 = vmatpush1.msra.mxu0 %v5665
        %5982 = vmatprep.subr.mxu0 %v5670
        %5983 = vmatpush1.msra.mxu0 %v5669
        %5984 = vmatprep.subr.mxu0 %v5674
        %5985 = vmatpush1.msra.mxu0 %v5673
        %5986 = vmatprep.subr.mxu0 %v5678
        %5987 = vmatpush1.msra.mxu0 %v5677
        %5988 = vmatprep.subr.mxu0 %v5682
        %5989 = vmatpush1.msra.mxu0 %v5681
        %5990 = vmatprep.subr.mxu0 %v5686
        %5991 = vmatpush1.msra.mxu0 %v5685
        %5992 = vmatprep.subr.mxu0 %v5690
        %5993 = vmatpush1.msra.mxu0 %v5689
        %5994 = vmatprep.subr.mxu0 %v5694
        %5995 = vmatpush1.msra.mxu0 %v5693
        %5996 = vmatprep.subr.mxu0 %v5698
        %5997 = vmatpush1.msra.mxu0 %v5697
        %5998 = vmatprep.subr.mxu0 %v5702
        %5999 = vmatpush1.msra.mxu0 %v5701
        %6000 = vmatprep.subr.mxu0 %v5706
        %6001 = vmatpush1.msra.mxu0 %v5705
        %6002 = vmatprep.mubr.f32.mxu0 %v5314
        %6003 = vmatmul.mubr.f32.gmra.mrb[0].mxu0 %v5312
        %v6004 = vpop.f32.mrb[0].mxu0
        %v6005 = vadd.f32 %v5928, %v6004
        %v6006 = vpop.f32.mrb[0].mxu0
        %v6007 = vadd.f32 %v5930, %v6006
        %6008 = vmatprep.mubr.f32.mxu0 %v5320
        %6009 = vmatmul.mubr.f32.gmra.mrb[0].mxu0 %v5318
        %v6010 = vpop.f32.mrb[0].mxu0
        %v6011 = vadd.f32 %v5934, %v6010
        %v6012 = vpop.f32.mrb[0].mxu0
        %v6013 = vadd.f32 %v5936, %v6012
        %6014 = vdwg.mxu0
        %6015 = vmatprep.subr.mxu0 %v4904
        %6016 = vmatpush1.msra.mxu0 %v4903
        %6017 = vmatprep.subr.mxu0 %v4908
        %6018 = vmatpush1.msra.mxu0 %v4907
        %6019 = vmatprep.subr.mxu0 %v4912
        %6020 = vmatpush1.msra.mxu0 %v4911
        %6021 = vmatprep.subr.mxu0 %v4916
        %6022 = vmatpush1.msra.mxu0 %v4915
        %6023 = vmatprep.subr.mxu0 %v4920
        %6024 = vmatpush1.msra.mxu0 %v4919
        %6025 = vmatprep.subr.mxu0 %v4924
        %6026 = vmatpush1.msra.mxu0 %v4923
        %6027 = vmatprep.subr.mxu0 %v4928
        %6028 = vmatpush1.msra.mxu0 %v4927
        %6029 = vmatprep.subr.mxu0 %v4932
        %6030 = vmatpush1.msra.mxu0 %v4931
        %6031 = vmatprep.subr.mxu0 %v4936
        %6032 = vmatpush1.msra.mxu0 %v4935
        %6033 = vmatprep.subr.mxu0 %v4940
        %6034 = vmatpush1.msra.mxu0 %v4939
        %6035 = vmatprep.subr.mxu0 %v4944
        %6036 = vmatpush1.msra.mxu0 %v4943
        %6037 = vmatprep.subr.mxu0 %v4948
        %6038 = vmatpush1.msra.mxu0 %v4947
        %6039 = vmatprep.subr.mxu0 %v4952
        %6040 = vmatpush1.msra.mxu0 %v4951
        %6041 = vmatprep.subr.mxu0 %v4956
        %6042 = vmatpush1.msra.mxu0 %v4955
        %6043 = vmatprep.subr.mxu0 %v4960
        %6044 = vmatpush1.msra.mxu0 %v4959
        %6045 = vmatprep.subr.mxu0 %v4964
        %6046 = vmatpush1.msra.mxu0 %v4963
        %6047 = vmatprep.subr.mxu0 %v4968
        %6048 = vmatpush1.msra.mxu0 %v4967
        %6049 = vmatprep.subr.mxu0 %v4972
        %6050 = vmatpush1.msra.mxu0 %v4971
        %6051 = vmatprep.subr.mxu0 %v4976
        %6052 = vmatpush1.msra.mxu0 %v4975
        %6053 = vmatprep.subr.mxu0 %v4980
        %6054 = vmatpush1.msra.mxu0 %v4979
        %6055 = vmatprep.subr.mxu0 %v4984
        %6056 = vmatpush1.msra.mxu0 %v4983
        %6057 = vmatprep.subr.mxu0 %v4988
        %6058 = vmatpush1.msra.mxu0 %v4987
        %6059 = vmatprep.subr.mxu0 %v4992
        %6060 = vmatpush1.msra.mxu0 %v4991
        %6061 = vmatprep.subr.mxu0 %v4996
        %6062 = vmatpush1.msra.mxu0 %v4995
        %6063 = vmatprep.subr.mxu0 %v5000
        %6064 = vmatpush1.msra.mxu0 %v4999
        %6065 = vmatprep.subr.mxu0 %v5004
        %6066 = vmatpush1.msra.mxu0 %v5003
        %6067 = vmatprep.subr.mxu0 %v5008
        %6068 = vmatpush1.msra.mxu0 %v5007
        %6069 = vmatprep.subr.mxu0 %v5012
        %6070 = vmatpush1.msra.mxu0 %v5011
        %6071 = vmatprep.subr.mxu0 %v5016
        %6072 = vmatpush1.msra.mxu0 %v5015
        %6073 = vmatprep.subr.mxu0 %v5020
        %6074 = vmatpush1.msra.mxu0 %v5019
        %6075 = vmatprep.subr.mxu0 %v5024
        %6076 = vmatpush1.msra.mxu0 %v5023
        %6077 = vmatprep.subr.mxu0 %v5028
        %6078 = vmatpush1.msra.mxu0 %v5027
        %6079 = vmatprep.mubr.f32.mxu0 %v4690
        %6080 = vmatmul.mubr.f32.gmra.mrb[0].mxu0 %v4688
        %v6081 = vpop.f32.mrb[0].mxu0
        %v6082 = vadd.f32 %v5851, %v6081
        %v6083 = vpop.f32.mrb[0].mxu0
        %v6084 = vadd.f32 %v5853, %v6083
        %6085 = vmatprep.mubr.f32.mxu0 %v4696
        %6086 = vmatmul.mubr.f32.gmra.mrb[0].mxu0 %v4694
        %v6087 = vpop.f32.mrb[0].mxu0
        %v6088 = vadd.f32 %v5857, %v6087
        %v6089 = vpop.f32.mrb[0].mxu0
        %v6090 = vadd.f32 %v5859, %v6089
        %6091 = vdwg.mxu0
        %6092 = vmatprep.subr.mxu0 %v5032
        %6093 = vmatpush1.msra.mxu0 %v5031
        %6094 = vmatprep.subr.mxu0 %v5036
        %6095 = vmatpush1.msra.mxu0 %v5035
        %6096 = vmatprep.subr.mxu0 %v5040
        %6097 = vmatpush1.msra.mxu0 %v5039
        %6098 = vmatprep.subr.mxu0 %v5044
        %6099 = vmatpush1.msra.mxu0 %v5043
        %6100 = vmatprep.subr.mxu0 %v5048
        %6101 = vmatpush1.msra.mxu0 %v5047
        %6102 = vmatprep.subr.mxu0 %v5052
        %6103 = vmatpush1.msra.mxu0 %v5051
        %6104 = vmatprep.subr.mxu0 %v5056
        %6105 = vmatpush1.msra.mxu0 %v5055
        %6106 = vmatprep.subr.mxu0 %v5060
        %6107 = vmatpush1.msra.mxu0 %v5059
        %6108 = vmatprep.subr.mxu0 %v5064
        %6109 = vmatpush1.msra.mxu0 %v5063
        %6110 = vmatprep.subr.mxu0 %v5068
        %6111 = vmatpush1.msra.mxu0 %v5067
        %6112 = vmatprep.subr.mxu0 %v5072
        %6113 = vmatpush1.msra.mxu0 %v5071
        %6114 = vmatprep.subr.mxu0 %v5076
        %6115 = vmatpush1.msra.mxu0 %v5075
        %6116 = vmatprep.subr.mxu0 %v5080
        %6117 = vmatpush1.msra.mxu0 %v5079
        %6118 = vmatprep.subr.mxu0 %v5084
        %6119 = vmatpush1.msra.mxu0 %v5083
        %6120 = vmatprep.subr.mxu0 %v5088
        %6121 = vmatpush1.msra.mxu0 %v5087
        %6122 = vmatprep.subr.mxu0 %v5092
        %6123 = vmatpush1.msra.mxu0 %v5091
        %6124 = vmatprep.subr.mxu0 %v5096
        %6125 = vmatpush1.msra.mxu0 %v5095
        %6126 = vmatprep.subr.mxu0 %v5100
        %6127 = vmatpush1.msra.mxu0 %v5099
        %6128 = vmatprep.subr.mxu0 %v5104
        %6129 = vmatpush1.msra.mxu0 %v5103
        %6130 = vmatprep.subr.mxu0 %v5108
        %6131 = vmatpush1.msra.mxu0 %v5107
        %6132 = vmatprep.subr.mxu0 %v5112
        %6133 = vmatpush1.msra.mxu0 %v5111
        %6134 = vmatprep.subr.mxu0 %v5116
        %6135 = vmatpush1.msra.mxu0 %v5115
        %6136 = vmatprep.subr.mxu0 %v5120
        %6137 = vmatpush1.msra.mxu0 %v5119
        %6138 = vmatprep.subr.mxu0 %v5124
        %6139 = vmatpush1.msra.mxu0 %v5123
        %6140 = vmatprep.subr.mxu0 %v5128
        %6141 = vmatpush1.msra.mxu0 %v5127
        %6142 = vmatprep.subr.mxu0 %v5132
        %6143 = vmatpush1.msra.mxu0 %v5131
        %6144 = vmatprep.subr.mxu0 %v5136
        %6145 = vmatpush1.msra.mxu0 %v5135
        %6146 = vmatprep.subr.mxu0 %v5140
        %6147 = vmatpush1.msra.mxu0 %v5139
        %6148 = vmatprep.subr.mxu0 %v5144
        %6149 = vmatpush1.msra.mxu0 %v5143
        %6150 = vmatprep.subr.mxu0 %v5148
        %6151 = vmatpush1.msra.mxu0 %v5147
        %6152 = vmatprep.subr.mxu0 %v5152
        %6153 = vmatpush1.msra.mxu0 %v5151
        %6154 = vmatprep.subr.mxu0 %v5156
        %6155 = vmatpush1.msra.mxu0 %v5155
        %6156 = vmatprep.mubr.f32.mxu0 %v4767
        %6157 = vmatmul.mubr.f32.gmra.mrb[0].mxu0 %v4765
        %v6158 = vpop.f32.mrb[0].mxu0
        %v6159 = vadd.f32 %v6082, %v6158
        %v6160 = vpop.f32.mrb[0].mxu0
        %v6161 = vadd.f32 %v6084, %v6160
        %6162 = vmatprep.mubr.f32.mxu0 %v4773
        %6163 = vmatmul.mubr.f32.gmra.mrb[0].mxu0 %v4771
        %v6164 = vpop.f32.mrb[0].mxu0
        %v6165 = vadd.f32 %v6088, %v6164
        %v6166 = vpop.f32.mrb[0].mxu0
        %v6167 = vadd.f32 %v6090, %v6166
        %6168 = vdwg.mxu0
        %6169 = vmatprep.subr.mxu0 %v4906
        %6170 = vmatpush1.msra.mxu0 %v4905
        %6171 = vmatprep.subr.mxu0 %v4910
        %6172 = vmatpush1.msra.mxu0 %v4909
        %6173 = vmatprep.subr.mxu0 %v4914
        %6174 = vmatpush1.msra.mxu0 %v4913
        %6175 = vmatprep.subr.mxu0 %v4918
        %6176 = vmatpush1.msra.mxu0 %v4917
        %6177 = vmatprep.subr.mxu0 %v4922
        %6178 = vmatpush1.msra.mxu0 %v4921
        %6179 = vmatprep.subr.mxu0 %v4926
        %6180 = vmatpush1.msra.mxu0 %v4925
        %6181 = vmatprep.subr.mxu0 %v4930
        %6182 = vmatpush1.msra.mxu0 %v4929
        %6183 = vmatprep.subr.mxu0 %v4934
        %6184 = vmatpush1.msra.mxu0 %v4933
        %6185 = vmatprep.subr.mxu0 %v4938
        %6186 = vmatpush1.msra.mxu0 %v4937
        %6187 = vmatprep.subr.mxu0 %v4942
        %6188 = vmatpush1.msra.mxu0 %v4941
        %6189 = vmatprep.subr.mxu0 %v4946
        %6190 = vmatpush1.msra.mxu0 %v4945
        %6191 = vmatprep.subr.mxu0 %v4950
        %6192 = vmatpush1.msra.mxu0 %v4949
        %6193 = vmatprep.subr.mxu0 %v4954
        %6194 = vmatpush1.msra.mxu0 %v4953
        %6195 = vmatprep.subr.mxu0 %v4958
        %6196 = vmatpush1.msra.mxu0 %v4957
        %6197 = vmatprep.subr.mxu0 %v4962
        %6198 = vmatpush1.msra.mxu0 %v4961
        %6199 = vmatprep.subr.mxu0 %v4966
        %6200 = vmatpush1.msra.mxu0 %v4965
        %6201 = vmatprep.subr.mxu0 %v4970
        %6202 = vmatpush1.msra.mxu0 %v4969
        %6203 = vmatprep.subr.mxu0 %v4974
        %6204 = vmatpush1.msra.mxu0 %v4973
        %6205 = vmatprep.subr.mxu0 %v4978
        %6206 = vmatpush1.msra.mxu0 %v4977
        %6207 = vmatprep.subr.mxu0 %v4982
        %6208 = vmatpush1.msra.mxu0 %v4981
        %6209 = vmatprep.subr.mxu0 %v4986
        %6210 = vmatpush1.msra.mxu0 %v4985
        %6211 = vmatprep.subr.mxu0 %v4990
        %6212 = vmatpush1.msra.mxu0 %v4989
        %6213 = vmatprep.subr.mxu0 %v4994
        %6214 = vmatpush1.msra.mxu0 %v4993
        %6215 = vmatprep.subr.mxu0 %v4998
        %6216 = vmatpush1.msra.mxu0 %v4997
        %6217 = vmatprep.subr.mxu0 %v5002
        %6218 = vmatpush1.msra.mxu0 %v5001
        %6219 = vmatprep.subr.mxu0 %v5006
        %6220 = vmatpush1.msra.mxu0 %v5005
        %6221 = vmatprep.subr.mxu0 %v5010
        %6222 = vmatpush1.msra.mxu0 %v5009
        %6223 = vmatprep.subr.mxu0 %v5014
        %6224 = vmatpush1.msra.mxu0 %v5013
        %6225 = vmatprep.subr.mxu0 %v5018
        %6226 = vmatpush1.msra.mxu0 %v5017
        %6227 = vmatprep.subr.mxu0 %v5022
        %6228 = vmatpush1.msra.mxu0 %v5021
        %6229 = vmatprep.subr.mxu0 %v5026
        %6230 = vmatpush1.msra.mxu0 %v5025
        %6231 = vmatprep.subr.mxu0 %v5030
        %6232 = vmatpush1.msra.mxu0 %v5029
        %6233 = vmatprep.mubr.f32.mxu0 %v4690
        %6234 = vmatmul.mubr.f32.gmra.mrb[0].mxu0 %v4688
        %v6235 = vpop.f32.mrb[0].mxu0
        %v6236 = vadd.f32 %v6005, %v6235
        %v6237 = vpop.f32.mrb[0].mxu0
        %v6238 = vadd.f32 %v6007, %v6237
        %6239 = vmatprep.mubr.f32.mxu0 %v4696
        %6240 = vmatmul.mubr.f32.gmra.mrb[0].mxu0 %v4694
        %v6241 = vpop.f32.mrb[0].mxu0
        %v6242 = vadd.f32 %v6011, %v6241
        %v6243 = vpop.f32.mrb[0].mxu0
        %v6244 = vadd.f32 %v6013, %v6243
        %6245 = vdwg.mxu0
        %6246 = vmatprep.subr.mxu0 %v5034
        %6247 = vmatpush1.msra.mxu0 %v5033
        %6248 = vmatprep.subr.mxu0 %v5038
        %6249 = vmatpush1.msra.mxu0 %v5037
        %6250 = vmatprep.subr.mxu0 %v5042
        %6251 = vmatpush1.msra.mxu0 %v5041
        %6252 = vmatprep.subr.mxu0 %v5046
        %6253 = vmatpush1.msra.mxu0 %v5045
        %6254 = vmatprep.subr.mxu0 %v5050
        %6255 = vmatpush1.msra.mxu0 %v5049
        %6256 = vmatprep.subr.mxu0 %v5054
        %6257 = vmatpush1.msra.mxu0 %v5053
        %6258 = vmatprep.subr.mxu0 %v5058
        %6259 = vmatpush1.msra.mxu0 %v5057
        %6260 = vmatprep.subr.mxu0 %v5062
        %6261 = vmatpush1.msra.mxu0 %v5061
        %6262 = vmatprep.subr.mxu0 %v5066
        %6263 = vmatpush1.msra.mxu0 %v5065
        %6264 = vmatprep.subr.mxu0 %v5070
        %6265 = vmatpush1.msra.mxu0 %v5069
        %6266 = vmatprep.subr.mxu0 %v5074
        %6267 = vmatpush1.msra.mxu0 %v5073
        %6268 = vmatprep.subr.mxu0 %v5078
        %6269 = vmatpush1.msra.mxu0 %v5077
        %6270 = vmatprep.subr.mxu0 %v5082
        %6271 = vmatpush1.msra.mxu0 %v5081
        %6272 = vmatprep.subr.mxu0 %v5086
        %6273 = vmatpush1.msra.mxu0 %v5085
        %6274 = vmatprep.subr.mxu0 %v5090
        %6275 = vmatpush1.msra.mxu0 %v5089
        %6276 = vmatprep.subr.mxu0 %v5094
        %6277 = vmatpush1.msra.mxu0 %v5093
        %6278 = vmatprep.subr.mxu0 %v5098
        %6279 = vmatpush1.msra.mxu0 %v5097
        %6280 = vmatprep.subr.mxu0 %v5102
        %6281 = vmatpush1.msra.mxu0 %v5101
        %6282 = vmatprep.subr.mxu0 %v5106
        %6283 = vmatpush1.msra.mxu0 %v5105
        %6284 = vmatprep.subr.mxu0 %v5110
        %6285 = vmatpush1.msra.mxu0 %v5109
        %6286 = vmatprep.subr.mxu0 %v5114
        %6287 = vmatpush1.msra.mxu0 %v5113
        %6288 = vmatprep.subr.mxu0 %v5118
        %6289 = vmatpush1.msra.mxu0 %v5117
        %6290 = vmatprep.subr.mxu0 %v5122
        %6291 = vmatpush1.msra.mxu0 %v5121
        %6292 = vmatprep.subr.mxu0 %v5126
        %6293 = vmatpush1.msra.mxu0 %v5125
        %6294 = vmatprep.subr.mxu0 %v5130
        %6295 = vmatpush1.msra.mxu0 %v5129
        %6296 = vmatprep.subr.mxu0 %v5134
        %6297 = vmatpush1.msra.mxu0 %v5133
        %6298 = vmatprep.subr.mxu0 %v5138
        %6299 = vmatpush1.msra.mxu0 %v5137
        %6300 = vmatprep.subr.mxu0 %v5142
        %6301 = vmatpush1.msra.mxu0 %v5141
        %6302 = vmatprep.subr.mxu0 %v5146
        %6303 = vmatpush1.msra.mxu0 %v5145
        %6304 = vmatprep.subr.mxu0 %v5150
        %6305 = vmatpush1.msra.mxu0 %v5149
        %6306 = vmatprep.subr.mxu0 %v5154
        %6307 = vmatpush1.msra.mxu0 %v5153
        %6308 = vmatprep.subr.mxu0 %v5158
        %6309 = vmatpush1.msra.mxu0 %v5157
        %6310 = vmatprep.mubr.f32.mxu0 %v4767
        %6311 = vmatmul.mubr.f32.gmra.mrb[0].mxu0 %v4765
        %v6312 = vpop.f32.mrb[0].mxu0
        %v6313 = vadd.f32 %v6236, %v6312
        %v6314 = vpop.f32.mrb[0].mxu0
        %v6315 = vadd.f32 %v6238, %v6314
        %6316 = vmatprep.mubr.f32.mxu0 %v4773
        %6317 = vmatmul.mubr.f32.gmra.mrb[0].mxu0 %v4771
        %v6318 = vpop.f32.mrb[0].mxu0
        %v6319 = vadd.f32 %v6242, %v6318
        %v6320 = vpop.f32.mrb[0].mxu0
        %v6321 = vadd.f32 %v6244, %v6320
        %6322 = vdwg.mxu0
        %s6323 = scalar_lea.vmem %s7, 32
        %v6324 = vld [vmem:[%s6323] sm:$0xff]
        %v6325 = vld [vmem:[%s6323 + $0x8] sm:$0x3]
        %v6327 = vsel %vm4601, %v6324, 0
        %v6330 = vsel %vm4601, %v6325, 0
        %6332 = vmatprep.subr.mxu0 %v4588
        %6333 = vmatpush1.msra.mxu0 %v4587
        %6334 = vmatprep.subr.mxu0 %v4592
        %6335 = vmatpush1.msra.mxu0 %v4591
        %6336 = vmatprep.subr.mxu0 %v4613
        %6337 = vmatpush1.msra.mxu0 %v4610
        %6338 = vmatprep.subr.mxu0 0.0
        %6339 = vmatpush1.msra.mxu0 0.0
        %6340 = vmatprep.subr.mxu0 0.0
        %6341 = vmatpush1.msra.mxu0 0.0
        %6342 = vmatprep.subr.mxu0 0.0
        %6343 = vmatpush1.msra.mxu0 0.0
        %6344 = vmatprep.subr.mxu0 0.0
        %6345 = vmatpush1.msra.mxu0 0.0
        %6346 = vmatprep.subr.mxu0 0.0
        %6347 = vmatpush1.msra.mxu0 0.0
        %6348 = vmatprep.subr.mxu0 0.0
        %6349 = vmatpush1.msra.mxu0 0.0
        %6350 = vmatprep.subr.mxu0 0.0
        %6351 = vmatpush1.msra.mxu0 0.0
        %6352 = vmatprep.subr.mxu0 0.0
        %6353 = vmatpush1.msra.mxu0 0.0
        %6354 = vmatprep.subr.mxu0 0.0
        %6355 = vmatpush1.msra.mxu0 0.0
        %6356 = vmatprep.subr.mxu0 0.0
        %6357 = vmatpush1.msra.mxu0 0.0
        %6358 = vmatprep.subr.mxu0 0.0
        %6359 = vmatpush1.msra.mxu0 0.0
        %6360 = vmatprep.subr.mxu0 0.0
        %6361 = vmatpush1.msra.mxu0 0.0
        %6362 = vmatprep.subr.mxu0 0.0
        %6363 = vmatpush1.msra.mxu0 0.0
        %6364 = vmatprep.subr.mxu0 0.0
        %6365 = vmatpush1.msra.mxu0 0.0
        %6366 = vmatprep.subr.mxu0 0.0
        %6367 = vmatpush1.msra.mxu0 0.0
        %6368 = vmatprep.subr.mxu0 0.0
        %6369 = vmatpush1.msra.mxu0 0.0
        %6370 = vmatprep.subr.mxu0 0.0
        %6371 = vmatpush1.msra.mxu0 0.0
        %6372 = vmatprep.subr.mxu0 0.0
        %6373 = vmatpush1.msra.mxu0 0.0
        %6374 = vmatprep.subr.mxu0 0.0
        %6375 = vmatpush1.msra.mxu0 0.0
        %6376 = vmatprep.subr.mxu0 0.0
        %6377 = vmatpush1.msra.mxu0 0.0
        %6378 = vmatprep.subr.mxu0 0.0
        %6379 = vmatpush1.msra.mxu0 0.0
        %6380 = vmatprep.subr.mxu0 0.0
        %6381 = vmatpush1.msra.mxu0 0.0
        %6382 = vmatprep.subr.mxu0 0.0
        %6383 = vmatpush1.msra.mxu0 0.0
        %6384 = vmatprep.subr.mxu0 0.0
        %6385 = vmatpush1.msra.mxu0 0.0
        %6386 = vmatprep.subr.mxu0 0.0
        %6387 = vmatpush1.msra.mxu0 0.0
        %6388 = vmatprep.subr.mxu0 0.0
        %6389 = vmatpush1.msra.mxu0 0.0
        %6390 = vmatprep.subr.mxu0 0.0
        %6391 = vmatpush1.msra.mxu0 0.0
        %6392 = vmatprep.subr.mxu0 0.0
        %6393 = vmatpush1.msra.mxu0 0.0
        %6394 = vmatprep.subr.mxu0 0.0
        %6395 = vmatpush1.msra.mxu0 0.0
        %6396 = vmatprep.mubr.f32.mxu0 0.0
        %6397 = vmatmul.mubr.f32.gmra.mrb[0].mxu0 %v6327
        %v6398 = vpop.f32.mrb[0].mxu0
        %v6399 = vadd.f32 0.0, %v6398
        %v6400 = vpop.f32.mrb[0].mxu0
        %v6401 = vadd.f32 0.0, %v6400
        %6402 = vmatprep.mubr.f32.mxu0 0.0
        %6403 = vmatmul.mubr.f32.gmra.mrb[0].mxu0 %v6330
        %v6404 = vpop.f32.mrb[0].mxu0
        %v6405 = vadd.f32 0.0, %v6404
        %v6406 = vpop.f32.mrb[0].mxu0
        %v6407 = vadd.f32 0.0, %v6406
        %6408 = vdwg.mxu0
        %6409 = vmatprep.subr.mxu0 %v4590
        %6410 = vmatpush1.msra.mxu0 %v4589
        %6411 = vmatprep.subr.mxu0 %v4594
        %6412 = vmatpush1.msra.mxu0 %v4593
        %6413 = vmatprep.subr.mxu0 %v4619
        %6414 = vmatpush1.msra.mxu0 %v4616
        %6415 = vmatprep.subr.mxu0 0.0
        %6416 = vmatpush1.msra.mxu0 0.0
        %6417 = vmatprep.subr.mxu0 0.0
        %6418 = vmatpush1.msra.mxu0 0.0
        %6419 = vmatprep.subr.mxu0 0.0
        %6420 = vmatpush1.msra.mxu0 0.0
        %6421 = vmatprep.subr.mxu0 0.0
        %6422 = vmatpush1.msra.mxu0 0.0
        %6423 = vmatprep.subr.mxu0 0.0
        %6424 = vmatpush1.msra.mxu0 0.0
        %6425 = vmatprep.subr.mxu0 0.0
        %6426 = vmatpush1.msra.mxu0 0.0
        %6427 = vmatprep.subr.mxu0 0.0
        %6428 = vmatpush1.msra.mxu0 0.0
        %6429 = vmatprep.subr.mxu0 0.0
        %6430 = vmatpush1.msra.mxu0 0.0
        %6431 = vmatprep.subr.mxu0 0.0
        %6432 = vmatpush1.msra.mxu0 0.0
        %6433 = vmatprep.subr.mxu0 0.0
        %6434 = vmatpush1.msra.mxu0 0.0
        %6435 = vmatprep.subr.mxu0 0.0
        %6436 = vmatpush1.msra.mxu0 0.0
        %6437 = vmatprep.subr.mxu0 0.0
        %6438 = vmatpush1.msra.mxu0 0.0
        %6439 = vmatprep.subr.mxu0 0.0
        %6440 = vmatpush1.msra.mxu0 0.0
        %6441 = vmatprep.subr.mxu0 0.0
        %6442 = vmatpush1.msra.mxu0 0.0
        %6443 = vmatprep.subr.mxu0 0.0
        %6444 = vmatpush1.msra.mxu0 0.0
        %6445 = vmatprep.subr.mxu0 0.0
        %6446 = vmatpush1.msra.mxu0 0.0
        %6447 = vmatprep.subr.mxu0 0.0
        %6448 = vmatpush1.msra.mxu0 0.0
        %6449 = vmatprep.subr.mxu0 0.0
        %6450 = vmatpush1.msra.mxu0 0.0
        %6451 = vmatprep.subr.mxu0 0.0
        %6452 = vmatpush1.msra.mxu0 0.0
        %6453 = vmatprep.subr.mxu0 0.0
        %6454 = vmatpush1.msra.mxu0 0.0
        %6455 = vmatprep.subr.mxu0 0.0
        %6456 = vmatpush1.msra.mxu0 0.0
        %6457 = vmatprep.subr.mxu0 0.0
        %6458 = vmatpush1.msra.mxu0 0.0
        %6459 = vmatprep.subr.mxu0 0.0
        %6460 = vmatpush1.msra.mxu0 0.0
        %6461 = vmatprep.subr.mxu0 0.0
        %6462 = vmatpush1.msra.mxu0 0.0
        %6463 = vmatprep.subr.mxu0 0.0
        %6464 = vmatpush1.msra.mxu0 0.0
        %6465 = vmatprep.subr.mxu0 0.0
        %6466 = vmatpush1.msra.mxu0 0.0
        %6467 = vmatprep.subr.mxu0 0.0
        %6468 = vmatpush1.msra.mxu0 0.0
        %6469 = vmatprep.subr.mxu0 0.0
        %6470 = vmatpush1.msra.mxu0 0.0
        %6471 = vmatprep.subr.mxu0 0.0
        %6472 = vmatpush1.msra.mxu0 0.0
        %6473 = vmatprep.mubr.f32.mxu0 0.0
        %6474 = vmatmul.mubr.f32.gmra.mrb[0].mxu0 %v6327
        %v6475 = vpop.f32.mrb[0].mxu0
        %v6476 = vadd.f32 0.0, %v6475
        %v6477 = vpop.f32.mrb[0].mxu0
        %v6478 = vadd.f32 0.0, %v6477
        %6479 = vmatprep.mubr.f32.mxu0 0.0
        %6480 = vmatmul.mubr.f32.gmra.mrb[0].mxu0 %v6330
        %v6481 = vpop.f32.mrb[0].mxu0
        %v6482 = vadd.f32 0.0, %v6481
        %v6483 = vpop.f32.mrb[0].mxu0
        %v6484 = vadd.f32 0.0, %v6483
        %6485 = vdwg.mxu0
        %s6486 = scalar_lea.vmem %s8, 2048
        %v6487 = vld [vmem:[%s6486] sm:$0xff]
        %v6488 = vld [vmem:[%s6486 + $0x8] sm:$0xff]
        %v6489 = vld [vmem:[%s6486 + $0x10] sm:$0xff]
        %v6490 = vld [vmem:[%s6486 + $0x18] sm:$0xff]
        %v6491 = vld [vmem:[%s6486 + $0x20] sm:$0xff]
        %v6492 = vld [vmem:[%s6486 + $0x28] sm:$0xff]
        %v6493 = vld [vmem:[%s6486 + $0x30] sm:$0xff]
        %v6494 = vld [vmem:[%s6486 + $0x38] sm:$0xff]
        %v6495 = vld [vmem:[%s6486 + $0x40] sm:$0xff]
        %v6496 = vld [vmem:[%s6486 + $0x48] sm:$0xff]
        %v6497 = vld [vmem:[%s6486 + $0x50] sm:$0xff]
        %v6498 = vld [vmem:[%s6486 + $0x58] sm:$0xff]
        %v6499 = vld [vmem:[%s6486 + $0x60] sm:$0xff]
        %v6500 = vld [vmem:[%s6486 + $0x68] sm:$0xff]
        %v6501 = vld [vmem:[%s6486 + $0x70] sm:$0xff]
        %v6502 = vld [vmem:[%s6486 + $0x78] sm:$0xff]
        %v6503 = vld [vmem:[%s6486 + $0x80] sm:$0xff]
        %v6504 = vld [vmem:[%s6486 + $0x88] sm:$0xff]
        %v6505 = vld [vmem:[%s6486 + $0x90] sm:$0xff]
        %v6506 = vld [vmem:[%s6486 + $0x98] sm:$0xff]
        %v6507 = vld [vmem:[%s6486 + $0xa0] sm:$0xff]
        %v6508 = vld [vmem:[%s6486 + $0xa8] sm:$0xff]
        %v6509 = vld [vmem:[%s6486 + $0xb0] sm:$0xff]
        %v6510 = vld [vmem:[%s6486 + $0xb8] sm:$0xff]
        %v6511 = vld [vmem:[%s6486 + $0xc0] sm:$0xff]
        %v6512 = vld [vmem:[%s6486 + $0xc8] sm:$0xff]
        %v6513 = vld [vmem:[%s6486 + $0xd0] sm:$0xff]
        %v6514 = vld [vmem:[%s6486 + $0xd8] sm:$0xff]
        %v6515 = vld [vmem:[%s6486 + $0xe0] sm:$0xff]
        %v6516 = vld [vmem:[%s6486 + $0xe8] sm:$0xff]
        %v6517 = vld [vmem:[%s6486 + $0xf0] sm:$0xff]
        %v6518 = vld [vmem:[%s6486 + $0xf8] sm:$0xff]
        %v6519 = vld [vmem:[%s6486 + $0x100] sm:$0xff]
        %v6520 = vld [vmem:[%s6486 + $0x108] sm:$0xff]
        %v6521 = vld [vmem:[%s6486 + $0x110] sm:$0xff]
        %v6522 = vld [vmem:[%s6486 + $0x118] sm:$0xff]
        %v6523 = vld [vmem:[%s6486 + $0x120] sm:$0xff]
        %v6524 = vld [vmem:[%s6486 + $0x128] sm:$0xff]
        %v6525 = vld [vmem:[%s6486 + $0x130] sm:$0xff]
        %v6526 = vld [vmem:[%s6486 + $0x138] sm:$0xff]
        %v6527 = vld [vmem:[%s6486 + $0x140] sm:$0xff]
        %v6528 = vld [vmem:[%s6486 + $0x148] sm:$0xff]
        %v6529 = vld [vmem:[%s6486 + $0x150] sm:$0xff]
        %v6530 = vld [vmem:[%s6486 + $0x158] sm:$0xff]
        %v6531 = vld [vmem:[%s6486 + $0x160] sm:$0xff]
        %v6532 = vld [vmem:[%s6486 + $0x168] sm:$0xff]
        %v6533 = vld [vmem:[%s6486 + $0x170] sm:$0xff]
        %v6534 = vld [vmem:[%s6486 + $0x178] sm:$0xff]
        %v6535 = vld [vmem:[%s6486 + $0x180] sm:$0xff]
        %v6536 = vld [vmem:[%s6486 + $0x188] sm:$0xff]
        %v6537 = vld [vmem:[%s6486 + $0x190] sm:$0xff]
        %v6538 = vld [vmem:[%s6486 + $0x198] sm:$0xff]
        %v6539 = vld [vmem:[%s6486 + $0x1a0] sm:$0xff]
        %v6540 = vld [vmem:[%s6486 + $0x1a8] sm:$0xff]
        %v6541 = vld [vmem:[%s6486 + $0x1b0] sm:$0xff]
        %v6542 = vld [vmem:[%s6486 + $0x1b8] sm:$0xff]
        %v6543 = vld [vmem:[%s6486 + $0x1c0] sm:$0xff]
        %v6544 = vld [vmem:[%s6486 + $0x1c8] sm:$0xff]
        %v6545 = vld [vmem:[%s6486 + $0x1d0] sm:$0xff]
        %v6546 = vld [vmem:[%s6486 + $0x1d8] sm:$0xff]
        %v6547 = vld [vmem:[%s6486 + $0x1e0] sm:$0xff]
        %v6548 = vld [vmem:[%s6486 + $0x1e8] sm:$0xff]
        %v6549 = vld [vmem:[%s6486 + $0x1f0] sm:$0xff]
        %v6550 = vld [vmem:[%s6486 + $0x1f8] sm:$0xff]
        %v6551 = vld [vmem:[%s6486 + $0x200] sm:$0xff]
        %v6552 = vld [vmem:[%s6486 + $0x208] sm:$0xff]
        %v6553 = vld [vmem:[%s6486 + $0x210] sm:$0xff]
        %v6554 = vld [vmem:[%s6486 + $0x218] sm:$0xff]
        %v6555 = vld [vmem:[%s6486 + $0x220] sm:$0xff]
        %v6556 = vld [vmem:[%s6486 + $0x228] sm:$0xff]
        %v6557 = vld [vmem:[%s6486 + $0x230] sm:$0xff]
        %v6558 = vld [vmem:[%s6486 + $0x238] sm:$0xff]
        %v6559 = vld [vmem:[%s6486 + $0x240] sm:$0xff]
        %v6560 = vld [vmem:[%s6486 + $0x248] sm:$0xff]
        %v6561 = vld [vmem:[%s6486 + $0x250] sm:$0xff]
        %v6562 = vld [vmem:[%s6486 + $0x258] sm:$0xff]
        %v6563 = vld [vmem:[%s6486 + $0x260] sm:$0xff]
        %v6564 = vld [vmem:[%s6486 + $0x268] sm:$0xff]
        %v6565 = vld [vmem:[%s6486 + $0x270] sm:$0xff]
        %v6566 = vld [vmem:[%s6486 + $0x278] sm:$0xff]
        %v6567 = vld [vmem:[%s6486 + $0x280] sm:$0xff]
        %v6568 = vld [vmem:[%s6486 + $0x288] sm:$0xff]
        %v6569 = vld [vmem:[%s6486 + $0x290] sm:$0xff]
        %v6570 = vld [vmem:[%s6486 + $0x298] sm:$0xff]
        %v6571 = vld [vmem:[%s6486 + $0x2a0] sm:$0xff]
        %v6572 = vld [vmem:[%s6486 + $0x2a8] sm:$0xff]
        %v6573 = vld [vmem:[%s6486 + $0x2b0] sm:$0xff]
        %v6574 = vld [vmem:[%s6486 + $0x2b8] sm:$0xff]
        %v6575 = vld [vmem:[%s6486 + $0x2c0] sm:$0xff]
        %v6576 = vld [vmem:[%s6486 + $0x2c8] sm:$0xff]
        %v6577 = vld [vmem:[%s6486 + $0x2d0] sm:$0xff]
        %v6578 = vld [vmem:[%s6486 + $0x2d8] sm:$0xff]
        %v6579 = vld [vmem:[%s6486 + $0x2e0] sm:$0xff]
        %v6580 = vld [vmem:[%s6486 + $0x2e8] sm:$0xff]
        %v6581 = vld [vmem:[%s6486 + $0x2f0] sm:$0xff]
        %v6582 = vld [vmem:[%s6486 + $0x2f8] sm:$0xff]
        %v6583 = vld [vmem:[%s6486 + $0x300] sm:$0xff]
        %v6584 = vld [vmem:[%s6486 + $0x308] sm:$0xff]
        %v6585 = vld [vmem:[%s6486 + $0x310] sm:$0xff]
        %v6586 = vld [vmem:[%s6486 + $0x318] sm:$0xff]
        %v6587 = vld [vmem:[%s6486 + $0x320] sm:$0xff]
        %v6588 = vld [vmem:[%s6486 + $0x328] sm:$0xff]
        %v6589 = vld [vmem:[%s6486 + $0x330] sm:$0xff]
        %v6590 = vld [vmem:[%s6486 + $0x338] sm:$0xff]
        %v6591 = vld [vmem:[%s6486 + $0x340] sm:$0xff]
        %v6592 = vld [vmem:[%s6486 + $0x348] sm:$0xff]
        %v6593 = vld [vmem:[%s6486 + $0x350] sm:$0xff]
        %v6594 = vld [vmem:[%s6486 + $0x358] sm:$0xff]
        %v6595 = vld [vmem:[%s6486 + $0x360] sm:$0xff]
        %v6596 = vld [vmem:[%s6486 + $0x368] sm:$0xff]
        %v6597 = vld [vmem:[%s6486 + $0x370] sm:$0xff]
        %v6598 = vld [vmem:[%s6486 + $0x378] sm:$0xff]
        %v6599 = vld [vmem:[%s6486 + $0x380] sm:$0xff]
        %v6600 = vld [vmem:[%s6486 + $0x388] sm:$0xff]
        %v6601 = vld [vmem:[%s6486 + $0x390] sm:$0xff]
        %v6602 = vld [vmem:[%s6486 + $0x398] sm:$0xff]
        %v6603 = vld [vmem:[%s6486 + $0x3a0] sm:$0xff]
        %v6604 = vld [vmem:[%s6486 + $0x3a8] sm:$0xff]
        %v6605 = vld [vmem:[%s6486 + $0x3b0] sm:$0xff]
        %v6606 = vld [vmem:[%s6486 + $0x3b8] sm:$0xff]
        %v6607 = vld [vmem:[%s6486 + $0x3c0] sm:$0xff]
        %v6608 = vld [vmem:[%s6486 + $0x3c8] sm:$0xff]
        %v6609 = vld [vmem:[%s6486 + $0x3d0] sm:$0xff]
        %v6610 = vld [vmem:[%s6486 + $0x3d8] sm:$0xff]
        %v6611 = vld [vmem:[%s6486 + $0x3e0] sm:$0xff]
        %v6612 = vld [vmem:[%s6486 + $0x3e8] sm:$0xff]
        %v6613 = vld [vmem:[%s6486 + $0x3f0] sm:$0xff]
        %v6614 = vld [vmem:[%s6486 + $0x3f8] sm:$0xff]
        %v6615 = vunpack.c.l.bf16 %v6487
        %v6616 = vunpack.c.h.bf16 %v6487
        %v6617 = vunpack.c.l.bf16 %v6488
        %v6618 = vunpack.c.h.bf16 %v6488
        %v6619 = vunpack.c.l.bf16 %v6489
        %v6620 = vunpack.c.h.bf16 %v6489
        %v6621 = vunpack.c.l.bf16 %v6490
        %v6622 = vunpack.c.h.bf16 %v6490
        %v6623 = vunpack.c.l.bf16 %v6491
        %v6624 = vunpack.c.h.bf16 %v6491
        %v6625 = vunpack.c.l.bf16 %v6492
        %v6626 = vunpack.c.h.bf16 %v6492
        %v6627 = vunpack.c.l.bf16 %v6493
        %v6628 = vunpack.c.h.bf16 %v6493
        %v6629 = vunpack.c.l.bf16 %v6494
        %v6630 = vunpack.c.h.bf16 %v6494
        %v6631 = vunpack.c.l.bf16 %v6495
        %v6632 = vunpack.c.h.bf16 %v6495
        %v6633 = vunpack.c.l.bf16 %v6496
        %v6634 = vunpack.c.h.bf16 %v6496
        %v6635 = vunpack.c.l.bf16 %v6497
        %v6636 = vunpack.c.h.bf16 %v6497
        %v6637 = vunpack.c.l.bf16 %v6498
        %v6638 = vunpack.c.h.bf16 %v6498
        %v6639 = vunpack.c.l.bf16 %v6499
        %v6640 = vunpack.c.h.bf16 %v6499
        %v6641 = vunpack.c.l.bf16 %v6500
        %v6642 = vunpack.c.h.bf16 %v6500
        %v6643 = vunpack.c.l.bf16 %v6501
        %v6644 = vunpack.c.h.bf16 %v6501
        %v6645 = vunpack.c.l.bf16 %v6502
        %v6646 = vunpack.c.h.bf16 %v6502
        %v6647 = vunpack.c.l.bf16 %v6503
        %v6648 = vunpack.c.h.bf16 %v6503
        %v6649 = vunpack.c.l.bf16 %v6504
        %v6650 = vunpack.c.h.bf16 %v6504
        %v6651 = vunpack.c.l.bf16 %v6505
        %v6652 = vunpack.c.h.bf16 %v6505
        %v6653 = vunpack.c.l.bf16 %v6506
        %v6654 = vunpack.c.h.bf16 %v6506
        %v6655 = vunpack.c.l.bf16 %v6507
        %v6656 = vunpack.c.h.bf16 %v6507
        %v6657 = vunpack.c.l.bf16 %v6508
        %v6658 = vunpack.c.h.bf16 %v6508
        %v6659 = vunpack.c.l.bf16 %v6509
        %v6660 = vunpack.c.h.bf16 %v6509
        %v6661 = vunpack.c.l.bf16 %v6510
        %v6662 = vunpack.c.h.bf16 %v6510
        %v6663 = vunpack.c.l.bf16 %v6511
        %v6664 = vunpack.c.h.bf16 %v6511
        %v6665 = vunpack.c.l.bf16 %v6512
        %v6666 = vunpack.c.h.bf16 %v6512
        %v6667 = vunpack.c.l.bf16 %v6513
        %v6668 = vunpack.c.h.bf16 %v6513
        %v6669 = vunpack.c.l.bf16 %v6514
        %v6670 = vunpack.c.h.bf16 %v6514
        %v6671 = vunpack.c.l.bf16 %v6515
        %v6672 = vunpack.c.h.bf16 %v6515
        %v6673 = vunpack.c.l.bf16 %v6516
        %v6674 = vunpack.c.h.bf16 %v6516
        %v6675 = vunpack.c.l.bf16 %v6517
        %v6676 = vunpack.c.h.bf16 %v6517
        %v6677 = vunpack.c.l.bf16 %v6518
        %v6678 = vunpack.c.h.bf16 %v6518
        %v6679 = vunpack.c.l.bf16 %v6519
        %v6680 = vunpack.c.h.bf16 %v6519
        %v6681 = vunpack.c.l.bf16 %v6520
        %v6682 = vunpack.c.h.bf16 %v6520
        %v6683 = vunpack.c.l.bf16 %v6521
        %v6684 = vunpack.c.h.bf16 %v6521
        %v6685 = vunpack.c.l.bf16 %v6522
        %v6686 = vunpack.c.h.bf16 %v6522
        %v6687 = vunpack.c.l.bf16 %v6523
        %v6688 = vunpack.c.h.bf16 %v6523
        %v6689 = vunpack.c.l.bf16 %v6524
        %v6690 = vunpack.c.h.bf16 %v6524
        %v6691 = vunpack.c.l.bf16 %v6525
        %v6692 = vunpack.c.h.bf16 %v6525
        %v6693 = vunpack.c.l.bf16 %v6526
        %v6694 = vunpack.c.h.bf16 %v6526
        %v6695 = vunpack.c.l.bf16 %v6527
        %v6696 = vunpack.c.h.bf16 %v6527
        %v6697 = vunpack.c.l.bf16 %v6528
        %v6698 = vunpack.c.h.bf16 %v6528
        %v6699 = vunpack.c.l.bf16 %v6529
        %v6700 = vunpack.c.h.bf16 %v6529
        %v6701 = vunpack.c.l.bf16 %v6530
        %v6702 = vunpack.c.h.bf16 %v6530
        %v6703 = vunpack.c.l.bf16 %v6531
        %v6704 = vunpack.c.h.bf16 %v6531
        %v6705 = vunpack.c.l.bf16 %v6532
        %v6706 = vunpack.c.h.bf16 %v6532
        %v6707 = vunpack.c.l.bf16 %v6533
        %v6708 = vunpack.c.h.bf16 %v6533
        %v6709 = vunpack.c.l.bf16 %v6534
        %v6710 = vunpack.c.h.bf16 %v6534
        %v6711 = vunpack.c.l.bf16 %v6535
        %v6712 = vunpack.c.h.bf16 %v6535
        %v6713 = vunpack.c.l.bf16 %v6536
        %v6714 = vunpack.c.h.bf16 %v6536
        %v6715 = vunpack.c.l.bf16 %v6537
        %v6716 = vunpack.c.h.bf16 %v6537
        %v6717 = vunpack.c.l.bf16 %v6538
        %v6718 = vunpack.c.h.bf16 %v6538
        %v6719 = vunpack.c.l.bf16 %v6539
        %v6720 = vunpack.c.h.bf16 %v6539
        %v6721 = vunpack.c.l.bf16 %v6540
        %v6722 = vunpack.c.h.bf16 %v6540
        %v6723 = vunpack.c.l.bf16 %v6541
        %v6724 = vunpack.c.h.bf16 %v6541
        %v6725 = vunpack.c.l.bf16 %v6542
        %v6726 = vunpack.c.h.bf16 %v6542
        %v6727 = vunpack.c.l.bf16 %v6543
        %v6728 = vunpack.c.h.bf16 %v6543
        %v6729 = vunpack.c.l.bf16 %v6544
        %v6730 = vunpack.c.h.bf16 %v6544
        %v6731 = vunpack.c.l.bf16 %v6545
        %v6732 = vunpack.c.h.bf16 %v6545
        %v6733 = vunpack.c.l.bf16 %v6546
        %v6734 = vunpack.c.h.bf16 %v6546
        %v6735 = vunpack.c.l.bf16 %v6547
        %v6736 = vunpack.c.h.bf16 %v6547
        %v6737 = vunpack.c.l.bf16 %v6548
        %v6738 = vunpack.c.h.bf16 %v6548
        %v6739 = vunpack.c.l.bf16 %v6549
        %v6740 = vunpack.c.h.bf16 %v6549
        %v6741 = vunpack.c.l.bf16 %v6550
        %v6742 = vunpack.c.h.bf16 %v6550
        %v6743 = vunpack.c.l.bf16 %v6551
        %v6744 = vunpack.c.h.bf16 %v6551
        %v6745 = vunpack.c.l.bf16 %v6552
        %v6746 = vunpack.c.h.bf16 %v6552
        %v6747 = vunpack.c.l.bf16 %v6553
        %v6748 = vunpack.c.h.bf16 %v6553
        %v6749 = vunpack.c.l.bf16 %v6554
        %v6750 = vunpack.c.h.bf16 %v6554
        %v6751 = vunpack.c.l.bf16 %v6555
        %v6752 = vunpack.c.h.bf16 %v6555
        %v6753 = vunpack.c.l.bf16 %v6556
        %v6754 = vunpack.c.h.bf16 %v6556
        %v6755 = vunpack.c.l.bf16 %v6557
        %v6756 = vunpack.c.h.bf16 %v6557
        %v6757 = vunpack.c.l.bf16 %v6558
        %v6758 = vunpack.c.h.bf16 %v6558
        %v6759 = vunpack.c.l.bf16 %v6559
        %v6760 = vunpack.c.h.bf16 %v6559
        %v6761 = vunpack.c.l.bf16 %v6560
        %v6762 = vunpack.c.h.bf16 %v6560
        %v6763 = vunpack.c.l.bf16 %v6561
        %v6764 = vunpack.c.h.bf16 %v6561
        %v6765 = vunpack.c.l.bf16 %v6562
        %v6766 = vunpack.c.h.bf16 %v6562
        %v6767 = vunpack.c.l.bf16 %v6563
        %v6768 = vunpack.c.h.bf16 %v6563
        %v6769 = vunpack.c.l.bf16 %v6564
        %v6770 = vunpack.c.h.bf16 %v6564
        %v6771 = vunpack.c.l.bf16 %v6565
        %v6772 = vunpack.c.h.bf16 %v6565
        %v6773 = vunpack.c.l.bf16 %v6566
        %v6774 = vunpack.c.h.bf16 %v6566
        %v6775 = vunpack.c.l.bf16 %v6567
        %v6776 = vunpack.c.h.bf16 %v6567
        %v6777 = vunpack.c.l.bf16 %v6568
        %v6778 = vunpack.c.h.bf16 %v6568
        %v6779 = vunpack.c.l.bf16 %v6569
        %v6780 = vunpack.c.h.bf16 %v6569
        %v6781 = vunpack.c.l.bf16 %v6570
        %v6782 = vunpack.c.h.bf16 %v6570
        %v6783 = vunpack.c.l.bf16 %v6571
        %v6784 = vunpack.c.h.bf16 %v6571
        %v6785 = vunpack.c.l.bf16 %v6572
        %v6786 = vunpack.c.h.bf16 %v6572
        %v6787 = vunpack.c.l.bf16 %v6573
        %v6788 = vunpack.c.h.bf16 %v6573
        %v6789 = vunpack.c.l.bf16 %v6574
        %v6790 = vunpack.c.h.bf16 %v6574
        %v6791 = vunpack.c.l.bf16 %v6575
        %v6792 = vunpack.c.h.bf16 %v6575
        %v6793 = vunpack.c.l.bf16 %v6576
        %v6794 = vunpack.c.h.bf16 %v6576
        %v6795 = vunpack.c.l.bf16 %v6577
        %v6796 = vunpack.c.h.bf16 %v6577
        %v6797 = vunpack.c.l.bf16 %v6578
        %v6798 = vunpack.c.h.bf16 %v6578
        %v6799 = vunpack.c.l.bf16 %v6579
        %v6800 = vunpack.c.h.bf16 %v6579
        %v6801 = vunpack.c.l.bf16 %v6580
        %v6802 = vunpack.c.h.bf16 %v6580
        %v6803 = vunpack.c.l.bf16 %v6581
        %v6804 = vunpack.c.h.bf16 %v6581
        %v6805 = vunpack.c.l.bf16 %v6582
        %v6806 = vunpack.c.h.bf16 %v6582
        %v6807 = vunpack.c.l.bf16 %v6583
        %v6808 = vunpack.c.h.bf16 %v6583
        %v6809 = vunpack.c.l.bf16 %v6584
        %v6810 = vunpack.c.h.bf16 %v6584
        %v6811 = vunpack.c.l.bf16 %v6585
        %v6812 = vunpack.c.h.bf16 %v6585
        %v6813 = vunpack.c.l.bf16 %v6586
        %v6814 = vunpack.c.h.bf16 %v6586
        %v6815 = vunpack.c.l.bf16 %v6587
        %v6816 = vunpack.c.h.bf16 %v6587
        %v6817 = vunpack.c.l.bf16 %v6588
        %v6818 = vunpack.c.h.bf16 %v6588
        %v6819 = vunpack.c.l.bf16 %v6589
        %v6820 = vunpack.c.h.bf16 %v6589
        %v6821 = vunpack.c.l.bf16 %v6590
        %v6822 = vunpack.c.h.bf16 %v6590
        %v6823 = vunpack.c.l.bf16 %v6591
        %v6824 = vunpack.c.h.bf16 %v6591
        %v6825 = vunpack.c.l.bf16 %v6592
        %v6826 = vunpack.c.h.bf16 %v6592
        %v6827 = vunpack.c.l.bf16 %v6593
        %v6828 = vunpack.c.h.bf16 %v6593
        %v6829 = vunpack.c.l.bf16 %v6594
        %v6830 = vunpack.c.h.bf16 %v6594
        %v6831 = vunpack.c.l.bf16 %v6595
        %v6832 = vunpack.c.h.bf16 %v6595
        %v6833 = vunpack.c.l.bf16 %v6596
        %v6834 = vunpack.c.h.bf16 %v6596
        %v6835 = vunpack.c.l.bf16 %v6597
        %v6836 = vunpack.c.h.bf16 %v6597
        %v6837 = vunpack.c.l.bf16 %v6598
        %v6838 = vunpack.c.h.bf16 %v6598
        %v6839 = vunpack.c.l.bf16 %v6599
        %v6840 = vunpack.c.h.bf16 %v6599
        %v6841 = vunpack.c.l.bf16 %v6600
        %v6842 = vunpack.c.h.bf16 %v6600
        %v6843 = vunpack.c.l.bf16 %v6601
        %v6844 = vunpack.c.h.bf16 %v6601
        %v6845 = vunpack.c.l.bf16 %v6602
        %v6846 = vunpack.c.h.bf16 %v6602
        %v6847 = vunpack.c.l.bf16 %v6603
        %v6848 = vunpack.c.h.bf16 %v6603
        %v6849 = vunpack.c.l.bf16 %v6604
        %v6850 = vunpack.c.h.bf16 %v6604
        %v6851 = vunpack.c.l.bf16 %v6605
        %v6852 = vunpack.c.h.bf16 %v6605
        %v6853 = vunpack.c.l.bf16 %v6606
        %v6854 = vunpack.c.h.bf16 %v6606
        %v6855 = vunpack.c.l.bf16 %v6607
        %v6856 = vunpack.c.h.bf16 %v6607
        %v6857 = vunpack.c.l.bf16 %v6608
        %v6858 = vunpack.c.h.bf16 %v6608
        %v6859 = vunpack.c.l.bf16 %v6609
        %v6860 = vunpack.c.h.bf16 %v6609
        %v6861 = vunpack.c.l.bf16 %v6610
        %v6862 = vunpack.c.h.bf16 %v6610
        %v6863 = vunpack.c.l.bf16 %v6611
        %v6864 = vunpack.c.h.bf16 %v6611
        %v6865 = vunpack.c.l.bf16 %v6612
        %v6866 = vunpack.c.h.bf16 %v6612
        %v6867 = vunpack.c.l.bf16 %v6613
        %v6868 = vunpack.c.h.bf16 %v6613
        %v6869 = vunpack.c.l.bf16 %v6614
        %v6870 = vunpack.c.h.bf16 %v6614
        %6871 = vmatprep.subr.mxu0 %v6616
        %6872 = vmatpush1.msra.mxu0 %v6615
        %6873 = vmatprep.subr.mxu0 %v6620
        %6874 = vmatpush1.msra.mxu0 %v6619
        %6875 = vmatprep.subr.mxu0 %v6624
        %6876 = vmatpush1.msra.mxu0 %v6623
        %6877 = vmatprep.subr.mxu0 %v6628
        %6878 = vmatpush1.msra.mxu0 %v6627
        %6879 = vmatprep.subr.mxu0 %v6632
        %6880 = vmatpush1.msra.mxu0 %v6631
        %6881 = vmatprep.subr.mxu0 %v6636
        %6882 = vmatpush1.msra.mxu0 %v6635
        %6883 = vmatprep.subr.mxu0 %v6640
        %6884 = vmatpush1.msra.mxu0 %v6639
        %6885 = vmatprep.subr.mxu0 %v6644
        %6886 = vmatpush1.msra.mxu0 %v6643
        %6887 = vmatprep.subr.mxu0 %v6648
        %6888 = vmatpush1.msra.mxu0 %v6647
        %6889 = vmatprep.subr.mxu0 %v6652
        %6890 = vmatpush1.msra.mxu0 %v6651
        %6891 = vmatprep.subr.mxu0 %v6656
        %6892 = vmatpush1.msra.mxu0 %v6655
        %6893 = vmatprep.subr.mxu0 %v6660
        %6894 = vmatpush1.msra.mxu0 %v6659
        %6895 = vmatprep.subr.mxu0 %v6664
        %6896 = vmatpush1.msra.mxu0 %v6663
        %6897 = vmatprep.subr.mxu0 %v6668
        %6898 = vmatpush1.msra.mxu0 %v6667
        %6899 = vmatprep.subr.mxu0 %v6672
        %6900 = vmatpush1.msra.mxu0 %v6671
        %6901 = vmatprep.subr.mxu0 %v6676
        %6902 = vmatpush1.msra.mxu0 %v6675
        %6903 = vmatprep.subr.mxu0 %v6680
        %6904 = vmatpush1.msra.mxu0 %v6679
        %6905 = vmatprep.subr.mxu0 %v6684
        %6906 = vmatpush1.msra.mxu0 %v6683
        %6907 = vmatprep.subr.mxu0 %v6688
        %6908 = vmatpush1.msra.mxu0 %v6687
        %6909 = vmatprep.subr.mxu0 %v6692
        %6910 = vmatpush1.msra.mxu0 %v6691
        %6911 = vmatprep.subr.mxu0 %v6696
        %6912 = vmatpush1.msra.mxu0 %v6695
        %6913 = vmatprep.subr.mxu0 %v6700
        %6914 = vmatpush1.msra.mxu0 %v6699
        %6915 = vmatprep.subr.mxu0 %v6704
        %6916 = vmatpush1.msra.mxu0 %v6703
        %6917 = vmatprep.subr.mxu0 %v6708
        %6918 = vmatpush1.msra.mxu0 %v6707
        %6919 = vmatprep.subr.mxu0 %v6712
        %6920 = vmatpush1.msra.mxu0 %v6711
        %6921 = vmatprep.subr.mxu0 %v6716
        %6922 = vmatpush1.msra.mxu0 %v6715
        %6923 = vmatprep.subr.mxu0 %v6720
        %6924 = vmatpush1.msra.mxu0 %v6719
        %6925 = vmatprep.subr.mxu0 %v6724
        %6926 = vmatpush1.msra.mxu0 %v6723
        %6927 = vmatprep.subr.mxu0 %v6728
        %6928 = vmatpush1.msra.mxu0 %v6727
        %6929 = vmatprep.subr.mxu0 %v6732
        %6930 = vmatpush1.msra.mxu0 %v6731
        %6931 = vmatprep.subr.mxu0 %v6736
        %6932 = vmatpush1.msra.mxu0 %v6735
        %6933 = vmatprep.subr.mxu0 %v6740
        %6934 = vmatpush1.msra.mxu0 %v6739
        %6935 = vmatprep.mubr.f32.mxu0 %v6401
        %6936 = vmatmul.mubr.f32.gmra.mrb[0].mxu0 %v6399
        %v6937 = vpop.f32.mrb[0].mxu0
        %v6938 = vadd.f32 0.0, %v6937
        %v6939 = vpop.f32.mrb[0].mxu0
        %v6940 = vadd.f32 0.0, %v6939
        %6941 = vmatprep.mubr.f32.mxu0 %v6407
        %6942 = vmatmul.mubr.f32.gmra.mrb[0].mxu0 %v6405
        %v6943 = vpop.f32.mrb[0].mxu0
        %v6944 = vadd.f32 0.0, %v6943
        %v6945 = vpop.f32.mrb[0].mxu0
        %v6946 = vadd.f32 0.0, %v6945
        %6947 = vdwg.mxu0
        %6948 = vmatprep.subr.mxu0 %v6744
        %6949 = vmatpush1.msra.mxu0 %v6743
        %6950 = vmatprep.subr.mxu0 %v6748
        %6951 = vmatpush1.msra.mxu0 %v6747
        %6952 = vmatprep.subr.mxu0 %v6752
        %6953 = vmatpush1.msra.mxu0 %v6751
        %6954 = vmatprep.subr.mxu0 %v6756
        %6955 = vmatpush1.msra.mxu0 %v6755
        %6956 = vmatprep.subr.mxu0 %v6760
        %6957 = vmatpush1.msra.mxu0 %v6759
        %6958 = vmatprep.subr.mxu0 %v6764
        %6959 = vmatpush1.msra.mxu0 %v6763
        %6960 = vmatprep.subr.mxu0 %v6768
        %6961 = vmatpush1.msra.mxu0 %v6767
        %6962 = vmatprep.subr.mxu0 %v6772
        %6963 = vmatpush1.msra.mxu0 %v6771
        %6964 = vmatprep.subr.mxu0 %v6776
        %6965 = vmatpush1.msra.mxu0 %v6775
        %6966 = vmatprep.subr.mxu0 %v6780
        %6967 = vmatpush1.msra.mxu0 %v6779
        %6968 = vmatprep.subr.mxu0 %v6784
        %6969 = vmatpush1.msra.mxu0 %v6783
        %6970 = vmatprep.subr.mxu0 %v6788
        %6971 = vmatpush1.msra.mxu0 %v6787
        %6972 = vmatprep.subr.mxu0 %v6792
        %6973 = vmatpush1.msra.mxu0 %v6791
        %6974 = vmatprep.subr.mxu0 %v6796
        %6975 = vmatpush1.msra.mxu0 %v6795
        %6976 = vmatprep.subr.mxu0 %v6800
        %6977 = vmatpush1.msra.mxu0 %v6799
        %6978 = vmatprep.subr.mxu0 %v6804
        %6979 = vmatpush1.msra.mxu0 %v6803
        %6980 = vmatprep.subr.mxu0 %v6808
        %6981 = vmatpush1.msra.mxu0 %v6807
        %6982 = vmatprep.subr.mxu0 %v6812
        %6983 = vmatpush1.msra.mxu0 %v6811
        %6984 = vmatprep.subr.mxu0 %v6816
        %6985 = vmatpush1.msra.mxu0 %v6815
        %6986 = vmatprep.subr.mxu0 %v6820
        %6987 = vmatpush1.msra.mxu0 %v6819
        %6988 = vmatprep.subr.mxu0 %v6824
        %6989 = vmatpush1.msra.mxu0 %v6823
        %6990 = vmatprep.subr.mxu0 %v6828
        %6991 = vmatpush1.msra.mxu0 %v6827
        %6992 = vmatprep.subr.mxu0 %v6832
        %6993 = vmatpush1.msra.mxu0 %v6831
        %6994 = vmatprep.subr.mxu0 %v6836
        %6995 = vmatpush1.msra.mxu0 %v6835
        %6996 = vmatprep.subr.mxu0 %v6840
        %6997 = vmatpush1.msra.mxu0 %v6839
        %6998 = vmatprep.subr.mxu0 %v6844
        %6999 = vmatpush1.msra.mxu0 %v6843
        %7000 = vmatprep.subr.mxu0 %v6848
        %7001 = vmatpush1.msra.mxu0 %v6847
        %7002 = vmatprep.subr.mxu0 %v6852
        %7003 = vmatpush1.msra.mxu0 %v6851
        %7004 = vmatprep.subr.mxu0 %v6856
        %7005 = vmatpush1.msra.mxu0 %v6855
        %7006 = vmatprep.subr.mxu0 %v6860
        %7007 = vmatpush1.msra.mxu0 %v6859
        %7008 = vmatprep.subr.mxu0 %v6864
        %7009 = vmatpush1.msra.mxu0 %v6863
        %7010 = vmatprep.subr.mxu0 %v6868
        %7011 = vmatpush1.msra.mxu0 %v6867
        %7012 = vmatprep.mubr.f32.mxu0 %v6478
        %7013 = vmatmul.mubr.f32.gmra.mrb[0].mxu0 %v6476
        %v7014 = vpop.f32.mrb[0].mxu0
        %v7015 = vadd.f32 %v6938, %v7014
        %v7016 = vpop.f32.mrb[0].mxu0
        %v7017 = vadd.f32 %v6940, %v7016
        %7018 = vmatprep.mubr.f32.mxu0 %v6484
        %7019 = vmatmul.mubr.f32.gmra.mrb[0].mxu0 %v6482
        %v7020 = vpop.f32.mrb[0].mxu0
        %v7021 = vadd.f32 %v6944, %v7020
        %v7022 = vpop.f32.mrb[0].mxu0
        %v7023 = vadd.f32 %v6946, %v7022
        %7024 = vdwg.mxu0
        %7025 = vmatprep.subr.mxu0 %v6618
        %7026 = vmatpush1.msra.mxu0 %v6617
        %7027 = vmatprep.subr.mxu0 %v6622
        %7028 = vmatpush1.msra.mxu0 %v6621
        %7029 = vmatprep.subr.mxu0 %v6626
        %7030 = vmatpush1.msra.mxu0 %v6625
        %7031 = vmatprep.subr.mxu0 %v6630
        %7032 = vmatpush1.msra.mxu0 %v6629
        %7033 = vmatprep.subr.mxu0 %v6634
        %7034 = vmatpush1.msra.mxu0 %v6633
        %7035 = vmatprep.subr.mxu0 %v6638
        %7036 = vmatpush1.msra.mxu0 %v6637
        %7037 = vmatprep.subr.mxu0 %v6642
        %7038 = vmatpush1.msra.mxu0 %v6641
        %7039 = vmatprep.subr.mxu0 %v6646
        %7040 = vmatpush1.msra.mxu0 %v6645
        %7041 = vmatprep.subr.mxu0 %v6650
        %7042 = vmatpush1.msra.mxu0 %v6649
        %7043 = vmatprep.subr.mxu0 %v6654
        %7044 = vmatpush1.msra.mxu0 %v6653
        %7045 = vmatprep.subr.mxu0 %v6658
        %7046 = vmatpush1.msra.mxu0 %v6657
        %7047 = vmatprep.subr.mxu0 %v6662
        %7048 = vmatpush1.msra.mxu0 %v6661
        %7049 = vmatprep.subr.mxu0 %v6666
        %7050 = vmatpush1.msra.mxu0 %v6665
        %7051 = vmatprep.subr.mxu0 %v6670
        %7052 = vmatpush1.msra.mxu0 %v6669
        %7053 = vmatprep.subr.mxu0 %v6674
        %7054 = vmatpush1.msra.mxu0 %v6673
        %7055 = vmatprep.subr.mxu0 %v6678
        %7056 = vmatpush1.msra.mxu0 %v6677
        %7057 = vmatprep.subr.mxu0 %v6682
        %7058 = vmatpush1.msra.mxu0 %v6681
        %7059 = vmatprep.subr.mxu0 %v6686
        %7060 = vmatpush1.msra.mxu0 %v6685
        %7061 = vmatprep.subr.mxu0 %v6690
        %7062 = vmatpush1.msra.mxu0 %v6689
        %7063 = vmatprep.subr.mxu0 %v6694
        %7064 = vmatpush1.msra.mxu0 %v6693
        %7065 = vmatprep.subr.mxu0 %v6698
        %7066 = vmatpush1.msra.mxu0 %v6697
        %7067 = vmatprep.subr.mxu0 %v6702
        %7068 = vmatpush1.msra.mxu0 %v6701
        %7069 = vmatprep.subr.mxu0 %v6706
        %7070 = vmatpush1.msra.mxu0 %v6705
        %7071 = vmatprep.subr.mxu0 %v6710
        %7072 = vmatpush1.msra.mxu0 %v6709
        %7073 = vmatprep.subr.mxu0 %v6714
        %7074 = vmatpush1.msra.mxu0 %v6713
        %7075 = vmatprep.subr.mxu0 %v6718
        %7076 = vmatpush1.msra.mxu0 %v6717
        %7077 = vmatprep.subr.mxu0 %v6722
        %7078 = vmatpush1.msra.mxu0 %v6721
        %7079 = vmatprep.subr.mxu0 %v6726
        %7080 = vmatpush1.msra.mxu0 %v6725
        %7081 = vmatprep.subr.mxu0 %v6730
        %7082 = vmatpush1.msra.mxu0 %v6729
        %7083 = vmatprep.subr.mxu0 %v6734
        %7084 = vmatpush1.msra.mxu0 %v6733
        %7085 = vmatprep.subr.mxu0 %v6738
        %7086 = vmatpush1.msra.mxu0 %v6737
        %7087 = vmatprep.subr.mxu0 %v6742
        %7088 = vmatpush1.msra.mxu0 %v6741
        %7089 = vmatprep.mubr.f32.mxu0 %v6401
        %7090 = vmatmul.mubr.f32.gmra.mrb[0].mxu0 %v6399
        %v7091 = vpop.f32.mrb[0].mxu0
        %v7092 = vadd.f32 0.0, %v7091
        %v7093 = vpop.f32.mrb[0].mxu0
        %v7094 = vadd.f32 0.0, %v7093
        %7095 = vmatprep.mubr.f32.mxu0 %v6407
        %7096 = vmatmul.mubr.f32.gmra.mrb[0].mxu0 %v6405
        %v7097 = vpop.f32.mrb[0].mxu0
        %v7098 = vadd.f32 0.0, %v7097
        %v7099 = vpop.f32.mrb[0].mxu0
        %v7100 = vadd.f32 0.0, %v7099
        %7101 = vdwg.mxu0
        %7102 = vmatprep.subr.mxu0 %v6746
        %7103 = vmatpush1.msra.mxu0 %v6745
        %7104 = vmatprep.subr.mxu0 %v6750
        %7105 = vmatpush1.msra.mxu0 %v6749
        %7106 = vmatprep.subr.mxu0 %v6754
        %7107 = vmatpush1.msra.mxu0 %v6753
        %7108 = vmatprep.subr.mxu0 %v6758
        %7109 = vmatpush1.msra.mxu0 %v6757
        %7110 = vmatprep.subr.mxu0 %v6762
        %7111 = vmatpush1.msra.mxu0 %v6761
        %7112 = vmatprep.subr.mxu0 %v6766
        %7113 = vmatpush1.msra.mxu0 %v6765
        %7114 = vmatprep.subr.mxu0 %v6770
        %7115 = vmatpush1.msra.mxu0 %v6769
        %7116 = vmatprep.subr.mxu0 %v6774
        %7117 = vmatpush1.msra.mxu0 %v6773
        %7118 = vmatprep.subr.mxu0 %v6778
        %7119 = vmatpush1.msra.mxu0 %v6777
        %7120 = vmatprep.subr.mxu0 %v6782
        %7121 = vmatpush1.msra.mxu0 %v6781
        %7122 = vmatprep.subr.mxu0 %v6786
        %7123 = vmatpush1.msra.mxu0 %v6785
        %7124 = vmatprep.subr.mxu0 %v6790
        %7125 = vmatpush1.msra.mxu0 %v6789
        %7126 = vmatprep.subr.mxu0 %v6794
        %7127 = vmatpush1.msra.mxu0 %v6793
        %7128 = vmatprep.subr.mxu0 %v6798
        %7129 = vmatpush1.msra.mxu0 %v6797
        %7130 = vmatprep.subr.mxu0 %v6802
        %7131 = vmatpush1.msra.mxu0 %v6801
        %7132 = vmatprep.subr.mxu0 %v6806
        %7133 = vmatpush1.msra.mxu0 %v6805
        %7134 = vmatprep.subr.mxu0 %v6810
        %7135 = vmatpush1.msra.mxu0 %v6809
        %7136 = vmatprep.subr.mxu0 %v6814
        %7137 = vmatpush1.msra.mxu0 %v6813
        %7138 = vmatprep.subr.mxu0 %v6818
        %7139 = vmatpush1.msra.mxu0 %v6817
        %7140 = vmatprep.subr.mxu0 %v6822
        %7141 = vmatpush1.msra.mxu0 %v6821
        %7142 = vmatprep.subr.mxu0 %v6826
        %7143 = vmatpush1.msra.mxu0 %v6825
        %7144 = vmatprep.subr.mxu0 %v6830
        %7145 = vmatpush1.msra.mxu0 %v6829
        %7146 = vmatprep.subr.mxu0 %v6834
        %7147 = vmatpush1.msra.mxu0 %v6833
        %7148 = vmatprep.subr.mxu0 %v6838
        %7149 = vmatpush1.msra.mxu0 %v6837
        %7150 = vmatprep.subr.mxu0 %v6842
        %7151 = vmatpush1.msra.mxu0 %v6841
        %7152 = vmatprep.subr.mxu0 %v6846
        %7153 = vmatpush1.msra.mxu0 %v6845
        %7154 = vmatprep.subr.mxu0 %v6850
        %7155 = vmatpush1.msra.mxu0 %v6849
        %7156 = vmatprep.subr.mxu0 %v6854
        %7157 = vmatpush1.msra.mxu0 %v6853
        %7158 = vmatprep.subr.mxu0 %v6858
        %7159 = vmatpush1.msra.mxu0 %v6857
        %7160 = vmatprep.subr.mxu0 %v6862
        %7161 = vmatpush1.msra.mxu0 %v6861
        %7162 = vmatprep.subr.mxu0 %v6866
        %7163 = vmatpush1.msra.mxu0 %v6865
        %7164 = vmatprep.subr.mxu0 %v6870
        %7165 = vmatpush1.msra.mxu0 %v6869
        %7166 = vmatprep.mubr.f32.mxu0 %v6478
        %7167 = vmatmul.mubr.f32.gmra.mrb[0].mxu0 %v6476
        %v7168 = vpop.f32.mrb[0].mxu0
        %v7169 = vadd.f32 %v7092, %v7168
        %v7170 = vpop.f32.mrb[0].mxu0
        %v7171 = vadd.f32 %v7094, %v7170
        %7172 = vmatprep.mubr.f32.mxu0 %v6484
        %7173 = vmatmul.mubr.f32.gmra.mrb[0].mxu0 %v6482
        %v7174 = vpop.f32.mrb[0].mxu0
        %v7175 = vadd.f32 %v7098, %v7174
        %v7176 = vpop.f32.mrb[0].mxu0
        %v7177 = vadd.f32 %v7100, %v7176
        %7178 = vdwg.mxu0
        %v7179 = vadd.f32 %v6159, %v7015
        %v7180 = vadd.f32 %v6161, %v7017
        %v7181 = vadd.f32 %v6313, %v7169
        %v7182 = vadd.f32 %v6315, %v7171
        %v7183 = vadd.f32 %v6165, %v7021
        %v7184 = vadd.f32 %v6167, %v7023
        %v7185 = vadd.f32 %v6319, %v7175
        %v7186 = vadd.f32 %v6321, %v7177
        %v7187 = vld [vmem:[%s9] sm:$0xf]
        %v7189 = vlaneseq
        %v7190 = vshrl.u32 %v7189, 7
        %v7191 = vsub.s32 0, %v7190
        %v7192 = vrot.slane %v7187, %v7191
        %v7193 = vlaneseq
        %v7194 = vshrl.u32 %v7193, 7
        %v7195 = vsub.s32 1, %v7194
        %v7196 = vrot.slane %v7187, %v7195
        %v7197 = vlaneseq
        %v7198 = vshrl.u32 %v7197, 7
        %v7199 = vsub.s32 2, %v7198
        %v7200 = vrot.slane %v7187, %v7199
        %v7201 = vlaneseq
        %v7202 = vshrl.u32 %v7201, 7
        %v7203 = vsub.s32 3, %v7202
        %v7204 = vrot.slane %v7187, %v7203
        %v7209 = vadd.f32 %v7179, %v7192
        %v7210 = vadd.f32 %v7180, %v7196
        %v7211 = vadd.f32 %v7181, %v7200
        %v7212 = vadd.f32 %v7182, %v7204
        %v7213 = vadd.f32 %v7183, %v7192
        %v7214 = vadd.f32 %v7184, %v7196
        %v7215 = vadd.f32 %v7185, %v7200
        %v7216 = vadd.f32 %v7186, %v7204
        %v7217 = vmax.f32 %v7209, 0.0
        %v7218 = vmax.f32 %v7210, 0.0
        %v7219 = vmax.f32 %v7211, 0.0
        %v7220 = vmax.f32 %v7212, 0.0
        %v7221 = vmax.f32 %v7213, 0.0
        %v7222 = vmax.f32 %v7214, 0.0
        %v7223 = vmax.f32 %v7215, 0.0
        %v7224 = vmax.f32 %v7216, 0.0
        %v7225 = vld [vmem:[%s11] sm:$0x1]
        %v7226 = vld [vmem:[%s10] sm:$0xf]
        %v7227 = vld [vmem:[%s10 + $0x4] sm:$0xf]
        %v7228 = vld [vmem:[%s10 + $0x8] sm:$0xf]
        %v7229 = vld [vmem:[%s10 + $0xc] sm:$0xf]
        %v7230 = vld [vmem:[%s10 + $0x10] sm:$0xf]
        %v7231 = vld [vmem:[%s10 + $0x14] sm:$0xf]
        %v7232 = vld [vmem:[%s10 + $0x18] sm:$0xf]
        %v7233 = vld [vmem:[%s10 + $0x1c] sm:$0xf]
        %v7234 = vld [vmem:[%s10 + $0x20] sm:$0xf]
        %v7235 = vld [vmem:[%s10 + $0x24] sm:$0xf]
        %v7236 = vld [vmem:[%s10 + $0x28] sm:$0xf]
        %v7237 = vld [vmem:[%s10 + $0x2c] sm:$0xf]
        %v7238 = vld [vmem:[%s10 + $0x30] sm:$0xf]
        %v7239 = vld [vmem:[%s10 + $0x34] sm:$0xf]
        %v7240 = vld [vmem:[%s10 + $0x38] sm:$0xf]
        %v7241 = vld [vmem:[%s10 + $0x3c] sm:$0xf]
        %v7242 = vld [vmem:[%s10 + $0x40] sm:$0xf]
        %v7243 = vld [vmem:[%s10 + $0x44] sm:$0xf]
        %v7244 = vld [vmem:[%s10 + $0x48] sm:$0xf]
        %v7245 = vld [vmem:[%s10 + $0x4c] sm:$0xf]
        %v7246 = vld [vmem:[%s10 + $0x50] sm:$0xf]
        %v7247 = vld [vmem:[%s10 + $0x54] sm:$0xf]
        %v7248 = vld [vmem:[%s10 + $0x58] sm:$0xf]
        %v7249 = vld [vmem:[%s10 + $0x5c] sm:$0xf]
        %v7250 = vld [vmem:[%s10 + $0x60] sm:$0xf]
        %v7251 = vld [vmem:[%s10 + $0x64] sm:$0xf]
        %v7252 = vld [vmem:[%s10 + $0x68] sm:$0xf]
        %v7253 = vld [vmem:[%s10 + $0x6c] sm:$0xf]
        %v7254 = vld [vmem:[%s10 + $0x70] sm:$0xf]
        %v7255 = vld [vmem:[%s10 + $0x74] sm:$0xf]
        %v7256 = vld [vmem:[%s10 + $0x78] sm:$0xf]
        %v7257 = vld [vmem:[%s10 + $0x7c] sm:$0xf]
        %v7258 = vld [vmem:[%s10 + $0x80] sm:$0xf]
        %v7259 = vld [vmem:[%s10 + $0x84] sm:$0xf]
        %v7260 = vld [vmem:[%s10 + $0x88] sm:$0xf]
        %v7261 = vld [vmem:[%s10 + $0x8c] sm:$0xf]
        %v7262 = vld [vmem:[%s10 + $0x90] sm:$0xf]
        %v7263 = vld [vmem:[%s10 + $0x94] sm:$0xf]
        %v7264 = vld [vmem:[%s10 + $0x98] sm:$0xf]
        %v7265 = vld [vmem:[%s10 + $0x9c] sm:$0xf]
        %v7266 = vld [vmem:[%s10 + $0xa0] sm:$0xf]
        %v7267 = vld [vmem:[%s10 + $0xa4] sm:$0xf]
        %v7268 = vld [vmem:[%s10 + $0xa8] sm:$0xf]
        %v7269 = vld [vmem:[%s10 + $0xac] sm:$0xf]
        %v7270 = vld [vmem:[%s10 + $0xb0] sm:$0xf]
        %v7271 = vld [vmem:[%s10 + $0xb4] sm:$0xf]
        %v7272 = vld [vmem:[%s10 + $0xb8] sm:$0xf]
        %v7273 = vld [vmem:[%s10 + $0xbc] sm:$0xf]
        %v7274 = vld [vmem:[%s10 + $0xc0] sm:$0xf]
        %v7275 = vld [vmem:[%s10 + $0xc4] sm:$0xf]
        %v7276 = vld [vmem:[%s10 + $0xc8] sm:$0xf]
        %v7277 = vld [vmem:[%s10 + $0xcc] sm:$0xf]
        %v7278 = vld [vmem:[%s10 + $0xd0] sm:$0xf]
        %v7279 = vld [vmem:[%s10 + $0xd4] sm:$0xf]
        %v7280 = vld [vmem:[%s10 + $0xd8] sm:$0xf]
        %v7281 = vld [vmem:[%s10 + $0xdc] sm:$0xf]
        %v7282 = vld [vmem:[%s10 + $0xe0] sm:$0xf]
        %v7283 = vld [vmem:[%s10 + $0xe4] sm:$0xf]
        %v7284 = vld [vmem:[%s10 + $0xe8] sm:$0xf]
        %v7285 = vld [vmem:[%s10 + $0xec] sm:$0xf]
        %v7286 = vunpack.c.l.bf16 %v7226
        %v7287 = vunpack.c.l.bf16 %v7227
        %v7288 = vunpack.c.l.bf16 %v7228
        %v7289 = vunpack.c.l.bf16 %v7229
        %v7290 = vunpack.c.l.bf16 %v7230
        %v7291 = vunpack.c.l.bf16 %v7231
        %v7292 = vunpack.c.l.bf16 %v7232
        %v7293 = vunpack.c.l.bf16 %v7233
        %v7294 = vunpack.c.l.bf16 %v7234
        %v7295 = vunpack.c.l.bf16 %v7235
        %v7296 = vunpack.c.l.bf16 %v7236
        %v7297 = vunpack.c.l.bf16 %v7237
        %v7298 = vunpack.c.l.bf16 %v7238
        %v7299 = vunpack.c.l.bf16 %v7239
        %v7300 = vunpack.c.l.bf16 %v7240
        %v7301 = vunpack.c.l.bf16 %v7241
        %v7302 = vunpack.c.l.bf16 %v7242
        %v7303 = vunpack.c.l.bf16 %v7243
        %v7304 = vunpack.c.l.bf16 %v7244
        %v7305 = vunpack.c.l.bf16 %v7245
        %v7306 = vunpack.c.l.bf16 %v7246
        %v7307 = vunpack.c.l.bf16 %v7247
        %v7308 = vunpack.c.l.bf16 %v7248
        %v7309 = vunpack.c.l.bf16 %v7249
        %v7310 = vunpack.c.l.bf16 %v7250
        %v7311 = vunpack.c.l.bf16 %v7251
        %v7312 = vunpack.c.l.bf16 %v7252
        %v7313 = vunpack.c.l.bf16 %v7253
        %v7314 = vunpack.c.l.bf16 %v7254
        %v7315 = vunpack.c.l.bf16 %v7255
        %v7316 = vunpack.c.l.bf16 %v7256
        %v7317 = vunpack.c.l.bf16 %v7257
        %v7318 = vunpack.c.l.bf16 %v7258
        %v7319 = vunpack.c.l.bf16 %v7259
        %v7320 = vunpack.c.l.bf16 %v7260
        %v7321 = vunpack.c.l.bf16 %v7261
        %v7322 = vunpack.c.l.bf16 %v7262
        %v7323 = vunpack.c.l.bf16 %v7263
        %v7324 = vunpack.c.l.bf16 %v7264
        %v7325 = vunpack.c.l.bf16 %v7265
        %v7326 = vunpack.c.l.bf16 %v7266
        %v7327 = vunpack.c.l.bf16 %v7267
        %v7328 = vunpack.c.l.bf16 %v7268
        %v7329 = vunpack.c.l.bf16 %v7269
        %v7330 = vunpack.c.l.bf16 %v7270
        %v7331 = vunpack.c.l.bf16 %v7271
        %v7332 = vunpack.c.l.bf16 %v7272
        %v7333 = vunpack.c.l.bf16 %v7273
        %v7334 = vunpack.c.l.bf16 %v7274
        %v7335 = vunpack.c.l.bf16 %v7275
        %v7336 = vunpack.c.l.bf16 %v7276
        %v7337 = vunpack.c.l.bf16 %v7277
        %v7338 = vunpack.c.l.bf16 %v7278
        %v7339 = vunpack.c.l.bf16 %v7279
        %v7340 = vunpack.c.l.bf16 %v7280
        %v7341 = vunpack.c.l.bf16 %v7281
        %v7342 = vunpack.c.l.bf16 %v7282
        %v7343 = vunpack.c.l.bf16 %v7283
        %v7344 = vunpack.c.l.bf16 %v7284
        %v7345 = vunpack.c.l.bf16 %v7285
        %vm7346 = vcmask 785408
        %v7348 = vsel %vm7346, %v7220, 0
        %7350 = vmatprep.subr.mxu0 0.0
        %7351 = vmatpush1.msra.mxu0 %v7286
        %7352 = vmatprep.subr.mxu0 0.0
        %7353 = vmatpush1.msra.mxu0 %v7287
        %7354 = vmatprep.subr.mxu0 0.0
        %7355 = vmatpush1.msra.mxu0 %v7288
        %7356 = vmatprep.subr.mxu0 0.0
        %7357 = vmatpush1.msra.mxu0 %v7289
        %7358 = vmatprep.subr.mxu0 0.0
        %7359 = vmatpush1.msra.mxu0 %v7290
        %7360 = vmatprep.subr.mxu0 0.0
        %7361 = vmatpush1.msra.mxu0 %v7291
        %7362 = vmatprep.subr.mxu0 0.0
        %7363 = vmatpush1.msra.mxu0 %v7292
        %7364 = vmatprep.subr.mxu0 0.0
        %7365 = vmatpush1.msra.mxu0 %v7293
        %7366 = vmatprep.subr.mxu0 0.0
        %7367 = vmatpush1.msra.mxu0 %v7294
        %7368 = vmatprep.subr.mxu0 0.0
        %7369 = vmatpush1.msra.mxu0 %v7295
        %7370 = vmatprep.subr.mxu0 0.0
        %7371 = vmatpush1.msra.mxu0 %v7296
        %7372 = vmatprep.subr.mxu0 0.0
        %7373 = vmatpush1.msra.mxu0 %v7297
        %7374 = vmatprep.subr.mxu0 0.0
        %7375 = vmatpush1.msra.mxu0 %v7298
        %7376 = vmatprep.subr.mxu0 0.0
        %7377 = vmatpush1.msra.mxu0 %v7299
        %7378 = vmatprep.subr.mxu0 0.0
        %7379 = vmatpush1.msra.mxu0 %v7300
        %7380 = vmatprep.subr.mxu0 0.0
        %7381 = vmatpush1.msra.mxu0 %v7301
        %7382 = vmatprep.subr.mxu0 0.0
        %7383 = vmatpush1.msra.mxu0 %v7302
        %7384 = vmatprep.subr.mxu0 0.0
        %7385 = vmatpush1.msra.mxu0 %v7303
        %7386 = vmatprep.subr.mxu0 0.0
        %7387 = vmatpush1.msra.mxu0 %v7304
        %7388 = vmatprep.subr.mxu0 0.0
        %7389 = vmatpush1.msra.mxu0 %v7305
        %7390 = vmatprep.subr.mxu0 0.0
        %7391 = vmatpush1.msra.mxu0 %v7306
        %7392 = vmatprep.subr.mxu0 0.0
        %7393 = vmatpush1.msra.mxu0 %v7307
        %7394 = vmatprep.subr.mxu0 0.0
        %7395 = vmatpush1.msra.mxu0 %v7308
        %7396 = vmatprep.subr.mxu0 0.0
        %7397 = vmatpush1.msra.mxu0 %v7309
        %7398 = vmatprep.subr.mxu0 0.0
        %7399 = vmatpush1.msra.mxu0 %v7310
        %7400 = vmatprep.subr.mxu0 0.0
        %7401 = vmatpush1.msra.mxu0 %v7311
        %7402 = vmatprep.subr.mxu0 0.0
        %7403 = vmatpush1.msra.mxu0 %v7312
        %7404 = vmatprep.subr.mxu0 0.0
        %7405 = vmatpush1.msra.mxu0 %v7313
        %7406 = vmatprep.subr.mxu0 0.0
        %7407 = vmatpush1.msra.mxu0 %v7314
        %7408 = vmatprep.subr.mxu0 0.0
        %7409 = vmatpush1.msra.mxu0 %v7315
        %7410 = vmatprep.subr.mxu0 0.0
        %7411 = vmatpush1.msra.mxu0 %v7316
        %7412 = vmatprep.subr.mxu0 0.0
        %7413 = vmatpush1.msra.mxu0 %v7317
        %7414 = vmatprep.mubr.f32.mxu0 %v7218
        %7415 = vmatmul.mubr.f32.gmra.mrb[0].mxu0 %v7217
        %v7416 = vpop.f32.mrb[0].mxu0
        %v7417 = vadd.f32 0.0, %v7416
        %v7418 = vpop.f32.mrb[0].mxu0
        %7419 = vdwg.mxu0
        %7420 = vmatprep.subr.mxu0 0.0
        %7421 = vmatpush1.msra.mxu0 %v7318
        %7422 = vmatprep.subr.mxu0 0.0
        %7423 = vmatpush1.msra.mxu0 %v7319
        %7424 = vmatprep.subr.mxu0 0.0
        %7425 = vmatpush1.msra.mxu0 %v7320
        %7426 = vmatprep.subr.mxu0 0.0
        %7427 = vmatpush1.msra.mxu0 %v7321
        %7428 = vmatprep.subr.mxu0 0.0
        %7429 = vmatpush1.msra.mxu0 %v7322
        %7430 = vmatprep.subr.mxu0 0.0
        %7431 = vmatpush1.msra.mxu0 %v7323
        %7432 = vmatprep.subr.mxu0 0.0
        %7433 = vmatpush1.msra.mxu0 %v7324
        %7434 = vmatprep.subr.mxu0 0.0
        %7435 = vmatpush1.msra.mxu0 %v7325
        %7436 = vmatprep.subr.mxu0 0.0
        %7437 = vmatpush1.msra.mxu0 %v7326
        %7438 = vmatprep.subr.mxu0 0.0
        %7439 = vmatpush1.msra.mxu0 %v7327
        %7440 = vmatprep.subr.mxu0 0.0
        %7441 = vmatpush1.msra.mxu0 %v7328
        %7442 = vmatprep.subr.mxu0 0.0
        %7443 = vmatpush1.msra.mxu0 %v7329
        %7444 = vmatprep.subr.mxu0 0.0
        %7445 = vmatpush1.msra.mxu0 %v7330
        %7446 = vmatprep.subr.mxu0 0.0
        %7447 = vmatpush1.msra.mxu0 %v7331
        %7448 = vmatprep.subr.mxu0 0.0
        %7449 = vmatpush1.msra.mxu0 %v7332
        %7450 = vmatprep.subr.mxu0 0.0
        %7451 = vmatpush1.msra.mxu0 %v7333
        %7452 = vmatprep.subr.mxu0 0.0
        %7453 = vmatpush1.msra.mxu0 %v7334
        %7454 = vmatprep.subr.mxu0 0.0
        %7455 = vmatpush1.msra.mxu0 %v7335
        %7456 = vmatprep.subr.mxu0 0.0
        %7457 = vmatpush1.msra.mxu0 %v7336
        %7458 = vmatprep.subr.mxu0 0.0
        %7459 = vmatpush1.msra.mxu0 %v7337
        %7460 = vmatprep.subr.mxu0 0.0
        %7461 = vmatpush1.msra.mxu0 %v7338
        %7462 = vmatprep.subr.mxu0 0.0
        %7463 = vmatpush1.msra.mxu0 %v7339
        %7464 = vmatprep.subr.mxu0 0.0
        %7465 = vmatpush1.msra.mxu0 %v7340
        %7466 = vmatprep.subr.mxu0 0.0
        %7467 = vmatpush1.msra.mxu0 %v7341
        %7468 = vmatprep.subr.mxu0 0.0
        %7469 = vmatpush1.msra.mxu0 %v7342
        %7470 = vmatprep.subr.mxu0 0.0
        %7471 = vmatpush1.msra.mxu0 %v7343
        %7472 = vmatprep.subr.mxu0 0.0
        %7473 = vmatpush1.msra.mxu0 %v7344
        %7474 = vmatprep.subr.mxu0 0.0
        %7475 = vmatpush1.msra.mxu0 %v7345
        %7476 = vmatprep.subr.mxu0 0.0
        %7477 = vmatpush1.msra.mxu0 0.0
        %7478 = vmatprep.subr.mxu0 0.0
        %7479 = vmatpush1.msra.mxu0 0.0
        %7480 = vmatprep.subr.mxu0 0.0
        %7481 = vmatpush1.msra.mxu0 0.0
        %7482 = vmatprep.subr.mxu0 0.0
        %7483 = vmatpush1.msra.mxu0 0.0
        %7484 = vmatprep.mubr.f32.mxu0 %v7348
        %7485 = vmatmul.mubr.f32.gmra.mrb[0].mxu0 %v7219
        %v7486 = vpop.f32.mrb[0].mxu0
        %v7487 = vadd.f32 %v7417, %v7486
        %v7488 = vpop.f32.mrb[0].mxu0
        %7489 = vdwg.mxu0
        %v7490 = vadd.f32 %v7225, %v7487
        %s7491 = scalar_lea.vmem %s10, 240
        %v7492 = vld [vmem:[%s7491] sm:$0xf]
        %v7493 = vld [vmem:[%s7491 + $0x4] sm:$0xf]
        %v7494 = vld [vmem:[%s7491 + $0x8] sm:$0xf]
        %v7495 = vld [vmem:[%s7491 + $0xc] sm:$0xf]
        %v7496 = vld [vmem:[%s7491 + $0x10] sm:$0xf]
        %v7497 = vld [vmem:[%s7491 + $0x14] sm:$0xf]
        %v7498 = vld [vmem:[%s7491 + $0x18] sm:$0xf]
        %v7499 = vld [vmem:[%s7491 + $0x1c] sm:$0xf]
        %v7500 = vld [vmem:[%s7491 + $0x20] sm:$0xf]
        %v7501 = vld [vmem:[%s7491 + $0x24] sm:$0xf]
        %v7502 = vld [vmem:[%s7491 + $0x28] sm:$0xf]
        %v7503 = vld [vmem:[%s7491 + $0x2c] sm:$0xf]
        %v7504 = vld [vmem:[%s7491 + $0x30] sm:$0xf]
        %v7505 = vld [vmem:[%s7491 + $0x34] sm:$0xf]
        %v7506 = vld [vmem:[%s7491 + $0x38] sm:$0xf]
        %v7507 = vld [vmem:[%s7491 + $0x3c] sm:$0xf]
        %v7508 = vld [vmem:[%s7491 + $0x40] sm:$0xf]
        %v7509 = vld [vmem:[%s7491 + $0x44] sm:$0xf]
        %v7510 = vld [vmem:[%s7491 + $0x48] sm:$0xf]
        %v7511 = vld [vmem:[%s7491 + $0x4c] sm:$0xf]
        %v7512 = vld [vmem:[%s7491 + $0x50] sm:$0xf]
        %v7513 = vld [vmem:[%s7491 + $0x54] sm:$0xf]
        %v7514 = vld [vmem:[%s7491 + $0x58] sm:$0xf]
        %v7515 = vld [vmem:[%s7491 + $0x5c] sm:$0xf]
        %v7516 = vld [vmem:[%s7491 + $0x60] sm:$0xf]
        %v7517 = vld [vmem:[%s7491 + $0x64] sm:$0xf]
        %v7518 = vld [vmem:[%s7491 + $0x68] sm:$0xf]
        %v7519 = vld [vmem:[%s7491 + $0x6c] sm:$0xf]
        %v7520 = vld [vmem:[%s7491 + $0x70] sm:$0xf]
        %v7521 = vld [vmem:[%s7491 + $0x74] sm:$0xf]
        %v7522 = vld [vmem:[%s7491 + $0x78] sm:$0xf]
        %v7523 = vld [vmem:[%s7491 + $0x7c] sm:$0xf]
        %v7524 = vld [vmem:[%s7491 + $0x80] sm:$0xf]
        %v7525 = vld [vmem:[%s7491 + $0x84] sm:$0xf]
        %v7526 = vld [vmem:[%s7491 + $0x88] sm:$0xf]
        %v7527 = vld [vmem:[%s7491 + $0x8c] sm:$0xf]
        %v7528 = vld [vmem:[%s7491 + $0x90] sm:$0xf]
        %v7529 = vld [vmem:[%s7491 + $0x94] sm:$0xf]
        %v7530 = vld [vmem:[%s7491 + $0x98] sm:$0xf]
        %v7531 = vld [vmem:[%s7491 + $0x9c] sm:$0xf]
        %v7532 = vld [vmem:[%s7491 + $0xa0] sm:$0xf]
        %v7533 = vld [vmem:[%s7491 + $0xa4] sm:$0xf]
        %v7534 = vld [vmem:[%s7491 + $0xa8] sm:$0xf]
        %v7535 = vld [vmem:[%s7491 + $0xac] sm:$0xf]
        %v7536 = vld [vmem:[%s7491 + $0xb0] sm:$0xf]
        %v7537 = vld [vmem:[%s7491 + $0xb4] sm:$0xf]
        %v7538 = vld [vmem:[%s7491 + $0xb8] sm:$0xf]
        %v7539 = vld [vmem:[%s7491 + $0xbc] sm:$0xf]
        %v7540 = vld [vmem:[%s7491 + $0xc0] sm:$0xf]
        %v7541 = vld [vmem:[%s7491 + $0xc4] sm:$0xf]
        %v7542 = vld [vmem:[%s7491 + $0xc8] sm:$0xf]
        %v7543 = vld [vmem:[%s7491 + $0xcc] sm:$0xf]
        %v7544 = vld [vmem:[%s7491 + $0xd0] sm:$0xf]
        %v7545 = vld [vmem:[%s7491 + $0xd4] sm:$0xf]
        %v7546 = vld [vmem:[%s7491 + $0xd8] sm:$0xf]
        %v7547 = vld [vmem:[%s7491 + $0xdc] sm:$0xf]
        %v7548 = vld [vmem:[%s7491 + $0xe0] sm:$0xf]
        %v7549 = vld [vmem:[%s7491 + $0xe4] sm:$0xf]
        %v7550 = vld [vmem:[%s7491 + $0xe8] sm:$0xf]
        %v7551 = vld [vmem:[%s7491 + $0xec] sm:$0xf]
        %v7552 = vunpack.c.l.bf16 %v7492
        %v7553 = vunpack.c.l.bf16 %v7493
        %v7554 = vunpack.c.l.bf16 %v7494
        %v7555 = vunpack.c.l.bf16 %v7495
        %v7556 = vunpack.c.l.bf16 %v7496
        %v7557 = vunpack.c.l.bf16 %v7497
        %v7558 = vunpack.c.l.bf16 %v7498
        %v7559 = vunpack.c.l.bf16 %v7499
        %v7560 = vunpack.c.l.bf16 %v7500
        %v7561 = vunpack.c.l.bf16 %v7501
        %v7562 = vunpack.c.l.bf16 %v7502
        %v7563 = vunpack.c.l.bf16 %v7503
        %v7564 = vunpack.c.l.bf16 %v7504
        %v7565 = vunpack.c.l.bf16 %v7505
        %v7566 = vunpack.c.l.bf16 %v7506
        %v7567 = vunpack.c.l.bf16 %v7507
        %v7568 = vunpack.c.l.bf16 %v7508
        %v7569 = vunpack.c.l.bf16 %v7509
        %v7570 = vunpack.c.l.bf16 %v7510
        %v7571 = vunpack.c.l.bf16 %v7511
        %v7572 = vunpack.c.l.bf16 %v7512
        %v7573 = vunpack.c.l.bf16 %v7513
        %v7574 = vunpack.c.l.bf16 %v7514
        %v7575 = vunpack.c.l.bf16 %v7515
        %v7576 = vunpack.c.l.bf16 %v7516
        %v7577 = vunpack.c.l.bf16 %v7517
        %v7578 = vunpack.c.l.bf16 %v7518
        %v7579 = vunpack.c.l.bf16 %v7519
        %v7580 = vunpack.c.l.bf16 %v7520
        %v7581 = vunpack.c.l.bf16 %v7521
        %v7582 = vunpack.c.l.bf16 %v7522
        %v7583 = vunpack.c.l.bf16 %v7523
        %v7584 = vunpack.c.l.bf16 %v7524
        %v7585 = vunpack.c.l.bf16 %v7525
        %v7586 = vunpack.c.l.bf16 %v7526
        %v7587 = vunpack.c.l.bf16 %v7527
        %v7588 = vunpack.c.l.bf16 %v7528
        %v7589 = vunpack.c.l.bf16 %v7529
        %v7590 = vunpack.c.l.bf16 %v7530
        %v7591 = vunpack.c.l.bf16 %v7531
        %v7592 = vunpack.c.l.bf16 %v7532
        %v7593 = vunpack.c.l.bf16 %v7533
        %v7594 = vunpack.c.l.bf16 %v7534
        %v7595 = vunpack.c.l.bf16 %v7535
        %v7596 = vunpack.c.l.bf16 %v7536
        %v7597 = vunpack.c.l.bf16 %v7537
        %v7598 = vunpack.c.l.bf16 %v7538
        %v7599 = vunpack.c.l.bf16 %v7539
        %v7600 = vunpack.c.l.bf16 %v7540
        %v7601 = vunpack.c.l.bf16 %v7541
        %v7602 = vunpack.c.l.bf16 %v7542
        %v7603 = vunpack.c.l.bf16 %v7543
        %v7604 = vunpack.c.l.bf16 %v7544
        %v7605 = vunpack.c.l.bf16 %v7545
        %v7606 = vunpack.c.l.bf16 %v7546
        %v7607 = vunpack.c.l.bf16 %v7547
        %v7608 = vunpack.c.l.bf16 %v7548
        %v7609 = vunpack.c.l.bf16 %v7549
        %v7610 = vunpack.c.l.bf16 %v7550
        %v7611 = vunpack.c.l.bf16 %v7551
        %v7615 = vrot.slane %v7217, 1
        %v7616 = vrot.slane %v7218, 1
        %v7617 = vrot.slane %v7219, 1
        %v7618 = vrot.slane %v7220, 1
        %v7622 = vsel %vm7346, %v7618, 0
        %7624 = vmatprep.subr.mxu0 0.0
        %7625 = vmatpush1.msra.mxu0 %v7552
        %7626 = vmatprep.subr.mxu0 0.0
        %7627 = vmatpush1.msra.mxu0 %v7553
        %7628 = vmatprep.subr.mxu0 0.0
        %7629 = vmatpush1.msra.mxu0 %v7554
        %7630 = vmatprep.subr.mxu0 0.0
        %7631 = vmatpush1.msra.mxu0 %v7555
        %7632 = vmatprep.subr.mxu0 0.0
        %7633 = vmatpush1.msra.mxu0 %v7556
        %7634 = vmatprep.subr.mxu0 0.0
        %7635 = vmatpush1.msra.mxu0 %v7557
        %7636 = vmatprep.subr.mxu0 0.0
        %7637 = vmatpush1.msra.mxu0 %v7558
        %7638 = vmatprep.subr.mxu0 0.0
        %7639 = vmatpush1.msra.mxu0 %v7559
        %7640 = vmatprep.subr.mxu0 0.0
        %7641 = vmatpush1.msra.mxu0 %v7560
        %7642 = vmatprep.subr.mxu0 0.0
        %7643 = vmatpush1.msra.mxu0 %v7561
        %7644 = vmatprep.subr.mxu0 0.0
        %7645 = vmatpush1.msra.mxu0 %v7562
        %7646 = vmatprep.subr.mxu0 0.0
        %7647 = vmatpush1.msra.mxu0 %v7563
        %7648 = vmatprep.subr.mxu0 0.0
        %7649 = vmatpush1.msra.mxu0 %v7564
        %7650 = vmatprep.subr.mxu0 0.0
        %7651 = vmatpush1.msra.mxu0 %v7565
        %7652 = vmatprep.subr.mxu0 0.0
        %7653 = vmatpush1.msra.mxu0 %v7566
        %7654 = vmatprep.subr.mxu0 0.0
        %7655 = vmatpush1.msra.mxu0 %v7567
        %7656 = vmatprep.subr.mxu0 0.0
        %7657 = vmatpush1.msra.mxu0 %v7568
        %7658 = vmatprep.subr.mxu0 0.0
        %7659 = vmatpush1.msra.mxu0 %v7569
        %7660 = vmatprep.subr.mxu0 0.0
        %7661 = vmatpush1.msra.mxu0 %v7570
        %7662 = vmatprep.subr.mxu0 0.0
        %7663 = vmatpush1.msra.mxu0 %v7571
        %7664 = vmatprep.subr.mxu0 0.0
        %7665 = vmatpush1.msra.mxu0 %v7572
        %7666 = vmatprep.subr.mxu0 0.0
        %7667 = vmatpush1.msra.mxu0 %v7573
        %7668 = vmatprep.subr.mxu0 0.0
        %7669 = vmatpush1.msra.mxu0 %v7574
        %7670 = vmatprep.subr.mxu0 0.0
        %7671 = vmatpush1.msra.mxu0 %v7575
        %7672 = vmatprep.subr.mxu0 0.0
        %7673 = vmatpush1.msra.mxu0 %v7576
        %7674 = vmatprep.subr.mxu0 0.0
        %7675 = vmatpush1.msra.mxu0 %v7577
        %7676 = vmatprep.subr.mxu0 0.0
        %7677 = vmatpush1.msra.mxu0 %v7578
        %7678 = vmatprep.subr.mxu0 0.0
        %7679 = vmatpush1.msra.mxu0 %v7579
        %7680 = vmatprep.subr.mxu0 0.0
        %7681 = vmatpush1.msra.mxu0 %v7580
        %7682 = vmatprep.subr.mxu0 0.0
        %7683 = vmatpush1.msra.mxu0 %v7581
        %7684 = vmatprep.subr.mxu0 0.0
        %7685 = vmatpush1.msra.mxu0 %v7582
        %7686 = vmatprep.subr.mxu0 0.0
        %7687 = vmatpush1.msra.mxu0 %v7583
        %7688 = vmatprep.mubr.f32.mxu0 %v7616
        %7689 = vmatmul.mubr.f32.gmra.mrb[0].mxu0 %v7615
        %v7690 = vpop.f32.mrb[0].mxu0
        %v7691 = vadd.f32 0.0, %v7690
        %v7692 = vpop.f32.mrb[0].mxu0
        %7693 = vdwg.mxu0
        %7694 = vmatprep.subr.mxu0 0.0
        %7695 = vmatpush1.msra.mxu0 %v7584
        %7696 = vmatprep.subr.mxu0 0.0
        %7697 = vmatpush1.msra.mxu0 %v7585
        %7698 = vmatprep.subr.mxu0 0.0
        %7699 = vmatpush1.msra.mxu0 %v7586
        %7700 = vmatprep.subr.mxu0 0.0
        %7701 = vmatpush1.msra.mxu0 %v7587
        %7702 = vmatprep.subr.mxu0 0.0
        %7703 = vmatpush1.msra.mxu0 %v7588
        %7704 = vmatprep.subr.mxu0 0.0
        %7705 = vmatpush1.msra.mxu0 %v7589
        %7706 = vmatprep.subr.mxu0 0.0
        %7707 = vmatpush1.msra.mxu0 %v7590
        %7708 = vmatprep.subr.mxu0 0.0
        %7709 = vmatpush1.msra.mxu0 %v7591
        %7710 = vmatprep.subr.mxu0 0.0
        %7711 = vmatpush1.msra.mxu0 %v7592
        %7712 = vmatprep.subr.mxu0 0.0
        %7713 = vmatpush1.msra.mxu0 %v7593
        %7714 = vmatprep.subr.mxu0 0.0
        %7715 = vmatpush1.msra.mxu0 %v7594
        %7716 = vmatprep.subr.mxu0 0.0
        %7717 = vmatpush1.msra.mxu0 %v7595
        %7718 = vmatprep.subr.mxu0 0.0
        %7719 = vmatpush1.msra.mxu0 %v7596
        %7720 = vmatprep.subr.mxu0 0.0
        %7721 = vmatpush1.msra.mxu0 %v7597
        %7722 = vmatprep.subr.mxu0 0.0
        %7723 = vmatpush1.msra.mxu0 %v7598
        %7724 = vmatprep.subr.mxu0 0.0
        %7725 = vmatpush1.msra.mxu0 %v7599
        %7726 = vmatprep.subr.mxu0 0.0
        %7727 = vmatpush1.msra.mxu0 %v7600
        %7728 = vmatprep.subr.mxu0 0.0
        %7729 = vmatpush1.msra.mxu0 %v7601
        %7730 = vmatprep.subr.mxu0 0.0
        %7731 = vmatpush1.msra.mxu0 %v7602
        %7732 = vmatprep.subr.mxu0 0.0
        %7733 = vmatpush1.msra.mxu0 %v7603
        %7734 = vmatprep.subr.mxu0 0.0
        %7735 = vmatpush1.msra.mxu0 %v7604
        %7736 = vmatprep.subr.mxu0 0.0
        %7737 = vmatpush1.msra.mxu0 %v7605
        %7738 = vmatprep.subr.mxu0 0.0
        %7739 = vmatpush1.msra.mxu0 %v7606
        %7740 = vmatprep.subr.mxu0 0.0
        %7741 = vmatpush1.msra.mxu0 %v7607
        %7742 = vmatprep.subr.mxu0 0.0
        %7743 = vmatpush1.msra.mxu0 %v7608
        %7744 = vmatprep.subr.mxu0 0.0
        %7745 = vmatpush1.msra.mxu0 %v7609
        %7746 = vmatprep.subr.mxu0 0.0
        %7747 = vmatpush1.msra.mxu0 %v7610
        %7748 = vmatprep.subr.mxu0 0.0
        %7749 = vmatpush1.msra.mxu0 %v7611
        %7750 = vmatprep.subr.mxu0 0.0
        %7751 = vmatpush1.msra.mxu0 0.0
        %7752 = vmatprep.subr.mxu0 0.0
        %7753 = vmatpush1.msra.mxu0 0.0
        %7754 = vmatprep.subr.mxu0 0.0
        %7755 = vmatpush1.msra.mxu0 0.0
        %7756 = vmatprep.subr.mxu0 0.0
        %7757 = vmatpush1.msra.mxu0 0.0
        %7758 = vmatprep.mubr.f32.mxu0 %v7622
        %7759 = vmatmul.mubr.f32.gmra.mrb[0].mxu0 %v7617
        %v7760 = vpop.f32.mrb[0].mxu0
        %v7761 = vadd.f32 %v7691, %v7760
        %v7762 = vpop.f32.mrb[0].mxu0
        %7763 = vdwg.mxu0
        %v7764 = vadd.f32 %v7490, %v7761
        %s7765 = scalar_lea.vmem %s10, 480
        %v7766 = vld [vmem:[%s7765] sm:$0xf]
        %v7767 = vld [vmem:[%s7765 + $0x4] sm:$0xf]
        %v7768 = vld [vmem:[%s7765 + $0x8] sm:$0xf]
        %v7769 = vld [vmem:[%s7765 + $0xc] sm:$0xf]
        %v7770 = vld [vmem:[%s7765 + $0x10] sm:$0xf]
        %v7771 = vld [vmem:[%s7765 + $0x14] sm:$0xf]
        %v7772 = vld [vmem:[%s7765 + $0x18] sm:$0xf]
        %v7773 = vld [vmem:[%s7765 + $0x1c] sm:$0xf]
        %v7774 = vld [vmem:[%s7765 + $0x20] sm:$0xf]
        %v7775 = vld [vmem:[%s7765 + $0x24] sm:$0xf]
        %v7776 = vld [vmem:[%s7765 + $0x28] sm:$0xf]
        %v7777 = vld [vmem:[%s7765 + $0x2c] sm:$0xf]
        %v7778 = vld [vmem:[%s7765 + $0x30] sm:$0xf]
        %v7779 = vld [vmem:[%s7765 + $0x34] sm:$0xf]
        %v7780 = vld [vmem:[%s7765 + $0x38] sm:$0xf]
        %v7781 = vld [vmem:[%s7765 + $0x3c] sm:$0xf]
        %v7782 = vld [vmem:[%s7765 + $0x40] sm:$0xf]
        %v7783 = vld [vmem:[%s7765 + $0x44] sm:$0xf]
        %v7784 = vld [vmem:[%s7765 + $0x48] sm:$0xf]
        %v7785 = vld [vmem:[%s7765 + $0x4c] sm:$0xf]
        %v7786 = vld [vmem:[%s7765 + $0x50] sm:$0xf]
        %v7787 = vld [vmem:[%s7765 + $0x54] sm:$0xf]
        %v7788 = vld [vmem:[%s7765 + $0x58] sm:$0xf]
        %v7789 = vld [vmem:[%s7765 + $0x5c] sm:$0xf]
        %v7790 = vld [vmem:[%s7765 + $0x60] sm:$0xf]
        %v7791 = vld [vmem:[%s7765 + $0x64] sm:$0xf]
        %v7792 = vld [vmem:[%s7765 + $0x68] sm:$0xf]
        %v7793 = vld [vmem:[%s7765 + $0x6c] sm:$0xf]
        %v7794 = vld [vmem:[%s7765 + $0x70] sm:$0xf]
        %v7795 = vld [vmem:[%s7765 + $0x74] sm:$0xf]
        %v7796 = vld [vmem:[%s7765 + $0x78] sm:$0xf]
        %v7797 = vld [vmem:[%s7765 + $0x7c] sm:$0xf]
        %v7798 = vld [vmem:[%s7765 + $0x80] sm:$0xf]
        %v7799 = vld [vmem:[%s7765 + $0x84] sm:$0xf]
        %v7800 = vld [vmem:[%s7765 + $0x88] sm:$0xf]
        %v7801 = vld [vmem:[%s7765 + $0x8c] sm:$0xf]
        %v7802 = vld [vmem:[%s7765 + $0x90] sm:$0xf]
        %v7803 = vld [vmem:[%s7765 + $0x94] sm:$0xf]
        %v7804 = vld [vmem:[%s7765 + $0x98] sm:$0xf]
        %v7805 = vld [vmem:[%s7765 + $0x9c] sm:$0xf]
        %v7806 = vld [vmem:[%s7765 + $0xa0] sm:$0xf]
        %v7807 = vld [vmem:[%s7765 + $0xa4] sm:$0xf]
        %v7808 = vld [vmem:[%s7765 + $0xa8] sm:$0xf]
        %v7809 = vld [vmem:[%s7765 + $0xac] sm:$0xf]
        %v7810 = vld [vmem:[%s7765 + $0xb0] sm:$0xf]
        %v7811 = vld [vmem:[%s7765 + $0xb4] sm:$0xf]
        %v7812 = vld [vmem:[%s7765 + $0xb8] sm:$0xf]
        %v7813 = vld [vmem:[%s7765 + $0xbc] sm:$0xf]
        %v7814 = vld [vmem:[%s7765 + $0xc0] sm:$0xf]
        %v7815 = vld [vmem:[%s7765 + $0xc4] sm:$0xf]
        %v7816 = vld [vmem:[%s7765 + $0xc8] sm:$0xf]
        %v7817 = vld [vmem:[%s7765 + $0xcc] sm:$0xf]
        %v7818 = vld [vmem:[%s7765 + $0xd0] sm:$0xf]
        %v7819 = vld [vmem:[%s7765 + $0xd4] sm:$0xf]
        %v7820 = vld [vmem:[%s7765 + $0xd8] sm:$0xf]
        %v7821 = vld [vmem:[%s7765 + $0xdc] sm:$0xf]
        %v7822 = vld [vmem:[%s7765 + $0xe0] sm:$0xf]
        %v7823 = vld [vmem:[%s7765 + $0xe4] sm:$0xf]
        %v7824 = vld [vmem:[%s7765 + $0xe8] sm:$0xf]
        %v7825 = vld [vmem:[%s7765 + $0xec] sm:$0xf]
        %v7826 = vunpack.c.l.bf16 %v7766
        %v7827 = vunpack.c.l.bf16 %v7767
        %v7828 = vunpack.c.l.bf16 %v7768
        %v7829 = vunpack.c.l.bf16 %v7769
        %v7830 = vunpack.c.l.bf16 %v7770
        %v7831 = vunpack.c.l.bf16 %v7771
        %v7832 = vunpack.c.l.bf16 %v7772
        %v7833 = vunpack.c.l.bf16 %v7773
        %v7834 = vunpack.c.l.bf16 %v7774
        %v7835 = vunpack.c.l.bf16 %v7775
        %v7836 = vunpack.c.l.bf16 %v7776
        %v7837 = vunpack.c.l.bf16 %v7777
        %v7838 = vunpack.c.l.bf16 %v7778
        %v7839 = vunpack.c.l.bf16 %v7779
        %v7840 = vunpack.c.l.bf16 %v7780
        %v7841 = vunpack.c.l.bf16 %v7781
        %v7842 = vunpack.c.l.bf16 %v7782
        %v7843 = vunpack.c.l.bf16 %v7783
        %v7844 = vunpack.c.l.bf16 %v7784
        %v7845 = vunpack.c.l.bf16 %v7785
        %v7846 = vunpack.c.l.bf16 %v7786
        %v7847 = vunpack.c.l.bf16 %v7787
        %v7848 = vunpack.c.l.bf16 %v7788
        %v7849 = vunpack.c.l.bf16 %v7789
        %v7850 = vunpack.c.l.bf16 %v7790
        %v7851 = vunpack.c.l.bf16 %v7791
        %v7852 = vunpack.c.l.bf16 %v7792
        %v7853 = vunpack.c.l.bf16 %v7793
        %v7854 = vunpack.c.l.bf16 %v7794
        %v7855 = vunpack.c.l.bf16 %v7795
        %v7856 = vunpack.c.l.bf16 %v7796
        %v7857 = vunpack.c.l.bf16 %v7797
        %v7858 = vunpack.c.l.bf16 %v7798
        %v7859 = vunpack.c.l.bf16 %v7799
        %v7860 = vunpack.c.l.bf16 %v7800
        %v7861 = vunpack.c.l.bf16 %v7801
        %v7862 = vunpack.c.l.bf16 %v7802
        %v7863 = vunpack.c.l.bf16 %v7803
        %v7864 = vunpack.c.l.bf16 %v7804
        %v7865 = vunpack.c.l.bf16 %v7805
        %v7866 = vunpack.c.l.bf16 %v7806
        %v7867 = vunpack.c.l.bf16 %v7807
        %v7868 = vunpack.c.l.bf16 %v7808
        %v7869 = vunpack.c.l.bf16 %v7809
        %v7870 = vunpack.c.l.bf16 %v7810
        %v7871 = vunpack.c.l.bf16 %v7811
        %v7872 = vunpack.c.l.bf16 %v7812
        %v7873 = vunpack.c.l.bf16 %v7813
        %v7874 = vunpack.c.l.bf16 %v7814
        %v7875 = vunpack.c.l.bf16 %v7815
        %v7876 = vunpack.c.l.bf16 %v7816
        %v7877 = vunpack.c.l.bf16 %v7817
        %v7878 = vunpack.c.l.bf16 %v7818
        %v7879 = vunpack.c.l.bf16 %v7819
        %v7880 = vunpack.c.l.bf16 %v7820
        %v7881 = vunpack.c.l.bf16 %v7821
        %v7882 = vunpack.c.l.bf16 %v7822
        %v7883 = vunpack.c.l.bf16 %v7823
        %v7884 = vunpack.c.l.bf16 %v7824
        %v7885 = vunpack.c.l.bf16 %v7825
        %v7886 = vrot.slane %v7217, 2
        %v7887 = vrot.slane %v7218, 2
        %v7888 = vrot.slane %v7219, 2
        %v7889 = vrot.slane %v7220, 2
        %v7893 = vsel %vm7346, %v7889, 0
        %7895 = vmatprep.subr.mxu0 0.0
        %7896 = vmatpush1.msra.mxu0 %v7826
        %7897 = vmatprep.subr.mxu0 0.0
        %7898 = vmatpush1.msra.mxu0 %v7827
        %7899 = vmatprep.subr.mxu0 0.0
        %7900 = vmatpush1.msra.mxu0 %v7828
        %7901 = vmatprep.subr.mxu0 0.0
        %7902 = vmatpush1.msra.mxu0 %v7829
        %7903 = vmatprep.subr.mxu0 0.0
        %7904 = vmatpush1.msra.mxu0 %v7830
        %7905 = vmatprep.subr.mxu0 0.0
        %7906 = vmatpush1.msra.mxu0 %v7831
        %7907 = vmatprep.subr.mxu0 0.0
        %7908 = vmatpush1.msra.mxu0 %v7832
        %7909 = vmatprep.subr.mxu0 0.0
        %7910 = vmatpush1.msra.mxu0 %v7833
        %7911 = vmatprep.subr.mxu0 0.0
        %7912 = vmatpush1.msra.mxu0 %v7834
        %7913 = vmatprep.subr.mxu0 0.0
        %7914 = vmatpush1.msra.mxu0 %v7835
        %7915 = vmatprep.subr.mxu0 0.0
        %7916 = vmatpush1.msra.mxu0 %v7836
        %7917 = vmatprep.subr.mxu0 0.0
        %7918 = vmatpush1.msra.mxu0 %v7837
        %7919 = vmatprep.subr.mxu0 0.0
        %7920 = vmatpush1.msra.mxu0 %v7838
        %7921 = vmatprep.subr.mxu0 0.0
        %7922 = vmatpush1.msra.mxu0 %v7839
        %7923 = vmatprep.subr.mxu0 0.0
        %7924 = vmatpush1.msra.mxu0 %v7840
        %7925 = vmatprep.subr.mxu0 0.0
        %7926 = vmatpush1.msra.mxu0 %v7841
        %7927 = vmatprep.subr.mxu0 0.0
        %7928 = vmatpush1.msra.mxu0 %v7842
        %7929 = vmatprep.subr.mxu0 0.0
        %7930 = vmatpush1.msra.mxu0 %v7843
        %7931 = vmatprep.subr.mxu0 0.0
        %7932 = vmatpush1.msra.mxu0 %v7844
        %7933 = vmatprep.subr.mxu0 0.0
        %7934 = vmatpush1.msra.mxu0 %v7845
        %7935 = vmatprep.subr.mxu0 0.0
        %7936 = vmatpush1.msra.mxu0 %v7846
        %7937 = vmatprep.subr.mxu0 0.0
        %7938 = vmatpush1.msra.mxu0 %v7847
        %7939 = vmatprep.subr.mxu0 0.0
        %7940 = vmatpush1.msra.mxu0 %v7848
        %7941 = vmatprep.subr.mxu0 0.0
        %7942 = vmatpush1.msra.mxu0 %v7849
        %7943 = vmatprep.subr.mxu0 0.0
        %7944 = vmatpush1.msra.mxu0 %v7850
        %7945 = vmatprep.subr.mxu0 0.0
        %7946 = vmatpush1.msra.mxu0 %v7851
        %7947 = vmatprep.subr.mxu0 0.0
        %7948 = vmatpush1.msra.mxu0 %v7852
        %7949 = vmatprep.subr.mxu0 0.0
        %7950 = vmatpush1.msra.mxu0 %v7853
        %7951 = vmatprep.subr.mxu0 0.0
        %7952 = vmatpush1.msra.mxu0 %v7854
        %7953 = vmatprep.subr.mxu0 0.0
        %7954 = vmatpush1.msra.mxu0 %v7855
        %7955 = vmatprep.subr.mxu0 0.0
        %7956 = vmatpush1.msra.mxu0 %v7856
        %7957 = vmatprep.subr.mxu0 0.0
        %7958 = vmatpush1.msra.mxu0 %v7857
        %7959 = vmatprep.mubr.f32.mxu0 %v7887
        %7960 = vmatmul.mubr.f32.gmra.mrb[0].mxu0 %v7886
        %v7961 = vpop.f32.mrb[0].mxu0
        %v7962 = vadd.f32 0.0, %v7961
        %v7963 = vpop.f32.mrb[0].mxu0
        %7964 = vdwg.mxu0
        %7965 = vmatprep.subr.mxu0 0.0
        %7966 = vmatpush1.msra.mxu0 %v7858
        %7967 = vmatprep.subr.mxu0 0.0
        %7968 = vmatpush1.msra.mxu0 %v7859
        %7969 = vmatprep.subr.mxu0 0.0
        %7970 = vmatpush1.msra.mxu0 %v7860
        %7971 = vmatprep.subr.mxu0 0.0
        %7972 = vmatpush1.msra.mxu0 %v7861
        %7973 = vmatprep.subr.mxu0 0.0
        %7974 = vmatpush1.msra.mxu0 %v7862
        %7975 = vmatprep.subr.mxu0 0.0
        %7976 = vmatpush1.msra.mxu0 %v7863
        %7977 = vmatprep.subr.mxu0 0.0
        %7978 = vmatpush1.msra.mxu0 %v7864
        %7979 = vmatprep.subr.mxu0 0.0
        %7980 = vmatpush1.msra.mxu0 %v7865
        %7981 = vmatprep.subr.mxu0 0.0
        %7982 = vmatpush1.msra.mxu0 %v7866
        %7983 = vmatprep.subr.mxu0 0.0
        %7984 = vmatpush1.msra.mxu0 %v7867
        %7985 = vmatprep.subr.mxu0 0.0
        %7986 = vmatpush1.msra.mxu0 %v7868
        %7987 = vmatprep.subr.mxu0 0.0
        %7988 = vmatpush1.msra.mxu0 %v7869
        %7989 = vmatprep.subr.mxu0 0.0
        %7990 = vmatpush1.msra.mxu0 %v7870
        %7991 = vmatprep.subr.mxu0 0.0
        %7992 = vmatpush1.msra.mxu0 %v7871
        %7993 = vmatprep.subr.mxu0 0.0
        %7994 = vmatpush1.msra.mxu0 %v7872
        %7995 = vmatprep.subr.mxu0 0.0
        %7996 = vmatpush1.msra.mxu0 %v7873
        %7997 = vmatprep.subr.mxu0 0.0
        %7998 = vmatpush1.msra.mxu0 %v7874
        %7999 = vmatprep.subr.mxu0 0.0
        %8000 = vmatpush1.msra.mxu0 %v7875
        %8001 = vmatprep.subr.mxu0 0.0
        %8002 = vmatpush1.msra.mxu0 %v7876
        %8003 = vmatprep.subr.mxu0 0.0
        %8004 = vmatpush1.msra.mxu0 %v7877
        %8005 = vmatprep.subr.mxu0 0.0
        %8006 = vmatpush1.msra.mxu0 %v7878
        %8007 = vmatprep.subr.mxu0 0.0
        %8008 = vmatpush1.msra.mxu0 %v7879
        %8009 = vmatprep.subr.mxu0 0.0
        %8010 = vmatpush1.msra.mxu0 %v7880
        %8011 = vmatprep.subr.mxu0 0.0
        %8012 = vmatpush1.msra.mxu0 %v7881
        %8013 = vmatprep.subr.mxu0 0.0
        %8014 = vmatpush1.msra.mxu0 %v7882
        %8015 = vmatprep.subr.mxu0 0.0
        %8016 = vmatpush1.msra.mxu0 %v7883
        %8017 = vmatprep.subr.mxu0 0.0
        %8018 = vmatpush1.msra.mxu0 %v7884
        %8019 = vmatprep.subr.mxu0 0.0
        %8020 = vmatpush1.msra.mxu0 %v7885
        %8021 = vmatprep.subr.mxu0 0.0
        %8022 = vmatpush1.msra.mxu0 0.0
        %8023 = vmatprep.subr.mxu0 0.0
        %8024 = vmatpush1.msra.mxu0 0.0
        %8025 = vmatprep.subr.mxu0 0.0
        %8026 = vmatpush1.msra.mxu0 0.0
        %8027 = vmatprep.subr.mxu0 0.0
        %8028 = vmatpush1.msra.mxu0 0.0
        %8029 = vmatprep.mubr.f32.mxu0 %v7893
        %8030 = vmatmul.mubr.f32.gmra.mrb[0].mxu0 %v7888
        %v8031 = vpop.f32.mrb[0].mxu0
        %v8032 = vadd.f32 %v7962, %v8031
        %v8033 = vpop.f32.mrb[0].mxu0
        %8034 = vdwg.mxu0
        %v8035 = vadd.f32 %v7764, %v8032
        %s8036 = scalar_lea.vmem %s10, 720
        %v8037 = vld [vmem:[%s8036] sm:$0xf]
        %v8038 = vld [vmem:[%s8036 + $0x4] sm:$0xf]
        %v8039 = vld [vmem:[%s8036 + $0x8] sm:$0xf]
        %v8040 = vld [vmem:[%s8036 + $0xc] sm:$0xf]
        %v8041 = vld [vmem:[%s8036 + $0x10] sm:$0xf]
        %v8042 = vld [vmem:[%s8036 + $0x14] sm:$0xf]
        %v8043 = vld [vmem:[%s8036 + $0x18] sm:$0xf]
        %v8044 = vld [vmem:[%s8036 + $0x1c] sm:$0xf]
        %v8045 = vld [vmem:[%s8036 + $0x20] sm:$0xf]
        %v8046 = vld [vmem:[%s8036 + $0x24] sm:$0xf]
        %v8047 = vld [vmem:[%s8036 + $0x28] sm:$0xf]
        %v8048 = vld [vmem:[%s8036 + $0x2c] sm:$0xf]
        %v8049 = vld [vmem:[%s8036 + $0x30] sm:$0xf]
        %v8050 = vld [vmem:[%s8036 + $0x34] sm:$0xf]
        %v8051 = vld [vmem:[%s8036 + $0x38] sm:$0xf]
        %v8052 = vld [vmem:[%s8036 + $0x3c] sm:$0xf]
        %v8053 = vld [vmem:[%s8036 + $0x40] sm:$0xf]
        %v8054 = vld [vmem:[%s8036 + $0x44] sm:$0xf]
        %v8055 = vld [vmem:[%s8036 + $0x48] sm:$0xf]
        %v8056 = vld [vmem:[%s8036 + $0x4c] sm:$0xf]
        %v8057 = vld [vmem:[%s8036 + $0x50] sm:$0xf]
        %v8058 = vld [vmem:[%s8036 + $0x54] sm:$0xf]
        %v8059 = vld [vmem:[%s8036 + $0x58] sm:$0xf]
        %v8060 = vld [vmem:[%s8036 + $0x5c] sm:$0xf]
        %v8061 = vld [vmem:[%s8036 + $0x60] sm:$0xf]
        %v8062 = vld [vmem:[%s8036 + $0x64] sm:$0xf]
        %v8063 = vld [vmem:[%s8036 + $0x68] sm:$0xf]
        %v8064 = vld [vmem:[%s8036 + $0x6c] sm:$0xf]
        %v8065 = vld [vmem:[%s8036 + $0x70] sm:$0xf]
        %v8066 = vld [vmem:[%s8036 + $0x74] sm:$0xf]
        %v8067 = vld [vmem:[%s8036 + $0x78] sm:$0xf]
        %v8068 = vld [vmem:[%s8036 + $0x7c] sm:$0xf]
        %v8069 = vld [vmem:[%s8036 + $0x80] sm:$0xf]
        %v8070 = vld [vmem:[%s8036 + $0x84] sm:$0xf]
        %v8071 = vld [vmem:[%s8036 + $0x88] sm:$0xf]
        %v8072 = vld [vmem:[%s8036 + $0x8c] sm:$0xf]
        %v8073 = vld [vmem:[%s8036 + $0x90] sm:$0xf]
        %v8074 = vld [vmem:[%s8036 + $0x94] sm:$0xf]
        %v8075 = vld [vmem:[%s8036 + $0x98] sm:$0xf]
        %v8076 = vld [vmem:[%s8036 + $0x9c] sm:$0xf]
        %v8077 = vld [vmem:[%s8036 + $0xa0] sm:$0xf]
        %v8078 = vld [vmem:[%s8036 + $0xa4] sm:$0xf]
        %v8079 = vld [vmem:[%s8036 + $0xa8] sm:$0xf]
        %v8080 = vld [vmem:[%s8036 + $0xac] sm:$0xf]
        %v8081 = vld [vmem:[%s8036 + $0xb0] sm:$0xf]
        %v8082 = vld [vmem:[%s8036 + $0xb4] sm:$0xf]
        %v8083 = vld [vmem:[%s8036 + $0xb8] sm:$0xf]
        %v8084 = vld [vmem:[%s8036 + $0xbc] sm:$0xf]
        %v8085 = vld [vmem:[%s8036 + $0xc0] sm:$0xf]
        %v8086 = vld [vmem:[%s8036 + $0xc4] sm:$0xf]
        %v8087 = vld [vmem:[%s8036 + $0xc8] sm:$0xf]
        %v8088 = vld [vmem:[%s8036 + $0xcc] sm:$0xf]
        %v8089 = vld [vmem:[%s8036 + $0xd0] sm:$0xf]
        %v8090 = vld [vmem:[%s8036 + $0xd4] sm:$0xf]
        %v8091 = vld [vmem:[%s8036 + $0xd8] sm:$0xf]
        %v8092 = vld [vmem:[%s8036 + $0xdc] sm:$0xf]
        %v8093 = vld [vmem:[%s8036 + $0xe0] sm:$0xf]
        %v8094 = vld [vmem:[%s8036 + $0xe4] sm:$0xf]
        %v8095 = vld [vmem:[%s8036 + $0xe8] sm:$0xf]
        %v8096 = vld [vmem:[%s8036 + $0xec] sm:$0xf]
        %v8097 = vunpack.c.l.bf16 %v8037
        %v8098 = vunpack.c.l.bf16 %v8038
        %v8099 = vunpack.c.l.bf16 %v8039
        %v8100 = vunpack.c.l.bf16 %v8040
        %v8101 = vunpack.c.l.bf16 %v8041
        %v8102 = vunpack.c.l.bf16 %v8042
        %v8103 = vunpack.c.l.bf16 %v8043
        %v8104 = vunpack.c.l.bf16 %v8044
        %v8105 = vunpack.c.l.bf16 %v8045
        %v8106 = vunpack.c.l.bf16 %v8046
        %v8107 = vunpack.c.l.bf16 %v8047
        %v8108 = vunpack.c.l.bf16 %v8048
        %v8109 = vunpack.c.l.bf16 %v8049
        %v8110 = vunpack.c.l.bf16 %v8050
        %v8111 = vunpack.c.l.bf16 %v8051
        %v8112 = vunpack.c.l.bf16 %v8052
        %v8113 = vunpack.c.l.bf16 %v8053
        %v8114 = vunpack.c.l.bf16 %v8054
        %v8115 = vunpack.c.l.bf16 %v8055
        %v8116 = vunpack.c.l.bf16 %v8056
        %v8117 = vunpack.c.l.bf16 %v8057
        %v8118 = vunpack.c.l.bf16 %v8058
        %v8119 = vunpack.c.l.bf16 %v8059
        %v8120 = vunpack.c.l.bf16 %v8060
        %v8121 = vunpack.c.l.bf16 %v8061
        %v8122 = vunpack.c.l.bf16 %v8062
        %v8123 = vunpack.c.l.bf16 %v8063
        %v8124 = vunpack.c.l.bf16 %v8064
        %v8125 = vunpack.c.l.bf16 %v8065
        %v8126 = vunpack.c.l.bf16 %v8066
        %v8127 = vunpack.c.l.bf16 %v8067
        %v8128 = vunpack.c.l.bf16 %v8068
        %v8129 = vunpack.c.l.bf16 %v8069
        %v8130 = vunpack.c.l.bf16 %v8070
        %v8131 = vunpack.c.l.bf16 %v8071
        %v8132 = vunpack.c.l.bf16 %v8072
        %v8133 = vunpack.c.l.bf16 %v8073
        %v8134 = vunpack.c.l.bf16 %v8074
        %v8135 = vunpack.c.l.bf16 %v8075
        %v8136 = vunpack.c.l.bf16 %v8076
        %v8137 = vunpack.c.l.bf16 %v8077
        %v8138 = vunpack.c.l.bf16 %v8078
        %v8139 = vunpack.c.l.bf16 %v8079
        %v8140 = vunpack.c.l.bf16 %v8080
        %v8141 = vunpack.c.l.bf16 %v8081
        %v8142 = vunpack.c.l.bf16 %v8082
        %v8143 = vunpack.c.l.bf16 %v8083
        %v8144 = vunpack.c.l.bf16 %v8084
        %v8145 = vunpack.c.l.bf16 %v8085
        %v8146 = vunpack.c.l.bf16 %v8086
        %v8147 = vunpack.c.l.bf16 %v8087
        %v8148 = vunpack.c.l.bf16 %v8088
        %v8149 = vunpack.c.l.bf16 %v8089
        %v8150 = vunpack.c.l.bf16 %v8090
        %v8151 = vunpack.c.l.bf16 %v8091
        %v8152 = vunpack.c.l.bf16 %v8092
        %v8153 = vunpack.c.l.bf16 %v8093
        %v8154 = vunpack.c.l.bf16 %v8094
        %v8155 = vunpack.c.l.bf16 %v8095
        %v8156 = vunpack.c.l.bf16 %v8096
        %v8157 = vrot.slane %v7217, 3
        %v8158 = vrot.slane %v7218, 3
        %v8159 = vrot.slane %v7219, 3
        %v8160 = vrot.slane %v7220, 3
        %v8164 = vsel %vm7346, %v8160, 0
        %8166 = vmatprep.subr.mxu0 0.0
        %8167 = vmatpush1.msra.mxu0 %v8097
        %8168 = vmatprep.subr.mxu0 0.0
        %8169 = vmatpush1.msra.mxu0 %v8098
        %8170 = vmatprep.subr.mxu0 0.0
        %8171 = vmatpush1.msra.mxu0 %v8099
        %8172 = vmatprep.subr.mxu0 0.0
        %8173 = vmatpush1.msra.mxu0 %v8100
        %8174 = vmatprep.subr.mxu0 0.0
        %8175 = vmatpush1.msra.mxu0 %v8101
        %8176 = vmatprep.subr.mxu0 0.0
        %8177 = vmatpush1.msra.mxu0 %v8102
        %8178 = vmatprep.subr.mxu0 0.0
        %8179 = vmatpush1.msra.mxu0 %v8103
        %8180 = vmatprep.subr.mxu0 0.0
        %8181 = vmatpush1.msra.mxu0 %v8104
        %8182 = vmatprep.subr.mxu0 0.0
        %8183 = vmatpush1.msra.mxu0 %v8105
        %8184 = vmatprep.subr.mxu0 0.0
        %8185 = vmatpush1.msra.mxu0 %v8106
        %8186 = vmatprep.subr.mxu0 0.0
        %8187 = vmatpush1.msra.mxu0 %v8107
        %8188 = vmatprep.subr.mxu0 0.0
        %8189 = vmatpush1.msra.mxu0 %v8108
        %8190 = vmatprep.subr.mxu0 0.0
        %8191 = vmatpush1.msra.mxu0 %v8109
        %8192 = vmatprep.subr.mxu0 0.0
        %8193 = vmatpush1.msra.mxu0 %v8110
        %8194 = vmatprep.subr.mxu0 0.0
        %8195 = vmatpush1.msra.mxu0 %v8111
        %8196 = vmatprep.subr.mxu0 0.0
        %8197 = vmatpush1.msra.mxu0 %v8112
        %8198 = vmatprep.subr.mxu0 0.0
        %8199 = vmatpush1.msra.mxu0 %v8113
        %8200 = vmatprep.subr.mxu0 0.0
        %8201 = vmatpush1.msra.mxu0 %v8114
        %8202 = vmatprep.subr.mxu0 0.0
        %8203 = vmatpush1.msra.mxu0 %v8115
        %8204 = vmatprep.subr.mxu0 0.0
        %8205 = vmatpush1.msra.mxu0 %v8116
        %8206 = vmatprep.subr.mxu0 0.0
        %8207 = vmatpush1.msra.mxu0 %v8117
        %8208 = vmatprep.subr.mxu0 0.0
        %8209 = vmatpush1.msra.mxu0 %v8118
        %8210 = vmatprep.subr.mxu0 0.0
        %8211 = vmatpush1.msra.mxu0 %v8119
        %8212 = vmatprep.subr.mxu0 0.0
        %8213 = vmatpush1.msra.mxu0 %v8120
        %8214 = vmatprep.subr.mxu0 0.0
        %8215 = vmatpush1.msra.mxu0 %v8121
        %8216 = vmatprep.subr.mxu0 0.0
        %8217 = vmatpush1.msra.mxu0 %v8122
        %8218 = vmatprep.subr.mxu0 0.0
        %8219 = vmatpush1.msra.mxu0 %v8123
        %8220 = vmatprep.subr.mxu0 0.0
        %8221 = vmatpush1.msra.mxu0 %v8124
        %8222 = vmatprep.subr.mxu0 0.0
        %8223 = vmatpush1.msra.mxu0 %v8125
        %8224 = vmatprep.subr.mxu0 0.0
        %8225 = vmatpush1.msra.mxu0 %v8126
        %8226 = vmatprep.subr.mxu0 0.0
        %8227 = vmatpush1.msra.mxu0 %v8127
        %8228 = vmatprep.subr.mxu0 0.0
        %8229 = vmatpush1.msra.mxu0 %v8128
        %8230 = vmatprep.mubr.f32.mxu0 %v8158
        %8231 = vmatmul.mubr.f32.gmra.mrb[0].mxu0 %v8157
        %v8232 = vpop.f32.mrb[0].mxu0
        %v8233 = vadd.f32 0.0, %v8232
        %v8234 = vpop.f32.mrb[0].mxu0
        %8235 = vdwg.mxu0
        %8236 = vmatprep.subr.mxu0 0.0
        %8237 = vmatpush1.msra.mxu0 %v8129
        %8238 = vmatprep.subr.mxu0 0.0
        %8239 = vmatpush1.msra.mxu0 %v8130
        %8240 = vmatprep.subr.mxu0 0.0
        %8241 = vmatpush1.msra.mxu0 %v8131
        %8242 = vmatprep.subr.mxu0 0.0
        %8243 = vmatpush1.msra.mxu0 %v8132
        %8244 = vmatprep.subr.mxu0 0.0
        %8245 = vmatpush1.msra.mxu0 %v8133
        %8246 = vmatprep.subr.mxu0 0.0
        %8247 = vmatpush1.msra.mxu0 %v8134
        %8248 = vmatprep.subr.mxu0 0.0
        %8249 = vmatpush1.msra.mxu0 %v8135
        %8250 = vmatprep.subr.mxu0 0.0
        %8251 = vmatpush1.msra.mxu0 %v8136
        %8252 = vmatprep.subr.mxu0 0.0
        %8253 = vmatpush1.msra.mxu0 %v8137
        %8254 = vmatprep.subr.mxu0 0.0
        %8255 = vmatpush1.msra.mxu0 %v8138
        %8256 = vmatprep.subr.mxu0 0.0
        %8257 = vmatpush1.msra.mxu0 %v8139
        %8258 = vmatprep.subr.mxu0 0.0
        %8259 = vmatpush1.msra.mxu0 %v8140
        %8260 = vmatprep.subr.mxu0 0.0
        %8261 = vmatpush1.msra.mxu0 %v8141
        %8262 = vmatprep.subr.mxu0 0.0
        %8263 = vmatpush1.msra.mxu0 %v8142
        %8264 = vmatprep.subr.mxu0 0.0
        %8265 = vmatpush1.msra.mxu0 %v8143
        %8266 = vmatprep.subr.mxu0 0.0
        %8267 = vmatpush1.msra.mxu0 %v8144
        %8268 = vmatprep.subr.mxu0 0.0
        %8269 = vmatpush1.msra.mxu0 %v8145
        %8270 = vmatprep.subr.mxu0 0.0
        %8271 = vmatpush1.msra.mxu0 %v8146
        %8272 = vmatprep.subr.mxu0 0.0
        %8273 = vmatpush1.msra.mxu0 %v8147
        %8274 = vmatprep.subr.mxu0 0.0
        %8275 = vmatpush1.msra.mxu0 %v8148
        %8276 = vmatprep.subr.mxu0 0.0
        %8277 = vmatpush1.msra.mxu0 %v8149
        %8278 = vmatprep.subr.mxu0 0.0
        %8279 = vmatpush1.msra.mxu0 %v8150
        %8280 = vmatprep.subr.mxu0 0.0
        %8281 = vmatpush1.msra.mxu0 %v8151
        %8282 = vmatprep.subr.mxu0 0.0
        %8283 = vmatpush1.msra.mxu0 %v8152
        %8284 = vmatprep.subr.mxu0 0.0
        %8285 = vmatpush1.msra.mxu0 %v8153
        %8286 = vmatprep.subr.mxu0 0.0
        %8287 = vmatpush1.msra.mxu0 %v8154
        %8288 = vmatprep.subr.mxu0 0.0
        %8289 = vmatpush1.msra.mxu0 %v8155
        %8290 = vmatprep.subr.mxu0 0.0
        %8291 = vmatpush1.msra.mxu0 %v8156
        %8292 = vmatprep.subr.mxu0 0.0
        %8293 = vmatpush1.msra.mxu0 0.0
        %8294 = vmatprep.subr.mxu0 0.0
        %8295 = vmatpush1.msra.mxu0 0.0
        %8296 = vmatprep.subr.mxu0 0.0
        %8297 = vmatpush1.msra.mxu0 0.0
        %8298 = vmatprep.subr.mxu0 0.0
        %8299 = vmatpush1.msra.mxu0 0.0
        %8300 = vmatprep.mubr.f32.mxu0 %v8164
        %8301 = vmatmul.mubr.f32.gmra.mrb[0].mxu0 %v8159
        %v8302 = vpop.f32.mrb[0].mxu0
        %v8303 = vadd.f32 %v8233, %v8302
        %v8304 = vpop.f32.mrb[0].mxu0
        %8305 = vdwg.mxu0
        %v8306 = vadd.f32 %v8035, %v8303
        %s8307 = scalar_lea.vmem %s10, 960
        %v8308 = vld [vmem:[%s8307] sm:$0xf]
        %v8309 = vld [vmem:[%s8307 + $0x4] sm:$0xf]
        %v8310 = vld [vmem:[%s8307 + $0x8] sm:$0xf]
        %v8311 = vld [vmem:[%s8307 + $0xc] sm:$0xf]
        %v8312 = vld [vmem:[%s8307 + $0x10] sm:$0xf]
        %v8313 = vld [vmem:[%s8307 + $0x14] sm:$0xf]
        %v8314 = vld [vmem:[%s8307 + $0x18] sm:$0xf]
        %v8315 = vld [vmem:[%s8307 + $0x1c] sm:$0xf]
        %v8316 = vld [vmem:[%s8307 + $0x20] sm:$0xf]
        %v8317 = vld [vmem:[%s8307 + $0x24] sm:$0xf]
        %v8318 = vld [vmem:[%s8307 + $0x28] sm:$0xf]
        %v8319 = vld [vmem:[%s8307 + $0x2c] sm:$0xf]
        %v8320 = vld [vmem:[%s8307 + $0x30] sm:$0xf]
        %v8321 = vld [vmem:[%s8307 + $0x34] sm:$0xf]
        %v8322 = vld [vmem:[%s8307 + $0x38] sm:$0xf]
        %v8323 = vld [vmem:[%s8307 + $0x3c] sm:$0xf]
        %v8324 = vld [vmem:[%s8307 + $0x40] sm:$0xf]
        %v8325 = vld [vmem:[%s8307 + $0x44] sm:$0xf]
        %v8326 = vld [vmem:[%s8307 + $0x48] sm:$0xf]
        %v8327 = vld [vmem:[%s8307 + $0x4c] sm:$0xf]
        %v8328 = vld [vmem:[%s8307 + $0x50] sm:$0xf]
        %v8329 = vld [vmem:[%s8307 + $0x54] sm:$0xf]
        %v8330 = vld [vmem:[%s8307 + $0x58] sm:$0xf]
        %v8331 = vld [vmem:[%s8307 + $0x5c] sm:$0xf]
        %v8332 = vld [vmem:[%s8307 + $0x60] sm:$0xf]
        %v8333 = vld [vmem:[%s8307 + $0x64] sm:$0xf]
        %v8334 = vld [vmem:[%s8307 + $0x68] sm:$0xf]
        %v8335 = vld [vmem:[%s8307 + $0x6c] sm:$0xf]
        %v8336 = vld [vmem:[%s8307 + $0x70] sm:$0xf]
        %v8337 = vld [vmem:[%s8307 + $0x74] sm:$0xf]
        %v8338 = vld [vmem:[%s8307 + $0x78] sm:$0xf]
        %v8339 = vld [vmem:[%s8307 + $0x7c] sm:$0xf]
        %v8340 = vld [vmem:[%s8307 + $0x80] sm:$0xf]
        %v8341 = vld [vmem:[%s8307 + $0x84] sm:$0xf]
        %v8342 = vld [vmem:[%s8307 + $0x88] sm:$0xf]
        %v8343 = vld [vmem:[%s8307 + $0x8c] sm:$0xf]
        %v8344 = vld [vmem:[%s8307 + $0x90] sm:$0xf]
        %v8345 = vld [vmem:[%s8307 + $0x94] sm:$0xf]
        %v8346 = vld [vmem:[%s8307 + $0x98] sm:$0xf]
        %v8347 = vld [vmem:[%s8307 + $0x9c] sm:$0xf]
        %v8348 = vld [vmem:[%s8307 + $0xa0] sm:$0xf]
        %v8349 = vld [vmem:[%s8307 + $0xa4] sm:$0xf]
        %v8350 = vld [vmem:[%s8307 + $0xa8] sm:$0xf]
        %v8351 = vld [vmem:[%s8307 + $0xac] sm:$0xf]
        %v8352 = vld [vmem:[%s8307 + $0xb0] sm:$0xf]
        %v8353 = vld [vmem:[%s8307 + $0xb4] sm:$0xf]
        %v8354 = vld [vmem:[%s8307 + $0xb8] sm:$0xf]
        %v8355 = vld [vmem:[%s8307 + $0xbc] sm:$0xf]
        %v8356 = vld [vmem:[%s8307 + $0xc0] sm:$0xf]
        %v8357 = vld [vmem:[%s8307 + $0xc4] sm:$0xf]
        %v8358 = vld [vmem:[%s8307 + $0xc8] sm:$0xf]
        %v8359 = vld [vmem:[%s8307 + $0xcc] sm:$0xf]
        %v8360 = vld [vmem:[%s8307 + $0xd0] sm:$0xf]
        %v8361 = vld [vmem:[%s8307 + $0xd4] sm:$0xf]
        %v8362 = vld [vmem:[%s8307 + $0xd8] sm:$0xf]
        %v8363 = vld [vmem:[%s8307 + $0xdc] sm:$0xf]
        %v8364 = vld [vmem:[%s8307 + $0xe0] sm:$0xf]
        %v8365 = vld [vmem:[%s8307 + $0xe4] sm:$0xf]
        %v8366 = vld [vmem:[%s8307 + $0xe8] sm:$0xf]
        %v8367 = vld [vmem:[%s8307 + $0xec] sm:$0xf]
        %v8368 = vunpack.c.l.bf16 %v8308
        %v8369 = vunpack.c.l.bf16 %v8309
        %v8370 = vunpack.c.l.bf16 %v8310
        %v8371 = vunpack.c.l.bf16 %v8311
        %v8372 = vunpack.c.l.bf16 %v8312
        %v8373 = vunpack.c.l.bf16 %v8313
        %v8374 = vunpack.c.l.bf16 %v8314
        %v8375 = vunpack.c.l.bf16 %v8315
        %v8376 = vunpack.c.l.bf16 %v8316
        %v8377 = vunpack.c.l.bf16 %v8317
        %v8378 = vunpack.c.l.bf16 %v8318
        %v8379 = vunpack.c.l.bf16 %v8319
        %v8380 = vunpack.c.l.bf16 %v8320
        %v8381 = vunpack.c.l.bf16 %v8321
        %v8382 = vunpack.c.l.bf16 %v8322
        %v8383 = vunpack.c.l.bf16 %v8323
        %v8384 = vunpack.c.l.bf16 %v8324
        %v8385 = vunpack.c.l.bf16 %v8325
        %v8386 = vunpack.c.l.bf16 %v8326
        %v8387 = vunpack.c.l.bf16 %v8327
        %v8388 = vunpack.c.l.bf16 %v8328
        %v8389 = vunpack.c.l.bf16 %v8329
        %v8390 = vunpack.c.l.bf16 %v8330
        %v8391 = vunpack.c.l.bf16 %v8331
        %v8392 = vunpack.c.l.bf16 %v8332
        %v8393 = vunpack.c.l.bf16 %v8333
        %v8394 = vunpack.c.l.bf16 %v8334
        %v8395 = vunpack.c.l.bf16 %v8335
        %v8396 = vunpack.c.l.bf16 %v8336
        %v8397 = vunpack.c.l.bf16 %v8337
        %v8398 = vunpack.c.l.bf16 %v8338
        %v8399 = vunpack.c.l.bf16 %v8339
        %v8400 = vunpack.c.l.bf16 %v8340
        %v8401 = vunpack.c.l.bf16 %v8341
        %v8402 = vunpack.c.l.bf16 %v8342
        %v8403 = vunpack.c.l.bf16 %v8343
        %v8404 = vunpack.c.l.bf16 %v8344
        %v8405 = vunpack.c.l.bf16 %v8345
        %v8406 = vunpack.c.l.bf16 %v8346
        %v8407 = vunpack.c.l.bf16 %v8347
        %v8408 = vunpack.c.l.bf16 %v8348
        %v8409 = vunpack.c.l.bf16 %v8349
        %v8410 = vunpack.c.l.bf16 %v8350
        %v8411 = vunpack.c.l.bf16 %v8351
        %v8412 = vunpack.c.l.bf16 %v8352
        %v8413 = vunpack.c.l.bf16 %v8353
        %v8414 = vunpack.c.l.bf16 %v8354
        %v8415 = vunpack.c.l.bf16 %v8355
        %v8416 = vunpack.c.l.bf16 %v8356
        %v8417 = vunpack.c.l.bf16 %v8357
        %v8418 = vunpack.c.l.bf16 %v8358
        %v8419 = vunpack.c.l.bf16 %v8359
        %v8420 = vunpack.c.l.bf16 %v8360
        %v8421 = vunpack.c.l.bf16 %v8361
        %v8422 = vunpack.c.l.bf16 %v8362
        %v8423 = vunpack.c.l.bf16 %v8363
        %v8424 = vunpack.c.l.bf16 %v8364
        %v8425 = vunpack.c.l.bf16 %v8365
        %v8426 = vunpack.c.l.bf16 %v8366
        %v8427 = vunpack.c.l.bf16 %v8367
        %v8428 = vrot.slane %v7217, 4
        %v8429 = vrot.slane %v7218, 4
        %v8430 = vrot.slane %v7219, 4
        %v8431 = vrot.slane %v7220, 4
        %v8435 = vsel %vm7346, %v8431, 0
        %8437 = vmatprep.subr.mxu0 0.0
        %8438 = vmatpush1.msra.mxu0 %v8368
        %8439 = vmatprep.subr.mxu0 0.0
        %8440 = vmatpush1.msra.mxu0 %v8369
        %8441 = vmatprep.subr.mxu0 0.0
        %8442 = vmatpush1.msra.mxu0 %v8370
        %8443 = vmatprep.subr.mxu0 0.0
        %8444 = vmatpush1.msra.mxu0 %v8371
        %8445 = vmatprep.subr.mxu0 0.0
        %8446 = vmatpush1.msra.mxu0 %v8372
        %8447 = vmatprep.subr.mxu0 0.0
        %8448 = vmatpush1.msra.mxu0 %v8373
        %8449 = vmatprep.subr.mxu0 0.0
        %8450 = vmatpush1.msra.mxu0 %v8374
        %8451 = vmatprep.subr.mxu0 0.0
        %8452 = vmatpush1.msra.mxu0 %v8375
        %8453 = vmatprep.subr.mxu0 0.0
        %8454 = vmatpush1.msra.mxu0 %v8376
        %8455 = vmatprep.subr.mxu0 0.0
        %8456 = vmatpush1.msra.mxu0 %v8377
        %8457 = vmatprep.subr.mxu0 0.0
        %8458 = vmatpush1.msra.mxu0 %v8378
        %8459 = vmatprep.subr.mxu0 0.0
        %8460 = vmatpush1.msra.mxu0 %v8379
        %8461 = vmatprep.subr.mxu0 0.0
        %8462 = vmatpush1.msra.mxu0 %v8380
        %8463 = vmatprep.subr.mxu0 0.0
        %8464 = vmatpush1.msra.mxu0 %v8381
        %8465 = vmatprep.subr.mxu0 0.0
        %8466 = vmatpush1.msra.mxu0 %v8382
        %8467 = vmatprep.subr.mxu0 0.0
        %8468 = vmatpush1.msra.mxu0 %v8383
        %8469 = vmatprep.subr.mxu0 0.0
        %8470 = vmatpush1.msra.mxu0 %v8384
        %8471 = vmatprep.subr.mxu0 0.0
        %8472 = vmatpush1.msra.mxu0 %v8385
        %8473 = vmatprep.subr.mxu0 0.0
        %8474 = vmatpush1.msra.mxu0 %v8386
        %8475 = vmatprep.subr.mxu0 0.0
        %8476 = vmatpush1.msra.mxu0 %v8387
        %8477 = vmatprep.subr.mxu0 0.0
        %8478 = vmatpush1.msra.mxu0 %v8388
        %8479 = vmatprep.subr.mxu0 0.0
        %8480 = vmatpush1.msra.mxu0 %v8389
        %8481 = vmatprep.subr.mxu0 0.0
        %8482 = vmatpush1.msra.mxu0 %v8390
        %8483 = vmatprep.subr.mxu0 0.0
        %8484 = vmatpush1.msra.mxu0 %v8391
        %8485 = vmatprep.subr.mxu0 0.0
        %8486 = vmatpush1.msra.mxu0 %v8392
        %8487 = vmatprep.subr.mxu0 0.0
        %8488 = vmatpush1.msra.mxu0 %v8393
        %8489 = vmatprep.subr.mxu0 0.0
        %8490 = vmatpush1.msra.mxu0 %v8394
        %8491 = vmatprep.subr.mxu0 0.0
        %8492 = vmatpush1.msra.mxu0 %v8395
        %8493 = vmatprep.subr.mxu0 0.0
        %8494 = vmatpush1.msra.mxu0 %v8396
        %8495 = vmatprep.subr.mxu0 0.0
        %8496 = vmatpush1.msra.mxu0 %v8397
        %8497 = vmatprep.subr.mxu0 0.0
        %8498 = vmatpush1.msra.mxu0 %v8398
        %8499 = vmatprep.subr.mxu0 0.0
        %8500 = vmatpush1.msra.mxu0 %v8399
        %8501 = vmatprep.mubr.f32.mxu0 %v8429
        %8502 = vmatmul.mubr.f32.gmra.mrb[0].mxu0 %v8428
        %v8503 = vpop.f32.mrb[0].mxu0
        %v8504 = vadd.f32 0.0, %v8503
        %v8505 = vpop.f32.mrb[0].mxu0
        %8506 = vdwg.mxu0
        %8507 = vmatprep.subr.mxu0 0.0
        %8508 = vmatpush1.msra.mxu0 %v8400
        %8509 = vmatprep.subr.mxu0 0.0
        %8510 = vmatpush1.msra.mxu0 %v8401
        %8511 = vmatprep.subr.mxu0 0.0
        %8512 = vmatpush1.msra.mxu0 %v8402
        %8513 = vmatprep.subr.mxu0 0.0
        %8514 = vmatpush1.msra.mxu0 %v8403
        %8515 = vmatprep.subr.mxu0 0.0
        %8516 = vmatpush1.msra.mxu0 %v8404
        %8517 = vmatprep.subr.mxu0 0.0
        %8518 = vmatpush1.msra.mxu0 %v8405
        %8519 = vmatprep.subr.mxu0 0.0
        %8520 = vmatpush1.msra.mxu0 %v8406
        %8521 = vmatprep.subr.mxu0 0.0
        %8522 = vmatpush1.msra.mxu0 %v8407
        %8523 = vmatprep.subr.mxu0 0.0
        %8524 = vmatpush1.msra.mxu0 %v8408
        %8525 = vmatprep.subr.mxu0 0.0
        %8526 = vmatpush1.msra.mxu0 %v8409
        %8527 = vmatprep.subr.mxu0 0.0
        %8528 = vmatpush1.msra.mxu0 %v8410
        %8529 = vmatprep.subr.mxu0 0.0
        %8530 = vmatpush1.msra.mxu0 %v8411
        %8531 = vmatprep.subr.mxu0 0.0
        %8532 = vmatpush1.msra.mxu0 %v8412
        %8533 = vmatprep.subr.mxu0 0.0
        %8534 = vmatpush1.msra.mxu0 %v8413
        %8535 = vmatprep.subr.mxu0 0.0
        %8536 = vmatpush1.msra.mxu0 %v8414
        %8537 = vmatprep.subr.mxu0 0.0
        %8538 = vmatpush1.msra.mxu0 %v8415
        %8539 = vmatprep.subr.mxu0 0.0
        %8540 = vmatpush1.msra.mxu0 %v8416
        %8541 = vmatprep.subr.mxu0 0.0
        %8542 = vmatpush1.msra.mxu0 %v8417
        %8543 = vmatprep.subr.mxu0 0.0
        %8544 = vmatpush1.msra.mxu0 %v8418
        %8545 = vmatprep.subr.mxu0 0.0
        %8546 = vmatpush1.msra.mxu0 %v8419
        %8547 = vmatprep.subr.mxu0 0.0
        %8548 = vmatpush1.msra.mxu0 %v8420
        %8549 = vmatprep.subr.mxu0 0.0
        %8550 = vmatpush1.msra.mxu0 %v8421
        %8551 = vmatprep.subr.mxu0 0.0
        %8552 = vmatpush1.msra.mxu0 %v8422
        %8553 = vmatprep.subr.mxu0 0.0
        %8554 = vmatpush1.msra.mxu0 %v8423
        %8555 = vmatprep.subr.mxu0 0.0
        %8556 = vmatpush1.msra.mxu0 %v8424
        %8557 = vmatprep.subr.mxu0 0.0
        %8558 = vmatpush1.msra.mxu0 %v8425
        %8559 = vmatprep.subr.mxu0 0.0
        %8560 = vmatpush1.msra.mxu0 %v8426
        %8561 = vmatprep.subr.mxu0 0.0
        %8562 = vmatpush1.msra.mxu0 %v8427
        %8563 = vmatprep.subr.mxu0 0.0
        %8564 = vmatpush1.msra.mxu0 0.0
        %8565 = vmatprep.subr.mxu0 0.0
        %8566 = vmatpush1.msra.mxu0 0.0
        %8567 = vmatprep.subr.mxu0 0.0
        %8568 = vmatpush1.msra.mxu0 0.0
        %8569 = vmatprep.subr.mxu0 0.0
        %8570 = vmatpush1.msra.mxu0 0.0
        %8571 = vmatprep.mubr.f32.mxu0 %v8435
        %8572 = vmatmul.mubr.f32.gmra.mrb[0].mxu0 %v8430
        %v8573 = vpop.f32.mrb[0].mxu0
        %v8574 = vadd.f32 %v8504, %v8573
        %v8575 = vpop.f32.mrb[0].mxu0
        %8576 = vdwg.mxu0
        %v8577 = vadd.f32 %v8306, %v8574
        %s8578 = scalar_lea.vmem %s10, 1200
        %v8579 = vld [vmem:[%s8578] sm:$0xf]
        %v8580 = vld [vmem:[%s8578 + $0x4] sm:$0xf]
        %v8581 = vld [vmem:[%s8578 + $0x8] sm:$0xf]
        %v8582 = vld [vmem:[%s8578 + $0xc] sm:$0xf]
        %v8583 = vld [vmem:[%s8578 + $0x10] sm:$0xf]
        %v8584 = vld [vmem:[%s8578 + $0x14] sm:$0xf]
        %v8585 = vld [vmem:[%s8578 + $0x18] sm:$0xf]
        %v8586 = vld [vmem:[%s8578 + $0x1c] sm:$0xf]
        %v8587 = vld [vmem:[%s8578 + $0x20] sm:$0xf]
        %v8588 = vld [vmem:[%s8578 + $0x24] sm:$0xf]
        %v8589 = vld [vmem:[%s8578 + $0x28] sm:$0xf]
        %v8590 = vld [vmem:[%s8578 + $0x2c] sm:$0xf]
        %v8591 = vld [vmem:[%s8578 + $0x30] sm:$0xf]
        %v8592 = vld [vmem:[%s8578 + $0x34] sm:$0xf]
        %v8593 = vld [vmem:[%s8578 + $0x38] sm:$0xf]
        %v8594 = vld [vmem:[%s8578 + $0x3c] sm:$0xf]
        %v8595 = vld [vmem:[%s8578 + $0x40] sm:$0xf]
        %v8596 = vld [vmem:[%s8578 + $0x44] sm:$0xf]
        %v8597 = vld [vmem:[%s8578 + $0x48] sm:$0xf]
        %v8598 = vld [vmem:[%s8578 + $0x4c] sm:$0xf]
        %v8599 = vld [vmem:[%s8578 + $0x50] sm:$0xf]
        %v8600 = vld [vmem:[%s8578 + $0x54] sm:$0xf]
        %v8601 = vld [vmem:[%s8578 + $0x58] sm:$0xf]
        %v8602 = vld [vmem:[%s8578 + $0x5c] sm:$0xf]
        %v8603 = vld [vmem:[%s8578 + $0x60] sm:$0xf]
        %v8604 = vld [vmem:[%s8578 + $0x64] sm:$0xf]
        %v8605 = vld [vmem:[%s8578 + $0x68] sm:$0xf]
        %v8606 = vld [vmem:[%s8578 + $0x6c] sm:$0xf]
        %v8607 = vld [vmem:[%s8578 + $0x70] sm:$0xf]
        %v8608 = vld [vmem:[%s8578 + $0x74] sm:$0xf]
        %v8609 = vld [vmem:[%s8578 + $0x78] sm:$0xf]
        %v8610 = vld [vmem:[%s8578 + $0x7c] sm:$0xf]
        %v8611 = vld [vmem:[%s8578 + $0x80] sm:$0xf]
        %v8612 = vld [vmem:[%s8578 + $0x84] sm:$0xf]
        %v8613 = vld [vmem:[%s8578 + $0x88] sm:$0xf]
        %v8614 = vld [vmem:[%s8578 + $0x8c] sm:$0xf]
        %v8615 = vld [vmem:[%s8578 + $0x90] sm:$0xf]
        %v8616 = vld [vmem:[%s8578 + $0x94] sm:$0xf]
        %v8617 = vld [vmem:[%s8578 + $0x98] sm:$0xf]
        %v8618 = vld [vmem:[%s8578 + $0x9c] sm:$0xf]
        %v8619 = vld [vmem:[%s8578 + $0xa0] sm:$0xf]
        %v8620 = vld [vmem:[%s8578 + $0xa4] sm:$0xf]
        %v8621 = vld [vmem:[%s8578 + $0xa8] sm:$0xf]
        %v8622 = vld [vmem:[%s8578 + $0xac] sm:$0xf]
        %v8623 = vld [vmem:[%s8578 + $0xb0] sm:$0xf]
        %v8624 = vld [vmem:[%s8578 + $0xb4] sm:$0xf]
        %v8625 = vld [vmem:[%s8578 + $0xb8] sm:$0xf]
        %v8626 = vld [vmem:[%s8578 + $0xbc] sm:$0xf]
        %v8627 = vld [vmem:[%s8578 + $0xc0] sm:$0xf]
        %v8628 = vld [vmem:[%s8578 + $0xc4] sm:$0xf]
        %v8629 = vld [vmem:[%s8578 + $0xc8] sm:$0xf]
        %v8630 = vld [vmem:[%s8578 + $0xcc] sm:$0xf]
        %v8631 = vld [vmem:[%s8578 + $0xd0] sm:$0xf]
        %v8632 = vld [vmem:[%s8578 + $0xd4] sm:$0xf]
        %v8633 = vld [vmem:[%s8578 + $0xd8] sm:$0xf]
        %v8634 = vld [vmem:[%s8578 + $0xdc] sm:$0xf]
        %v8635 = vld [vmem:[%s8578 + $0xe0] sm:$0xf]
        %v8636 = vld [vmem:[%s8578 + $0xe4] sm:$0xf]
        %v8637 = vld [vmem:[%s8578 + $0xe8] sm:$0xf]
        %v8638 = vld [vmem:[%s8578 + $0xec] sm:$0xf]
        %v8639 = vunpack.c.l.bf16 %v8579
        %v8640 = vunpack.c.l.bf16 %v8580
        %v8641 = vunpack.c.l.bf16 %v8581
        %v8642 = vunpack.c.l.bf16 %v8582
        %v8643 = vunpack.c.l.bf16 %v8583
        %v8644 = vunpack.c.l.bf16 %v8584
        %v8645 = vunpack.c.l.bf16 %v8585
        %v8646 = vunpack.c.l.bf16 %v8586
        %v8647 = vunpack.c.l.bf16 %v8587
        %v8648 = vunpack.c.l.bf16 %v8588
        %v8649 = vunpack.c.l.bf16 %v8589
        %v8650 = vunpack.c.l.bf16 %v8590
        %v8651 = vunpack.c.l.bf16 %v8591
        %v8652 = vunpack.c.l.bf16 %v8592
        %v8653 = vunpack.c.l.bf16 %v8593
        %v8654 = vunpack.c.l.bf16 %v8594
        %v8655 = vunpack.c.l.bf16 %v8595
        %v8656 = vunpack.c.l.bf16 %v8596
        %v8657 = vunpack.c.l.bf16 %v8597
        %v8658 = vunpack.c.l.bf16 %v8598
        %v8659 = vunpack.c.l.bf16 %v8599
        %v8660 = vunpack.c.l.bf16 %v8600
        %v8661 = vunpack.c.l.bf16 %v8601
        %v8662 = vunpack.c.l.bf16 %v8602
        %v8663 = vunpack.c.l.bf16 %v8603
        %v8664 = vunpack.c.l.bf16 %v8604
        %v8665 = vunpack.c.l.bf16 %v8605
        %v8666 = vunpack.c.l.bf16 %v8606
        %v8667 = vunpack.c.l.bf16 %v8607
        %v8668 = vunpack.c.l.bf16 %v8608
        %v8669 = vunpack.c.l.bf16 %v8609
        %v8670 = vunpack.c.l.bf16 %v8610
        %v8671 = vunpack.c.l.bf16 %v8611
        %v8672 = vunpack.c.l.bf16 %v8612
        %v8673 = vunpack.c.l.bf16 %v8613
        %v8674 = vunpack.c.l.bf16 %v8614
        %v8675 = vunpack.c.l.bf16 %v8615
        %v8676 = vunpack.c.l.bf16 %v8616
        %v8677 = vunpack.c.l.bf16 %v8617
        %v8678 = vunpack.c.l.bf16 %v8618
        %v8679 = vunpack.c.l.bf16 %v8619
        %v8680 = vunpack.c.l.bf16 %v8620
        %v8681 = vunpack.c.l.bf16 %v8621
        %v8682 = vunpack.c.l.bf16 %v8622
        %v8683 = vunpack.c.l.bf16 %v8623
        %v8684 = vunpack.c.l.bf16 %v8624
        %v8685 = vunpack.c.l.bf16 %v8625
        %v8686 = vunpack.c.l.bf16 %v8626
        %v8687 = vunpack.c.l.bf16 %v8627
        %v8688 = vunpack.c.l.bf16 %v8628
        %v8689 = vunpack.c.l.bf16 %v8629
        %v8690 = vunpack.c.l.bf16 %v8630
        %v8691 = vunpack.c.l.bf16 %v8631
        %v8692 = vunpack.c.l.bf16 %v8632
        %v8693 = vunpack.c.l.bf16 %v8633
        %v8694 = vunpack.c.l.bf16 %v8634
        %v8695 = vunpack.c.l.bf16 %v8635
        %v8696 = vunpack.c.l.bf16 %v8636
        %v8697 = vunpack.c.l.bf16 %v8637
        %v8698 = vunpack.c.l.bf16 %v8638
        %v8699 = vrot.slane %v7217, 5
        %v8700 = vrot.slane %v7218, 5
        %v8701 = vrot.slane %v7219, 5
        %v8702 = vrot.slane %v7220, 5
        %v8706 = vsel %vm7346, %v8702, 0
        %8708 = vmatprep.subr.mxu0 0.0
        %8709 = vmatpush1.msra.mxu0 %v8639
        %8710 = vmatprep.subr.mxu0 0.0
        %8711 = vmatpush1.msra.mxu0 %v8640
        %8712 = vmatprep.subr.mxu0 0.0
        %8713 = vmatpush1.msra.mxu0 %v8641
        %8714 = vmatprep.subr.mxu0 0.0
        %8715 = vmatpush1.msra.mxu0 %v8642
        %8716 = vmatprep.subr.mxu0 0.0
        %8717 = vmatpush1.msra.mxu0 %v8643
        %8718 = vmatprep.subr.mxu0 0.0
        %8719 = vmatpush1.msra.mxu0 %v8644
        %8720 = vmatprep.subr.mxu0 0.0
        %8721 = vmatpush1.msra.mxu0 %v8645
        %8722 = vmatprep.subr.mxu0 0.0
        %8723 = vmatpush1.msra.mxu0 %v8646
        %8724 = vmatprep.subr.mxu0 0.0
        %8725 = vmatpush1.msra.mxu0 %v8647
        %8726 = vmatprep.subr.mxu0 0.0
        %8727 = vmatpush1.msra.mxu0 %v8648
        %8728 = vmatprep.subr.mxu0 0.0
        %8729 = vmatpush1.msra.mxu0 %v8649
        %8730 = vmatprep.subr.mxu0 0.0
        %8731 = vmatpush1.msra.mxu0 %v8650
        %8732 = vmatprep.subr.mxu0 0.0
        %8733 = vmatpush1.msra.mxu0 %v8651
        %8734 = vmatprep.subr.mxu0 0.0
        %8735 = vmatpush1.msra.mxu0 %v8652
        %8736 = vmatprep.subr.mxu0 0.0
        %8737 = vmatpush1.msra.mxu0 %v8653
        %8738 = vmatprep.subr.mxu0 0.0
        %8739 = vmatpush1.msra.mxu0 %v8654
        %8740 = vmatprep.subr.mxu0 0.0
        %8741 = vmatpush1.msra.mxu0 %v8655
        %8742 = vmatprep.subr.mxu0 0.0
        %8743 = vmatpush1.msra.mxu0 %v8656
        %8744 = vmatprep.subr.mxu0 0.0
        %8745 = vmatpush1.msra.mxu0 %v8657
        %8746 = vmatprep.subr.mxu0 0.0
        %8747 = vmatpush1.msra.mxu0 %v8658
        %8748 = vmatprep.subr.mxu0 0.0
        %8749 = vmatpush1.msra.mxu0 %v8659
        %8750 = vmatprep.subr.mxu0 0.0
        %8751 = vmatpush1.msra.mxu0 %v8660
        %8752 = vmatprep.subr.mxu0 0.0
        %8753 = vmatpush1.msra.mxu0 %v8661
        %8754 = vmatprep.subr.mxu0 0.0
        %8755 = vmatpush1.msra.mxu0 %v8662
        %8756 = vmatprep.subr.mxu0 0.0
        %8757 = vmatpush1.msra.mxu0 %v8663
        %8758 = vmatprep.subr.mxu0 0.0
        %8759 = vmatpush1.msra.mxu0 %v8664
        %8760 = vmatprep.subr.mxu0 0.0
        %8761 = vmatpush1.msra.mxu0 %v8665
        %8762 = vmatprep.subr.mxu0 0.0
        %8763 = vmatpush1.msra.mxu0 %v8666
        %8764 = vmatprep.subr.mxu0 0.0
        %8765 = vmatpush1.msra.mxu0 %v8667
        %8766 = vmatprep.subr.mxu0 0.0
        %8767 = vmatpush1.msra.mxu0 %v8668
        %8768 = vmatprep.subr.mxu0 0.0
        %8769 = vmatpush1.msra.mxu0 %v8669
        %8770 = vmatprep.subr.mxu0 0.0
        %8771 = vmatpush1.msra.mxu0 %v8670
        %8772 = vmatprep.mubr.f32.mxu0 %v8700
        %8773 = vmatmul.mubr.f32.gmra.mrb[0].mxu0 %v8699
        %v8774 = vpop.f32.mrb[0].mxu0
        %v8775 = vadd.f32 0.0, %v8774
        %v8776 = vpop.f32.mrb[0].mxu0
        %8777 = vdwg.mxu0
        %8778 = vmatprep.subr.mxu0 0.0
        %8779 = vmatpush1.msra.mxu0 %v8671
        %8780 = vmatprep.subr.mxu0 0.0
        %8781 = vmatpush1.msra.mxu0 %v8672
        %8782 = vmatprep.subr.mxu0 0.0
        %8783 = vmatpush1.msra.mxu0 %v8673
        %8784 = vmatprep.subr.mxu0 0.0
        %8785 = vmatpush1.msra.mxu0 %v8674
        %8786 = vmatprep.subr.mxu0 0.0
        %8787 = vmatpush1.msra.mxu0 %v8675
        %8788 = vmatprep.subr.mxu0 0.0
        %8789 = vmatpush1.msra.mxu0 %v8676
        %8790 = vmatprep.subr.mxu0 0.0
        %8791 = vmatpush1.msra.mxu0 %v8677
        %8792 = vmatprep.subr.mxu0 0.0
        %8793 = vmatpush1.msra.mxu0 %v8678
        %8794 = vmatprep.subr.mxu0 0.0
        %8795 = vmatpush1.msra.mxu0 %v8679
        %8796 = vmatprep.subr.mxu0 0.0
        %8797 = vmatpush1.msra.mxu0 %v8680
        %8798 = vmatprep.subr.mxu0 0.0
        %8799 = vmatpush1.msra.mxu0 %v8681
        %8800 = vmatprep.subr.mxu0 0.0
        %8801 = vmatpush1.msra.mxu0 %v8682
        %8802 = vmatprep.subr.mxu0 0.0
        %8803 = vmatpush1.msra.mxu0 %v8683
        %8804 = vmatprep.subr.mxu0 0.0
        %8805 = vmatpush1.msra.mxu0 %v8684
        %8806 = vmatprep.subr.mxu0 0.0
        %8807 = vmatpush1.msra.mxu0 %v8685
        %8808 = vmatprep.subr.mxu0 0.0
        %8809 = vmatpush1.msra.mxu0 %v8686
        %8810 = vmatprep.subr.mxu0 0.0
        %8811 = vmatpush1.msra.mxu0 %v8687
        %8812 = vmatprep.subr.mxu0 0.0
        %8813 = vmatpush1.msra.mxu0 %v8688
        %8814 = vmatprep.subr.mxu0 0.0
        %8815 = vmatpush1.msra.mxu0 %v8689
        %8816 = vmatprep.subr.mxu0 0.0
        %8817 = vmatpush1.msra.mxu0 %v8690
        %8818 = vmatprep.subr.mxu0 0.0
        %8819 = vmatpush1.msra.mxu0 %v8691
        %8820 = vmatprep.subr.mxu0 0.0
        %8821 = vmatpush1.msra.mxu0 %v8692
        %8822 = vmatprep.subr.mxu0 0.0
        %8823 = vmatpush1.msra.mxu0 %v8693
        %8824 = vmatprep.subr.mxu0 0.0
        %8825 = vmatpush1.msra.mxu0 %v8694
        %8826 = vmatprep.subr.mxu0 0.0
        %8827 = vmatpush1.msra.mxu0 %v8695
        %8828 = vmatprep.subr.mxu0 0.0
        %8829 = vmatpush1.msra.mxu0 %v8696
        %8830 = vmatprep.subr.mxu0 0.0
        %8831 = vmatpush1.msra.mxu0 %v8697
        %8832 = vmatprep.subr.mxu0 0.0
        %8833 = vmatpush1.msra.mxu0 %v8698
        %8834 = vmatprep.subr.mxu0 0.0
        %8835 = vmatpush1.msra.mxu0 0.0
        %8836 = vmatprep.subr.mxu0 0.0
        %8837 = vmatpush1.msra.mxu0 0.0
        %8838 = vmatprep.subr.mxu0 0.0
        %8839 = vmatpush1.msra.mxu0 0.0
        %8840 = vmatprep.subr.mxu0 0.0
        %8841 = vmatpush1.msra.mxu0 0.0
        %8842 = vmatprep.mubr.f32.mxu0 %v8706
        %8843 = vmatmul.mubr.f32.gmra.mrb[0].mxu0 %v8701
        %v8844 = vpop.f32.mrb[0].mxu0
        %v8845 = vadd.f32 %v8775, %v8844
        %v8846 = vpop.f32.mrb[0].mxu0
        %8847 = vdwg.mxu0
        %v8848 = vadd.f32 %v8577, %v8845
        %s8849 = scalar_lea.vmem %s10, 1440
        %v8850 = vld [vmem:[%s8849] sm:$0xf]
        %v8851 = vld [vmem:[%s8849 + $0x4] sm:$0xf]
        %v8852 = vld [vmem:[%s8849 + $0x8] sm:$0xf]
        %v8853 = vld [vmem:[%s8849 + $0xc] sm:$0xf]
        %v8854 = vld [vmem:[%s8849 + $0x10] sm:$0xf]
        %v8855 = vld [vmem:[%s8849 + $0x14] sm:$0xf]
        %v8856 = vld [vmem:[%s8849 + $0x18] sm:$0xf]
        %v8857 = vld [vmem:[%s8849 + $0x1c] sm:$0xf]
        %v8858 = vld [vmem:[%s8849 + $0x20] sm:$0xf]
        %v8859 = vld [vmem:[%s8849 + $0x24] sm:$0xf]
        %v8860 = vld [vmem:[%s8849 + $0x28] sm:$0xf]
        %v8861 = vld [vmem:[%s8849 + $0x2c] sm:$0xf]
        %v8862 = vld [vmem:[%s8849 + $0x30] sm:$0xf]
        %v8863 = vld [vmem:[%s8849 + $0x34] sm:$0xf]
        %v8864 = vld [vmem:[%s8849 + $0x38] sm:$0xf]
        %v8865 = vld [vmem:[%s8849 + $0x3c] sm:$0xf]
        %v8866 = vld [vmem:[%s8849 + $0x40] sm:$0xf]
        %v8867 = vld [vmem:[%s8849 + $0x44] sm:$0xf]
        %v8868 = vld [vmem:[%s8849 + $0x48] sm:$0xf]
        %v8869 = vld [vmem:[%s8849 + $0x4c] sm:$0xf]
        %v8870 = vld [vmem:[%s8849 + $0x50] sm:$0xf]
        %v8871 = vld [vmem:[%s8849 + $0x54] sm:$0xf]
        %v8872 = vld [vmem:[%s8849 + $0x58] sm:$0xf]
        %v8873 = vld [vmem:[%s8849 + $0x5c] sm:$0xf]
        %v8874 = vld [vmem:[%s8849 + $0x60] sm:$0xf]
        %v8875 = vld [vmem:[%s8849 + $0x64] sm:$0xf]
        %v8876 = vld [vmem:[%s8849 + $0x68] sm:$0xf]
        %v8877 = vld [vmem:[%s8849 + $0x6c] sm:$0xf]
        %v8878 = vld [vmem:[%s8849 + $0x70] sm:$0xf]
        %v8879 = vld [vmem:[%s8849 + $0x74] sm:$0xf]
        %v8880 = vld [vmem:[%s8849 + $0x78] sm:$0xf]
        %v8881 = vld [vmem:[%s8849 + $0x7c] sm:$0xf]
        %v8882 = vld [vmem:[%s8849 + $0x80] sm:$0xf]
        %v8883 = vld [vmem:[%s8849 + $0x84] sm:$0xf]
        %v8884 = vld [vmem:[%s8849 + $0x88] sm:$0xf]
        %v8885 = vld [vmem:[%s8849 + $0x8c] sm:$0xf]
        %v8886 = vld [vmem:[%s8849 + $0x90] sm:$0xf]
        %v8887 = vld [vmem:[%s8849 + $0x94] sm:$0xf]
        %v8888 = vld [vmem:[%s8849 + $0x98] sm:$0xf]
        %v8889 = vld [vmem:[%s8849 + $0x9c] sm:$0xf]
        %v8890 = vld [vmem:[%s8849 + $0xa0] sm:$0xf]
        %v8891 = vld [vmem:[%s8849 + $0xa4] sm:$0xf]
        %v8892 = vld [vmem:[%s8849 + $0xa8] sm:$0xf]
        %v8893 = vld [vmem:[%s8849 + $0xac] sm:$0xf]
        %v8894 = vld [vmem:[%s8849 + $0xb0] sm:$0xf]
        %v8895 = vld [vmem:[%s8849 + $0xb4] sm:$0xf]
        %v8896 = vld [vmem:[%s8849 + $0xb8] sm:$0xf]
        %v8897 = vld [vmem:[%s8849 + $0xbc] sm:$0xf]
        %v8898 = vld [vmem:[%s8849 + $0xc0] sm:$0xf]
        %v8899 = vld [vmem:[%s8849 + $0xc4] sm:$0xf]
        %v8900 = vld [vmem:[%s8849 + $0xc8] sm:$0xf]
        %v8901 = vld [vmem:[%s8849 + $0xcc] sm:$0xf]
        %v8902 = vld [vmem:[%s8849 + $0xd0] sm:$0xf]
        %v8903 = vld [vmem:[%s8849 + $0xd4] sm:$0xf]
        %v8904 = vld [vmem:[%s8849 + $0xd8] sm:$0xf]
        %v8905 = vld [vmem:[%s8849 + $0xdc] sm:$0xf]
        %v8906 = vld [vmem:[%s8849 + $0xe0] sm:$0xf]
        %v8907 = vld [vmem:[%s8849 + $0xe4] sm:$0xf]
        %v8908 = vld [vmem:[%s8849 + $0xe8] sm:$0xf]
        %v8909 = vld [vmem:[%s8849 + $0xec] sm:$0xf]
        %v8910 = vunpack.c.l.bf16 %v8850
        %v8911 = vunpack.c.l.bf16 %v8851
        %v8912 = vunpack.c.l.bf16 %v8852
        %v8913 = vunpack.c.l.bf16 %v8853
        %v8914 = vunpack.c.l.bf16 %v8854
        %v8915 = vunpack.c.l.bf16 %v8855
        %v8916 = vunpack.c.l.bf16 %v8856
        %v8917 = vunpack.c.l.bf16 %v8857
        %v8918 = vunpack.c.l.bf16 %v8858
        %v8919 = vunpack.c.l.bf16 %v8859
        %v8920 = vunpack.c.l.bf16 %v8860
        %v8921 = vunpack.c.l.bf16 %v8861
        %v8922 = vunpack.c.l.bf16 %v8862
        %v8923 = vunpack.c.l.bf16 %v8863
        %v8924 = vunpack.c.l.bf16 %v8864
        %v8925 = vunpack.c.l.bf16 %v8865
        %v8926 = vunpack.c.l.bf16 %v8866
        %v8927 = vunpack.c.l.bf16 %v8867
        %v8928 = vunpack.c.l.bf16 %v8868
        %v8929 = vunpack.c.l.bf16 %v8869
        %v8930 = vunpack.c.l.bf16 %v8870
        %v8931 = vunpack.c.l.bf16 %v8871
        %v8932 = vunpack.c.l.bf16 %v8872
        %v8933 = vunpack.c.l.bf16 %v8873
        %v8934 = vunpack.c.l.bf16 %v8874
        %v8935 = vunpack.c.l.bf16 %v8875
        %v8936 = vunpack.c.l.bf16 %v8876
        %v8937 = vunpack.c.l.bf16 %v8877
        %v8938 = vunpack.c.l.bf16 %v8878
        %v8939 = vunpack.c.l.bf16 %v8879
        %v8940 = vunpack.c.l.bf16 %v8880
        %v8941 = vunpack.c.l.bf16 %v8881
        %v8942 = vunpack.c.l.bf16 %v8882
        %v8943 = vunpack.c.l.bf16 %v8883
        %v8944 = vunpack.c.l.bf16 %v8884
        %v8945 = vunpack.c.l.bf16 %v8885
        %v8946 = vunpack.c.l.bf16 %v8886
        %v8947 = vunpack.c.l.bf16 %v8887
        %v8948 = vunpack.c.l.bf16 %v8888
        %v8949 = vunpack.c.l.bf16 %v8889
        %v8950 = vunpack.c.l.bf16 %v8890
        %v8951 = vunpack.c.l.bf16 %v8891
        %v8952 = vunpack.c.l.bf16 %v8892
        %v8953 = vunpack.c.l.bf16 %v8893
        %v8954 = vunpack.c.l.bf16 %v8894
        %v8955 = vunpack.c.l.bf16 %v8895
        %v8956 = vunpack.c.l.bf16 %v8896
        %v8957 = vunpack.c.l.bf16 %v8897
        %v8958 = vunpack.c.l.bf16 %v8898
        %v8959 = vunpack.c.l.bf16 %v8899
        %v8960 = vunpack.c.l.bf16 %v8900
        %v8961 = vunpack.c.l.bf16 %v8901
        %v8962 = vunpack.c.l.bf16 %v8902
        %v8963 = vunpack.c.l.bf16 %v8903
        %v8964 = vunpack.c.l.bf16 %v8904
        %v8965 = vunpack.c.l.bf16 %v8905
        %v8966 = vunpack.c.l.bf16 %v8906
        %v8967 = vunpack.c.l.bf16 %v8907
        %v8968 = vunpack.c.l.bf16 %v8908
        %v8969 = vunpack.c.l.bf16 %v8909
        %v8970 = vrot.slane %v7217, 6
        %v8971 = vrot.slane %v7218, 6
        %v8972 = vrot.slane %v7219, 6
        %v8973 = vrot.slane %v7220, 6
        %v8977 = vsel %vm7346, %v8973, 0
        %8979 = vmatprep.subr.mxu0 0.0
        %8980 = vmatpush1.msra.mxu0 %v8910
        %8981 = vmatprep.subr.mxu0 0.0
        %8982 = vmatpush1.msra.mxu0 %v8911
        %8983 = vmatprep.subr.mxu0 0.0
        %8984 = vmatpush1.msra.mxu0 %v8912
        %8985 = vmatprep.subr.mxu0 0.0
        %8986 = vmatpush1.msra.mxu0 %v8913
        %8987 = vmatprep.subr.mxu0 0.0
        %8988 = vmatpush1.msra.mxu0 %v8914
        %8989 = vmatprep.subr.mxu0 0.0
        %8990 = vmatpush1.msra.mxu0 %v8915
        %8991 = vmatprep.subr.mxu0 0.0
        %8992 = vmatpush1.msra.mxu0 %v8916
        %8993 = vmatprep.subr.mxu0 0.0
        %8994 = vmatpush1.msra.mxu0 %v8917
        %8995 = vmatprep.subr.mxu0 0.0
        %8996 = vmatpush1.msra.mxu0 %v8918
        %8997 = vmatprep.subr.mxu0 0.0
        %8998 = vmatpush1.msra.mxu0 %v8919
        %8999 = vmatprep.subr.mxu0 0.0
        %9000 = vmatpush1.msra.mxu0 %v8920
        %9001 = vmatprep.subr.mxu0 0.0
        %9002 = vmatpush1.msra.mxu0 %v8921
        %9003 = vmatprep.subr.mxu0 0.0
        %9004 = vmatpush1.msra.mxu0 %v8922
        %9005 = vmatprep.subr.mxu0 0.0
        %9006 = vmatpush1.msra.mxu0 %v8923
        %9007 = vmatprep.subr.mxu0 0.0
        %9008 = vmatpush1.msra.mxu0 %v8924
        %9009 = vmatprep.subr.mxu0 0.0
        %9010 = vmatpush1.msra.mxu0 %v8925
        %9011 = vmatprep.subr.mxu0 0.0
        %9012 = vmatpush1.msra.mxu0 %v8926
        %9013 = vmatprep.subr.mxu0 0.0
        %9014 = vmatpush1.msra.mxu0 %v8927
        %9015 = vmatprep.subr.mxu0 0.0
        %9016 = vmatpush1.msra.mxu0 %v8928
        %9017 = vmatprep.subr.mxu0 0.0
        %9018 = vmatpush1.msra.mxu0 %v8929
        %9019 = vmatprep.subr.mxu0 0.0
        %9020 = vmatpush1.msra.mxu0 %v8930
        %9021 = vmatprep.subr.mxu0 0.0
        %9022 = vmatpush1.msra.mxu0 %v8931
        %9023 = vmatprep.subr.mxu0 0.0
        %9024 = vmatpush1.msra.mxu0 %v8932
        %9025 = vmatprep.subr.mxu0 0.0
        %9026 = vmatpush1.msra.mxu0 %v8933
        %9027 = vmatprep.subr.mxu0 0.0
        %9028 = vmatpush1.msra.mxu0 %v8934
        %9029 = vmatprep.subr.mxu0 0.0
        %9030 = vmatpush1.msra.mxu0 %v8935
        %9031 = vmatprep.subr.mxu0 0.0
        %9032 = vmatpush1.msra.mxu0 %v8936
        %9033 = vmatprep.subr.mxu0 0.0
        %9034 = vmatpush1.msra.mxu0 %v8937
        %9035 = vmatprep.subr.mxu0 0.0
        %9036 = vmatpush1.msra.mxu0 %v8938
        %9037 = vmatprep.subr.mxu0 0.0
        %9038 = vmatpush1.msra.mxu0 %v8939
        %9039 = vmatprep.subr.mxu0 0.0
        %9040 = vmatpush1.msra.mxu0 %v8940
        %9041 = vmatprep.subr.mxu0 0.0
        %9042 = vmatpush1.msra.mxu0 %v8941
        %9043 = vmatprep.mubr.f32.mxu0 %v8971
        %9044 = vmatmul.mubr.f32.gmra.mrb[0].mxu0 %v8970
        %v9045 = vpop.f32.mrb[0].mxu0
        %v9046 = vadd.f32 0.0, %v9045
        %v9047 = vpop.f32.mrb[0].mxu0
        %9048 = vdwg.mxu0
        %9049 = vmatprep.subr.mxu0 0.0
        %9050 = vmatpush1.msra.mxu0 %v8942
        %9051 = vmatprep.subr.mxu0 0.0
        %9052 = vmatpush1.msra.mxu0 %v8943
        %9053 = vmatprep.subr.mxu0 0.0
        %9054 = vmatpush1.msra.mxu0 %v8944
        %9055 = vmatprep.subr.mxu0 0.0
        %9056 = vmatpush1.msra.mxu0 %v8945
        %9057 = vmatprep.subr.mxu0 0.0
        %9058 = vmatpush1.msra.mxu0 %v8946
        %9059 = vmatprep.subr.mxu0 0.0
        %9060 = vmatpush1.msra.mxu0 %v8947
        %9061 = vmatprep.subr.mxu0 0.0
        %9062 = vmatpush1.msra.mxu0 %v8948
        %9063 = vmatprep.subr.mxu0 0.0
        %9064 = vmatpush1.msra.mxu0 %v8949
        %9065 = vmatprep.subr.mxu0 0.0
        %9066 = vmatpush1.msra.mxu0 %v8950
        %9067 = vmatprep.subr.mxu0 0.0
        %9068 = vmatpush1.msra.mxu0 %v8951
        %9069 = vmatprep.subr.mxu0 0.0
        %9070 = vmatpush1.msra.mxu0 %v8952
        %9071 = vmatprep.subr.mxu0 0.0
        %9072 = vmatpush1.msra.mxu0 %v8953
        %9073 = vmatprep.subr.mxu0 0.0
        %9074 = vmatpush1.msra.mxu0 %v8954
        %9075 = vmatprep.subr.mxu0 0.0
        %9076 = vmatpush1.msra.mxu0 %v8955
        %9077 = vmatprep.subr.mxu0 0.0
        %9078 = vmatpush1.msra.mxu0 %v8956
        %9079 = vmatprep.subr.mxu0 0.0
        %9080 = vmatpush1.msra.mxu0 %v8957
        %9081 = vmatprep.subr.mxu0 0.0
        %9082 = vmatpush1.msra.mxu0 %v8958
        %9083 = vmatprep.subr.mxu0 0.0
        %9084 = vmatpush1.msra.mxu0 %v8959
        %9085 = vmatprep.subr.mxu0 0.0
        %9086 = vmatpush1.msra.mxu0 %v8960
        %9087 = vmatprep.subr.mxu0 0.0
        %9088 = vmatpush1.msra.mxu0 %v8961
        %9089 = vmatprep.subr.mxu0 0.0
        %9090 = vmatpush1.msra.mxu0 %v8962
        %9091 = vmatprep.subr.mxu0 0.0
        %9092 = vmatpush1.msra.mxu0 %v8963
        %9093 = vmatprep.subr.mxu0 0.0
        %9094 = vmatpush1.msra.mxu0 %v8964
        %9095 = vmatprep.subr.mxu0 0.0
        %9096 = vmatpush1.msra.mxu0 %v8965
        %9097 = vmatprep.subr.mxu0 0.0
        %9098 = vmatpush1.msra.mxu0 %v8966
        %9099 = vmatprep.subr.mxu0 0.0
        %9100 = vmatpush1.msra.mxu0 %v8967
        %9101 = vmatprep.subr.mxu0 0.0
        %9102 = vmatpush1.msra.mxu0 %v8968
        %9103 = vmatprep.subr.mxu0 0.0
        %9104 = vmatpush1.msra.mxu0 %v8969
        %9105 = vmatprep.subr.mxu0 0.0
        %9106 = vmatpush1.msra.mxu0 0.0
        %9107 = vmatprep.subr.mxu0 0.0
        %9108 = vmatpush1.msra.mxu0 0.0
        %9109 = vmatprep.subr.mxu0 0.0
        %9110 = vmatpush1.msra.mxu0 0.0
        %9111 = vmatprep.subr.mxu0 0.0
        %9112 = vmatpush1.msra.mxu0 0.0
        %9113 = vmatprep.mubr.f32.mxu0 %v8977
        %9114 = vmatmul.mubr.f32.gmra.mrb[0].mxu0 %v8972
        %v9115 = vpop.f32.mrb[0].mxu0
        %v9116 = vadd.f32 %v9046, %v9115
        %v9117 = vpop.f32.mrb[0].mxu0
        %9118 = vdwg.mxu0
        %v9119 = vadd.f32 %v8848, %v9116
        %s9120 = scalar_lea.vmem %s10, 1680
        %v9121 = vld [vmem:[%s9120] sm:$0xf]
        %v9122 = vld [vmem:[%s9120 + $0x4] sm:$0xf]
        %v9123 = vld [vmem:[%s9120 + $0x8] sm:$0xf]
        %v9124 = vld [vmem:[%s9120 + $0xc] sm:$0xf]
        %v9125 = vld [vmem:[%s9120 + $0x10] sm:$0xf]
        %v9126 = vld [vmem:[%s9120 + $0x14] sm:$0xf]
        %v9127 = vld [vmem:[%s9120 + $0x18] sm:$0xf]
        %v9128 = vld [vmem:[%s9120 + $0x1c] sm:$0xf]
        %v9129 = vld [vmem:[%s9120 + $0x20] sm:$0xf]
        %v9130 = vld [vmem:[%s9120 + $0x24] sm:$0xf]
        %v9131 = vld [vmem:[%s9120 + $0x28] sm:$0xf]
        %v9132 = vld [vmem:[%s9120 + $0x2c] sm:$0xf]
        %v9133 = vld [vmem:[%s9120 + $0x30] sm:$0xf]
        %v9134 = vld [vmem:[%s9120 + $0x34] sm:$0xf]
        %v9135 = vld [vmem:[%s9120 + $0x38] sm:$0xf]
        %v9136 = vld [vmem:[%s9120 + $0x3c] sm:$0xf]
        %v9137 = vld [vmem:[%s9120 + $0x40] sm:$0xf]
        %v9138 = vld [vmem:[%s9120 + $0x44] sm:$0xf]
        %v9139 = vld [vmem:[%s9120 + $0x48] sm:$0xf]
        %v9140 = vld [vmem:[%s9120 + $0x4c] sm:$0xf]
        %v9141 = vld [vmem:[%s9120 + $0x50] sm:$0xf]
        %v9142 = vld [vmem:[%s9120 + $0x54] sm:$0xf]
        %v9143 = vld [vmem:[%s9120 + $0x58] sm:$0xf]
        %v9144 = vld [vmem:[%s9120 + $0x5c] sm:$0xf]
        %v9145 = vld [vmem:[%s9120 + $0x60] sm:$0xf]
        %v9146 = vld [vmem:[%s9120 + $0x64] sm:$0xf]
        %v9147 = vld [vmem:[%s9120 + $0x68] sm:$0xf]
        %v9148 = vld [vmem:[%s9120 + $0x6c] sm:$0xf]
        %v9149 = vld [vmem:[%s9120 + $0x70] sm:$0xf]
        %v9150 = vld [vmem:[%s9120 + $0x74] sm:$0xf]
        %v9151 = vld [vmem:[%s9120 + $0x78] sm:$0xf]
        %v9152 = vld [vmem:[%s9120 + $0x7c] sm:$0xf]
        %v9153 = vld [vmem:[%s9120 + $0x80] sm:$0xf]
        %v9154 = vld [vmem:[%s9120 + $0x84] sm:$0xf]
        %v9155 = vld [vmem:[%s9120 + $0x88] sm:$0xf]
        %v9156 = vld [vmem:[%s9120 + $0x8c] sm:$0xf]
        %v9157 = vld [vmem:[%s9120 + $0x90] sm:$0xf]
        %v9158 = vld [vmem:[%s9120 + $0x94] sm:$0xf]
        %v9159 = vld [vmem:[%s9120 + $0x98] sm:$0xf]
        %v9160 = vld [vmem:[%s9120 + $0x9c] sm:$0xf]
        %v9161 = vld [vmem:[%s9120 + $0xa0] sm:$0xf]
        %v9162 = vld [vmem:[%s9120 + $0xa4] sm:$0xf]
        %v9163 = vld [vmem:[%s9120 + $0xa8] sm:$0xf]
        %v9164 = vld [vmem:[%s9120 + $0xac] sm:$0xf]
        %v9165 = vld [vmem:[%s9120 + $0xb0] sm:$0xf]
        %v9166 = vld [vmem:[%s9120 + $0xb4] sm:$0xf]
        %v9167 = vld [vmem:[%s9120 + $0xb8] sm:$0xf]
        %v9168 = vld [vmem:[%s9120 + $0xbc] sm:$0xf]
        %v9169 = vld [vmem:[%s9120 + $0xc0] sm:$0xf]
        %v9170 = vld [vmem:[%s9120 + $0xc4] sm:$0xf]
        %v9171 = vld [vmem:[%s9120 + $0xc8] sm:$0xf]
        %v9172 = vld [vmem:[%s9120 + $0xcc] sm:$0xf]
        %v9173 = vld [vmem:[%s9120 + $0xd0] sm:$0xf]
        %v9174 = vld [vmem:[%s9120 + $0xd4] sm:$0xf]
        %v9175 = vld [vmem:[%s9120 + $0xd8] sm:$0xf]
        %v9176 = vld [vmem:[%s9120 + $0xdc] sm:$0xf]
        %v9177 = vld [vmem:[%s9120 + $0xe0] sm:$0xf]
        %v9178 = vld [vmem:[%s9120 + $0xe4] sm:$0xf]
        %v9179 = vld [vmem:[%s9120 + $0xe8] sm:$0xf]
        %v9180 = vld [vmem:[%s9120 + $0xec] sm:$0xf]
        %v9181 = vunpack.c.l.bf16 %v9121
        %v9182 = vunpack.c.l.bf16 %v9122
        %v9183 = vunpack.c.l.bf16 %v9123
        %v9184 = vunpack.c.l.bf16 %v9124
        %v9185 = vunpack.c.l.bf16 %v9125
        %v9186 = vunpack.c.l.bf16 %v9126
        %v9187 = vunpack.c.l.bf16 %v9127
        %v9188 = vunpack.c.l.bf16 %v9128
        %v9189 = vunpack.c.l.bf16 %v9129
        %v9190 = vunpack.c.l.bf16 %v9130
        %v9191 = vunpack.c.l.bf16 %v9131
        %v9192 = vunpack.c.l.bf16 %v9132
        %v9193 = vunpack.c.l.bf16 %v9133
        %v9194 = vunpack.c.l.bf16 %v9134
        %v9195 = vunpack.c.l.bf16 %v9135
        %v9196 = vunpack.c.l.bf16 %v9136
        %v9197 = vunpack.c.l.bf16 %v9137
        %v9198 = vunpack.c.l.bf16 %v9138
        %v9199 = vunpack.c.l.bf16 %v9139
        %v9200 = vunpack.c.l.bf16 %v9140
        %v9201 = vunpack.c.l.bf16 %v9141
        %v9202 = vunpack.c.l.bf16 %v9142
        %v9203 = vunpack.c.l.bf16 %v9143
        %v9204 = vunpack.c.l.bf16 %v9144
        %v9205 = vunpack.c.l.bf16 %v9145
        %v9206 = vunpack.c.l.bf16 %v9146
        %v9207 = vunpack.c.l.bf16 %v9147
        %v9208 = vunpack.c.l.bf16 %v9148
        %v9209 = vunpack.c.l.bf16 %v9149
        %v9210 = vunpack.c.l.bf16 %v9150
        %v9211 = vunpack.c.l.bf16 %v9151
        %v9212 = vunpack.c.l.bf16 %v9152
        %v9213 = vunpack.c.l.bf16 %v9153
        %v9214 = vunpack.c.l.bf16 %v9154
        %v9215 = vunpack.c.l.bf16 %v9155
        %v9216 = vunpack.c.l.bf16 %v9156
        %v9217 = vunpack.c.l.bf16 %v9157
        %v9218 = vunpack.c.l.bf16 %v9158
        %v9219 = vunpack.c.l.bf16 %v9159
        %v9220 = vunpack.c.l.bf16 %v9160
        %v9221 = vunpack.c.l.bf16 %v9161
        %v9222 = vunpack.c.l.bf16 %v9162
        %v9223 = vunpack.c.l.bf16 %v9163
        %v9224 = vunpack.c.l.bf16 %v9164
        %v9225 = vunpack.c.l.bf16 %v9165
        %v9226 = vunpack.c.l.bf16 %v9166
        %v9227 = vunpack.c.l.bf16 %v9167
        %v9228 = vunpack.c.l.bf16 %v9168
        %v9229 = vunpack.c.l.bf16 %v9169
        %v9230 = vunpack.c.l.bf16 %v9170
        %v9231 = vunpack.c.l.bf16 %v9171
        %v9232 = vunpack.c.l.bf16 %v9172
        %v9233 = vunpack.c.l.bf16 %v9173
        %v9234 = vunpack.c.l.bf16 %v9174
        %v9235 = vunpack.c.l.bf16 %v9175
        %v9236 = vunpack.c.l.bf16 %v9176
        %v9237 = vunpack.c.l.bf16 %v9177
        %v9238 = vunpack.c.l.bf16 %v9178
        %v9239 = vunpack.c.l.bf16 %v9179
        %v9240 = vunpack.c.l.bf16 %v9180
        %v9241 = vrot.slane %v7217, 7
        %v9242 = vrot.slane %v7218, 7
        %v9243 = vrot.slane %v7219, 7
        %v9244 = vrot.slane %v7220, 7
        %v9248 = vsel %vm7346, %v9244, 0
        %9250 = vmatprep.subr.mxu0 0.0
        %9251 = vmatpush1.msra.mxu0 %v9181
        %9252 = vmatprep.subr.mxu0 0.0
        %9253 = vmatpush1.msra.mxu0 %v9182
        %9254 = vmatprep.subr.mxu0 0.0
        %9255 = vmatpush1.msra.mxu0 %v9183
        %9256 = vmatprep.subr.mxu0 0.0
        %9257 = vmatpush1.msra.mxu0 %v9184
        %9258 = vmatprep.subr.mxu0 0.0
        %9259 = vmatpush1.msra.mxu0 %v9185
        %9260 = vmatprep.subr.mxu0 0.0
        %9261 = vmatpush1.msra.mxu0 %v9186
        %9262 = vmatprep.subr.mxu0 0.0
        %9263 = vmatpush1.msra.mxu0 %v9187
        %9264 = vmatprep.subr.mxu0 0.0
        %9265 = vmatpush1.msra.mxu0 %v9188
        %9266 = vmatprep.subr.mxu0 0.0
        %9267 = vmatpush1.msra.mxu0 %v9189
        %9268 = vmatprep.subr.mxu0 0.0
        %9269 = vmatpush1.msra.mxu0 %v9190
        %9270 = vmatprep.subr.mxu0 0.0
        %9271 = vmatpush1.msra.mxu0 %v9191
        %9272 = vmatprep.subr.mxu0 0.0
        %9273 = vmatpush1.msra.mxu0 %v9192
        %9274 = vmatprep.subr.mxu0 0.0
        %9275 = vmatpush1.msra.mxu0 %v9193
        %9276 = vmatprep.subr.mxu0 0.0
        %9277 = vmatpush1.msra.mxu0 %v9194
        %9278 = vmatprep.subr.mxu0 0.0
        %9279 = vmatpush1.msra.mxu0 %v9195
        %9280 = vmatprep.subr.mxu0 0.0
        %9281 = vmatpush1.msra.mxu0 %v9196
        %9282 = vmatprep.subr.mxu0 0.0
        %9283 = vmatpush1.msra.mxu0 %v9197
        %9284 = vmatprep.subr.mxu0 0.0
        %9285 = vmatpush1.msra.mxu0 %v9198
        %9286 = vmatprep.subr.mxu0 0.0
        %9287 = vmatpush1.msra.mxu0 %v9199
        %9288 = vmatprep.subr.mxu0 0.0
        %9289 = vmatpush1.msra.mxu0 %v9200
        %9290 = vmatprep.subr.mxu0 0.0
        %9291 = vmatpush1.msra.mxu0 %v9201
        %9292 = vmatprep.subr.mxu0 0.0
        %9293 = vmatpush1.msra.mxu0 %v9202
        %9294 = vmatprep.subr.mxu0 0.0
        %9295 = vmatpush1.msra.mxu0 %v9203
        %9296 = vmatprep.subr.mxu0 0.0
        %9297 = vmatpush1.msra.mxu0 %v9204
        %9298 = vmatprep.subr.mxu0 0.0
        %9299 = vmatpush1.msra.mxu0 %v9205
        %9300 = vmatprep.subr.mxu0 0.0
        %9301 = vmatpush1.msra.mxu0 %v9206
        %9302 = vmatprep.subr.mxu0 0.0
        %9303 = vmatpush1.msra.mxu0 %v9207
        %9304 = vmatprep.subr.mxu0 0.0
        %9305 = vmatpush1.msra.mxu0 %v9208
        %9306 = vmatprep.subr.mxu0 0.0
        %9307 = vmatpush1.msra.mxu0 %v9209
        %9308 = vmatprep.subr.mxu0 0.0
        %9309 = vmatpush1.msra.mxu0 %v9210
        %9310 = vmatprep.subr.mxu0 0.0
        %9311 = vmatpush1.msra.mxu0 %v9211
        %9312 = vmatprep.subr.mxu0 0.0
        %9313 = vmatpush1.msra.mxu0 %v9212
        %9314 = vmatprep.mubr.f32.mxu0 %v9242
        %9315 = vmatmul.mubr.f32.gmra.mrb[0].mxu0 %v9241
        %v9316 = vpop.f32.mrb[0].mxu0
        %v9317 = vadd.f32 0.0, %v9316
        %v9318 = vpop.f32.mrb[0].mxu0
        %9319 = vdwg.mxu0
        %9320 = vmatprep.subr.mxu0 0.0
        %9321 = vmatpush1.msra.mxu0 %v9213
        %9322 = vmatprep.subr.mxu0 0.0
        %9323 = vmatpush1.msra.mxu0 %v9214
        %9324 = vmatprep.subr.mxu0 0.0
        %9325 = vmatpush1.msra.mxu0 %v9215
        %9326 = vmatprep.subr.mxu0 0.0
        %9327 = vmatpush1.msra.mxu0 %v9216
        %9328 = vmatprep.subr.mxu0 0.0
        %9329 = vmatpush1.msra.mxu0 %v9217
        %9330 = vmatprep.subr.mxu0 0.0
        %9331 = vmatpush1.msra.mxu0 %v9218
        %9332 = vmatprep.subr.mxu0 0.0
        %9333 = vmatpush1.msra.mxu0 %v9219
        %9334 = vmatprep.subr.mxu0 0.0
        %9335 = vmatpush1.msra.mxu0 %v9220
        %9336 = vmatprep.subr.mxu0 0.0
        %9337 = vmatpush1.msra.mxu0 %v9221
        %9338 = vmatprep.subr.mxu0 0.0
        %9339 = vmatpush1.msra.mxu0 %v9222
        %9340 = vmatprep.subr.mxu0 0.0
        %9341 = vmatpush1.msra.mxu0 %v9223
        %9342 = vmatprep.subr.mxu0 0.0
        %9343 = vmatpush1.msra.mxu0 %v9224
        %9344 = vmatprep.subr.mxu0 0.0
        %9345 = vmatpush1.msra.mxu0 %v9225
        %9346 = vmatprep.subr.mxu0 0.0
        %9347 = vmatpush1.msra.mxu0 %v9226
        %9348 = vmatprep.subr.mxu0 0.0
        %9349 = vmatpush1.msra.mxu0 %v9227
        %9350 = vmatprep.subr.mxu0 0.0
        %9351 = vmatpush1.msra.mxu0 %v9228
        %9352 = vmatprep.subr.mxu0 0.0
        %9353 = vmatpush1.msra.mxu0 %v9229
        %9354 = vmatprep.subr.mxu0 0.0
        %9355 = vmatpush1.msra.mxu0 %v9230
        %9356 = vmatprep.subr.mxu0 0.0
        %9357 = vmatpush1.msra.mxu0 %v9231
        %9358 = vmatprep.subr.mxu0 0.0
        %9359 = vmatpush1.msra.mxu0 %v9232
        %9360 = vmatprep.subr.mxu0 0.0
        %9361 = vmatpush1.msra.mxu0 %v9233
        %9362 = vmatprep.subr.mxu0 0.0
        %9363 = vmatpush1.msra.mxu0 %v9234
        %9364 = vmatprep.subr.mxu0 0.0
        %9365 = vmatpush1.msra.mxu0 %v9235
        %9366 = vmatprep.subr.mxu0 0.0
        %9367 = vmatpush1.msra.mxu0 %v9236
        %9368 = vmatprep.subr.mxu0 0.0
        %9369 = vmatpush1.msra.mxu0 %v9237
        %9370 = vmatprep.subr.mxu0 0.0
        %9371 = vmatpush1.msra.mxu0 %v9238
        %9372 = vmatprep.subr.mxu0 0.0
        %9373 = vmatpush1.msra.mxu0 %v9239
        %9374 = vmatprep.subr.mxu0 0.0
        %9375 = vmatpush1.msra.mxu0 %v9240
        %9376 = vmatprep.subr.mxu0 0.0
        %9377 = vmatpush1.msra.mxu0 0.0
        %9378 = vmatprep.subr.mxu0 0.0
        %9379 = vmatpush1.msra.mxu0 0.0
        %9380 = vmatprep.subr.mxu0 0.0
        %9381 = vmatpush1.msra.mxu0 0.0
        %9382 = vmatprep.subr.mxu0 0.0
        %9383 = vmatpush1.msra.mxu0 0.0
        %9384 = vmatprep.mubr.f32.mxu0 %v9248
        %9385 = vmatmul.mubr.f32.gmra.mrb[0].mxu0 %v9243
        %v9386 = vpop.f32.mrb[0].mxu0
        %v9387 = vadd.f32 %v9317, %v9386
        %v9388 = vpop.f32.mrb[0].mxu0
        %9389 = vdwg.mxu0
        %v9390 = vadd.f32 %v9119, %v9387
        %s9391 = scalar_lea.vmem %s10, 1920
        %v9392 = vld [vmem:[%s9391] sm:$0xf]
        %v9393 = vld [vmem:[%s9391 + $0x4] sm:$0xf]
        %v9394 = vld [vmem:[%s9391 + $0x8] sm:$0xf]
        %v9395 = vld [vmem:[%s9391 + $0xc] sm:$0xf]
        %v9396 = vld [vmem:[%s9391 + $0x10] sm:$0xf]
        %v9397 = vld [vmem:[%s9391 + $0x14] sm:$0xf]
        %v9398 = vld [vmem:[%s9391 + $0x18] sm:$0xf]
        %v9399 = vld [vmem:[%s9391 + $0x1c] sm:$0xf]
        %v9400 = vld [vmem:[%s9391 + $0x20] sm:$0xf]
        %v9401 = vld [vmem:[%s9391 + $0x24] sm:$0xf]
        %v9402 = vld [vmem:[%s9391 + $0x28] sm:$0xf]
        %v9403 = vld [vmem:[%s9391 + $0x2c] sm:$0xf]
        %v9404 = vld [vmem:[%s9391 + $0x30] sm:$0xf]
        %v9405 = vld [vmem:[%s9391 + $0x34] sm:$0xf]
        %v9406 = vld [vmem:[%s9391 + $0x38] sm:$0xf]
        %v9407 = vld [vmem:[%s9391 + $0x3c] sm:$0xf]
        %v9408 = vld [vmem:[%s9391 + $0x40] sm:$0xf]
        %v9409 = vld [vmem:[%s9391 + $0x44] sm:$0xf]
        %v9410 = vld [vmem:[%s9391 + $0x48] sm:$0xf]
        %v9411 = vld [vmem:[%s9391 + $0x4c] sm:$0xf]
        %v9412 = vld [vmem:[%s9391 + $0x50] sm:$0xf]
        %v9413 = vld [vmem:[%s9391 + $0x54] sm:$0xf]
        %v9414 = vld [vmem:[%s9391 + $0x58] sm:$0xf]
        %v9415 = vld [vmem:[%s9391 + $0x5c] sm:$0xf]
        %v9416 = vld [vmem:[%s9391 + $0x60] sm:$0xf]
        %v9417 = vld [vmem:[%s9391 + $0x64] sm:$0xf]
        %v9418 = vld [vmem:[%s9391 + $0x68] sm:$0xf]
        %v9419 = vld [vmem:[%s9391 + $0x6c] sm:$0xf]
        %v9420 = vld [vmem:[%s9391 + $0x70] sm:$0xf]
        %v9421 = vld [vmem:[%s9391 + $0x74] sm:$0xf]
        %v9422 = vld [vmem:[%s9391 + $0x78] sm:$0xf]
        %v9423 = vld [vmem:[%s9391 + $0x7c] sm:$0xf]
        %v9424 = vld [vmem:[%s9391 + $0x80] sm:$0xf]
        %v9425 = vld [vmem:[%s9391 + $0x84] sm:$0xf]
        %v9426 = vld [vmem:[%s9391 + $0x88] sm:$0xf]
        %v9427 = vld [vmem:[%s9391 + $0x8c] sm:$0xf]
        %v9428 = vld [vmem:[%s9391 + $0x90] sm:$0xf]
        %v9429 = vld [vmem:[%s9391 + $0x94] sm:$0xf]
        %v9430 = vld [vmem:[%s9391 + $0x98] sm:$0xf]
        %v9431 = vld [vmem:[%s9391 + $0x9c] sm:$0xf]
        %v9432 = vld [vmem:[%s9391 + $0xa0] sm:$0xf]
        %v9433 = vld [vmem:[%s9391 + $0xa4] sm:$0xf]
        %v9434 = vld [vmem:[%s9391 + $0xa8] sm:$0xf]
        %v9435 = vld [vmem:[%s9391 + $0xac] sm:$0xf]
        %v9436 = vld [vmem:[%s9391 + $0xb0] sm:$0xf]
        %v9437 = vld [vmem:[%s9391 + $0xb4] sm:$0xf]
        %v9438 = vld [vmem:[%s9391 + $0xb8] sm:$0xf]
        %v9439 = vld [vmem:[%s9391 + $0xbc] sm:$0xf]
        %v9440 = vld [vmem:[%s9391 + $0xc0] sm:$0xf]
        %v9441 = vld [vmem:[%s9391 + $0xc4] sm:$0xf]
        %v9442 = vld [vmem:[%s9391 + $0xc8] sm:$0xf]
        %v9443 = vld [vmem:[%s9391 + $0xcc] sm:$0xf]
        %v9444 = vld [vmem:[%s9391 + $0xd0] sm:$0xf]
        %v9445 = vld [vmem:[%s9391 + $0xd4] sm:$0xf]
        %v9446 = vld [vmem:[%s9391 + $0xd8] sm:$0xf]
        %v9447 = vld [vmem:[%s9391 + $0xdc] sm:$0xf]
        %v9448 = vld [vmem:[%s9391 + $0xe0] sm:$0xf]
        %v9449 = vld [vmem:[%s9391 + $0xe4] sm:$0xf]
        %v9450 = vld [vmem:[%s9391 + $0xe8] sm:$0xf]
        %v9451 = vld [vmem:[%s9391 + $0xec] sm:$0xf]
        %v9452 = vunpack.c.l.bf16 %v9392
        %v9453 = vunpack.c.l.bf16 %v9393
        %v9454 = vunpack.c.l.bf16 %v9394
        %v9455 = vunpack.c.l.bf16 %v9395
        %v9456 = vunpack.c.l.bf16 %v9396
        %v9457 = vunpack.c.l.bf16 %v9397
        %v9458 = vunpack.c.l.bf16 %v9398
        %v9459 = vunpack.c.l.bf16 %v9399
        %v9460 = vunpack.c.l.bf16 %v9400
        %v9461 = vunpack.c.l.bf16 %v9401
        %v9462 = vunpack.c.l.bf16 %v9402
        %v9463 = vunpack.c.l.bf16 %v9403
        %v9464 = vunpack.c.l.bf16 %v9404
        %v9465 = vunpack.c.l.bf16 %v9405
        %v9466 = vunpack.c.l.bf16 %v9406
        %v9467 = vunpack.c.l.bf16 %v9407
        %v9468 = vunpack.c.l.bf16 %v9408
        %v9469 = vunpack.c.l.bf16 %v9409
        %v9470 = vunpack.c.l.bf16 %v9410
        %v9471 = vunpack.c.l.bf16 %v9411
        %v9472 = vunpack.c.l.bf16 %v9412
        %v9473 = vunpack.c.l.bf16 %v9413
        %v9474 = vunpack.c.l.bf16 %v9414
        %v9475 = vunpack.c.l.bf16 %v9415
        %v9476 = vunpack.c.l.bf16 %v9416
        %v9477 = vunpack.c.l.bf16 %v9417
        %v9478 = vunpack.c.l.bf16 %v9418
        %v9479 = vunpack.c.l.bf16 %v9419
        %v9480 = vunpack.c.l.bf16 %v9420
        %v9481 = vunpack.c.l.bf16 %v9421
        %v9482 = vunpack.c.l.bf16 %v9422
        %v9483 = vunpack.c.l.bf16 %v9423
        %v9484 = vunpack.c.l.bf16 %v9424
        %v9485 = vunpack.c.l.bf16 %v9425
        %v9486 = vunpack.c.l.bf16 %v9426
        %v9487 = vunpack.c.l.bf16 %v9427
        %v9488 = vunpack.c.l.bf16 %v9428
        %v9489 = vunpack.c.l.bf16 %v9429
        %v9490 = vunpack.c.l.bf16 %v9430
        %v9491 = vunpack.c.l.bf16 %v9431
        %v9492 = vunpack.c.l.bf16 %v9432
        %v9493 = vunpack.c.l.bf16 %v9433
        %v9494 = vunpack.c.l.bf16 %v9434
        %v9495 = vunpack.c.l.bf16 %v9435
        %v9496 = vunpack.c.l.bf16 %v9436
        %v9497 = vunpack.c.l.bf16 %v9437
        %v9498 = vunpack.c.l.bf16 %v9438
        %v9499 = vunpack.c.l.bf16 %v9439
        %v9500 = vunpack.c.l.bf16 %v9440
        %v9501 = vunpack.c.l.bf16 %v9441
        %v9502 = vunpack.c.l.bf16 %v9442
        %v9503 = vunpack.c.l.bf16 %v9443
        %v9504 = vunpack.c.l.bf16 %v9444
        %v9505 = vunpack.c.l.bf16 %v9445
        %v9506 = vunpack.c.l.bf16 %v9446
        %v9507 = vunpack.c.l.bf16 %v9447
        %v9508 = vunpack.c.l.bf16 %v9448
        %v9509 = vunpack.c.l.bf16 %v9449
        %v9510 = vunpack.c.l.bf16 %v9450
        %v9511 = vunpack.c.l.bf16 %v9451
        %v9513 = vsel %vm7346, %v7224, 0
        %9515 = vmatprep.subr.mxu0 0.0
        %9516 = vmatpush1.msra.mxu0 %v9452
        %9517 = vmatprep.subr.mxu0 0.0
        %9518 = vmatpush1.msra.mxu0 %v9453
        %9519 = vmatprep.subr.mxu0 0.0
        %9520 = vmatpush1.msra.mxu0 %v9454
        %9521 = vmatprep.subr.mxu0 0.0
        %9522 = vmatpush1.msra.mxu0 %v9455
        %9523 = vmatprep.subr.mxu0 0.0
        %9524 = vmatpush1.msra.mxu0 %v9456
        %9525 = vmatprep.subr.mxu0 0.0
        %9526 = vmatpush1.msra.mxu0 %v9457
        %9527 = vmatprep.subr.mxu0 0.0
        %9528 = vmatpush1.msra.mxu0 %v9458
        %9529 = vmatprep.subr.mxu0 0.0
        %9530 = vmatpush1.msra.mxu0 %v9459
        %9531 = vmatprep.subr.mxu0 0.0
        %9532 = vmatpush1.msra.mxu0 %v9460
        %9533 = vmatprep.subr.mxu0 0.0
        %9534 = vmatpush1.msra.mxu0 %v9461
        %9535 = vmatprep.subr.mxu0 0.0
        %9536 = vmatpush1.msra.mxu0 %v9462
        %9537 = vmatprep.subr.mxu0 0.0
        %9538 = vmatpush1.msra.mxu0 %v9463
        %9539 = vmatprep.subr.mxu0 0.0
        %9540 = vmatpush1.msra.mxu0 %v9464
        %9541 = vmatprep.subr.mxu0 0.0
        %9542 = vmatpush1.msra.mxu0 %v9465
        %9543 = vmatprep.subr.mxu0 0.0
        %9544 = vmatpush1.msra.mxu0 %v9466
        %9545 = vmatprep.subr.mxu0 0.0
        %9546 = vmatpush1.msra.mxu0 %v9467
        %9547 = vmatprep.subr.mxu0 0.0
        %9548 = vmatpush1.msra.mxu0 %v9468
        %9549 = vmatprep.subr.mxu0 0.0
        %9550 = vmatpush1.msra.mxu0 %v9469
        %9551 = vmatprep.subr.mxu0 0.0
        %9552 = vmatpush1.msra.mxu0 %v9470
        %9553 = vmatprep.subr.mxu0 0.0
        %9554 = vmatpush1.msra.mxu0 %v9471
        %9555 = vmatprep.subr.mxu0 0.0
        %9556 = vmatpush1.msra.mxu0 %v9472
        %9557 = vmatprep.subr.mxu0 0.0
        %9558 = vmatpush1.msra.mxu0 %v9473
        %9559 = vmatprep.subr.mxu0 0.0
        %9560 = vmatpush1.msra.mxu0 %v9474
        %9561 = vmatprep.subr.mxu0 0.0
        %9562 = vmatpush1.msra.mxu0 %v9475
        %9563 = vmatprep.subr.mxu0 0.0
        %9564 = vmatpush1.msra.mxu0 %v9476
        %9565 = vmatprep.subr.mxu0 0.0
        %9566 = vmatpush1.msra.mxu0 %v9477
        %9567 = vmatprep.subr.mxu0 0.0
        %9568 = vmatpush1.msra.mxu0 %v9478
        %9569 = vmatprep.subr.mxu0 0.0
        %9570 = vmatpush1.msra.mxu0 %v9479
        %9571 = vmatprep.subr.mxu0 0.0
        %9572 = vmatpush1.msra.mxu0 %v9480
        %9573 = vmatprep.subr.mxu0 0.0
        %9574 = vmatpush1.msra.mxu0 %v9481
        %9575 = vmatprep.subr.mxu0 0.0
        %9576 = vmatpush1.msra.mxu0 %v9482
        %9577 = vmatprep.subr.mxu0 0.0
        %9578 = vmatpush1.msra.mxu0 %v9483
        %9579 = vmatprep.mubr.f32.mxu0 %v7222
        %9580 = vmatmul.mubr.f32.gmra.mrb[0].mxu0 %v7221
        %v9581 = vpop.f32.mrb[0].mxu0
        %v9582 = vadd.f32 0.0, %v9581
        %v9583 = vpop.f32.mrb[0].mxu0
        %9584 = vdwg.mxu0
        %9585 = vmatprep.subr.mxu0 0.0
        %9586 = vmatpush1.msra.mxu0 %v9484
        %9587 = vmatprep.subr.mxu0 0.0
        %9588 = vmatpush1.msra.mxu0 %v9485
        %9589 = vmatprep.subr.mxu0 0.0
        %9590 = vmatpush1.msra.mxu0 %v9486
        %9591 = vmatprep.subr.mxu0 0.0
        %9592 = vmatpush1.msra.mxu0 %v9487
        %9593 = vmatprep.subr.mxu0 0.0
        %9594 = vmatpush1.msra.mxu0 %v9488
        %9595 = vmatprep.subr.mxu0 0.0
        %9596 = vmatpush1.msra.mxu0 %v9489
        %9597 = vmatprep.subr.mxu0 0.0
        %9598 = vmatpush1.msra.mxu0 %v9490
        %9599 = vmatprep.subr.mxu0 0.0
        %9600 = vmatpush1.msra.mxu0 %v9491
        %9601 = vmatprep.subr.mxu0 0.0
        %9602 = vmatpush1.msra.mxu0 %v9492
        %9603 = vmatprep.subr.mxu0 0.0
        %9604 = vmatpush1.msra.mxu0 %v9493
        %9605 = vmatprep.subr.mxu0 0.0
        %9606 = vmatpush1.msra.mxu0 %v9494
        %9607 = vmatprep.subr.mxu0 0.0
        %9608 = vmatpush1.msra.mxu0 %v9495
        %9609 = vmatprep.subr.mxu0 0.0
        %9610 = vmatpush1.msra.mxu0 %v9496
        %9611 = vmatprep.subr.mxu0 0.0
        %9612 = vmatpush1.msra.mxu0 %v9497
        %9613 = vmatprep.subr.mxu0 0.0
        %9614 = vmatpush1.msra.mxu0 %v9498
        %9615 = vmatprep.subr.mxu0 0.0
        %9616 = vmatpush1.msra.mxu0 %v9499
        %9617 = vmatprep.subr.mxu0 0.0
        %9618 = vmatpush1.msra.mxu0 %v9500
        %9619 = vmatprep.subr.mxu0 0.0
        %9620 = vmatpush1.msra.mxu0 %v9501
        %9621 = vmatprep.subr.mxu0 0.0
        %9622 = vmatpush1.msra.mxu0 %v9502
        %9623 = vmatprep.subr.mxu0 0.0
        %9624 = vmatpush1.msra.mxu0 %v9503
        %9625 = vmatprep.subr.mxu0 0.0
        %9626 = vmatpush1.msra.mxu0 %v9504
        %9627 = vmatprep.subr.mxu0 0.0
        %9628 = vmatpush1.msra.mxu0 %v9505
        %9629 = vmatprep.subr.mxu0 0.0
        %9630 = vmatpush1.msra.mxu0 %v9506
        %9631 = vmatprep.subr.mxu0 0.0
        %9632 = vmatpush1.msra.mxu0 %v9507
        %9633 = vmatprep.subr.mxu0 0.0
        %9634 = vmatpush1.msra.mxu0 %v9508
        %9635 = vmatprep.subr.mxu0 0.0
        %9636 = vmatpush1.msra.mxu0 %v9509
        %9637 = vmatprep.subr.mxu0 0.0
        %9638 = vmatpush1.msra.mxu0 %v9510
        %9639 = vmatprep.subr.mxu0 0.0
        %9640 = vmatpush1.msra.mxu0 %v9511
        %9641 = vmatprep.subr.mxu0 0.0
        %9642 = vmatpush1.msra.mxu0 0.0
        %9643 = vmatprep.subr.mxu0 0.0
        %9644 = vmatpush1.msra.mxu0 0.0
        %9645 = vmatprep.subr.mxu0 0.0
        %9646 = vmatpush1.msra.mxu0 0.0
        %9647 = vmatprep.subr.mxu0 0.0
        %9648 = vmatpush1.msra.mxu0 0.0
        %9649 = vmatprep.mubr.f32.mxu0 %v9513
        %9650 = vmatmul.mubr.f32.gmra.mrb[0].mxu0 %v7223
        %v9651 = vpop.f32.mrb[0].mxu0
        %v9652 = vadd.f32 %v9582, %v9651
        %v9653 = vpop.f32.mrb[0].mxu0
        %9654 = vdwg.mxu0
        %v9655 = vadd.f32 %v9390, %v9652
        %s9656 = scalar_lea.vmem %s10, 2160
        %v9657 = vld [vmem:[%s9656] sm:$0xf]
        %v9658 = vld [vmem:[%s9656 + $0x4] sm:$0xf]
        %v9659 = vld [vmem:[%s9656 + $0x8] sm:$0xf]
        %v9660 = vld [vmem:[%s9656 + $0xc] sm:$0xf]
        %v9661 = vld [vmem:[%s9656 + $0x10] sm:$0xf]
        %v9662 = vld [vmem:[%s9656 + $0x14] sm:$0xf]
        %v9663 = vld [vmem:[%s9656 + $0x18] sm:$0xf]
        %v9664 = vld [vmem:[%s9656 + $0x1c] sm:$0xf]
        %v9665 = vld [vmem:[%s9656 + $0x20] sm:$0xf]
        %v9666 = vld [vmem:[%s9656 + $0x24] sm:$0xf]
        %v9667 = vld [vmem:[%s9656 + $0x28] sm:$0xf]
        %v9668 = vld [vmem:[%s9656 + $0x2c] sm:$0xf]
        %v9669 = vld [vmem:[%s9656 + $0x30] sm:$0xf]
        %v9670 = vld [vmem:[%s9656 + $0x34] sm:$0xf]
        %v9671 = vld [vmem:[%s9656 + $0x38] sm:$0xf]
        %v9672 = vld [vmem:[%s9656 + $0x3c] sm:$0xf]
        %v9673 = vld [vmem:[%s9656 + $0x40] sm:$0xf]
        %v9674 = vld [vmem:[%s9656 + $0x44] sm:$0xf]
        %v9675 = vld [vmem:[%s9656 + $0x48] sm:$0xf]
        %v9676 = vld [vmem:[%s9656 + $0x4c] sm:$0xf]
        %v9677 = vld [vmem:[%s9656 + $0x50] sm:$0xf]
        %v9678 = vld [vmem:[%s9656 + $0x54] sm:$0xf]
        %v9679 = vld [vmem:[%s9656 + $0x58] sm:$0xf]
        %v9680 = vld [vmem:[%s9656 + $0x5c] sm:$0xf]
        %v9681 = vld [vmem:[%s9656 + $0x60] sm:$0xf]
        %v9682 = vld [vmem:[%s9656 + $0x64] sm:$0xf]
        %v9683 = vld [vmem:[%s9656 + $0x68] sm:$0xf]
        %v9684 = vld [vmem:[%s9656 + $0x6c] sm:$0xf]
        %v9685 = vld [vmem:[%s9656 + $0x70] sm:$0xf]
        %v9686 = vld [vmem:[%s9656 + $0x74] sm:$0xf]
        %v9687 = vld [vmem:[%s9656 + $0x78] sm:$0xf]
        %v9688 = vld [vmem:[%s9656 + $0x7c] sm:$0xf]
        %v9689 = vld [vmem:[%s9656 + $0x80] sm:$0xf]
        %v9690 = vld [vmem:[%s9656 + $0x84] sm:$0xf]
        %v9691 = vld [vmem:[%s9656 + $0x88] sm:$0xf]
        %v9692 = vld [vmem:[%s9656 + $0x8c] sm:$0xf]
        %v9693 = vld [vmem:[%s9656 + $0x90] sm:$0xf]
        %v9694 = vld [vmem:[%s9656 + $0x94] sm:$0xf]
        %v9695 = vld [vmem:[%s9656 + $0x98] sm:$0xf]
        %v9696 = vld [vmem:[%s9656 + $0x9c] sm:$0xf]
        %v9697 = vld [vmem:[%s9656 + $0xa0] sm:$0xf]
        %v9698 = vld [vmem:[%s9656 + $0xa4] sm:$0xf]
        %v9699 = vld [vmem:[%s9656 + $0xa8] sm:$0xf]
        %v9700 = vld [vmem:[%s9656 + $0xac] sm:$0xf]
        %v9701 = vld [vmem:[%s9656 + $0xb0] sm:$0xf]
        %v9702 = vld [vmem:[%s9656 + $0xb4] sm:$0xf]
        %v9703 = vld [vmem:[%s9656 + $0xb8] sm:$0xf]
        %v9704 = vld [vmem:[%s9656 + $0xbc] sm:$0xf]
        %v9705 = vld [vmem:[%s9656 + $0xc0] sm:$0xf]
        %v9706 = vld [vmem:[%s9656 + $0xc4] sm:$0xf]
        %v9707 = vld [vmem:[%s9656 + $0xc8] sm:$0xf]
        %v9708 = vld [vmem:[%s9656 + $0xcc] sm:$0xf]
        %v9709 = vld [vmem:[%s9656 + $0xd0] sm:$0xf]
        %v9710 = vld [vmem:[%s9656 + $0xd4] sm:$0xf]
        %v9711 = vld [vmem:[%s9656 + $0xd8] sm:$0xf]
        %v9712 = vld [vmem:[%s9656 + $0xdc] sm:$0xf]
        %v9713 = vld [vmem:[%s9656 + $0xe0] sm:$0xf]
        %v9714 = vld [vmem:[%s9656 + $0xe4] sm:$0xf]
        %v9715 = vld [vmem:[%s9656 + $0xe8] sm:$0xf]
        %v9716 = vld [vmem:[%s9656 + $0xec] sm:$0xf]
        %v9717 = vunpack.c.l.bf16 %v9657
        %v9718 = vunpack.c.l.bf16 %v9658
        %v9719 = vunpack.c.l.bf16 %v9659
        %v9720 = vunpack.c.l.bf16 %v9660
        %v9721 = vunpack.c.l.bf16 %v9661
        %v9722 = vunpack.c.l.bf16 %v9662
        %v9723 = vunpack.c.l.bf16 %v9663
        %v9724 = vunpack.c.l.bf16 %v9664
        %v9725 = vunpack.c.l.bf16 %v9665
        %v9726 = vunpack.c.l.bf16 %v9666
        %v9727 = vunpack.c.l.bf16 %v9667
        %v9728 = vunpack.c.l.bf16 %v9668
        %v9729 = vunpack.c.l.bf16 %v9669
        %v9730 = vunpack.c.l.bf16 %v9670
        %v9731 = vunpack.c.l.bf16 %v9671
        %v9732 = vunpack.c.l.bf16 %v9672
        %v9733 = vunpack.c.l.bf16 %v9673
        %v9734 = vunpack.c.l.bf16 %v9674
        %v9735 = vunpack.c.l.bf16 %v9675
        %v9736 = vunpack.c.l.bf16 %v9676
        %v9737 = vunpack.c.l.bf16 %v9677
        %v9738 = vunpack.c.l.bf16 %v9678
        %v9739 = vunpack.c.l.bf16 %v9679
        %v9740 = vunpack.c.l.bf16 %v9680
        %v9741 = vunpack.c.l.bf16 %v9681
        %v9742 = vunpack.c.l.bf16 %v9682
        %v9743 = vunpack.c.l.bf16 %v9683
        %v9744 = vunpack.c.l.bf16 %v9684
        %v9745 = vunpack.c.l.bf16 %v9685
        %v9746 = vunpack.c.l.bf16 %v9686
        %v9747 = vunpack.c.l.bf16 %v9687
        %v9748 = vunpack.c.l.bf16 %v9688
        %v9749 = vunpack.c.l.bf16 %v9689
        %v9750 = vunpack.c.l.bf16 %v9690
        %v9751 = vunpack.c.l.bf16 %v9691
        %v9752 = vunpack.c.l.bf16 %v9692
        %v9753 = vunpack.c.l.bf16 %v9693
        %v9754 = vunpack.c.l.bf16 %v9694
        %v9755 = vunpack.c.l.bf16 %v9695
        %v9756 = vunpack.c.l.bf16 %v9696
        %v9757 = vunpack.c.l.bf16 %v9697
        %v9758 = vunpack.c.l.bf16 %v9698
        %v9759 = vunpack.c.l.bf16 %v9699
        %v9760 = vunpack.c.l.bf16 %v9700
        %v9761 = vunpack.c.l.bf16 %v9701
        %v9762 = vunpack.c.l.bf16 %v9702
        %v9763 = vunpack.c.l.bf16 %v9703
        %v9764 = vunpack.c.l.bf16 %v9704
        %v9765 = vunpack.c.l.bf16 %v9705
        %v9766 = vunpack.c.l.bf16 %v9706
        %v9767 = vunpack.c.l.bf16 %v9707
        %v9768 = vunpack.c.l.bf16 %v9708
        %v9769 = vunpack.c.l.bf16 %v9709
        %v9770 = vunpack.c.l.bf16 %v9710
        %v9771 = vunpack.c.l.bf16 %v9711
        %v9772 = vunpack.c.l.bf16 %v9712
        %v9773 = vunpack.c.l.bf16 %v9713
        %v9774 = vunpack.c.l.bf16 %v9714
        %v9775 = vunpack.c.l.bf16 %v9715
        %v9776 = vunpack.c.l.bf16 %v9716
        %v9780 = vrot.slane %v7221, 1
        %v9781 = vrot.slane %v7222, 1
        %v9782 = vrot.slane %v7223, 1
        %v9783 = vrot.slane %v7224, 1
        %v9787 = vsel %vm7346, %v9783, 0
        %9789 = vmatprep.subr.mxu0 0.0
        %9790 = vmatpush1.msra.mxu0 %v9717
        %9791 = vmatprep.subr.mxu0 0.0
        %9792 = vmatpush1.msra.mxu0 %v9718
        %9793 = vmatprep.subr.mxu0 0.0
        %9794 = vmatpush1.msra.mxu0 %v9719
        %9795 = vmatprep.subr.mxu0 0.0
        %9796 = vmatpush1.msra.mxu0 %v9720
        %9797 = vmatprep.subr.mxu0 0.0
        %9798 = vmatpush1.msra.mxu0 %v9721
        %9799 = vmatprep.subr.mxu0 0.0
        %9800 = vmatpush1.msra.mxu0 %v9722
        %9801 = vmatprep.subr.mxu0 0.0
        %9802 = vmatpush1.msra.mxu0 %v9723
        %9803 = vmatprep.subr.mxu0 0.0
        %9804 = vmatpush1.msra.mxu0 %v9724
        %9805 = vmatprep.subr.mxu0 0.0
        %9806 = vmatpush1.msra.mxu0 %v9725
        %9807 = vmatprep.subr.mxu0 0.0
        %9808 = vmatpush1.msra.mxu0 %v9726
        %9809 = vmatprep.subr.mxu0 0.0
        %9810 = vmatpush1.msra.mxu0 %v9727
        %9811 = vmatprep.subr.mxu0 0.0
        %9812 = vmatpush1.msra.mxu0 %v9728
        %9813 = vmatprep.subr.mxu0 0.0
        %9814 = vmatpush1.msra.mxu0 %v9729
        %9815 = vmatprep.subr.mxu0 0.0
        %9816 = vmatpush1.msra.mxu0 %v9730
        %9817 = vmatprep.subr.mxu0 0.0
        %9818 = vmatpush1.msra.mxu0 %v9731
        %9819 = vmatprep.subr.mxu0 0.0
        %9820 = vmatpush1.msra.mxu0 %v9732
        %9821 = vmatprep.subr.mxu0 0.0
        %9822 = vmatpush1.msra.mxu0 %v9733
        %9823 = vmatprep.subr.mxu0 0.0
        %9824 = vmatpush1.msra.mxu0 %v9734
        %9825 = vmatprep.subr.mxu0 0.0
        %9826 = vmatpush1.msra.mxu0 %v9735
        %9827 = vmatprep.subr.mxu0 0.0
        %9828 = vmatpush1.msra.mxu0 %v9736
        %9829 = vmatprep.subr.mxu0 0.0
        %9830 = vmatpush1.msra.mxu0 %v9737
        %9831 = vmatprep.subr.mxu0 0.0
        %9832 = vmatpush1.msra.mxu0 %v9738
        %9833 = vmatprep.subr.mxu0 0.0
        %9834 = vmatpush1.msra.mxu0 %v9739
        %9835 = vmatprep.subr.mxu0 0.0
        %9836 = vmatpush1.msra.mxu0 %v9740
        %9837 = vmatprep.subr.mxu0 0.0
        %9838 = vmatpush1.msra.mxu0 %v9741
        %9839 = vmatprep.subr.mxu0 0.0
        %9840 = vmatpush1.msra.mxu0 %v9742
        %9841 = vmatprep.subr.mxu0 0.0
        %9842 = vmatpush1.msra.mxu0 %v9743
        %9843 = vmatprep.subr.mxu0 0.0
        %9844 = vmatpush1.msra.mxu0 %v9744
        %9845 = vmatprep.subr.mxu0 0.0
        %9846 = vmatpush1.msra.mxu0 %v9745
        %9847 = vmatprep.subr.mxu0 0.0
        %9848 = vmatpush1.msra.mxu0 %v9746
        %9849 = vmatprep.subr.mxu0 0.0
        %9850 = vmatpush1.msra.mxu0 %v9747
        %9851 = vmatprep.subr.mxu0 0.0
        %9852 = vmatpush1.msra.mxu0 %v9748
        %9853 = vmatprep.mubr.f32.mxu0 %v9781
        %9854 = vmatmul.mubr.f32.gmra.mrb[0].mxu0 %v9780
        %v9855 = vpop.f32.mrb[0].mxu0
        %v9856 = vadd.f32 0.0, %v9855
        %v9857 = vpop.f32.mrb[0].mxu0
        %9858 = vdwg.mxu0
        %9859 = vmatprep.subr.mxu0 0.0
        %9860 = vmatpush1.msra.mxu0 %v9749
        %9861 = vmatprep.subr.mxu0 0.0
        %9862 = vmatpush1.msra.mxu0 %v9750
        %9863 = vmatprep.subr.mxu0 0.0
        %9864 = vmatpush1.msra.mxu0 %v9751
        %9865 = vmatprep.subr.mxu0 0.0
        %9866 = vmatpush1.msra.mxu0 %v9752
        %9867 = vmatprep.subr.mxu0 0.0
        %9868 = vmatpush1.msra.mxu0 %v9753
        %9869 = vmatprep.subr.mxu0 0.0
        %9870 = vmatpush1.msra.mxu0 %v9754
        %9871 = vmatprep.subr.mxu0 0.0
        %9872 = vmatpush1.msra.mxu0 %v9755
        %9873 = vmatprep.subr.mxu0 0.0
        %9874 = vmatpush1.msra.mxu0 %v9756
        %9875 = vmatprep.subr.mxu0 0.0
        %9876 = vmatpush1.msra.mxu0 %v9757
        %9877 = vmatprep.subr.mxu0 0.0
        %9878 = vmatpush1.msra.mxu0 %v9758
        %9879 = vmatprep.subr.mxu0 0.0
        %9880 = vmatpush1.msra.mxu0 %v9759
        %9881 = vmatprep.subr.mxu0 0.0
        %9882 = vmatpush1.msra.mxu0 %v9760
        %9883 = vmatprep.subr.mxu0 0.0
        %9884 = vmatpush1.msra.mxu0 %v9761
        %9885 = vmatprep.subr.mxu0 0.0
        %9886 = vmatpush1.msra.mxu0 %v9762
        %9887 = vmatprep.subr.mxu0 0.0
        %9888 = vmatpush1.msra.mxu0 %v9763
        %9889 = vmatprep.subr.mxu0 0.0
        %9890 = vmatpush1.msra.mxu0 %v9764
        %9891 = vmatprep.subr.mxu0 0.0
        %9892 = vmatpush1.msra.mxu0 %v9765
        %9893 = vmatprep.subr.mxu0 0.0
        %9894 = vmatpush1.msra.mxu0 %v9766
        %9895 = vmatprep.subr.mxu0 0.0
        %9896 = vmatpush1.msra.mxu0 %v9767
        %9897 = vmatprep.subr.mxu0 0.0
        %9898 = vmatpush1.msra.mxu0 %v9768
        %9899 = vmatprep.subr.mxu0 0.0
        %9900 = vmatpush1.msra.mxu0 %v9769
        %9901 = vmatprep.subr.mxu0 0.0
        %9902 = vmatpush1.msra.mxu0 %v9770
        %9903 = vmatprep.subr.mxu0 0.0
        %9904 = vmatpush1.msra.mxu0 %v9771
        %9905 = vmatprep.subr.mxu0 0.0
        %9906 = vmatpush1.msra.mxu0 %v9772
        %9907 = vmatprep.subr.mxu0 0.0
        %9908 = vmatpush1.msra.mxu0 %v9773
        %9909 = vmatprep.subr.mxu0 0.0
        %9910 = vmatpush1.msra.mxu0 %v9774
        %9911 = vmatprep.subr.mxu0 0.0
        %9912 = vmatpush1.msra.mxu0 %v9775
        %9913 = vmatprep.subr.mxu0 0.0
        %9914 = vmatpush1.msra.mxu0 %v9776
        %9915 = vmatprep.subr.mxu0 0.0
        %9916 = vmatpush1.msra.mxu0 0.0
        %9917 = vmatprep.subr.mxu0 0.0
        %9918 = vmatpush1.msra.mxu0 0.0
        %9919 = vmatprep.subr.mxu0 0.0
        %9920 = vmatpush1.msra.mxu0 0.0
        %9921 = vmatprep.subr.mxu0 0.0
        %9922 = vmatpush1.msra.mxu0 0.0
        %9923 = vmatprep.mubr.f32.mxu0 %v9787
        %9924 = vmatmul.mubr.f32.gmra.mrb[0].mxu0 %v9782
        %v9925 = vpop.f32.mrb[0].mxu0
        %v9926 = vadd.f32 %v9856, %v9925
        %v9927 = vpop.f32.mrb[0].mxu0
        %9928 = vdwg.mxu0
        %v9929 = vadd.f32 %v9655, %v9926
        %v9930 = vmax.f32 %v9929, 0.0
        %v9931 = vld [vmem:[%s12] sm:$0xff]
        %v9932 = vld [vmem:[%s12 + $0x8] sm:$0xff]
        %v9933 = vld [vmem:[%s12 + $0x10] sm:$0xff]
        %v9934 = vld [vmem:[%s12 + $0x18] sm:$0xff]
        %v9935 = vld [vmem:[%s12 + $0x20] sm:$0xff]
        %v9936 = vld [vmem:[%s12 + $0x28] sm:$0xff]
        %v9937 = vld [vmem:[%s12 + $0x30] sm:$0xff]
        %v9938 = vld [vmem:[%s12 + $0x38] sm:$0xff]
        %v9939 = vld [vmem:[%s12 + $0x40] sm:$0xff]
        %v9940 = vld [vmem:[%s12 + $0x48] sm:$0xff]
        %v9941 = vld [vmem:[%s12 + $0x50] sm:$0xff]
        %v9942 = vld [vmem:[%s12 + $0x58] sm:$0xff]
        %v9943 = vld [vmem:[%s12 + $0x60] sm:$0xff]
        %v9944 = vld [vmem:[%s12 + $0x68] sm:$0xff]
        %v9945 = vld [vmem:[%s12 + $0x70] sm:$0xff]
        %v9946 = vld [vmem:[%s12 + $0x78] sm:$0xff]
        %v9947 = vld [vmem:[%s13] sm:$0x1]
        %9948 = vmatprep.subr.mxu0 0.0
        %9949 = vmatpush1.msra.mxu0 %v9931
        %9950 = vmatprep.subr.mxu0 0.0
        %9951 = vmatpush1.msra.mxu0 %v9932
        %9952 = vmatprep.subr.mxu0 0.0
        %9953 = vmatpush1.msra.mxu0 %v9933
        %9954 = vmatprep.subr.mxu0 0.0
        %9955 = vmatpush1.msra.mxu0 %v9934
        %9956 = vmatprep.subr.mxu0 0.0
        %9957 = vmatpush1.msra.mxu0 %v9935
        %9958 = vmatprep.subr.mxu0 0.0
        %9959 = vmatpush1.msra.mxu0 %v9936
        %9960 = vmatprep.subr.mxu0 0.0
        %9961 = vmatpush1.msra.mxu0 %v9937
        %9962 = vmatprep.subr.mxu0 0.0
        %9963 = vmatpush1.msra.mxu0 %v9938
        %9964 = vmatprep.subr.mxu0 0.0
        %9965 = vmatpush1.msra.mxu0 %v9939
        %9966 = vmatprep.subr.mxu0 0.0
        %9967 = vmatpush1.msra.mxu0 %v9940
        %9968 = vmatprep.subr.mxu0 0.0
        %9969 = vmatpush1.msra.mxu0 %v9941
        %9970 = vmatprep.subr.mxu0 0.0
        %9971 = vmatpush1.msra.mxu0 %v9942
        %9972 = vmatprep.subr.mxu0 0.0
        %9973 = vmatpush1.msra.mxu0 %v9943
        %9974 = vmatprep.subr.mxu0 0.0
        %9975 = vmatpush1.msra.mxu0 %v9944
        %9976 = vmatprep.subr.mxu0 0.0
        %9977 = vmatpush1.msra.mxu0 %v9945
        %9978 = vmatprep.subr.mxu0 0.0
        %9979 = vmatpush1.msra.mxu0 %v9946
        %9980 = vmatprep.subr.mxu0 0.0
        %9981 = vmatpush1.msra.mxu0 0.0
        %9982 = vmatprep.subr.mxu0 0.0
        %9983 = vmatpush1.msra.mxu0 0.0
        %9984 = vmatprep.subr.mxu0 0.0
        %9985 = vmatpush1.msra.mxu0 0.0
        %9986 = vmatprep.subr.mxu0 0.0
        %9987 = vmatpush1.msra.mxu0 0.0
        %9988 = vmatprep.subr.mxu0 0.0
        %9989 = vmatpush1.msra.mxu0 0.0
        %9990 = vmatprep.subr.mxu0 0.0
        %9991 = vmatpush1.msra.mxu0 0.0
        %9992 = vmatprep.subr.mxu0 0.0
        %9993 = vmatpush1.msra.mxu0 0.0
        %9994 = vmatprep.subr.mxu0 0.0
        %9995 = vmatpush1.msra.mxu0 0.0
        %9996 = vmatprep.subr.mxu0 0.0
        %9997 = vmatpush1.msra.mxu0 0.0
        %9998 = vmatprep.subr.mxu0 0.0
        %9999 = vmatpush1.msra.mxu0 0.0
        %10000 = vmatprep.subr.mxu0 0.0
        %10001 = vmatpush1.msra.mxu0 0.0
        %10002 = vmatprep.subr.mxu0 0.0
        %10003 = vmatpush1.msra.mxu0 0.0
        %10004 = vmatprep.subr.mxu0 0.0
        %10005 = vmatpush1.msra.mxu0 0.0
        %10006 = vmatprep.subr.mxu0 0.0
        %10007 = vmatpush1.msra.mxu0 0.0
        %10008 = vmatprep.subr.mxu0 0.0
        %10009 = vmatpush1.msra.mxu0 0.0
        %10010 = vmatprep.subr.mxu0 0.0
        %10011 = vmatpush1.msra.mxu0 0.0
        %10012 = vmatprep.mubr.f32.mxu0 0.0
        %10013 = vmatmul.mubr.f32.gmra.mrb[0].mxu0 %v9930
        %v10014 = vpop.f32.mrb[0].mxu0
        %v10015 = vadd.f32 %v9947, %v10014
        %v10016 = vpop.f32.mrb[0].mxu0
        %10017 = vdwg.mxu0
        %vm10018 = vcmask 253952
        %10019 = vst.msk [vmem:[%s474] sm:$0x1] %vm10018, %v10015
        %s10020 = sand.u32 %s336, 1
        %s10021 = scalar_lea.sflag [#allocation4], %s10020
        %s10022 = sand.u32 %s336, 1
        %s10023 = scalar_lea.vmem [#allocation5], %s10022
        // Predicated region
        $region81: #{encoder_forward.1} parent=75 // pred_check
          %p10024 = pneg %p346
        $region82: #{encoder_forward.1} parent=75 // pred_check_branch
          %10026 = sbr.rel (%p10024) target = $region84
        $region83: #{encoder_forward.1} parent=75 // pred_region
          %s10028 = ssub.s32 16, 16
          %10029 = vsyncadd %s10021, %s10028
          %s10030 = smul.addr %s29, 16
          %s10031 = scalar_lea.hbm %s14, %s10030
          %s10033 = sshll.u32 %s10023, 4
          %s10034 = int_to_ptr.vmem [resolvable:$true] %s10033
          %10036 = dma.vmem_to_hbm [thread:$0]  %s10034, 16, %s10031, %s10021
        $region84: #{encoder_forward.1} parent=75 // pred_fallthru
          _
      $region76: #{encoder_forward.1} parent=5 // pred_fallthru
        _
      %p10037 = scmp.le.s32.totalorder 2, %s24
      // Predicated region
      $region85: #{encoder_forward.1} parent=5 // pred_check
        %p10038 = pneg %p10037
      $region86: #{encoder_forward.1} parent=5 // pred_check_branch
        %10040 = sbr.rel (%p10038) target = $region88
      $region87: #{encoder_forward.1} parent=5 // pred_region
        %s10041 = ssub.s32 %s24, 2
        // Predicated region
        $region89: #{encoder_forward.1} parent=87 // pred_check
          %p10042 = pneg %p352
        $region90: #{encoder_forward.1} parent=87 // pred_check_branch
          %10044 = sbr.rel (%p10042) target = $region92
        $region91: #{encoder_forward.1} parent=87 // pred_region
          %s10045 = sand.u32 %s337, 1
          %s10046 = scalar_lea.sflag [#allocation4], %s10045
          %s10047 = sand.u32 %s337, 1
          %s10048 = scalar_lea.vmem [#allocation5], %s10047
          %10049 = dma.done %s10046, 16
        $region92: #{encoder_forward.1} parent=87 // pred_fallthru
          _
      $region88: #{encoder_forward.1} parent=5 // pred_fallthru
        _
    $region6: #{encoder_forward.1} parent=1 // loop_footer
      %s28 = sadd.s32 1, %s24
    $region7: #{encoder_forward.1} parent=1 // loop_footer_branch
      %23 = sbr.rel target = $region3
    $region8: #{encoder_forward.1} parent=1 // loop_exit
      _
    %10050 = vsyncpa [#allocation3], 1
    %s10051 = scalar_lea.sflag [#allocation3], 1
    %10052 = vsyncpa %s10051, 1
    %10053 = vsyncpa [#allocation4], 1
    %s10054 = scalar_lea.sflag [#allocation4], 1
    %10055 = vsyncpa %s10054, 1

</llo_original>
